<compile_context>
chip_gen: v7x
topology: tpu7x:2x2x1
jax: 0.10.0
libtpu: 0.0.40
codegen_flags: <defaults>
</compile_context>

<pallas_src>
import functools

import jax
import jax.numpy as jnp
import numpy as np
from jax import lax
from jax.experimental import pallas as pl
from jax.experimental.pallas import tpu as pltpu

# ------------------------------------------------------------------ constants
CHANNEL = (4, 8, 8)      # snnlstm_NI1(channel) — small channel counts
IMG = 256                # input spatial size (hard-coded membranes imply 128 after pool)
POOL = 2
PH = IMG // POOL         # 128
KS = 10                  # conv kernel size
ST = 2                   # conv stride
H1, H2, H3 = 60, 26, 9   # conv output spatial sizes (hard-coded in the module)
HID = 38                 # LSTM hidden size
NLAYERS = 3              # LSTM layers
T_FRAMES = 4             # sequence length (frames)
BATCH = 2

LANE = 128
SUB = 8
HP = 128                 # padded hidden width (one lane group)
GP = 4 * HP              # padded gate width: [i | f | g | o], each 128 lanes


def _round_up(v, m):
    return (v + m - 1) // m * m


def _sigmoid(x):
    return 1.0 / (1.0 + jnp.exp(-x))


# ------------------------------------------------------------ kernel 1: avg pool 2x2
def _pool_kernel(p_ref, pt_ref, x_ref, o_ref):
    tmp = jnp.dot(p_ref[...], x_ref[0], preferred_element_type=jnp.float32)   # (PH, IMG)
    o_ref[0] = jnp.dot(tmp, pt_ref[...],
                       preferred_element_type=jnp.float32).astype(o_ref.dtype)


def avg_pool2(x):
    """x: (B, IMG, IMG) -> (B, PH, PH); exact 2x2 mean pooling on the MXU."""
    b = x.shape[0]
    p_mat = jnp.kron(jnp.eye(PH, dtype=x.dtype),
                     jnp.full((1, POOL), 1.0 / POOL, x.dtype))                 # (PH, IMG)
    pt_mat = p_mat.T                                                           # precomputed
    return pl.pallas_call(
        _pool_kernel,
        out_shape=jax.ShapeDtypeStruct((b, PH, PH), x.dtype),
        grid=(b,),
        in_specs=[pl.BlockSpec((PH, IMG), lambda i: (0, 0)),
                  pl.BlockSpec((IMG, PH), lambda i: (0, 0)),
                  pl.BlockSpec((1, IMG, IMG), lambda i: (i, 0, 0))],
        out_specs=pl.BlockSpec((1, PH, PH), lambda i: (i, 0, 0)),
        compiler_params=pltpu.CompilerParams(dimension_semantics=("parallel",)),
    )(p_mat, pt_mat, x)


# ------------------------------------------------ kernel 2: fused conv (matmul) + LIF
def _conv_lif_kernel(x_ref, w_ref, b_ref, o_ref, mem_ref):
    t = pl.program_id(1)

    @pl.when(t == 0)
    def _init():
        mem_ref[...] = jnp.zeros_like(mem_ref)     # membrane resets per batch element

    z = jnp.dot(w_ref[...], x_ref[0, 0], preferred_element_type=jnp.float32)
    mem = mem_ref[...] + z + b_ref[...]            # (C_pad, P_pad)
    spike = mem > 1.0                              # LIF: strict threshold at 1
    o_ref[0, 0] = spike.astype(o_ref.dtype)
    mem_ref[...] = jnp.where(spike, 0.0, mem)      # reset where spiked


def conv_lif(patches, w_p, b_p):
    """patches: (N, T, Kf_pad, P_pad) -> spikes (N, T, C_pad, P_pad)."""
    n, t_frames, kf_pad, p_pad = patches.shape
    c_pad = w_p.shape[0]
    return pl.pallas_call(
        _conv_lif_kernel,
        out_shape=jax.ShapeDtypeStruct((n, t_frames, c_pad, p_pad), jnp.float32),
        grid=(n, t_frames),
        in_specs=[pl.BlockSpec((1, 1, kf_pad, p_pad), lambda i, j: (i, j, 0, 0)),
                  pl.BlockSpec((c_pad, kf_pad), lambda i, j: (0, 0)),
                  pl.BlockSpec((c_pad, 1), lambda i, j: (0, 0))],
        out_specs=pl.BlockSpec((1, 1, c_pad, p_pad), lambda i, j: (i, j, 0, 0)),
        scratch_shapes=[pltpu.VMEM((c_pad, p_pad), jnp.float32)],
        compiler_params=pltpu.CompilerParams(
            dimension_semantics=("parallel", "arbitrary")),
    )(patches, w_p, b_p)


# ------------------------------------------------------------ kernel 3: 3-layer LSTM
def _lstm_kernel(x_ref, wih0_ref, whh0_ref, wih1_ref, whh1_ref, wih2_ref, whh2_ref,
                 b0_ref, b1_ref, b2_ref, o_ref, h_scr, c_scr, acc_scr):
    t = pl.program_id(0)

    @pl.when(t == 0)
    def _init():
        h_scr[...] = jnp.zeros_like(h_scr)
        c_scr[...] = jnp.zeros_like(c_scr)
        acc_scr[...] = jnp.zeros_like(acc_scr)

    def cell(layer, x_in, wih_ref, whh_ref, b_ref):
        gates = (jnp.dot(x_in, wih_ref[...], preferred_element_type=jnp.float32)
                 + jnp.dot(h_scr[layer], whh_ref[...], preferred_element_type=jnp.float32)
                 + b_ref[...])                                   # (N_pad, GP)
        i_g = _sigmoid(gates[:, 0 * HP:1 * HP])
        f_g = _sigmoid(gates[:, 1 * HP:2 * HP])
        g_g = jnp.tanh(gates[:, 2 * HP:3 * HP])
        o_g = _sigmoid(gates[:, 3 * HP:4 * HP])
        c_new = f_g * c_scr[layer] + i_g * g_g
        h_new = o_g * jnp.tanh(c_new)
        c_scr[layer] = c_new
        h_scr[layer] = h_new
        return h_new

    h = cell(0, x_ref[0], wih0_ref, whh0_ref, b0_ref)
    h = cell(1, h, wih1_ref, whh1_ref, b1_ref)
    h = cell(2, h, wih2_ref, whh2_ref, b2_ref)
    acc_scr[...] += h                                            # torch.sum(output, 1)

    @pl.when(t == pl.num_programs(0) - 1)
    def _finalize():
        o_ref[...] = acc_scr[...].astype(o_ref.dtype)


def lstm_sum(x_seq, lstm_params):
    """x_seq: (T, N_pad, F0_pad) -> sum over time of last-layer hidden, (N_pad, HP)."""
    t_frames, n_pad, f0_pad = x_seq.shape
    in_specs = [pl.BlockSpec((1, n_pad, f0_pad), lambda t: (t, 0, 0)),
                pl.BlockSpec((f0_pad, GP), lambda t: (0, 0)),
                pl.BlockSpec((HP, GP), lambda t: (0, 0)),
                pl.BlockSpec((HP, GP), lambda t: (0, 0)),
                pl.BlockSpec((HP, GP), lambda t: (0, 0)),
                pl.BlockSpec((HP, GP), lambda t: (0, 0)),
                pl.BlockSpec((HP, GP), lambda t: (0, 0)),
                pl.BlockSpec((1, GP), lambda t: (0, 0)),
                pl.BlockSpec((1, GP), lambda t: (0, 0)),
                pl.BlockSpec((1, GP), lambda t: (0, 0))]
    return pl.pallas_call(
        _lstm_kernel,
        out_shape=jax.ShapeDtypeStruct((n_pad, HP), jnp.float32),
        grid=(t_frames,),
        in_specs=in_specs,
        out_specs=pl.BlockSpec((n_pad, HP), lambda t: (0, 0)),
        scratch_shapes=[pltpu.VMEM((NLAYERS, n_pad, HP), jnp.float32),
                        pltpu.VMEM((NLAYERS, n_pad, HP), jnp.float32),
                        pltpu.VMEM((n_pad, HP), jnp.float32)],
        compiler_params=pltpu.CompilerParams(dimension_semantics=("arbitrary",)),
    )(x_seq, *lstm_params)


# ---------------------------------------------------------------- im2col (XLA glue)
# TODO(synk): im2col patch extraction stays in XLA glue; a fully in-kernel version
#             would need manual strided DMA gathers.
def _im2col(x):
    """x: (B, C, H, W) -> (B, C*KS*KS, HO*WO), feature order (c, kh, kw)."""
    b, c, h, w = x.shape
    ho = (h - KS) // ST + 1
    wo = (w - KS) // ST + 1
    taps = []
    for kh in range(KS):
        for kw in range(KS):
            taps.append(x[:, :, kh::ST, kw::ST][:, :, :ho, :wo])
    p = jnp.stack(taps, axis=2)                   # (B, C, KS*KS, HO, WO)
    return p.reshape(b, c * KS * KS, ho * wo)


# ---------------------------------------------------------------- forward wrapper
def snn_lstm_forward(x, prep, channel):
    """x: (N, T, IMG, IMG) float32 -> (N, HID) float32."""
    c1, c2, c3 = channel
    n, t_frames = x.shape[0], x.shape[1]
    nt = n * t_frames

    # avg_pool2d(x, 2)  (Pallas kernel 1)
    pooled = avg_pool2(x.reshape(nt, IMG, IMG))                  # (NT, 128, 128)
    spikes = pooled.reshape(nt, 1, PH, PH)

    # spiking conv front-end  (Pallas kernel 2, once per layer)
    layer_dims = ((1, c1, H1), (c1, c2, H2), (c2, c3, H3))
    for li, (cin, cout, hout) in enumerate(layer_dims):
        p_sp = hout * hout
        kf = cin * KS * KS
        kf_pad = _round_up(kf, SUB)
        p_pad = _round_up(p_sp, LANE)
        patches = _im2col(spikes)                                # (NT, kf, p_sp)
        patches = jnp.pad(patches, ((0, 0), (0, kf_pad - kf), (0, p_pad - p_sp)))
        patches = patches.reshape(n, t_frames, kf_pad, p_pad)
        w_p, b_p = prep["conv"][li]
        sp = conv_lif(patches, w_p, b_p)                         # (N, T, C_pad, P_pad)
        spikes = sp[:, :, :cout, :p_sp].reshape(nt, cout, hout, hout)

    # 3-layer LSTM over time + sum over time  (Pallas kernel 3)
    f0 = c3 * H3 * H3                                            # torch.flatten(c3o, 2)
    f0_pad = _round_up(f0, LANE)
    n_pad = _round_up(max(n, SUB), SUB)                          # derived from N, no clipping
    seq = spikes.reshape(n, t_frames, f0)
    x_seq = jnp.zeros((t_frames, n_pad, f0_pad), jnp.float32)
    x_seq = x_seq.at[:, :n, :f0].set(jnp.transpose(seq, (1, 0, 2)))
    out = lstm_sum(x_seq, prep["lstm"])                          # (N_pad, HP)
    return out[:n, :HID]


# ------------------------------------------------------------ parameter preparation
def prepare_params(raw, channel):
    """One-time padding / relayout of weights into kernel-friendly shapes."""
    c_in = (1, channel[0], channel[1])
    c_out = channel
    conv = []
    for li in range(3):
        w = raw[f"conv{li + 1}_w"]                               # (C_out, C_in, KS, KS)
        b = raw[f"conv{li + 1}_b"]
        kf = c_in[li] * KS * KS
        kf_pad = _round_up(kf, SUB)
        c_pad = _round_up(c_out[li], SUB)
        w_p = jnp.zeros((c_pad, kf_pad), jnp.float32)
        w_p = w_p.at[:c_out[li], :kf].set(w.reshape(c_out[li], kf))
        b_p = jnp.zeros((c_pad, 1), jnp.float32).at[:c_out[li], 0].set(b)
        conv.append((w_p, b_p))

    def gate_mat(w):                               # torch (4*HID, in_dim) -> (in_pad, GP)
        in_dim = w.shape[1]
        in_pad = _round_up(in_dim, LANE)
        out = jnp.zeros((in_pad, GP), jnp.float32)
        for g in range(4):                         # gate order i, f, g, o (lane-aligned)
            out = out.at[:in_dim, g * HP:g * HP + HID].set(w[g * HID:(g + 1) * HID, :].T)
        return out

    def gate_bias(b_ih, b_hh):
        b = b_ih + b_hh
        out = jnp.zeros((1, GP), jnp.float32)
        for g in range(4):
            out = out.at[0, g * HP:g * HP + HID].set(b[g * HID:(g + 1) * HID])
        return out

    lstm = []
    for l in range(NLAYERS):
        lstm.append(gate_mat(raw[f"w_ih_l{l}"]))
        lstm.append(gate_mat(raw[f"w_hh_l{l}"]))
    for l in range(NLAYERS):
        lstm.append(gate_bias(raw[f"b_ih_l{l}"], raw[f"b_hh_l{l}"]))
    return {"conv": tuple(conv), "lstm": tuple(lstm)}


# ---------------------------------------------------------------- parameter init
def init_raw_params(key, channel):
    """Random parameters.  Conv weights/biases are quantized to coarse power-of-two
    grids so the spiking front-end (matmuls + hard threshold) is exact in f32; the
    Pallas kernels and the pure-JAX reference then produce identical spike trains."""
    c1, c2, c3 = channel
    ks = jax.random.split(key, 20)

    def quant(k, shape, bound, grid):
        w = jax.random.uniform(k, shape, jnp.float32, -bound, bound)
        return jnp.round(w * grid) / grid

    raw = {
        "conv1_w": quant(ks[0], (c1, 1, KS, KS), 0.25, 32.0),
        "conv1_b": quant(ks[1], (c1,), 1.0 / 16.0, 64.0),
        "conv2_w": quant(ks[2], (c2, c1, KS, KS), 0.125, 64.0),
        "conv2_b": quant(ks[3], (c2,), 1.0 / 16.0, 64.0),
        "conv3_w": quant(ks[4], (c3, c2, KS, KS), 1.0 / 16.0, 64.0),
        "conv3_b": quant(ks[5], (c3,), 1.0 / 16.0, 64.0),
    }
    bound = 1.0 / np.sqrt(HID)
    sizes = (H3 * H3 * c3, HID, HID)
    idx = 6
    for l in range(NLAYERS):
        raw[f"w_ih_l{l}"] = jax.random.uniform(ks[idx], (4 * HID, sizes[l]),
                                               jnp.float32, -bound, bound); idx += 1
        raw[f"w_hh_l{l}"] = jax.random.uniform(ks[idx], (4 * HID, HID),
                                               jnp.float32, -bound, bound); idx += 1
        raw[f"b_ih_l{l}"] = jax.random.uniform(ks[idx], (4 * HID,),
                                               jnp.float32, -bound, bound); idx += 1
        raw[f"b_hh_l{l}"] = jax.random.uniform(ks[idx], (4 * HID,),
                                               jnp.float32, -bound, bound); idx += 1
    return raw


# ---------------------------------------------------------------- pure-JAX reference
def reference_forward(x, raw, channel):
    """Mirrors the PyTorch snnlstm_NI1 forward (avg_pool -> 3x {conv, LIF} -> LSTM -> sum)."""
    c1, c2, c3 = channel
    n, t_frames = x.shape[0], x.shape[1]
    xp = x.reshape(n, t_frames, PH, POOL, PH, POOL).mean(axis=(3, 5))

    def conv(inp, w, b):
        y = lax.conv_general_dilated(inp, w, (ST, ST), "VALID",
                                     dimension_numbers=("NCHW", "OIHW", "NCHW"))
        return y + b[None, :, None, None]

    def lif(mem):
        spk = (mem > 1.0).astype(jnp.float32)
        return jnp.where(mem > 1.0, 0.0, mem), spk

    mem1 = jnp.zeros((n, c1, H1, H1), jnp.float32)
    mem2 = jnp.zeros((n, c2, H2, H2), jnp.float32)
    mem3 = jnp.zeros((n, c3, H3, H3), jnp.float32)
    seq = []
    for t in range(t_frames):
        frame = xp[:, t][:, None]
        mem1, s1 = lif(mem1 + conv(frame, raw["conv1_w"], raw["conv1_b"]))
        mem2, s2 = lif(mem2 + conv(s1, raw["conv2_w"], raw["conv2_b"]))
        mem3, s3 = lif(mem3 + conv(s2, raw["conv3_w"], raw["conv3_b"]))
        seq.append(s3.reshape(n, -1))
    seq = jnp.stack(seq, axis=1)                                 # (N, T, 81*c3)

    h = [jnp.zeros((n, HID), jnp.float32) for _ in range(NLAYERS)]
    c = [jnp.zeros((n, HID), jnp.float32) for _ in range(NLAYERS)]
    outs = []
    for t in range(t_frames):
        inp = seq[:, t]
        for l in range(NLAYERS):
            gates = (inp @ raw[f"w_ih_l{l}"].T + raw[f"b_ih_l{l}"]
                     + h[l] @ raw[f"w_hh_l{l}"].T + raw[f"b_hh_l{l}"])
            i_g = _sigmoid(gates[:, 0 * HID:1 * HID])
            f_g = _sigmoid(gates[:, 1 * HID:2 * HID])
            g_g = jnp.tanh(gates[:, 2 * HID:3 * HID])
            o_g = _sigmoid(gates[:, 3 * HID:4 * HID])
            c[l] = f_g * c[l] + i_g * g_g
            h[l] = o_g * jnp.tanh(c[l])
            inp = h[l]
        outs.append(h[NLAYERS - 1])
    return jnp.stack(outs, axis=1).sum(axis=1)


if __name__ == "__main__":
    key = jax.random.PRNGKey(0)
    kx, kp = jax.random.split(key)
    # Spatial size is pinned to 256 by the module (membranes 60/26/9 after stride-2
    # convs on the 2x-pooled input); batch / frames / channels are kept small.
    x = jnp.round(jax.random.uniform(kx, (BATCH, T_FRAMES, IMG, IMG),
                                     jnp.float32, -2.0, 2.0) * 8.0) / 8.0
    raw = init_raw_params(kp, CHANNEL)
    prep = prepare_params(raw, CHANNEL)      # one-time weight padding, outside forward

    fwd = jax.jit(functools.partial(snn_lstm_forward, channel=CHANNEL))
    out = jax.block_until_ready(fwd(x, prep))

    ref = jax.jit(functools.partial(reference_forward, channel=CHANNEL))(x, raw)
    ref = jax.block_until_ready(ref)

    np.testing.assert_allclose(np.asarray(out), np.asarray(ref), rtol=2e-2, atol=2e-2)
    assert out.shape == (BATCH, HID)
    print("KERNEL_OK")
</pallas_src>

<mosaic_0001>
module attributes {stable_mosaic.version = 11 : i64} {
  func.func @_pool_kernel(%arg0: i32, %arg1: memref<128x256xf32, #tpu.memory_space<vmem>>, %arg2: memref<256x128xf32, #tpu.memory_space<vmem>>, %arg3: memref<1x256x256xf32, #tpu.memory_space<vmem>>, %arg4: memref<1x128x128xf32, #tpu.memory_space<vmem>>) attributes {dimension_semantics = [#tpu.dimension_semantics<parallel>], iteration_bounds = array<i64: 8>, scalar_prefetch = 0 : i64, scratch_operands = 0 : i64, tpu.core_type = #tpu.core_type<tc>, window_params = [{pipeline_mode = #tpu.pipeline_mode<synchronous>, transform_indices = @transform_0, window_bounds = array<i64: 128, 256>}, {pipeline_mode = #tpu.pipeline_mode<synchronous>, transform_indices = @transform_1, window_bounds = array<i64: 256, 128>}, {transform_indices = @transform_2, window_bounds = array<i64: 1, 256, 256>}, {transform_indices = @transform_3, window_bounds = array<i64: 1, 128, 128>}]} {
    %c0 = arith.constant 0 : index
    %c0_0 = arith.constant 0 : index
    %0 = vector.load %arg1[%c0, %c0_0] : memref<128x256xf32, #tpu.memory_space<vmem>>, vector<128x256xf32>
    %c0_1 = arith.constant 0 : index
    %c0_2 = arith.constant 0 : index
    %c0_3 = arith.constant 0 : index
    %1 = vector.load %arg3[%c0_1, %c0_2, %c0_3] : memref<1x256x256xf32, #tpu.memory_space<vmem>>, vector<1x256x256xf32>
    %2 = vector.shape_cast %1 : vector<1x256x256xf32> to vector<256x256xf32>
    %cst = arith.constant dense<0.000000e+00> : vector<128x256xf32>
    %3 = tpu.matmul %0, %2, %cst {dimension_numbers = #tpu.dot_dimension_numbers<[1], [0], [0], [1], [0, 0, 1, 1], [], []>} : vector<128x256xf32>, vector<256x256xf32>, vector<128x256xf32> -> vector<128x256xf32>
    %c0_4 = arith.constant 0 : index
    %c0_5 = arith.constant 0 : index
    %4 = vector.load %arg2[%c0_4, %c0_5] : memref<256x128xf32, #tpu.memory_space<vmem>>, vector<256x128xf32>
    %cst_6 = arith.constant dense<0.000000e+00> : vector<128x128xf32>
    %5 = tpu.matmul %3, %4, %cst_6 {dimension_numbers = #tpu.dot_dimension_numbers<[1], [0], [0], [1], [0, 0, 1, 1], [], []>} : vector<128x256xf32>, vector<256x128xf32>, vector<128x128xf32> -> vector<128x128xf32>
    %c0_7 = arith.constant 0 : index
    %c0_8 = arith.constant 0 : index
    %c0_9 = arith.constant 0 : index
    %6 = vector.load %arg4[%c0_7, %c0_8, %c0_9] : memref<1x128x128xf32, #tpu.memory_space<vmem>>, vector<1x128x128xf32>
    %7 = vector.shape_cast %6 : vector<1x128x128xf32> to vector<128x128xf32>
    %8 = vector.shape_cast %5 : vector<128x128xf32> to vector<1x128x128xf32>
    tpu.vector_store %arg4[%c0_7, %c0_8, %c0_9], %8 {strides = array<i32>} : memref<1x128x128xf32, #tpu.memory_space<vmem>>, vector<1x128x128xf32>,
    return
  }
  func.func @transform_0(%arg0: i32) -> (i32, i32) {
    %c0_i32 = arith.constant 0 : i32
    %c0_i32_0 = arith.constant 0 : i32
    %c0_i32_1 = arith.constant 0 : i32
    return %c0_i32, %c0_i32_0 : i32, i32
  }
  func.func @transform_1(%arg0: i32) -> (i32, i32) {
    %c0_i32 = arith.constant 0 : i32
    %c0_i32_0 = arith.constant 0 : i32
    %c0_i32_1 = arith.constant 0 : i32
    return %c0_i32, %c0_i32_0 : i32, i32
  }
  func.func @transform_2(%arg0: i32) -> (i32, i32, i32) {
    %c0_i32 = arith.constant 0 : i32
    %c0_i32_0 = arith.constant 0 : i32
    %c0_i32_1 = arith.constant 0 : i32
    return %arg0, %c0_i32, %c0_i32_0 : i32, i32, i32
  }
  func.func @transform_3(%arg0: i32) -> (i32, i32, i32) {
    %c0_i32 = arith.constant 0 : i32
    %c0_i32_0 = arith.constant 0 : i32
    %c0_i32_1 = arith.constant 0 : i32
    return %arg0, %c0_i32, %c0_i32_0 : i32, i32, i32
  }
}

module attributes {stable_mosaic.version = 11 : i64} {
  func.func @_conv_lif_kernel(%arg0: i32, %arg1: i32, %arg2: memref<1x1x104x3712xf32, #tpu.memory_space<vmem>>, %arg3: memref<8x104xf32, #tpu.memory_space<vmem>>, %arg4: memref<8x1xf32, #tpu.memory_space<vmem>>, %arg5: memref<1x1x8x3712xf32, #tpu.memory_space<vmem>>, %arg6: memref<8x3712xf32, #tpu.memory_space<vmem>>) attributes {dimension_semantics = [#tpu.dimension_semantics<parallel>, #tpu.dimension_semantics<arbitrary>], iteration_bounds = array<i64: 2, 4>, scalar_prefetch = 0 : i64, scratch_operands = 1 : i64, tpu.core_type = #tpu.core_type<tc>, window_params = [{transform_indices = @transform_0, window_bounds = array<i64: 1, 1, 104, 3712>}, {pipeline_mode = #tpu.pipeline_mode<synchronous>, transform_indices = @transform_1, window_bounds = array<i64: 8, 104>}, {pipeline_mode = #tpu.pipeline_mode<synchronous>, transform_indices = @transform_2, window_bounds = array<i64: 8, 1>}, {transform_indices = @transform_3, window_bounds = array<i64: 1, 1, 8, 3712>}]} {
    %c0_i32 = arith.constant 0 : i32
    %0 = arith.cmpi eq, %arg1, %c0_i32 : i32
    %1 = arith.extui %0 : i1 to i32
    %c0_i32_0 = arith.constant 0 : i32
    %2 = arith.cmpi ne, %1, %c0_i32_0 : i32
    scf.if %2 {
      %cst_18 = arith.constant 0.000000e+00 : f32
      %22 = vector.broadcast %cst_18 : f32 to vector<8x3712xf32>
      %c0_19 = arith.constant 0 : index
      %c0_20 = arith.constant 0 : index
      %23 = vector.load %arg6[%c0_19, %c0_20] : memref<8x3712xf32, #tpu.memory_space<vmem>>, vector<8x3712xf32>
      tpu.vector_store %arg6[%c0_19, %c0_20], %22 {strides = array<i32>} : memref<8x3712xf32, #tpu.memory_space<vmem>>, vector<8x3712xf32>,
    } else {
    }
    %c0 = arith.constant 0 : index
    %c0_1 = arith.constant 0 : index
    %3 = vector.load %arg3[%c0, %c0_1] : memref<8x104xf32, #tpu.memory_space<vmem>>, vector<8x104xf32>
    %c0_2 = arith.constant 0 : index
    %c0_3 = arith.constant 0 : index
    %c0_4 = arith.constant 0 : index
    %c0_5 = arith.constant 0 : index
    %4 = vector.load %arg2[%c0_2, %c0_3, %c0_4, %c0_5] : memref<1x1x104x3712xf32, #tpu.memory_space<vmem>>, vector<1x1x104x3712xf32>
    %5 = vector.shape_cast %4 : vector<1x1x104x3712xf32> to vector<104x3712xf32>
    %cst = arith.constant dense<0.000000e+00> : vector<8x3712xf32>
    %6 = tpu.matmul %3, %5, %cst {dimension_numbers = #tpu.dot_dimension_numbers<[1], [0], [0], [1], [0, 0, 1, 1], [], []>} : vector<8x104xf32>, vector<104x3712xf32>, vector<8x3712xf32> -> vector<8x3712xf32>
    %c0_6 = arith.constant 0 : index
    %c0_7 = arith.constant 0 : index
    %7 = vector.load %arg6[%c0_6, %c0_7] : memref<8x3712xf32, #tpu.memory_space<vmem>>, vector<8x3712xf32>
    %8 = arith.addf %7, %6 : vector<8x3712xf32>
    %c0_8 = arith.constant 0 : index
    %c0_9 = arith.constant 0 : index
    %9 = vector.load %arg4[%c0_8, %c0_9] : memref<8x1xf32, #tpu.memory_space<vmem>>, vector<8x1xf32>
    %10 = vector.broadcast %9 : vector<8x1xf32> to vector<8x3712xf32>
    %11 = arith.addf %8, %10 : vector<8x3712xf32>
    %cst_10 = arith.constant 1.000000e+00 : f32
    %12 = vector.broadcast %cst_10 : f32 to vector<8x3712xf32>
    %13 = arith.cmpf ogt, %11, %12 : vector<8x3712xf32>
    %14 = arith.extui %13 : vector<8x3712xi1> to vector<8x3712xi32>
    %15 = arith.sitofp %14 : vector<8x3712xi32> to vector<8x3712xf32>
    %c0_11 = arith.constant 0 : index
    %c0_12 = arith.constant 0 : index
    %c0_13 = arith.constant 0 : index
    %c0_14 = arith.constant 0 : index
    %16 = vector.load %arg5[%c0_11, %c0_12, %c0_13, %c0_14] : memref<1x1x8x3712xf32, #tpu.memory_space<vmem>>, vector<1x1x8x3712xf32>
    %17 = vector.shape_cast %16 : vector<1x1x8x3712xf32> to vector<8x3712xf32>
    %18 = vector.shape_cast %15 : vector<8x3712xf32> to vector<1x1x8x3712xf32>
    tpu.vector_store %arg5[%c0_11, %c0_12, %c0_13, %c0_14], %18 {strides = array<i32>} : memref<1x1x8x3712xf32, #tpu.memory_space<vmem>>, vector<1x1x8x3712xf32>,
    %cst_15 = arith.constant 0.000000e+00 : f32
    %19 = vector.broadcast %cst_15 : f32 to vector<8x3712xf32>
    %20 = arith.select %13, %19, %11 : vector<8x3712xi1>, vector<8x3712xf32>
    %c0_16 = arith.constant 0 : index
    %c0_17 = arith.constant 0 : index
    %21 = vector.load %arg6[%c0_16, %c0_17] : memref<8x3712xf32, #tpu.memory_space<vmem>>, vector<8x3712xf32>
    tpu.vector_store %arg6[%c0_16, %c0_17], %20 {strides = array<i32>} : memref<8x3712xf32, #tpu.memory_space<vmem>>, vector<8x3712xf32>,
    return
  }
  func.func @transform_0(%arg0: i32, %arg1: i32) -> (i32, i32, i32, i32) {
    %c0_i32 = arith.constant 0 : i32
    %c0_i32_0 = arith.constant 0 : i32
    %c0_i32_1 = arith.constant 0 : i32
    return %arg0, %arg1, %c0_i32, %c0_i32_0 : i32, i32, i32, i32
  }
  func.func @transform_1(%arg0: i32, %arg1: i32) -> (i32, i32) {
    %c0_i32 = arith.constant 0 : i32
    %c0_i32_0 = arith.constant 0 : i32
    %c0_i32_1 = arith.constant 0 : i32
    return %c0_i32, %c0_i32_0 : i32, i32
  }
  func.func @transform_2(%arg0: i32, %arg1: i32) -> (i32, i32) {
    %c0_i32 = arith.constant 0 : i32
    %c0_i32_0 = arith.constant 0 : i32
    %c0_i32_1 = arith.constant 0 : i32
    return %c0_i32, %c0_i32_0 : i32, i32
  }
  func.func @transform_3(%arg0: i32, %arg1: i32) -> (i32, i32, i32, i32) {
    %c0_i32 = arith.constant 0 : i32
    %c0_i32_0 = arith.constant 0 : i32
    %c0_i32_1 = arith.constant 0 : i32
    return %arg0, %arg1, %c0_i32, %c0_i32_0 : i32, i32, i32, i32
  }
}

module attributes {stable_mosaic.version = 11 : i64} {
  func.func @_conv_lif_kernel(%arg0: i32, %arg1: i32, %arg2: memref<1x1x400x768xf32, #tpu.memory_space<vmem>>, %arg3: memref<8x400xf32, #tpu.memory_space<vmem>>, %arg4: memref<8x1xf32, #tpu.memory_space<vmem>>, %arg5: memref<1x1x8x768xf32, #tpu.memory_space<vmem>>, %arg6: memref<8x768xf32, #tpu.memory_space<vmem>>) attributes {dimension_semantics = [#tpu.dimension_semantics<parallel>, #tpu.dimension_semantics<arbitrary>], iteration_bounds = array<i64: 2, 4>, scalar_prefetch = 0 : i64, scratch_operands = 1 : i64, tpu.core_type = #tpu.core_type<tc>, window_params = [{transform_indices = @transform_0, window_bounds = array<i64: 1, 1, 400, 768>}, {pipeline_mode = #tpu.pipeline_mode<synchronous>, transform_indices = @transform_1, window_bounds = array<i64: 8, 400>}, {pipeline_mode = #tpu.pipeline_mode<synchronous>, transform_indices = @transform_2, window_bounds = array<i64: 8, 1>}, {transform_indices = @transform_3, window_bounds = array<i64: 1, 1, 8, 768>}]} {
    %c0_i32 = arith.constant 0 : i32
    %0 = arith.cmpi eq, %arg1, %c0_i32 : i32
    %1 = arith.extui %0 : i1 to i32
    %c0_i32_0 = arith.constant 0 : i32
    %2 = arith.cmpi ne, %1, %c0_i32_0 : i32
    scf.if %2 {
      %cst_18 = arith.constant 0.000000e+00 : f32
      %22 = vector.broadcast %cst_18 : f32 to vector<8x768xf32>
      %c0_19 = arith.constant 0 : index
      %c0_20 = arith.constant 0 : index
      %23 = vector.load %arg6[%c0_19, %c0_20] : memref<8x768xf32, #tpu.memory_space<vmem>>, vector<8x768xf32>
      tpu.vector_store %arg6[%c0_19, %c0_20], %22 {strides = array<i32>} : memref<8x768xf32, #tpu.memory_space<vmem>>, vector<8x768xf32>,
    } else {
    }
    %c0 = arith.constant 0 : index
    %c0_1 = arith.constant 0 : index
    %3 = vector.load %arg3[%c0, %c0_1] : memref<8x400xf32, #tpu.memory_space<vmem>>, vector<8x400xf32>
    %c0_2 = arith.constant 0 : index
    %c0_3 = arith.constant 0 : index
    %c0_4 = arith.constant 0 : index
    %c0_5 = arith.constant 0 : index
    %4 = vector.load %arg2[%c0_2, %c0_3, %c0_4, %c0_5] : memref<1x1x400x768xf32, #tpu.memory_space<vmem>>, vector<1x1x400x768xf32>
    %5 = vector.shape_cast %4 : vector<1x1x400x768xf32> to vector<400x768xf32>
    %cst = arith.constant dense<0.000000e+00> : vector<8x768xf32>
    %6 = tpu.matmul %3, %5, %cst {dimension_numbers = #tpu.dot_dimension_numbers<[1], [0], [0], [1], [0, 0, 1, 1], [], []>} : vector<8x400xf32>, vector<400x768xf32>, vector<8x768xf32> -> vector<8x768xf32>
    %c0_6 = arith.constant 0 : index
    %c0_7 = arith.constant 0 : index
    %7 = vector.load %arg6[%c0_6, %c0_7] : memref<8x768xf32, #tpu.memory_space<vmem>>, vector<8x768xf32>
    %8 = arith.addf %7, %6 : vector<8x768xf32>
    %c0_8 = arith.constant 0 : index
    %c0_9 = arith.constant 0 : index
    %9 = vector.load %arg4[%c0_8, %c0_9] : memref<8x1xf32, #tpu.memory_space<vmem>>, vector<8x1xf32>
    %10 = vector.broadcast %9 : vector<8x1xf32> to vector<8x768xf32>
    %11 = arith.addf %8, %10 : vector<8x768xf32>
    %cst_10 = arith.constant 1.000000e+00 : f32
    %12 = vector.broadcast %cst_10 : f32 to vector<8x768xf32>
    %13 = arith.cmpf ogt, %11, %12 : vector<8x768xf32>
    %14 = arith.extui %13 : vector<8x768xi1> to vector<8x768xi32>
    %15 = arith.sitofp %14 : vector<8x768xi32> to vector<8x768xf32>
    %c0_11 = arith.constant 0 : index
    %c0_12 = arith.constant 0 : index
    %c0_13 = arith.constant 0 : index
    %c0_14 = arith.constant 0 : index
    %16 = vector.load %arg5[%c0_11, %c0_12, %c0_13, %c0_14] : memref<1x1x8x768xf32, #tpu.memory_space<vmem>>, vector<1x1x8x768xf32>
    %17 = vector.shape_cast %16 : vector<1x1x8x768xf32> to vector<8x768xf32>
    %18 = vector.shape_cast %15 : vector<8x768xf32> to vector<1x1x8x768xf32>
    tpu.vector_store %arg5[%c0_11, %c0_12, %c0_13, %c0_14], %18 {strides = array<i32>} : memref<1x1x8x768xf32, #tpu.memory_space<vmem>>, vector<1x1x8x768xf32>,
    %cst_15 = arith.constant 0.000000e+00 : f32
    %19 = vector.broadcast %cst_15 : f32 to vector<8x768xf32>
    %20 = arith.select %13, %19, %11 : vector<8x768xi1>, vector<8x768xf32>
    %c0_16 = arith.constant 0 : index
    %c0_17 = arith.constant 0 : index
    %21 = vector.load %arg6[%c0_16, %c0_17] : memref<8x768xf32, #tpu.memory_space<vmem>>, vector<8x768xf32>
    tpu.vector_store %arg6[%c0_16, %c0_17], %20 {strides = array<i32>} : memref<8x768xf32, #tpu.memory_space<vmem>>, vector<8x768xf32>,
    return
  }
  func.func @transform_0(%arg0: i32, %arg1: i32) -> (i32, i32, i32, i32) {
    %c0_i32 = arith.constant 0 : i32
    %c0_i32_0 = arith.constant 0 : i32
    %c0_i32_1 = arith.constant 0 : i32
    return %arg0, %arg1, %c0_i32, %c0_i32_0 : i32, i32, i32, i32
  }
  func.func @transform_1(%arg0: i32, %arg1: i32) -> (i32, i32) {
    %c0_i32 = arith.constant 0 : i32
    %c0_i32_0 = arith.constant 0 : i32
    %c0_i32_1 = arith.constant 0 : i32
    return %c0_i32, %c0_i32_0 : i32, i32
  }
  func.func @transform_2(%arg0: i32, %arg1: i32) -> (i32, i32) {
    %c0_i32 = arith.constant 0 : i32
    %c0_i32_0 = arith.constant 0 : i32
    %c0_i32_1 = arith.constant 0 : i32
    return %c0_i32, %c0_i32_0 : i32, i32
  }
  func.func @transform_3(%arg0: i32, %arg1: i32) -> (i32, i32, i32, i32) {
    %c0_i32 = arith.constant 0 : i32
    %c0_i32_0 = arith.constant 0 : i32
    %c0_i32_1 = arith.constant 0 : i32
    return %arg0, %arg1, %c0_i32, %c0_i32_0 : i32, i32, i32, i32
  }
}

module attributes {stable_mosaic.version = 11 : i64} {
  func.func @_conv_lif_kernel(%arg0: i32, %arg1: i32, %arg2: memref<1x1x800x128xf32, #tpu.memory_space<vmem>>, %arg3: memref<8x800xf32, #tpu.memory_space<vmem>>, %arg4: memref<8x1xf32, #tpu.memory_space<vmem>>, %arg5: memref<1x1x8x128xf32, #tpu.memory_space<vmem>>, %arg6: memref<8x128xf32, #tpu.memory_space<vmem>>) attributes {dimension_semantics = [#tpu.dimension_semantics<parallel>, #tpu.dimension_semantics<arbitrary>], iteration_bounds = array<i64: 2, 4>, scalar_prefetch = 0 : i64, scratch_operands = 1 : i64, tpu.core_type = #tpu.core_type<tc>, window_params = [{transform_indices = @transform_0, window_bounds = array<i64: 1, 1, 800, 128>}, {pipeline_mode = #tpu.pipeline_mode<synchronous>, transform_indices = @transform_1, window_bounds = array<i64: 8, 800>}, {pipeline_mode = #tpu.pipeline_mode<synchronous>, transform_indices = @transform_2, window_bounds = array<i64: 8, 1>}, {transform_indices = @transform_3, window_bounds = array<i64: 1, 1, 8, 128>}]} {
    %c0_i32 = arith.constant 0 : i32
    %0 = arith.cmpi eq, %arg1, %c0_i32 : i32
    %1 = arith.extui %0 : i1 to i32
    %c0_i32_0 = arith.constant 0 : i32
    %2 = arith.cmpi ne, %1, %c0_i32_0 : i32
    scf.if %2 {
      %cst_18 = arith.constant 0.000000e+00 : f32
      %22 = vector.broadcast %cst_18 : f32 to vector<8x128xf32>
      %c0_19 = arith.constant 0 : index
      %c0_20 = arith.constant 0 : index
      %23 = vector.load %arg6[%c0_19, %c0_20] : memref<8x128xf32, #tpu.memory_space<vmem>>, vector<8x128xf32>
      tpu.vector_store %arg6[%c0_19, %c0_20], %22 {strides = array<i32>} : memref<8x128xf32, #tpu.memory_space<vmem>>, vector<8x128xf32>,
    } else {
    }
    %c0 = arith.constant 0 : index
    %c0_1 = arith.constant 0 : index
    %3 = vector.load %arg3[%c0, %c0_1] : memref<8x800xf32, #tpu.memory_space<vmem>>, vector<8x800xf32>
    %c0_2 = arith.constant 0 : index
    %c0_3 = arith.constant 0 : index
    %c0_4 = arith.constant 0 : index
    %c0_5 = arith.constant 0 : index
    %4 = vector.load %arg2[%c0_2, %c0_3, %c0_4, %c0_5] : memref<1x1x800x128xf32, #tpu.memory_space<vmem>>, vector<1x1x800x128xf32>
    %5 = vector.shape_cast %4 : vector<1x1x800x128xf32> to vector<800x128xf32>
    %cst = arith.constant dense<0.000000e+00> : vector<8x128xf32>
    %6 = tpu.matmul %3, %5, %cst {dimension_numbers = #tpu.dot_dimension_numbers<[1], [0], [0], [1], [0, 0, 1, 1], [], []>} : vector<8x800xf32>, vector<800x128xf32>, vector<8x128xf32> -> vector<8x128xf32>
    %c0_6 = arith.constant 0 : index
    %c0_7 = arith.constant 0 : index
    %7 = vector.load %arg6[%c0_6, %c0_7] : memref<8x128xf32, #tpu.memory_space<vmem>>, vector<8x128xf32>
    %8 = arith.addf %7, %6 : vector<8x128xf32>
    %c0_8 = arith.constant 0 : index
    %c0_9 = arith.constant 0 : index
    %9 = vector.load %arg4[%c0_8, %c0_9] : memref<8x1xf32, #tpu.memory_space<vmem>>, vector<8x1xf32>
    %10 = vector.broadcast %9 : vector<8x1xf32> to vector<8x128xf32>
    %11 = arith.addf %8, %10 : vector<8x128xf32>
    %cst_10 = arith.constant 1.000000e+00 : f32
    %12 = vector.broadcast %cst_10 : f32 to vector<8x128xf32>
    %13 = arith.cmpf ogt, %11, %12 : vector<8x128xf32>
    %14 = arith.extui %13 : vector<8x128xi1> to vector<8x128xi32>
    %15 = arith.sitofp %14 : vector<8x128xi32> to vector<8x128xf32>
    %c0_11 = arith.constant 0 : index
    %c0_12 = arith.constant 0 : index
    %c0_13 = arith.constant 0 : index
    %c0_14 = arith.constant 0 : index
    %16 = vector.load %arg5[%c0_11, %c0_12, %c0_13, %c0_14] : memref<1x1x8x128xf32, #tpu.memory_space<vmem>>, vector<1x1x8x128xf32>
    %17 = vector.shape_cast %16 : vector<1x1x8x128xf32> to vector<8x128xf32>
    %18 = vector.shape_cast %15 : vector<8x128xf32> to vector<1x1x8x128xf32>
    tpu.vector_store %arg5[%c0_11, %c0_12, %c0_13, %c0_14], %18 {strides = array<i32>} : memref<1x1x8x128xf32, #tpu.memory_space<vmem>>, vector<1x1x8x128xf32>,
    %cst_15 = arith.constant 0.000000e+00 : f32
    %19 = vector.broadcast %cst_15 : f32 to vector<8x128xf32>
    %20 = arith.select %13, %19, %11 : vector<8x128xi1>, vector<8x128xf32>
    %c0_16 = arith.constant 0 : index
    %c0_17 = arith.constant 0 : index
    %21 = vector.load %arg6[%c0_16, %c0_17] : memref<8x128xf32, #tpu.memory_space<vmem>>, vector<8x128xf32>
    tpu.vector_store %arg6[%c0_16, %c0_17], %20 {strides = array<i32>} : memref<8x128xf32, #tpu.memory_space<vmem>>, vector<8x128xf32>,
    return
  }
  func.func @transform_0(%arg0: i32, %arg1: i32) -> (i32, i32, i32, i32) {
    %c0_i32 = arith.constant 0 : i32
    %c0_i32_0 = arith.constant 0 : i32
    %c0_i32_1 = arith.constant 0 : i32
    return %arg0, %arg1, %c0_i32, %c0_i32_0 : i32, i32, i32, i32
  }
  func.func @transform_1(%arg0: i32, %arg1: i32) -> (i32, i32) {
    %c0_i32 = arith.constant 0 : i32
    %c0_i32_0 = arith.constant 0 : i32
    %c0_i32_1 = arith.constant 0 : i32
    return %c0_i32, %c0_i32_0 : i32, i32
  }
  func.func @transform_2(%arg0: i32, %arg1: i32) -> (i32, i32) {
    %c0_i32 = arith.constant 0 : i32
    %c0_i32_0 = arith.constant 0 : i32
    %c0_i32_1 = arith.constant 0 : i32
    return %c0_i32, %c0_i32_0 : i32, i32
  }
  func.func @transform_3(%arg0: i32, %arg1: i32) -> (i32, i32, i32, i32) {
    %c0_i32 = arith.constant 0 : i32
    %c0_i32_0 = arith.constant 0 : i32
    %c0_i32_1 = arith.constant 0 : i32
    return %arg0, %arg1, %c0_i32, %c0_i32_0 : i32, i32, i32, i32
  }
}

module attributes {stable_mosaic.version = 11 : i64} {
  func.func @_lstm_kernel(%arg0: i32, %arg1: memref<1x8x768xf32, #tpu.memory_space<vmem>>, %arg2: memref<768x512xf32, #tpu.memory_space<vmem>>, %arg3: memref<128x512xf32, #tpu.memory_space<vmem>>, %arg4: memref<128x512xf32, #tpu.memory_space<vmem>>, %arg5: memref<128x512xf32, #tpu.memory_space<vmem>>, %arg6: memref<128x512xf32, #tpu.memory_space<vmem>>, %arg7: memref<128x512xf32, #tpu.memory_space<vmem>>, %arg8: memref<1x512xf32, #tpu.memory_space<vmem>>, %arg9: memref<1x512xf32, #tpu.memory_space<vmem>>, %arg10: memref<1x512xf32, #tpu.memory_space<vmem>>, %arg11: memref<8x128xf32, #tpu.memory_space<vmem>>, %arg12: memref<3x8x128xf32, #tpu.memory_space<vmem>>, %arg13: memref<3x8x128xf32, #tpu.memory_space<vmem>>, %arg14: memref<8x128xf32, #tpu.memory_space<vmem>>) attributes {dimension_semantics = [#tpu.dimension_semantics<arbitrary>], iteration_bounds = array<i64: 4>, scalar_prefetch = 0 : i64, scratch_operands = 3 : i64, tpu.core_type = #tpu.core_type<tc>, window_params = [{transform_indices = @transform_0, window_bounds = array<i64: 1, 8, 768>}, {pipeline_mode = #tpu.pipeline_mode<synchronous>, transform_indices = @transform_1, window_bounds = array<i64: 768, 512>}, {pipeline_mode = #tpu.pipeline_mode<synchronous>, transform_indices = @transform_2, window_bounds = array<i64: 128, 512>}, {pipeline_mode = #tpu.pipeline_mode<synchronous>, transform_indices = @transform_3, window_bounds = array<i64: 128, 512>}, {pipeline_mode = #tpu.pipeline_mode<synchronous>, transform_indices = @transform_4, window_bounds = array<i64: 128, 512>}, {pipeline_mode = #tpu.pipeline_mode<synchronous>, transform_indices = @transform_5, window_bounds = array<i64: 128, 512>}, {pipeline_mode = #tpu.pipeline_mode<synchronous>, transform_indices = @transform_6, window_bounds = array<i64: 128, 512>}, {pipeline_mode = #tpu.pipeline_mode<synchronous>, transform_indices = @transform_7, window_bounds = array<i64: 1, 512>}, {pipeline_mode = #tpu.pipeline_mode<synchronous>, transform_indices = @transform_8, window_bounds = array<i64: 1, 512>}, {pipeline_mode = #tpu.pipeline_mode<synchronous>, transform_indices = @transform_9, window_bounds = array<i64: 1, 512>}, {pipeline_mode = #tpu.pipeline_mode<synchronous>, transform_indices = @transform_10, window_bounds = array<i64: 8, 128>}]} {
    %c0_i32 = arith.constant 0 : i32
    %0 = arith.cmpi eq, %arg0, %c0_i32 : i32
    %1 = arith.extui %0 : i1 to i32
    %c0_i32_0 = arith.constant 0 : i32
    %2 = arith.cmpi ne, %1, %c0_i32_0 : i32
    scf.if %2 {
      %cst_92 = arith.constant 0.000000e+00 : f32
      %158 = vector.broadcast %cst_92 : f32 to vector<3x8x128xf32>
      %c0_93 = arith.constant 0 : index
      %c0_94 = arith.constant 0 : index
      %c0_95 = arith.constant 0 : index
      %159 = vector.load %arg12[%c0_93, %c0_94, %c0_95] : memref<3x8x128xf32, #tpu.memory_space<vmem>>, vector<3x8x128xf32>
      tpu.vector_store %arg12[%c0_93, %c0_94, %c0_95], %158 {strides = array<i32>} : memref<3x8x128xf32, #tpu.memory_space<vmem>>, vector<3x8x128xf32>,
      %cst_96 = arith.constant 0.000000e+00 : f32
      %160 = vector.broadcast %cst_96 : f32 to vector<3x8x128xf32>
      %c0_97 = arith.constant 0 : index
      %c0_98 = arith.constant 0 : index
      %c0_99 = arith.constant 0 : index
      %161 = vector.load %arg13[%c0_97, %c0_98, %c0_99] : memref<3x8x128xf32, #tpu.memory_space<vmem>>, vector<3x8x128xf32>
      tpu.vector_store %arg13[%c0_97, %c0_98, %c0_99], %160 {strides = array<i32>} : memref<3x8x128xf32, #tpu.memory_space<vmem>>, vector<3x8x128xf32>,
      %cst_100 = arith.constant 0.000000e+00 : f32
      %162 = vector.broadcast %cst_100 : f32 to vector<8x128xf32>
      %c0_101 = arith.constant 0 : index
      %c0_102 = arith.constant 0 : index
      %163 = vector.load %arg14[%c0_101, %c0_102] : memref<8x128xf32, #tpu.memory_space<vmem>>, vector<8x128xf32>
      tpu.vector_store %arg14[%c0_101, %c0_102], %162 {strides = array<i32>} : memref<8x128xf32, #tpu.memory_space<vmem>>, vector<8x128xf32>,
    } else {
    }
    %c0 = arith.constant 0 : index
    %c0_1 = arith.constant 0 : index
    %c0_2 = arith.constant 0 : index
    %3 = vector.load %arg1[%c0, %c0_1, %c0_2] : memref<1x8x768xf32, #tpu.memory_space<vmem>>, vector<1x8x768xf32>
    %4 = vector.shape_cast %3 : vector<1x8x768xf32> to vector<8x768xf32>
    %c0_3 = arith.constant 0 : index
    %c0_4 = arith.constant 0 : index
    %5 = vector.load %arg2[%c0_3, %c0_4] : memref<768x512xf32, #tpu.memory_space<vmem>>, vector<768x512xf32>
    %cst = arith.constant dense<0.000000e+00> : vector<8x512xf32>
    %6 = tpu.matmul %4, %5, %cst {dimension_numbers = #tpu.dot_dimension_numbers<[1], [0], [0], [1], [0, 0, 1, 1], [], []>} : vector<8x768xf32>, vector<768x512xf32>, vector<8x512xf32> -> vector<8x512xf32>
    %c0_5 = arith.constant 0 : index
    %c0_6 = arith.constant 0 : index
    %c0_7 = arith.constant 0 : index
    %7 = vector.load %arg12[%c0_5, %c0_6, %c0_7] : memref<3x8x128xf32, #tpu.memory_space<vmem>>, vector<1x8x128xf32>
    %8 = vector.shape_cast %7 : vector<1x8x128xf32> to vector<8x128xf32>
    %c0_8 = arith.constant 0 : index
    %c0_9 = arith.constant 0 : index
    %9 = vector.load %arg3[%c0_8, %c0_9] : memref<128x512xf32, #tpu.memory_space<vmem>>, vector<128x512xf32>
    %cst_10 = arith.constant dense<0.000000e+00> : vector<8x512xf32>
    %10 = tpu.matmul %8, %9, %cst_10 {dimension_numbers = #tpu.dot_dimension_numbers<[1], [0], [0], [1], [0, 0, 1, 1], [], []>} : vector<8x128xf32>, vector<128x512xf32>, vector<8x512xf32> -> vector<8x512xf32>
    %11 = arith.addf %6, %10 : vector<8x512xf32>
    %c0_11 = arith.constant 0 : index
    %c0_12 = arith.constant 0 : index
    %12 = vector.load %arg8[%c0_11, %c0_12] : memref<1x512xf32, #tpu.memory_space<vmem>>, vector<1x512xf32>
    %13 = vector.broadcast %12 : vector<1x512xf32> to vector<8x512xf32>
    %14 = arith.addf %11, %13 : vector<8x512xf32>
    %15 = vector.extract_strided_slice %14 {offsets = [0, 0], sizes = [8, 128], strides = [1, 1]} : vector<8x512xf32> to vector<8x128xf32>
    %cst_13 = arith.constant 0.000000e+00 : f32
    %16 = vector.broadcast %cst_13 : f32 to vector<8x128xf32>
    %17 = arith.subf %16, %15 : vector<8x128xf32>
    %18 = math.exp %17 : vector<8x128xf32>
    %cst_14 = arith.constant 1.000000e+00 : f32
    %19 = vector.broadcast %cst_14 : f32 to vector<8x128xf32>
    %20 = arith.addf %19, %18 : vector<8x128xf32>
    %cst_15 = arith.constant 1.000000e+00 : f32
    %21 = vector.broadcast %cst_15 : f32 to vector<8x128xf32>
    %22 = arith.divf %21, %20 : vector<8x128xf32>
    %23 = vector.extract_strided_slice %14 {offsets = [0, 128], sizes = [8, 128], strides = [1, 1]} : vector<8x512xf32> to vector<8x128xf32>
    %cst_16 = arith.constant 0.000000e+00 : f32
    %24 = vector.broadcast %cst_16 : f32 to vector<8x128xf32>
    %25 = arith.subf %24, %23 : vector<8x128xf32>
    %26 = math.exp %25 : vector<8x128xf32>
    %cst_17 = arith.constant 1.000000e+00 : f32
    %27 = vector.broadcast %cst_17 : f32 to vector<8x128xf32>
    %28 = arith.addf %27, %26 : vector<8x128xf32>
    %cst_18 = arith.constant 1.000000e+00 : f32
    %29 = vector.broadcast %cst_18 : f32 to vector<8x128xf32>
    %30 = arith.divf %29, %28 : vector<8x128xf32>
    %31 = vector.extract_strided_slice %14 {offsets = [0, 256], sizes = [8, 128], strides = [1, 1]} : vector<8x512xf32> to vector<8x128xf32>
    %32 = math.tanh %31 : vector<8x128xf32>
    %33 = vector.extract_strided_slice %14 {offsets = [0, 384], sizes = [8, 128], strides = [1, 1]} : vector<8x512xf32> to vector<8x128xf32>
    %cst_19 = arith.constant 0.000000e+00 : f32
    %34 = vector.broadcast %cst_19 : f32 to vector<8x128xf32>
    %35 = arith.subf %34, %33 : vector<8x128xf32>
    %36 = math.exp %35 : vector<8x128xf32>
    %cst_20 = arith.constant 1.000000e+00 : f32
    %37 = vector.broadcast %cst_20 : f32 to vector<8x128xf32>
    %38 = arith.addf %37, %36 : vector<8x128xf32>
    %cst_21 = arith.constant 1.000000e+00 : f32
    %39 = vector.broadcast %cst_21 : f32 to vector<8x128xf32>
    %40 = arith.divf %39, %38 : vector<8x128xf32>
    %c0_22 = arith.constant 0 : index
    %c0_23 = arith.constant 0 : index
    %c0_24 = arith.constant 0 : index
    %41 = vector.load %arg13[%c0_22, %c0_23, %c0_24] : memref<3x8x128xf32, #tpu.memory_space<vmem>>, vector<1x8x128xf32>
    %42 = vector.shape_cast %41 : vector<1x8x128xf32> to vector<8x128xf32>
    %43 = arith.mulf %30, %42 : vector<8x128xf32>
    %44 = arith.mulf %22, %32 : vector<8x128xf32>
    %45 = arith.addf %43, %44 : vector<8x128xf32>
    %46 = math.tanh %45 : vector<8x128xf32>
    %47 = arith.mulf %40, %46 : vector<8x128xf32>
    %c0_25 = arith.constant 0 : index
    %c0_26 = arith.constant 0 : index
    %c0_27 = arith.constant 0 : index
    %48 = vector.load %arg13[%c0_25, %c0_26, %c0_27] : memref<3x8x128xf32, #tpu.memory_space<vmem>>, vector<1x8x128xf32>
    %49 = vector.shape_cast %48 : vector<1x8x128xf32> to vector<8x128xf32>
    %50 = vector.shape_cast %45 : vector<8x128xf32> to vector<1x8x128xf32>
    tpu.vector_store %arg13[%c0_25, %c0_26, %c0_27], %50 {strides = array<i32>} : memref<3x8x128xf32, #tpu.memory_space<vmem>>, vector<1x8x128xf32>,
    %c0_28 = arith.constant 0 : index
    %c0_29 = arith.constant 0 : index
    %c0_30 = arith.constant 0 : index
    %51 = vector.load %arg12[%c0_28, %c0_29, %c0_30] : memref<3x8x128xf32, #tpu.memory_space<vmem>>, vector<1x8x128xf32>
    %52 = vector.shape_cast %51 : vector<1x8x128xf32> to vector<8x128xf32>
    %53 = vector.shape_cast %47 : vector<8x128xf32> to vector<1x8x128xf32>
    tpu.vector_store %arg12[%c0_28, %c0_29, %c0_30], %53 {strides = array<i32>} : memref<3x8x128xf32, #tpu.memory_space<vmem>>, vector<1x8x128xf32>,
    %c0_31 = arith.constant 0 : index
    %c0_32 = arith.constant 0 : index
    %54 = vector.load %arg4[%c0_31, %c0_32] : memref<128x512xf32, #tpu.memory_space<vmem>>, vector<128x512xf32>
    %cst_33 = arith.constant dense<0.000000e+00> : vector<8x512xf32>
    %55 = tpu.matmul %47, %54, %cst_33 {dimension_numbers = #tpu.dot_dimension_numbers<[1], [0], [0], [1], [0, 0, 1, 1], [], []>} : vector<8x128xf32>, vector<128x512xf32>, vector<8x512xf32> -> vector<8x512xf32>
    %c1 = arith.constant 1 : index
    %c0_34 = arith.constant 0 : index
    %c0_35 = arith.constant 0 : index
    %56 = vector.load %arg12[%c1, %c0_34, %c0_35] : memref<3x8x128xf32, #tpu.memory_space<vmem>>, vector<1x8x128xf32>
    %57 = vector.shape_cast %56 : vector<1x8x128xf32> to vector<8x128xf32>
    %c0_36 = arith.constant 0 : index
    %c0_37 = arith.constant 0 : index
    %58 = vector.load %arg5[%c0_36, %c0_37] : memref<128x512xf32, #tpu.memory_space<vmem>>, vector<128x512xf32>
    %cst_38 = arith.constant dense<0.000000e+00> : vector<8x512xf32>
    %59 = tpu.matmul %57, %58, %cst_38 {dimension_numbers = #tpu.dot_dimension_numbers<[1], [0], [0], [1], [0, 0, 1, 1], [], []>} : vector<8x128xf32>, vector<128x512xf32>, vector<8x512xf32> -> vector<8x512xf32>
    %60 = arith.addf %55, %59 : vector<8x512xf32>
    %c0_39 = arith.constant 0 : index
    %c0_40 = arith.constant 0 : index
    %61 = vector.load %arg9[%c0_39, %c0_40] : memref<1x512xf32, #tpu.memory_space<vmem>>, vector<1x512xf32>
    %62 = vector.broadcast %61 : vector<1x512xf32> to vector<8x512xf32>
    %63 = arith.addf %60, %62 : vector<8x512xf32>
    %64 = vector.extract_strided_slice %63 {offsets = [0, 0], sizes = [8, 128], strides = [1, 1]} : vector<8x512xf32> to vector<8x128xf32>
    %cst_41 = arith.constant 0.000000e+00 : f32
    %65 = vector.broadcast %cst_41 : f32 to vector<8x128xf32>
    %66 = arith.subf %65, %64 : vector<8x128xf32>
    %67 = math.exp %66 : vector<8x128xf32>
    %cst_42 = arith.constant 1.000000e+00 : f32
    %68 = vector.broadcast %cst_42 : f32 to vector<8x128xf32>
    %69 = arith.addf %68, %67 : vector<8x128xf32>
    %cst_43 = arith.constant 1.000000e+00 : f32
    %70 = vector.broadcast %cst_43 : f32 to vector<8x128xf32>
    %71 = arith.divf %70, %69 : vector<8x128xf32>
    %72 = vector.extract_strided_slice %63 {offsets = [0, 128], sizes = [8, 128], strides = [1, 1]} : vector<8x512xf32> to vector<8x128xf32>
    %cst_44 = arith.constant 0.000000e+00 : f32
    %73 = vector.broadcast %cst_44 : f32 to vector<8x128xf32>
    %74 = arith.subf %73, %72 : vector<8x128xf32>
    %75 = math.exp %74 : vector<8x128xf32>
    %cst_45 = arith.constant 1.000000e+00 : f32
    %76 = vector.broadcast %cst_45 : f32 to vector<8x128xf32>
    %77 = arith.addf %76, %75 : vector<8x128xf32>
    %cst_46 = arith.constant 1.000000e+00 : f32
    %78 = vector.broadcast %cst_46 : f32 to vector<8x128xf32>
    %79 = arith.divf %78, %77 : vector<8x128xf32>
    %80 = vector.extract_strided_slice %63 {offsets = [0, 256], sizes = [8, 128], strides = [1, 1]} : vector<8x512xf32> to vector<8x128xf32>
    %81 = math.tanh %80 : vector<8x128xf32>
    %82 = vector.extract_strided_slice %63 {offsets = [0, 384], sizes = [8, 128], strides = [1, 1]} : vector<8x512xf32> to vector<8x128xf32>
    %cst_47 = arith.constant 0.000000e+00 : f32
    %83 = vector.broadcast %cst_47 : f32 to vector<8x128xf32>
    %84 = arith.subf %83, %82 : vector<8x128xf32>
    %85 = math.exp %84 : vector<8x128xf32>
    %cst_48 = arith.constant 1.000000e+00 : f32
    %86 = vector.broadcast %cst_48 : f32 to vector<8x128xf32>
    %87 = arith.addf %86, %85 : vector<8x128xf32>
    %cst_49 = arith.constant 1.000000e+00 : f32
    %88 = vector.broadcast %cst_49 : f32 to vector<8x128xf32>
    %89 = arith.divf %88, %87 : vector<8x128xf32>
    %c1_50 = arith.constant 1 : index
    %c0_51 = arith.constant 0 : index
    %c0_52 = arith.constant 0 : index
    %90 = vector.load %arg13[%c1_50, %c0_51, %c0_52] : memref<3x8x128xf32, #tpu.memory_space<vmem>>, vector<1x8x128xf32>
    %91 = vector.shape_cast %90 : vector<1x8x128xf32> to vector<8x128xf32>
    %92 = arith.mulf %79, %91 : vector<8x128xf32>
    %93 = arith.mulf %71, %81 : vector<8x128xf32>
    %94 = arith.addf %92, %93 : vector<8x128xf32>
    %95 = math.tanh %94 : vector<8x128xf32>
    %96 = arith.mulf %89, %95 : vector<8x128xf32>
    %c1_53 = arith.constant 1 : index
    %c0_54 = arith.constant 0 : index
    %c0_55 = arith.constant 0 : index
    %97 = vector.load %arg13[%c1_53, %c0_54, %c0_55] : memref<3x8x128xf32, #tpu.memory_space<vmem>>, vector<1x8x128xf32>
    %98 = vector.shape_cast %97 : vector<1x8x128xf32> to vector<8x128xf32>
    %99 = vector.shape_cast %94 : vector<8x128xf32> to vector<1x8x128xf32>
    tpu.vector_store %arg13[%c1_53, %c0_54, %c0_55], %99 {strides = array<i32>} : memref<3x8x128xf32, #tpu.memory_space<vmem>>, vector<1x8x128xf32>,
    %c1_56 = arith.constant 1 : index
    %c0_57 = arith.constant 0 : index
    %c0_58 = arith.constant 0 : index
    %100 = vector.load %arg12[%c1_56, %c0_57, %c0_58] : memref<3x8x128xf32, #tpu.memory_space<vmem>>, vector<1x8x128xf32>
    %101 = vector.shape_cast %100 : vector<1x8x128xf32> to vector<8x128xf32>
    %102 = vector.shape_cast %96 : vector<8x128xf32> to vector<1x8x128xf32>
    tpu.vector_store %arg12[%c1_56, %c0_57, %c0_58], %102 {strides = array<i32>} : memref<3x8x128xf32, #tpu.memory_space<vmem>>, vector<1x8x128xf32>,
    %c0_59 = arith.constant 0 : index
    %c0_60 = arith.constant 0 : index
    %103 = vector.load %arg6[%c0_59, %c0_60] : memref<128x512xf32, #tpu.memory_space<vmem>>, vector<128x512xf32>
    %cst_61 = arith.constant dense<0.000000e+00> : vector<8x512xf32>
    %104 = tpu.matmul %96, %103, %cst_61 {dimension_numbers = #tpu.dot_dimension_numbers<[1], [0], [0], [1], [0, 0, 1, 1], [], []>} : vector<8x128xf32>, vector<128x512xf32>, vector<8x512xf32> -> vector<8x512xf32>
    %c2 = arith.constant 2 : index
    %c0_62 = arith.constant 0 : index
    %c0_63 = arith.constant 0 : index
    %105 = vector.load %arg12[%c2, %c0_62, %c0_63] : memref<3x8x128xf32, #tpu.memory_space<vmem>>, vector<1x8x128xf32>
    %106 = vector.shape_cast %105 : vector<1x8x128xf32> to vector<8x128xf32>
    %c0_64 = arith.constant 0 : index
    %c0_65 = arith.constant 0 : index
    %107 = vector.load %arg7[%c0_64, %c0_65] : memref<128x512xf32, #tpu.memory_space<vmem>>, vector<128x512xf32>
    %cst_66 = arith.constant dense<0.000000e+00> : vector<8x512xf32>
    %108 = tpu.matmul %106, %107, %cst_66 {dimension_numbers = #tpu.dot_dimension_numbers<[1], [0], [0], [1], [0, 0, 1, 1], [], []>} : vector<8x128xf32>, vector<128x512xf32>, vector<8x512xf32> -> vector<8x512xf32>
    %109 = arith.addf %104, %108 : vector<8x512xf32>
    %c0_67 = arith.constant 0 : index
    %c0_68 = arith.constant 0 : index
    %110 = vector.load %arg10[%c0_67, %c0_68] : memref<1x512xf32, #tpu.memory_space<vmem>>, vector<1x512xf32>
    %111 = vector.broadcast %110 : vector<1x512xf32> to vector<8x512xf32>
    %112 = arith.addf %109, %111 : vector<8x512xf32>
    %113 = vector.extract_strided_slice %112 {offsets = [0, 0], sizes = [8, 128], strides = [1, 1]} : vector<8x512xf32> to vector<8x128xf32>
    %cst_69 = arith.constant 0.000000e+00 : f32
    %114 = vector.broadcast %cst_69 : f32 to vector<8x128xf32>
    %115 = arith.subf %114, %113 : vector<8x128xf32>
    %116 = math.exp %115 : vector<8x128xf32>
    %cst_70 = arith.constant 1.000000e+00 : f32
    %117 = vector.broadcast %cst_70 : f32 to vector<8x128xf32>
    %118 = arith.addf %117, %116 : vector<8x128xf32>
    %cst_71 = arith.constant 1.000000e+00 : f32
    %119 = vector.broadcast %cst_71 : f32 to vector<8x128xf32>
    %120 = arith.divf %119, %118 : vector<8x128xf32>
    %121 = vector.extract_strided_slice %112 {offsets = [0, 128], sizes = [8, 128], strides = [1, 1]} : vector<8x512xf32> to vector<8x128xf32>
    %cst_72 = arith.constant 0.000000e+00 : f32
    %122 = vector.broadcast %cst_72 : f32 to vector<8x128xf32>
    %123 = arith.subf %122, %121 : vector<8x128xf32>
    %124 = math.exp %123 : vector<8x128xf32>
    %cst_73 = arith.constant 1.000000e+00 : f32
    %125 = vector.broadcast %cst_73 : f32 to vector<8x128xf32>
    %126 = arith.addf %125, %124 : vector<8x128xf32>
    %cst_74 = arith.constant 1.000000e+00 : f32
    %127 = vector.broadcast %cst_74 : f32 to vector<8x128xf32>
    %128 = arith.divf %127, %126 : vector<8x128xf32>
    %129 = vector.extract_strided_slice %112 {offsets = [0, 256], sizes = [8, 128], strides = [1, 1]} : vector<8x512xf32> to vector<8x128xf32>
    %130 = math.tanh %129 : vector<8x128xf32>
    %131 = vector.extract_strided_slice %112 {offsets = [0, 384], sizes = [8, 128], strides = [1, 1]} : vector<8x512xf32> to vector<8x128xf32>
    %cst_75 = arith.constant 0.000000e+00 : f32
    %132 = vector.broadcast %cst_75 : f32 to vector<8x128xf32>
    %133 = arith.subf %132, %131 : vector<8x128xf32>
    %134 = math.exp %133 : vector<8x128xf32>
    %cst_76 = arith.constant 1.000000e+00 : f32
    %135 = vector.broadcast %cst_76 : f32 to vector<8x128xf32>
    %136 = arith.addf %135, %134 : vector<8x128xf32>
    %cst_77 = arith.constant 1.000000e+00 : f32
    %137 = vector.broadcast %cst_77 : f32 to vector<8x128xf32>
    %138 = arith.divf %137, %136 : vector<8x128xf32>
    %c2_78 = arith.constant 2 : index
    %c0_79 = arith.constant 0 : index
    %c0_80 = arith.constant 0 : index
    %139 = vector.load %arg13[%c2_78, %c0_79, %c0_80] : memref<3x8x128xf32, #tpu.memory_space<vmem>>, vector<1x8x128xf32>
    %140 = vector.shape_cast %139 : vector<1x8x128xf32> to vector<8x128xf32>
    %141 = arith.mulf %128, %140 : vector<8x128xf32>
    %142 = arith.mulf %120, %130 : vector<8x128xf32>
    %143 = arith.addf %141, %142 : vector<8x128xf32>
    %144 = math.tanh %143 : vector<8x128xf32>
    %145 = arith.mulf %138, %144 : vector<8x128xf32>
    %c2_81 = arith.constant 2 : index
    %c0_82 = arith.constant 0 : index
    %c0_83 = arith.constant 0 : index
    %146 = vector.load %arg13[%c2_81, %c0_82, %c0_83] : memref<3x8x128xf32, #tpu.memory_space<vmem>>, vector<1x8x128xf32>
    %147 = vector.shape_cast %146 : vector<1x8x128xf32> to vector<8x128xf32>
    %148 = vector.shape_cast %143 : vector<8x128xf32> to vector<1x8x128xf32>
    tpu.vector_store %arg13[%c2_81, %c0_82, %c0_83], %148 {strides = array<i32>} : memref<3x8x128xf32, #tpu.memory_space<vmem>>, vector<1x8x128xf32>,
    %c2_84 = arith.constant 2 : index
    %c0_85 = arith.constant 0 : index
    %c0_86 = arith.constant 0 : index
    %149 = vector.load %arg12[%c2_84, %c0_85, %c0_86] : memref<3x8x128xf32, #tpu.memory_space<vmem>>, vector<1x8x128xf32>
    %150 = vector.shape_cast %149 : vector<1x8x128xf32> to vector<8x128xf32>
    %151 = vector.shape_cast %145 : vector<8x128xf32> to vector<1x8x128xf32>
    tpu.vector_store %arg12[%c2_84, %c0_85, %c0_86], %151 {strides = array<i32>} : memref<3x8x128xf32, #tpu.memory_space<vmem>>, vector<1x8x128xf32>,
    %c0_87 = arith.constant 0 : index
    %c0_88 = arith.constant 0 : index
    %152 = vector.load %arg14[%c0_87, %c0_88] : memref<8x128xf32, #tpu.memory_space<vmem>>, vector<8x128xf32>
    %153 = arith.addf %152, %145 : vector<8x128xf32>
    %c0_89 = arith.constant 0 : index
    %c0_90 = arith.constant 0 : index
    %154 = vector.load %arg14[%c0_89, %c0_90] : memref<8x128xf32, #tpu.memory_space<vmem>>, vector<8x128xf32>
    tpu.vector_store %arg14[%c0_89, %c0_90], %153 {strides = array<i32>} : memref<8x128xf32, #tpu.memory_space<vmem>>, vector<8x128xf32>,
    %c3_i32 = arith.constant 3 : i32
    %155 = arith.cmpi eq, %arg0, %c3_i32 : i32
    %156 = arith.extui %155 : i1 to i32
    %c0_i32_91 = arith.constant 0 : i32
    %157 = arith.cmpi ne, %156, %c0_i32_91 : i32
    scf.if %157 {
      %c0_92 = arith.constant 0 : index
      %c0_93 = arith.constant 0 : index
      %158 = vector.load %arg14[%c0_92, %c0_93] : memref<8x128xf32, #tpu.memory_space<vmem>>, vector<8x128xf32>
      %c0_94 = arith.constant 0 : index
      %c0_95 = arith.constant 0 : index
      %159 = vector.load %arg11[%c0_94, %c0_95] : memref<8x128xf32, #tpu.memory_space<vmem>>, vector<8x128xf32>
      tpu.vector_store %arg11[%c0_94, %c0_95], %158 {strides = array<i32>} : memref<8x128xf32, #tpu.memory_space<vmem>>, vector<8x128xf32>,
    } else {
    }
    return
  }
  func.func @transform_0(%arg0: i32) -> (i32, i32, i32) {
    %c0_i32 = arith.constant 0 : i32
    %c0_i32_0 = arith.constant 0 : i32
    %c0_i32_1 = arith.constant 0 : i32
    return %arg0, %c0_i32, %c0_i32_0 : i32, i32, i32
  }
  func.func @transform_1(%arg0: i32) -> (i32, i32) {
    %c0_i32 = arith.constant 0 : i32
    %c0_i32_0 = arith.constant 0 : i32
    %c0_i32_1 = arith.constant 0 : i32
    return %c0_i32, %c0_i32_0 : i32, i32
  }
  func.func @transform_2(%arg0: i32) -> (i32, i32) {
    %c0_i32 = arith.constant 0 : i32
    %c0_i32_0 = arith.constant 0 : i32
    %c0_i32_1 = arith.constant 0 : i32
    return %c0_i32, %c0_i32_0 : i32, i32
  }
  func.func @transform_3(%arg0: i32) -> (i32, i32) {
    %c0_i32 = arith.constant 0 : i32
    %c0_i32_0 = arith.constant 0 : i32
    %c0_i32_1 = arith.constant 0 : i32
    return %c0_i32, %c0_i32_0 : i32, i32
  }
  func.func @transform_4(%arg0: i32) -> (i32, i32) {
    %c0_i32 = arith.constant 0 : i32
    %c0_i32_0 = arith.constant 0 : i32
    %c0_i32_1 = arith.constant 0 : i32
    return %c0_i32, %c0_i32_0 : i32, i32
  }
  func.func @transform_5(%arg0: i32) -> (i32, i32) {
    %c0_i32 = arith.constant 0 : i32
    %c0_i32_0 = arith.constant 0 : i32
    %c0_i32_1 = arith.constant 0 : i32
    return %c0_i32, %c0_i32_0 : i32, i32
  }
  func.func @transform_6(%arg0: i32) -> (i32, i32) {
    %c0_i32 = arith.constant 0 : i32
    %c0_i32_0 = arith.constant 0 : i32
    %c0_i32_1 = arith.constant 0 : i32
    return %c0_i32, %c0_i32_0 : i32, i32
  }
  func.func @transform_7(%arg0: i32) -> (i32, i32) {
    %c0_i32 = arith.constant 0 : i32
    %c0_i32_0 = arith.constant 0 : i32
    %c0_i32_1 = arith.constant 0 : i32
    return %c0_i32, %c0_i32_0 : i32, i32
  }
  func.func @transform_8(%arg0: i32) -> (i32, i32) {
    %c0_i32 = arith.constant 0 : i32
    %c0_i32_0 = arith.constant 0 : i32
    %c0_i32_1 = arith.constant 0 : i32
    return %c0_i32, %c0_i32_0 : i32, i32
  }
  func.func @transform_9(%arg0: i32) -> (i32, i32) {
    %c0_i32 = arith.constant 0 : i32
    %c0_i32_0 = arith.constant 0 : i32
    %c0_i32_1 = arith.constant 0 : i32
    return %c0_i32, %c0_i32_0 : i32, i32
  }
  func.func @transform_10(%arg0: i32) -> (i32, i32) {
    %c0_i32 = arith.constant 0 : i32
    %c0_i32_0 = arith.constant 0 : i32
    %c0_i32_1 = arith.constant 0 : i32
    return %c0_i32, %c0_i32_0 : i32, i32
  }
}

</mosaic_0001>

<llo_original>
// kernel: snn_lstm_forward.5
$region0: #{snn_lstm_forward.5}
  #allocation0 [shape = 'u32[]', space=smem, size = 0x4, offset = 0x4, fixed_abs, tag = 'smem constant byte address 0x4 - core index']
  #allocation1 [shape = 'u32[144,128]{1,0:T(1,128)}', space=vmem, size = 0x12000, scoped, tag = 'internal scratch']
  %s0 = inlined_call_operand.vmem [shape: f32[128,256], index: 0, kind: input, shape index: {}]
  %s1 = inlined_call_operand.vmem [shape: f32[256,128], index: 1, kind: input, shape index: {}]
  %s2 = inlined_call_operand.hbm [shape: f32[8,256,256], index: 2, kind: input, shape index: {}]
  %s3 = inlined_call_operand.vmem [shape: f32[8,128,128], index: 3, kind: output, shape index: {}]
  %s4 = sld [smem:[#allocation0]]
  $region49: #{snn_lstm_forward.5} parent=0
    _
  %s6 = ssub.s32 1, %s4
  %s7 = scalar_select 0, %s6, %s4
  $region1: #{snn_lstm_forward.5} parent=0
    #allocation2 [shape = 'u8[524288]{0}', space=vmem, size = 0x80000, scoped, tag = 'input window, operand 2']
    #allocation3 [shape = 's32[2]{0}', space=sflag, size = 0x8, scoped, tag = 'scoped memory for snn_lstm_forward.5']
    %8 = vsyncpa [#allocation3], 0
    %s9 = scalar_lea.sflag [#allocation3], 1
    %10 = vsyncpa %s9, 0
    loop: start=0, step=1, limit=10
    $region2: #{snn_lstm_forward.5} parent=1 // loop_pre_header
      _
    $region3: #{snn_lstm_forward.5} parent=1 // loop_header
      %s12 = sphi 0, %s16
      %p13 = scmp.ge.s32.totalorder %s12, 10
      %s20 = sphi 0, %s20
      %s22 = sphi 0, %s20
      %s23 = sphi 0, %s22
      %s37 = sphi 0, %s23
      %s41 = sphi 0, %s41
      %s43 = sphi 0, %s41
      %s44 = sphi 0, %s43
      %s58 = sphi 0, %s44
      %s64 = sphi 0, %s66
      %s67 = sphi 0, %s64
      %s68 = sphi 0, %s67
      %s84 = sphi 0, %s68
      %s90 = sphi 0, %s92
      %s93 = sphi 0, %s90
      %s94 = sphi 0, %s93
      %s110 = sphi 0, %s94
    $region4: #{snn_lstm_forward.5} parent=1 // loop_header_branch
      %15 = sbr.rel (%p13) target = $region8
    $region5: #{snn_lstm_forward.5} parent=1 // loop_body
      %s17 = ssub.s32 %s12, 1
      %s18 = ssub.s32 %s12, 2
      %s19 = sadd.s32 %s12, 1
      %s21 = sadd.s32 %s20, 1
      %p24 = scmp.eq.s32.totalorder %s12, 7
      %p25 = scmp.ne.s32.totalorder %s20, %s22
      %p26 = scmp.eq.s32.totalorder %s12, 0
      %p27 = por %p25, %p26
      %p28 = scmp.ne.s32.totalorder %s20, %s22
      %p29 = scmp.eq.s32.totalorder %s17, 7
      %p30 = por %p28, %p29
      %p31 = scmp.ne.s32.totalorder %s22, %s23
      %p32 = scmp.eq.s32.totalorder %s17, 0
      %p33 = por %p31, %p32
      %p34 = scmp.ne.s32.totalorder %s22, %s23
      %p35 = scmp.eq.s32.totalorder %s18, 7
      %p36 = por %p34, %p35
      %p38 = scmp.ne.s32.totalorder %s23, %s37
      %p39 = scmp.eq.s32.totalorder %s18, 0
      %p40 = por %p38, %p39
      %s42 = sadd.s32 %s41, 1
      %p45 = scmp.eq.s32.totalorder %s12, 7
      %p46 = scmp.ne.s32.totalorder %s41, %s43
      %p47 = scmp.eq.s32.totalorder %s12, 0
      %p48 = por %p46, %p47
      %p49 = scmp.ne.s32.totalorder %s41, %s43
      %p50 = scmp.eq.s32.totalorder %s17, 7
      %p51 = por %p49, %p50
      %p52 = scmp.ne.s32.totalorder %s43, %s44
      %p53 = scmp.eq.s32.totalorder %s17, 0
      %p54 = por %p52, %p53
      %p55 = scmp.ne.s32.totalorder %s43, %s44
      %p56 = scmp.eq.s32.totalorder %s18, 7
      %p57 = por %p55, %p56
      %p59 = scmp.ne.s32.totalorder %s44, %s58
      %p60 = scmp.eq.s32.totalorder %s18, 0
      %p61 = por %p59, %p60
      %s62 = ssub.s32 %s12, %s19
      %p63 = scmp.eq.s32.totalorder %s62, 0
      %s65 = sadd.s32 %s64, 1
      %s66 = scalar_select %p63, %s64, %s65
      %p69 = pneg %p63
      %p70 = scmp.eq.s32.totalorder %s12, 7
      %p71 = por %p69, %p70
      %p72 = scmp.ne.s32.totalorder %s64, %s67
      %p73 = scmp.eq.s32.totalorder %s12, 0
      %p74 = por %p72, %p73
      %p75 = scmp.ne.s32.totalorder %s64, %s67
      %p76 = scmp.eq.s32.totalorder %s17, 7
      %p77 = por %p75, %p76
      %p78 = scmp.ne.s32.totalorder %s67, %s68
      %p79 = scmp.eq.s32.totalorder %s17, 0
      %p80 = por %p78, %p79
      %p81 = scmp.ne.s32.totalorder %s67, %s68
      %p82 = scmp.eq.s32.totalorder %s18, 7
      %p83 = por %p81, %p82
      %p85 = scmp.ne.s32.totalorder %s68, %s84
      %p86 = scmp.eq.s32.totalorder %s18, 0
      %p87 = por %p85, %p86
      %s88 = ssub.s32 %s12, %s19
      %p89 = scmp.eq.s32.totalorder %s88, 0
      %s91 = sadd.s32 %s90, 1
      %s92 = scalar_select %p89, %s90, %s91
      %p95 = pneg %p89
      %p96 = scmp.eq.s32.totalorder %s12, 7
      %p97 = por %p95, %p96
      %p98 = scmp.ne.s32.totalorder %s90, %s93
      %p99 = scmp.eq.s32.totalorder %s12, 0
      %p100 = por %p98, %p99
      %p101 = scmp.ne.s32.totalorder %s90, %s93
      %p102 = scmp.eq.s32.totalorder %s17, 7
      %p103 = por %p101, %p102
      %p104 = scmp.ne.s32.totalorder %s93, %s94
      %p105 = scmp.eq.s32.totalorder %s17, 0
      %p106 = por %p104, %p105
      %p107 = scmp.ne.s32.totalorder %s93, %s94
      %p108 = scmp.eq.s32.totalorder %s18, 7
      %p109 = por %p107, %p108
      %p111 = scmp.ne.s32.totalorder %s94, %s110
      %p112 = scmp.eq.s32.totalorder %s18, 0
      %p113 = por %p111, %p112
      %p114 = scmp.le.s32.totalorder 1, %s12
      %p115 = scmp.lt.s32.totalorder %s12, 9
      %p116 = pnand %p114, %p115
      %p117 = pneg %p116
      // Predicated region
      $region9: #{snn_lstm_forward.5} parent=5 // pred_check
        _
      $region10: #{snn_lstm_forward.5} parent=5 // pred_check_branch
        %119 = sbr.rel (%p116) target = $region12
      $region11: #{snn_lstm_forward.5} parent=5 // pred_region
        %s120 = ssub.s32 %s12, 1
        // Predicated region
        $region13: #{snn_lstm_forward.5} parent=11 // pred_check
          %p121 = pneg %p33
        $region14: #{snn_lstm_forward.5} parent=11 // pred_check_branch
          %123 = sbr.rel (%p121) target = $region16
        $region15: #{snn_lstm_forward.5} parent=11 // pred_region
          _
        $region16: #{snn_lstm_forward.5} parent=11 // pred_fallthru
          _
        // Predicated region
        $region17: #{snn_lstm_forward.5} parent=11 // pred_check
          %p124 = pneg %p54
        $region18: #{snn_lstm_forward.5} parent=11 // pred_check_branch
          %126 = sbr.rel (%p124) target = $region20
        $region19: #{snn_lstm_forward.5} parent=11 // pred_region
          _
        $region20: #{snn_lstm_forward.5} parent=11 // pred_fallthru
          _
      $region12: #{snn_lstm_forward.5} parent=5 // pred_fallthru
        _
      %p127 = scmp.lt.s32.totalorder %s12, 8
      // Predicated region
      $region21: #{snn_lstm_forward.5} parent=5 // pred_check
        %p128 = pneg %p127
      $region22: #{snn_lstm_forward.5} parent=5 // pred_check_branch
        %130 = sbr.rel (%p128) target = $region24
      $region23: #{snn_lstm_forward.5} parent=5 // pred_region
        // Predicated region
        $region25: #{snn_lstm_forward.5} parent=23 // pred_check
          %p131 = pneg %p74
        $region26: #{snn_lstm_forward.5} parent=23 // pred_check_branch
          %133 = sbr.rel (%p131) target = $region28
        $region27: #{snn_lstm_forward.5} parent=23 // pred_region
          %s134 = sand.u32 %s64, 1
          %s135 = scalar_lea.sflag [#allocation3], %s134
          %s136 = sand.u32 %s64, 1
          %s137 = smul.addr %s136, 512
          %s138 = scalar_lea.vmem [#allocation2], %s137
          %s140 = ssub.s32 8192, 8192
          %141 = vsyncadd %s135, %s140
          %s142 = smul.addr %s12, 64
          %s143 = smul.addr %s142, 128
          %s144 = scalar_lea.hbm %s2, %s143
          %s145 = sshll.u32 %s138, 4
          %s146 = int_to_ptr.vmem [resolvable:$true] %s145
          %151 = dma.hbm_to_vmem [thread:$0]  %s144, 8192, %s146, %s135, 256, 256, 16
        $region28: #{snn_lstm_forward.5} parent=23 // pred_fallthru
          _
      $region24: #{snn_lstm_forward.5} parent=5 // pred_fallthru
        _
      %p152 = scmp.le.s32.totalorder 1, %s12
      %p153 = scmp.lt.s32.totalorder %s12, 9
      %p154 = pnand %p152, %p153
      %p155 = pneg %p154
      // Predicated region
      $region29: #{snn_lstm_forward.5} parent=5 // pred_check
        _
      $region30: #{snn_lstm_forward.5} parent=5 // pred_check_branch
        %157 = sbr.rel (%p154) target = $region32
      $region31: #{snn_lstm_forward.5} parent=5 // pred_region
        %s158 = ssub.s32 %s12, 1
        %s159 = sand.u32 %s67, 1
        %s160 = scalar_lea.sflag [#allocation3], %s159
        %s161 = sand.u32 %s67, 1
        %s162 = smul.addr %s161, 512
        %s163 = scalar_lea.vmem [#allocation2], %s162
        // Predicated region
        $region33: #{snn_lstm_forward.5} parent=31 // pred_check
          %p164 = pneg %p80
        $region34: #{snn_lstm_forward.5} parent=31 // pred_check_branch
          %166 = sbr.rel (%p164) target = $region36
        $region35: #{snn_lstm_forward.5} parent=31 // pred_region
          %167 = dma.done %s160, 8192
        $region36: #{snn_lstm_forward.5} parent=31 // pred_fallthru
          _
        %p168 = pneg %p33
        %p169 = pneg %p30
        %p170 = pneg %p54
        %p171 = pneg %p51
        %s172 = sand.u32 %s67, 1
        %s173 = scalar_lea.sflag [#allocation3], %s172
        %s174 = sand.u32 %s67, 1
        %s175 = smul.addr %s174, 512
        %s176 = scalar_lea.vmem [#allocation2], %s175
        %p177 = pneg %p80
        %p178 = pneg %p77
        %p179 = pneg %p106
        %p180 = pneg %p103
        %p181 = scmp.lt.s32.totalorder %s17, 7
        %s182 = scalar_select %p181, %s17, 7
        %s183 = smul.addr %s182, 16
        %s184 = smul.addr %s183, 8
        %s185 = scalar_lea.vmem %s3, %s184
        %p186 = scmp.lt.s32.totalorder %s17, 7
        %s187 = scalar_select %p186, %s17, 7
        %s188 = smul.addr %s187, 16
        %s189 = smul.addr %s188, 8
        %s190 = scalar_lea.vmem %s3, %s189
        %v191 = vld [vmem:[%s0] sm:$0xff]
        %v192 = vld [vmem:[%s0 + $0x8] sm:$0xff]
        %v193 = vld [vmem:[%s0 + $0x10] sm:$0xff]
        %v194 = vld [vmem:[%s0 + $0x18] sm:$0xff]
        %v195 = vld [vmem:[%s0 + $0x20] sm:$0xff]
        %v196 = vld [vmem:[%s0 + $0x28] sm:$0xff]
        %v197 = vld [vmem:[%s0 + $0x30] sm:$0xff]
        %v198 = vld [vmem:[%s0 + $0x38] sm:$0xff]
        %v199 = vld [vmem:[%s0 + $0x40] sm:$0xff]
        %v200 = vld [vmem:[%s0 + $0x48] sm:$0xff]
        %v201 = vld [vmem:[%s0 + $0x50] sm:$0xff]
        %v202 = vld [vmem:[%s0 + $0x58] sm:$0xff]
        %v203 = vld [vmem:[%s0 + $0x60] sm:$0xff]
        %v204 = vld [vmem:[%s0 + $0x68] sm:$0xff]
        %v205 = vld [vmem:[%s0 + $0x70] sm:$0xff]
        %v206 = vld [vmem:[%s0 + $0x78] sm:$0xff]
        %v207 = vld [vmem:[%s0 + $0x80] sm:$0xff]
        %v208 = vld [vmem:[%s0 + $0x88] sm:$0xff]
        %v209 = vld [vmem:[%s0 + $0x90] sm:$0xff]
        %v210 = vld [vmem:[%s0 + $0x98] sm:$0xff]
        %v211 = vld [vmem:[%s0 + $0xa0] sm:$0xff]
        %v212 = vld [vmem:[%s0 + $0xa8] sm:$0xff]
        %v213 = vld [vmem:[%s0 + $0xb0] sm:$0xff]
        %v214 = vld [vmem:[%s0 + $0xb8] sm:$0xff]
        %v215 = vld [vmem:[%s0 + $0xc0] sm:$0xff]
        %v216 = vld [vmem:[%s0 + $0xc8] sm:$0xff]
        %v217 = vld [vmem:[%s0 + $0xd0] sm:$0xff]
        %v218 = vld [vmem:[%s0 + $0xd8] sm:$0xff]
        %v219 = vld [vmem:[%s0 + $0xe0] sm:$0xff]
        %v220 = vld [vmem:[%s0 + $0xe8] sm:$0xff]
        %v221 = vld [vmem:[%s0 + $0xf0] sm:$0xff]
        %v222 = vld [vmem:[%s0 + $0xf8] sm:$0xff]
        %v223 = vld [vmem:[%s163] sm:$0xff]
        %v224 = vld [vmem:[%s163 + $0x8] sm:$0xff]
        %v225 = vld [vmem:[%s163 + $0x10] sm:$0xff]
        %v226 = vld [vmem:[%s163 + $0x18] sm:$0xff]
        %v227 = vld [vmem:[%s163 + $0x20] sm:$0xff]
        %v228 = vld [vmem:[%s163 + $0x28] sm:$0xff]
        %v229 = vld [vmem:[%s163 + $0x30] sm:$0xff]
        %v230 = vld [vmem:[%s163 + $0x38] sm:$0xff]
        %v231 = vld [vmem:[%s163 + $0x40] sm:$0xff]
        %v232 = vld [vmem:[%s163 + $0x48] sm:$0xff]
        %v233 = vld [vmem:[%s163 + $0x50] sm:$0xff]
        %v234 = vld [vmem:[%s163 + $0x58] sm:$0xff]
        %v235 = vld [vmem:[%s163 + $0x60] sm:$0xff]
        %v236 = vld [vmem:[%s163 + $0x68] sm:$0xff]
        %v237 = vld [vmem:[%s163 + $0x70] sm:$0xff]
        %v238 = vld [vmem:[%s163 + $0x78] sm:$0xff]
        %v239 = vld [vmem:[%s163 + $0x80] sm:$0xff]
        %v240 = vld [vmem:[%s163 + $0x88] sm:$0xff]
        %v241 = vld [vmem:[%s163 + $0x90] sm:$0xff]
        %v242 = vld [vmem:[%s163 + $0x98] sm:$0xff]
        %v243 = vld [vmem:[%s163 + $0xa0] sm:$0xff]
        %v244 = vld [vmem:[%s163 + $0xa8] sm:$0xff]
        %v245 = vld [vmem:[%s163 + $0xb0] sm:$0xff]
        %v246 = vld [vmem:[%s163 + $0xb8] sm:$0xff]
        %v247 = vld [vmem:[%s163 + $0xc0] sm:$0xff]
        %v248 = vld [vmem:[%s163 + $0xc8] sm:$0xff]
        %v249 = vld [vmem:[%s163 + $0xd0] sm:$0xff]
        %v250 = vld [vmem:[%s163 + $0xd8] sm:$0xff]
        %v251 = vld [vmem:[%s163 + $0xe0] sm:$0xff]
        %v252 = vld [vmem:[%s163 + $0xe8] sm:$0xff]
        %v253 = vld [vmem:[%s163 + $0xf0] sm:$0xff]
        %v254 = vld [vmem:[%s163 + $0xf8] sm:$0xff]
        %v255 = vld [vmem:[%s163 + $0x100] sm:$0xff]
        %v256 = vld [vmem:[%s163 + $0x108] sm:$0xff]
        %v257 = vld [vmem:[%s163 + $0x110] sm:$0xff]
        %v258 = vld [vmem:[%s163 + $0x118] sm:$0xff]
        %v259 = vld [vmem:[%s163 + $0x120] sm:$0xff]
        %v260 = vld [vmem:[%s163 + $0x128] sm:$0xff]
        %v261 = vld [vmem:[%s163 + $0x130] sm:$0xff]
        %v262 = vld [vmem:[%s163 + $0x138] sm:$0xff]
        %v263 = vld [vmem:[%s163 + $0x140] sm:$0xff]
        %v264 = vld [vmem:[%s163 + $0x148] sm:$0xff]
        %v265 = vld [vmem:[%s163 + $0x150] sm:$0xff]
        %v266 = vld [vmem:[%s163 + $0x158] sm:$0xff]
        %v267 = vld [vmem:[%s163 + $0x160] sm:$0xff]
        %v268 = vld [vmem:[%s163 + $0x168] sm:$0xff]
        %v269 = vld [vmem:[%s163 + $0x170] sm:$0xff]
        %v270 = vld [vmem:[%s163 + $0x178] sm:$0xff]
        %v271 = vld [vmem:[%s163 + $0x180] sm:$0xff]
        %v272 = vld [vmem:[%s163 + $0x188] sm:$0xff]
        %v273 = vld [vmem:[%s163 + $0x190] sm:$0xff]
        %v274 = vld [vmem:[%s163 + $0x198] sm:$0xff]
        %v275 = vld [vmem:[%s163 + $0x1a0] sm:$0xff]
        %v276 = vld [vmem:[%s163 + $0x1a8] sm:$0xff]
        %v277 = vld [vmem:[%s163 + $0x1b0] sm:$0xff]
        %v278 = vld [vmem:[%s163 + $0x1b8] sm:$0xff]
        %v279 = vld [vmem:[%s163 + $0x1c0] sm:$0xff]
        %v280 = vld [vmem:[%s163 + $0x1c8] sm:$0xff]
        %v281 = vld [vmem:[%s163 + $0x1d0] sm:$0xff]
        %v282 = vld [vmem:[%s163 + $0x1d8] sm:$0xff]
        %v283 = vld [vmem:[%s163 + $0x1e0] sm:$0xff]
        %v284 = vld [vmem:[%s163 + $0x1e8] sm:$0xff]
        %v285 = vld [vmem:[%s163 + $0x1f0] sm:$0xff]
        %v286 = vld [vmem:[%s163 + $0x1f8] sm:$0xff]
        %287 = vmatprep.subr.mxu0 %v224
        %288 = vmatpush1.msra.mxu0 %v223
        %289 = vmatprep.subr.mxu0 %v226
        %290 = vmatpush1.msra.mxu0 %v225
        %291 = vmatprep.subr.mxu0 %v228
        %292 = vmatpush1.msra.mxu0 %v227
        %293 = vmatprep.subr.mxu0 %v230
        %294 = vmatpush1.msra.mxu0 %v229
        %295 = vmatprep.subr.mxu0 %v232
        %296 = vmatpush1.msra.mxu0 %v231
        %297 = vmatprep.subr.mxu0 %v234
        %298 = vmatpush1.msra.mxu0 %v233
        %299 = vmatprep.subr.mxu0 %v236
        %300 = vmatpush1.msra.mxu0 %v235
        %301 = vmatprep.subr.mxu0 %v238
        %302 = vmatpush1.msra.mxu0 %v237
        %303 = vmatprep.subr.mxu0 %v240
        %304 = vmatpush1.msra.mxu0 %v239
        %305 = vmatprep.subr.mxu0 %v242
        %306 = vmatpush1.msra.mxu0 %v241
        %307 = vmatprep.subr.mxu0 %v244
        %308 = vmatpush1.msra.mxu0 %v243
        %309 = vmatprep.subr.mxu0 %v246
        %310 = vmatpush1.msra.mxu0 %v245
        %311 = vmatprep.subr.mxu0 %v248
        %312 = vmatpush1.msra.mxu0 %v247
        %313 = vmatprep.subr.mxu0 %v250
        %314 = vmatpush1.msra.mxu0 %v249
        %315 = vmatprep.subr.mxu0 %v252
        %316 = vmatpush1.msra.mxu0 %v251
        %317 = vmatprep.subr.mxu0 %v254
        %318 = vmatpush1.msra.mxu0 %v253
        %319 = vmatprep.subr.mxu0 %v256
        %320 = vmatpush1.msra.mxu0 %v255
        %321 = vmatprep.subr.mxu0 %v258
        %322 = vmatpush1.msra.mxu0 %v257
        %323 = vmatprep.subr.mxu0 %v260
        %324 = vmatpush1.msra.mxu0 %v259
        %325 = vmatprep.subr.mxu0 %v262
        %326 = vmatpush1.msra.mxu0 %v261
        %327 = vmatprep.subr.mxu0 %v264
        %328 = vmatpush1.msra.mxu0 %v263
        %329 = vmatprep.subr.mxu0 %v266
        %330 = vmatpush1.msra.mxu0 %v265
        %331 = vmatprep.subr.mxu0 %v268
        %332 = vmatpush1.msra.mxu0 %v267
        %333 = vmatprep.subr.mxu0 %v270
        %334 = vmatpush1.msra.mxu0 %v269
        %335 = vmatprep.subr.mxu0 %v272
        %336 = vmatpush1.msra.mxu0 %v271
        %337 = vmatprep.subr.mxu0 %v274
        %338 = vmatpush1.msra.mxu0 %v273
        %339 = vmatprep.subr.mxu0 %v276
        %340 = vmatpush1.msra.mxu0 %v275
        %341 = vmatprep.subr.mxu0 %v278
        %342 = vmatpush1.msra.mxu0 %v277
        %343 = vmatprep.subr.mxu0 %v280
        %344 = vmatpush1.msra.mxu0 %v279
        %345 = vmatprep.subr.mxu0 %v282
        %346 = vmatpush1.msra.mxu0 %v281
        %347 = vmatprep.subr.mxu0 %v284
        %348 = vmatpush1.msra.mxu0 %v283
        %349 = vmatprep.subr.mxu0 %v286
        %350 = vmatpush1.msra.mxu0 %v285
        %351 = vmatprep.mubr.f32.mxu0 %v192
        %352 = vmatmul.mubr.f32.gmra.mrb[0].mxu0 %v191
        %v353 = vpop.f32.mrb[0].mxu0
        %v354 = vadd.f32 0.0, %v353
        %v355 = vpop.f32.mrb[0].mxu0
        %v356 = vadd.f32 0.0, %v355
        %357 = vmatprep.mubr.f32.mxu0 %v194
        %358 = vmatmul.mubr.f32.gmra.mrb[0].mxu0 %v193
        %v359 = vpop.f32.mrb[0].mxu0
        %v360 = vadd.f32 0.0, %v359
        %v361 = vpop.f32.mrb[0].mxu0
        %v362 = vadd.f32 0.0, %v361
        %363 = vmatprep.mubr.f32.mxu0 %v196
        %364 = vmatmul.mubr.f32.gmra.mrb[0].mxu0 %v195
        %v365 = vpop.f32.mrb[0].mxu0
        %v366 = vadd.f32 0.0, %v365
        %v367 = vpop.f32.mrb[0].mxu0
        %v368 = vadd.f32 0.0, %v367
        %369 = vmatprep.mubr.f32.mxu0 %v198
        %370 = vmatmul.mubr.f32.gmra.mrb[0].mxu0 %v197
        %v371 = vpop.f32.mrb[0].mxu0
        %v372 = vadd.f32 0.0, %v371
        %v373 = vpop.f32.mrb[0].mxu0
        %v374 = vadd.f32 0.0, %v373
        %375 = vmatprep.mubr.f32.mxu0 %v200
        %376 = vmatmul.mubr.f32.gmra.mrb[0].mxu0 %v199
        %v377 = vpop.f32.mrb[0].mxu0
        %v378 = vadd.f32 0.0, %v377
        %v379 = vpop.f32.mrb[0].mxu0
        %v380 = vadd.f32 0.0, %v379
        %381 = vmatprep.mubr.f32.mxu0 %v202
        %382 = vmatmul.mubr.f32.gmra.mrb[0].mxu0 %v201
        %v383 = vpop.f32.mrb[0].mxu0
        %v384 = vadd.f32 0.0, %v383
        %v385 = vpop.f32.mrb[0].mxu0
        %v386 = vadd.f32 0.0, %v385
        %387 = vmatprep.mubr.f32.mxu0 %v204
        %388 = vmatmul.mubr.f32.gmra.mrb[0].mxu0 %v203
        %v389 = vpop.f32.mrb[0].mxu0
        %v390 = vadd.f32 0.0, %v389
        %v391 = vpop.f32.mrb[0].mxu0
        %v392 = vadd.f32 0.0, %v391
        %393 = vmatprep.mubr.f32.mxu0 %v206
        %394 = vmatmul.mubr.f32.gmra.mrb[0].mxu0 %v205
        %v395 = vpop.f32.mrb[0].mxu0
        %v396 = vadd.f32 0.0, %v395
        %v397 = vpop.f32.mrb[0].mxu0
        %v398 = vadd.f32 0.0, %v397
        %399 = vmatprep.mubr.f32.mxu0 %v208
        %400 = vmatmul.mubr.f32.gmra.mrb[0].mxu0 %v207
        %v401 = vpop.f32.mrb[0].mxu0
        %v402 = vadd.f32 0.0, %v401
        %v403 = vpop.f32.mrb[0].mxu0
        %v404 = vadd.f32 0.0, %v403
        %405 = vmatprep.mubr.f32.mxu0 %v210
        %406 = vmatmul.mubr.f32.gmra.mrb[0].mxu0 %v209
        %v407 = vpop.f32.mrb[0].mxu0
        %v408 = vadd.f32 0.0, %v407
        %v409 = vpop.f32.mrb[0].mxu0
        %v410 = vadd.f32 0.0, %v409
        %411 = vmatprep.mubr.f32.mxu0 %v212
        %412 = vmatmul.mubr.f32.gmra.mrb[0].mxu0 %v211
        %v413 = vpop.f32.mrb[0].mxu0
        %v414 = vadd.f32 0.0, %v413
        %v415 = vpop.f32.mrb[0].mxu0
        %v416 = vadd.f32 0.0, %v415
        %417 = vmatprep.mubr.f32.mxu0 %v214
        %418 = vmatmul.mubr.f32.gmra.mrb[0].mxu0 %v213
        %v419 = vpop.f32.mrb[0].mxu0
        %v420 = vadd.f32 0.0, %v419
        %v421 = vpop.f32.mrb[0].mxu0
        %v422 = vadd.f32 0.0, %v421
        %423 = vmatprep.mubr.f32.mxu0 %v216
        %424 = vmatmul.mubr.f32.gmra.mrb[0].mxu0 %v215
        %v425 = vpop.f32.mrb[0].mxu0
        %v426 = vadd.f32 0.0, %v425
        %v427 = vpop.f32.mrb[0].mxu0
        %v428 = vadd.f32 0.0, %v427
        %429 = vmatprep.mubr.f32.mxu0 %v218
        %430 = vmatmul.mubr.f32.gmra.mrb[0].mxu0 %v217
        %v431 = vpop.f32.mrb[0].mxu0
        %v432 = vadd.f32 0.0, %v431
        %v433 = vpop.f32.mrb[0].mxu0
        %v434 = vadd.f32 0.0, %v433
        %435 = vmatprep.mubr.f32.mxu0 %v220
        %436 = vmatmul.mubr.f32.gmra.mrb[0].mxu0 %v219
        %v437 = vpop.f32.mrb[0].mxu0
        %v438 = vadd.f32 0.0, %v437
        %v439 = vpop.f32.mrb[0].mxu0
        %v440 = vadd.f32 0.0, %v439
        %441 = vmatprep.mubr.f32.mxu0 %v222
        %442 = vmatmul.mubr.f32.gmra.mrb[0].mxu0 %v221
        %v443 = vpop.f32.mrb[0].mxu0
        %v444 = vadd.f32 0.0, %v443
        %v445 = vpop.f32.mrb[0].mxu0
        %v446 = vadd.f32 0.0, %v445
        %447 = vdwg.mxu0
        %v448 = vld [vmem:[%s1] sm:$0xff]
        %v449 = vld [vmem:[%s1 + $0x8] sm:$0xff]
        %v450 = vld [vmem:[%s1 + $0x10] sm:$0xff]
        %v451 = vld [vmem:[%s1 + $0x18] sm:$0xff]
        %v452 = vld [vmem:[%s1 + $0x20] sm:$0xff]
        %v453 = vld [vmem:[%s1 + $0x28] sm:$0xff]
        %v454 = vld [vmem:[%s1 + $0x30] sm:$0xff]
        %v455 = vld [vmem:[%s1 + $0x38] sm:$0xff]
        %v456 = vld [vmem:[%s1 + $0x40] sm:$0xff]
        %v457 = vld [vmem:[%s1 + $0x48] sm:$0xff]
        %v458 = vld [vmem:[%s1 + $0x50] sm:$0xff]
        %v459 = vld [vmem:[%s1 + $0x58] sm:$0xff]
        %v460 = vld [vmem:[%s1 + $0x60] sm:$0xff]
        %v461 = vld [vmem:[%s1 + $0x68] sm:$0xff]
        %v462 = vld [vmem:[%s1 + $0x70] sm:$0xff]
        %v463 = vld [vmem:[%s1 + $0x78] sm:$0xff]
        %v464 = vld [vmem:[%s1 + $0x80] sm:$0xff]
        %v465 = vld [vmem:[%s1 + $0x88] sm:$0xff]
        %v466 = vld [vmem:[%s1 + $0x90] sm:$0xff]
        %v467 = vld [vmem:[%s1 + $0x98] sm:$0xff]
        %v468 = vld [vmem:[%s1 + $0xa0] sm:$0xff]
        %v469 = vld [vmem:[%s1 + $0xa8] sm:$0xff]
        %v470 = vld [vmem:[%s1 + $0xb0] sm:$0xff]
        %v471 = vld [vmem:[%s1 + $0xb8] sm:$0xff]
        %v472 = vld [vmem:[%s1 + $0xc0] sm:$0xff]
        %v473 = vld [vmem:[%s1 + $0xc8] sm:$0xff]
        %v474 = vld [vmem:[%s1 + $0xd0] sm:$0xff]
        %v475 = vld [vmem:[%s1 + $0xd8] sm:$0xff]
        %v476 = vld [vmem:[%s1 + $0xe0] sm:$0xff]
        %v477 = vld [vmem:[%s1 + $0xe8] sm:$0xff]
        %v478 = vld [vmem:[%s1 + $0xf0] sm:$0xff]
        %v479 = vld [vmem:[%s1 + $0xf8] sm:$0xff]
        %480 = vmatprep.subr.mxu0 0.0
        %481 = vmatpush1.msra.mxu0 %v448
        %482 = vmatprep.subr.mxu0 0.0
        %483 = vmatpush1.msra.mxu0 %v449
        %484 = vmatprep.subr.mxu0 0.0
        %485 = vmatpush1.msra.mxu0 %v450
        %486 = vmatprep.subr.mxu0 0.0
        %487 = vmatpush1.msra.mxu0 %v451
        %488 = vmatprep.subr.mxu0 0.0
        %489 = vmatpush1.msra.mxu0 %v452
        %490 = vmatprep.subr.mxu0 0.0
        %491 = vmatpush1.msra.mxu0 %v453
        %492 = vmatprep.subr.mxu0 0.0
        %493 = vmatpush1.msra.mxu0 %v454
        %494 = vmatprep.subr.mxu0 0.0
        %495 = vmatpush1.msra.mxu0 %v455
        %496 = vmatprep.subr.mxu0 0.0
        %497 = vmatpush1.msra.mxu0 %v456
        %498 = vmatprep.subr.mxu0 0.0
        %499 = vmatpush1.msra.mxu0 %v457
        %500 = vmatprep.subr.mxu0 0.0
        %501 = vmatpush1.msra.mxu0 %v458
        %502 = vmatprep.subr.mxu0 0.0
        %503 = vmatpush1.msra.mxu0 %v459
        %504 = vmatprep.subr.mxu0 0.0
        %505 = vmatpush1.msra.mxu0 %v460
        %506 = vmatprep.subr.mxu0 0.0
        %507 = vmatpush1.msra.mxu0 %v461
        %508 = vmatprep.subr.mxu0 0.0
        %509 = vmatpush1.msra.mxu0 %v462
        %510 = vmatprep.subr.mxu0 0.0
        %511 = vmatpush1.msra.mxu0 %v463
        %512 = vmatprep.subr.mxu0 0.0
        %513 = vmatpush1.msra.mxu0 %v464
        %514 = vmatprep.subr.mxu0 0.0
        %515 = vmatpush1.msra.mxu0 %v465
        %516 = vmatprep.subr.mxu0 0.0
        %517 = vmatpush1.msra.mxu0 %v466
        %518 = vmatprep.subr.mxu0 0.0
        %519 = vmatpush1.msra.mxu0 %v467
        %520 = vmatprep.subr.mxu0 0.0
        %521 = vmatpush1.msra.mxu0 %v468
        %522 = vmatprep.subr.mxu0 0.0
        %523 = vmatpush1.msra.mxu0 %v469
        %524 = vmatprep.subr.mxu0 0.0
        %525 = vmatpush1.msra.mxu0 %v470
        %526 = vmatprep.subr.mxu0 0.0
        %527 = vmatpush1.msra.mxu0 %v471
        %528 = vmatprep.subr.mxu0 0.0
        %529 = vmatpush1.msra.mxu0 %v472
        %530 = vmatprep.subr.mxu0 0.0
        %531 = vmatpush1.msra.mxu0 %v473
        %532 = vmatprep.subr.mxu0 0.0
        %533 = vmatpush1.msra.mxu0 %v474
        %534 = vmatprep.subr.mxu0 0.0
        %535 = vmatpush1.msra.mxu0 %v475
        %536 = vmatprep.subr.mxu0 0.0
        %537 = vmatpush1.msra.mxu0 %v476
        %538 = vmatprep.subr.mxu0 0.0
        %539 = vmatpush1.msra.mxu0 %v477
        %540 = vmatprep.subr.mxu0 0.0
        %541 = vmatpush1.msra.mxu0 %v478
        %542 = vmatprep.subr.mxu0 0.0
        %543 = vmatpush1.msra.mxu0 %v479
        %544 = vmatprep.mubr.f32.mxu0 %v356
        %545 = vmatmul.mubr.f32.gmra.mrb[0].mxu0 %v354
        %v546 = vpop.f32.mrb[0].mxu0
        %v547 = vadd.f32 0.0, %v546
        %v548 = vpop.f32.mrb[0].mxu0
        %549 = vmatprep.mubr.f32.mxu0 %v362
        %550 = vmatmul.mubr.f32.gmra.mrb[0].mxu0 %v360
        %v551 = vpop.f32.mrb[0].mxu0
        %v552 = vadd.f32 0.0, %v551
        %v553 = vpop.f32.mrb[0].mxu0
        %554 = vmatprep.mubr.f32.mxu0 %v368
        %555 = vmatmul.mubr.f32.gmra.mrb[0].mxu0 %v366
        %v556 = vpop.f32.mrb[0].mxu0
        %v557 = vadd.f32 0.0, %v556
        %v558 = vpop.f32.mrb[0].mxu0
        %559 = vmatprep.mubr.f32.mxu0 %v374
        %560 = vmatmul.mubr.f32.gmra.mrb[0].mxu0 %v372
        %v561 = vpop.f32.mrb[0].mxu0
        %v562 = vadd.f32 0.0, %v561
        %v563 = vpop.f32.mrb[0].mxu0
        %564 = vmatprep.mubr.f32.mxu0 %v380
        %565 = vmatmul.mubr.f32.gmra.mrb[0].mxu0 %v378
        %v566 = vpop.f32.mrb[0].mxu0
        %v567 = vadd.f32 0.0, %v566
        %v568 = vpop.f32.mrb[0].mxu0
        %569 = vmatprep.mubr.f32.mxu0 %v386
        %570 = vmatmul.mubr.f32.gmra.mrb[0].mxu0 %v384
        %v571 = vpop.f32.mrb[0].mxu0
        %v572 = vadd.f32 0.0, %v571
        %v573 = vpop.f32.mrb[0].mxu0
        %574 = vmatprep.mubr.f32.mxu0 %v392
        %575 = vmatmul.mubr.f32.gmra.mrb[0].mxu0 %v390
        %v576 = vpop.f32.mrb[0].mxu0
        %v577 = vadd.f32 0.0, %v576
        %v578 = vpop.f32.mrb[0].mxu0
        %579 = vmatprep.mubr.f32.mxu0 %v398
        %580 = vmatmul.mubr.f32.gmra.mrb[0].mxu0 %v396
        %v581 = vpop.f32.mrb[0].mxu0
        %v582 = vadd.f32 0.0, %v581
        %v583 = vpop.f32.mrb[0].mxu0
        %584 = vmatprep.mubr.f32.mxu0 %v404
        %585 = vmatmul.mubr.f32.gmra.mrb[0].mxu0 %v402
        %v586 = vpop.f32.mrb[0].mxu0
        %v587 = vadd.f32 0.0, %v586
        %v588 = vpop.f32.mrb[0].mxu0
        %589 = vmatprep.mubr.f32.mxu0 %v410
        %590 = vmatmul.mubr.f32.gmra.mrb[0].mxu0 %v408
        %v591 = vpop.f32.mrb[0].mxu0
        %v592 = vadd.f32 0.0, %v591
        %v593 = vpop.f32.mrb[0].mxu0
        %594 = vmatprep.mubr.f32.mxu0 %v416
        %595 = vmatmul.mubr.f32.gmra.mrb[0].mxu0 %v414
        %v596 = vpop.f32.mrb[0].mxu0
        %v597 = vadd.f32 0.0, %v596
        %v598 = vpop.f32.mrb[0].mxu0
        %599 = vmatprep.mubr.f32.mxu0 %v422
        %600 = vmatmul.mubr.f32.gmra.mrb[0].mxu0 %v420
        %v601 = vpop.f32.mrb[0].mxu0
        %v602 = vadd.f32 0.0, %v601
        %v603 = vpop.f32.mrb[0].mxu0
        %604 = vmatprep.mubr.f32.mxu0 %v428
        %605 = vmatmul.mubr.f32.gmra.mrb[0].mxu0 %v426
        %v606 = vpop.f32.mrb[0].mxu0
        %v607 = vadd.f32 0.0, %v606
        %v608 = vpop.f32.mrb[0].mxu0
        %609 = vmatprep.mubr.f32.mxu0 %v434
        %610 = vmatmul.mubr.f32.gmra.mrb[0].mxu0 %v432
        %v611 = vpop.f32.mrb[0].mxu0
        %v612 = vadd.f32 0.0, %v611
        %v613 = vpop.f32.mrb[0].mxu0
        %614 = vmatprep.mubr.f32.mxu0 %v440
        %615 = vmatmul.mubr.f32.gmra.mrb[0].mxu0 %v438
        %v616 = vpop.f32.mrb[0].mxu0
        %v617 = vadd.f32 0.0, %v616
        %v618 = vpop.f32.mrb[0].mxu0
        %619 = vmatprep.mubr.f32.mxu0 %v446
        %620 = vmatmul.mubr.f32.gmra.mrb[0].mxu0 %v444
        %v621 = vpop.f32.mrb[0].mxu0
        %v622 = vadd.f32 0.0, %v621
        %v623 = vpop.f32.mrb[0].mxu0
        %624 = vdwg.mxu0
        %625 = vst [vmem:[%s190] sm:$0xff] %v547
        %626 = vst [vmem:[%s190 + $0x8] sm:$0xff] %v552
        %627 = vst [vmem:[%s190 + $0x10] sm:$0xff] %v557
        %628 = vst [vmem:[%s190 + $0x18] sm:$0xff] %v562
        %629 = vst [vmem:[%s190 + $0x20] sm:$0xff] %v567
        %630 = vst [vmem:[%s190 + $0x28] sm:$0xff] %v572
        %631 = vst [vmem:[%s190 + $0x30] sm:$0xff] %v577
        %632 = vst [vmem:[%s190 + $0x38] sm:$0xff] %v582
        %633 = vst [vmem:[%s190 + $0x40] sm:$0xff] %v587
        %634 = vst [vmem:[%s190 + $0x48] sm:$0xff] %v592
        %635 = vst [vmem:[%s190 + $0x50] sm:$0xff] %v597
        %636 = vst [vmem:[%s190 + $0x58] sm:$0xff] %v602
        %637 = vst [vmem:[%s190 + $0x60] sm:$0xff] %v607
        %638 = vst [vmem:[%s190 + $0x68] sm:$0xff] %v612
        %639 = vst [vmem:[%s190 + $0x70] sm:$0xff] %v617
        %640 = vst [vmem:[%s190 + $0x78] sm:$0xff] %v622
        %p641 = scmp.lt.s32.totalorder %s17, 7
        %s642 = scalar_select %p641, %s17, 7
        %s643 = smul.addr %s642, 16
        %s644 = smul.addr %s643, 8
        %s645 = scalar_lea.vmem %s3, %s644
        // Predicated region
        $region37: #{snn_lstm_forward.5} parent=31 // pred_check
          %p646 = pneg %p103
        $region38: #{snn_lstm_forward.5} parent=31 // pred_check_branch
          %648 = sbr.rel (%p646) target = $region40
        $region39: #{snn_lstm_forward.5} parent=31 // pred_region
          _
        $region40: #{snn_lstm_forward.5} parent=31 // pred_fallthru
          _
      $region32: #{snn_lstm_forward.5} parent=5 // pred_fallthru
        _
      %p649 = scmp.le.s32.totalorder 2, %s12
      // Predicated region
      $region41: #{snn_lstm_forward.5} parent=5 // pred_check
        %p650 = pneg %p649
      $region42: #{snn_lstm_forward.5} parent=5 // pred_check_branch
        %652 = sbr.rel (%p650) target = $region44
      $region43: #{snn_lstm_forward.5} parent=5 // pred_region
        %s653 = ssub.s32 %s12, 2
        // Predicated region
        $region45: #{snn_lstm_forward.5} parent=43 // pred_check
          %p654 = pneg %p109
        $region46: #{snn_lstm_forward.5} parent=43 // pred_check_branch
          %656 = sbr.rel (%p654) target = $region48
        $region47: #{snn_lstm_forward.5} parent=43 // pred_region
          %p657 = scmp.lt.s32.totalorder %s18, 7
          %s658 = scalar_select %p657, %s18, 7
          %s659 = smul.addr %s658, 16
          %s660 = smul.addr %s659, 8
          %s661 = scalar_lea.vmem %s3, %s660
        $region48: #{snn_lstm_forward.5} parent=43 // pred_fallthru
          _
      $region44: #{snn_lstm_forward.5} parent=5 // pred_fallthru
        _
    $region6: #{snn_lstm_forward.5} parent=1 // loop_footer
      %s16 = sadd.s32 1, %s12
    $region7: #{snn_lstm_forward.5} parent=1 // loop_footer_branch
      %11 = sbr.rel target = $region3
    $region8: #{snn_lstm_forward.5} parent=1 // loop_exit
      _
    %662 = vsyncpa [#allocation3], 1
    %s663 = scalar_lea.sflag [#allocation3], 1
    %664 = vsyncpa %s663, 1

// kernel: snn_lstm_forward.6
$region0: #{snn_lstm_forward.6}
  #allocation0 [shape = 'u32[]', space=smem, size = 0x4, offset = 0x4, fixed_abs, tag = 'smem constant byte address 0x4 - core index']
  #allocation1 [shape = 'u32[144,128]{1,0:T(1,128)}', space=vmem, size = 0x12000, scoped, tag = 'internal scratch']
  #allocation2 [shape = 'f32[8,3712]{1,0:T(8,128)}', space=vmem, size = 0x1d000, scoped, tag = 'scratch operand']
  %s0 = inlined_call_operand.vmem [shape: f32[2,4,104,3712], index: 0, kind: input, shape index: {}]
  %s1 = inlined_call_operand.vmem [shape: f32[8,104], index: 1, kind: input, shape index: {}]
  %s2 = inlined_call_operand.vmem [shape: f32[8,1], index: 2, kind: input, shape index: {}]
  %s3 = inlined_call_operand.vmem [shape: f32[2,4,8,3712], index: 3, kind: output, shape index: {}]
  %s4 = sld [smem:[#allocation0]]
  $region49: #{snn_lstm_forward.6} parent=0
    _
  %s6 = ssub.s32 1, %s4
  %s7 = scalar_select 0, %s6, %s4
  loop: start=0, step=1, limit=10
  $region2: #{snn_lstm_forward.6} parent=0 // loop_pre_header
    _
  $region3: #{snn_lstm_forward.6} parent=0 // loop_header
    %s9 = sphi 0, %s13
    %p10 = scmp.ge.s32.totalorder %s9, 10
    %s16 = sphi 0, %s28
    %s17 = sphi 0, %s24
    %s18 = sphi 0, %s16
    %s19 = sphi 0, %s17
    %s20 = sphi 0, %s18
    %s21 = sphi 0, %s19
    %s33 = sphi 0, %s35
    %s36 = sphi 0, %s33
    %s37 = sphi 0, %s36
    %s53 = sphi 0, %s37
    %s57 = sphi 0, %s57
    %s59 = sphi 0, %s57
    %s60 = sphi 0, %s59
    %s74 = sphi 0, %s60
    %s78 = sphi 0, %s78
    %s80 = sphi 0, %s78
    %s81 = sphi 0, %s80
    %s95 = sphi 0, %s81
    %s103 = sphi 0, %s105
    %s106 = sphi 0, %s103
    %s107 = sphi 0, %s106
    %s123 = sphi 0, %s107
  $region4: #{snn_lstm_forward.6} parent=0 // loop_header_branch
    %12 = sbr.rel (%p10) target = $region8
  $region5: #{snn_lstm_forward.6} parent=0 // loop_body
    %s14 = ssub.s32 %s9, 1
    %s15 = ssub.s32 %s9, 2
    %s22 = sadd.s32 1, %s17
    %p23 = scmp.ge.s32.totalorder %s22, 4
    %s24 = scalar_select %p23, 0, %s22
    %s25 = sadd.s32 1, %s16
    %s26 = scalar_select %p23, %s25, %s16
    %p27 = scmp.ge.s32.totalorder %s26, 2
    %s28 = scalar_select %p27, 0, %s26
    %s29 = ssub.s32 %s16, %s28
    %s30 = ssub.s32 %s17, %s24
    %s31 = sor.u32 %s29, %s30
    %p32 = scmp.eq.s32.totalorder %s31, 0
    %s34 = sadd.s32 %s33, 1
    %s35 = scalar_select %p32, %s33, %s34
    %p38 = pneg %p32
    %p39 = scmp.eq.s32.totalorder %s9, 7
    %p40 = por %p38, %p39
    %p41 = scmp.ne.s32.totalorder %s33, %s36
    %p42 = scmp.eq.s32.totalorder %s9, 0
    %p43 = por %p41, %p42
    %p44 = scmp.ne.s32.totalorder %s33, %s36
    %p45 = scmp.eq.s32.totalorder %s14, 7
    %p46 = por %p44, %p45
    %p47 = scmp.ne.s32.totalorder %s36, %s37
    %p48 = scmp.eq.s32.totalorder %s14, 0
    %p49 = por %p47, %p48
    %p50 = scmp.ne.s32.totalorder %s36, %s37
    %p51 = scmp.eq.s32.totalorder %s15, 7
    %p52 = por %p50, %p51
    %p54 = scmp.ne.s32.totalorder %s37, %s53
    %p55 = scmp.eq.s32.totalorder %s15, 0
    %p56 = por %p54, %p55
    %s58 = sadd.s32 %s57, 1
    %p61 = scmp.eq.s32.totalorder %s9, 7
    %p62 = scmp.ne.s32.totalorder %s57, %s59
    %p63 = scmp.eq.s32.totalorder %s9, 0
    %p64 = por %p62, %p63
    %p65 = scmp.ne.s32.totalorder %s57, %s59
    %p66 = scmp.eq.s32.totalorder %s14, 7
    %p67 = por %p65, %p66
    %p68 = scmp.ne.s32.totalorder %s59, %s60
    %p69 = scmp.eq.s32.totalorder %s14, 0
    %p70 = por %p68, %p69
    %p71 = scmp.ne.s32.totalorder %s59, %s60
    %p72 = scmp.eq.s32.totalorder %s15, 7
    %p73 = por %p71, %p72
    %p75 = scmp.ne.s32.totalorder %s60, %s74
    %p76 = scmp.eq.s32.totalorder %s15, 0
    %p77 = por %p75, %p76
    %s79 = sadd.s32 %s78, 1
    %p82 = scmp.eq.s32.totalorder %s9, 7
    %p83 = scmp.ne.s32.totalorder %s78, %s80
    %p84 = scmp.eq.s32.totalorder %s9, 0
    %p85 = por %p83, %p84
    %p86 = scmp.ne.s32.totalorder %s78, %s80
    %p87 = scmp.eq.s32.totalorder %s14, 7
    %p88 = por %p86, %p87
    %p89 = scmp.ne.s32.totalorder %s80, %s81
    %p90 = scmp.eq.s32.totalorder %s14, 0
    %p91 = por %p89, %p90
    %p92 = scmp.ne.s32.totalorder %s80, %s81
    %p93 = scmp.eq.s32.totalorder %s15, 7
    %p94 = por %p92, %p93
    %p96 = scmp.ne.s32.totalorder %s81, %s95
    %p97 = scmp.eq.s32.totalorder %s15, 0
    %p98 = por %p96, %p97
    %s99 = ssub.s32 %s16, %s28
    %s100 = ssub.s32 %s17, %s24
    %s101 = sor.u32 %s99, %s100
    %p102 = scmp.eq.s32.totalorder %s101, 0
    %s104 = sadd.s32 %s103, 1
    %s105 = scalar_select %p102, %s103, %s104
    %p108 = pneg %p102
    %p109 = scmp.eq.s32.totalorder %s9, 7
    %p110 = por %p108, %p109
    %p111 = scmp.ne.s32.totalorder %s103, %s106
    %p112 = scmp.eq.s32.totalorder %s9, 0
    %p113 = por %p111, %p112
    %p114 = scmp.ne.s32.totalorder %s103, %s106
    %p115 = scmp.eq.s32.totalorder %s14, 7
    %p116 = por %p114, %p115
    %p117 = scmp.ne.s32.totalorder %s106, %s107
    %p118 = scmp.eq.s32.totalorder %s14, 0
    %p119 = por %p117, %p118
    %p120 = scmp.ne.s32.totalorder %s106, %s107
    %p121 = scmp.eq.s32.totalorder %s15, 7
    %p122 = por %p120, %p121
    %p124 = scmp.ne.s32.totalorder %s107, %s123
    %p125 = scmp.eq.s32.totalorder %s15, 0
    %p126 = por %p124, %p125
    %p127 = scmp.le.s32.totalorder 1, %s9
    %p128 = scmp.lt.s32.totalorder %s9, 9
    %p129 = pnand %p127, %p128
    %p130 = pneg %p129
    // Predicated region
    $region9: #{snn_lstm_forward.6} parent=5 // pred_check
      _
    $region10: #{snn_lstm_forward.6} parent=5 // pred_check_branch
      %132 = sbr.rel (%p129) target = $region12
    $region11: #{snn_lstm_forward.6} parent=5 // pred_region
      %s133 = ssub.s32 %s9, 1
      // Predicated region
      $region13: #{snn_lstm_forward.6} parent=11 // pred_check
        %p134 = pneg %p70
      $region14: #{snn_lstm_forward.6} parent=11 // pred_check_branch
        %136 = sbr.rel (%p134) target = $region16
      $region15: #{snn_lstm_forward.6} parent=11 // pred_region
        _
      $region16: #{snn_lstm_forward.6} parent=11 // pred_fallthru
        _
      // Predicated region
      $region17: #{snn_lstm_forward.6} parent=11 // pred_check
        %p137 = pneg %p91
      $region18: #{snn_lstm_forward.6} parent=11 // pred_check_branch
        %139 = sbr.rel (%p137) target = $region20
      $region19: #{snn_lstm_forward.6} parent=11 // pred_region
        _
      $region20: #{snn_lstm_forward.6} parent=11 // pred_fallthru
        _
    $region12: #{snn_lstm_forward.6} parent=5 // pred_fallthru
      _
    %p140 = scmp.lt.s32.totalorder %s9, 8
    // Predicated region
    $region21: #{snn_lstm_forward.6} parent=5 // pred_check
      %p141 = pneg %p140
    $region22: #{snn_lstm_forward.6} parent=5 // pred_check_branch
      %143 = sbr.rel (%p141) target = $region24
    $region23: #{snn_lstm_forward.6} parent=5 // pred_region
      // Predicated region
      $region25: #{snn_lstm_forward.6} parent=23 // pred_check
        %p144 = pneg %p43
      $region26: #{snn_lstm_forward.6} parent=23 // pred_check_branch
        %146 = sbr.rel (%p144) target = $region28
      $region27: #{snn_lstm_forward.6} parent=23 // pred_region
        %p147 = scmp.lt.s32.totalorder %s16, 1
        %s148 = scalar_select %p147, %s16, 1
        %p149 = scmp.lt.s32.totalorder %s17, 3
        %s150 = scalar_select %p149, %s17, 3
        %s151 = smul.addr %s150, 377
        %s152 = smul.addr %s148, 1508
        %s153 = sadd.s32 %s151, %s152
        %s154 = smul.addr %s153, 8
        %s155 = scalar_lea.vmem %s0, %s154
      $region28: #{snn_lstm_forward.6} parent=23 // pred_fallthru
        _
    $region24: #{snn_lstm_forward.6} parent=5 // pred_fallthru
      _
    %p156 = scmp.le.s32.totalorder 1, %s9
    %p157 = scmp.lt.s32.totalorder %s9, 9
    %p158 = pnand %p156, %p157
    %p159 = pneg %p158
    // Predicated region
    $region29: #{snn_lstm_forward.6} parent=5 // pred_check
      _
    $region30: #{snn_lstm_forward.6} parent=5 // pred_check_branch
      %161 = sbr.rel (%p158) target = $region32
    $region31: #{snn_lstm_forward.6} parent=5 // pred_region
      %s162 = ssub.s32 %s9, 1
      %p163 = scmp.lt.s32.totalorder %s18, 1
      %s164 = scalar_select %p163, %s18, 1
      %p165 = scmp.lt.s32.totalorder %s19, 3
      %s166 = scalar_select %p165, %s19, 3
      %s167 = smul.addr %s166, 377
      %s168 = smul.addr %s164, 1508
      %s169 = sadd.s32 %s167, %s168
      %s170 = smul.addr %s169, 8
      %s171 = scalar_lea.vmem %s0, %s170
      %p172 = pneg %p49
      %p173 = pneg %p46
      %p174 = pneg %p70
      %p175 = pneg %p67
      %p176 = pneg %p91
      %p177 = pneg %p88
      %p178 = pneg %p119
      %p179 = pneg %p116
      %p180 = scmp.lt.s32.totalorder %s18, 1
      %s181 = scalar_select %p180, %s18, 1
      %p182 = scmp.lt.s32.totalorder %s19, 3
      %s183 = scalar_select %p182, %s19, 3
      %s184 = smul.addr %s183, 29
      %s185 = smul.addr %s181, 116
      %s186 = sadd.s32 %s184, %s185
      %s187 = smul.addr %s186, 8
      %s188 = scalar_lea.vmem %s3, %s187
      %p189 = scmp.lt.s32.totalorder %s18, 1
      %s190 = scalar_select %p189, %s18, 1
      %p191 = scmp.lt.s32.totalorder %s19, 3
      %s192 = scalar_select %p191, %s19, 3
      %s193 = smul.addr %s192, 377
      %s194 = smul.addr %s190, 1508
      %s195 = sadd.s32 %s193, %s194
      %s196 = smul.addr %s195, 8
      %s197 = scalar_lea.vmem %s0, %s196
      %p198 = scmp.lt.s32.totalorder %s18, 1
      %s199 = scalar_select %p198, %s18, 1
      %p200 = scmp.lt.s32.totalorder %s19, 3
      %s201 = scalar_select %p200, %s19, 3
      %s202 = smul.addr %s201, 29
      %s203 = smul.addr %s199, 116
      %s204 = sadd.s32 %s202, %s203
      %s205 = smul.addr %s204, 8
      %s206 = scalar_lea.vmem %s3, %s205
      %p207 = scmp.eq.s32.totalorder %s19, 0
      // Predicated region
      $region33: #{snn_lstm_forward.6} parent=31 // pred_check
        %p208 = pneg %p207
      $region34: #{snn_lstm_forward.6} parent=31 // pred_check_branch
        %210 = sbr.rel (%p208) target = $region36
      $region35: #{snn_lstm_forward.6} parent=31 // pred_region
        %211 = vst [vmem:[#allocation2] sm:$0xff] 0.0
        %212 = vst [vmem:[#allocation2 + $0x8] sm:$0xff] 0.0
        %213 = vst [vmem:[#allocation2 + $0x10] sm:$0xff] 0.0
        %214 = vst [vmem:[#allocation2 + $0x18] sm:$0xff] 0.0
        %215 = vst [vmem:[#allocation2 + $0x20] sm:$0xff] 0.0
        %216 = vst [vmem:[#allocation2 + $0x28] sm:$0xff] 0.0
        %217 = vst [vmem:[#allocation2 + $0x30] sm:$0xff] 0.0
        %218 = vst [vmem:[#allocation2 + $0x38] sm:$0xff] 0.0
        %219 = vst [vmem:[#allocation2 + $0x40] sm:$0xff] 0.0
        %220 = vst [vmem:[#allocation2 + $0x48] sm:$0xff] 0.0
        %221 = vst [vmem:[#allocation2 + $0x50] sm:$0xff] 0.0
        %222 = vst [vmem:[#allocation2 + $0x58] sm:$0xff] 0.0
        %223 = vst [vmem:[#allocation2 + $0x60] sm:$0xff] 0.0
        %224 = vst [vmem:[#allocation2 + $0x68] sm:$0xff] 0.0
        %225 = vst [vmem:[#allocation2 + $0x70] sm:$0xff] 0.0
        %226 = vst [vmem:[#allocation2 + $0x78] sm:$0xff] 0.0
        %227 = vst [vmem:[#allocation2 + $0x80] sm:$0xff] 0.0
        %228 = vst [vmem:[#allocation2 + $0x88] sm:$0xff] 0.0
        %229 = vst [vmem:[#allocation2 + $0x90] sm:$0xff] 0.0
        %230 = vst [vmem:[#allocation2 + $0x98] sm:$0xff] 0.0
        %231 = vst [vmem:[#allocation2 + $0xa0] sm:$0xff] 0.0
        %232 = vst [vmem:[#allocation2 + $0xa8] sm:$0xff] 0.0
        %233 = vst [vmem:[#allocation2 + $0xb0] sm:$0xff] 0.0
        %234 = vst [vmem:[#allocation2 + $0xb8] sm:$0xff] 0.0
        %235 = vst [vmem:[#allocation2 + $0xc0] sm:$0xff] 0.0
        %236 = vst [vmem:[#allocation2 + $0xc8] sm:$0xff] 0.0
        %237 = vst [vmem:[#allocation2 + $0xd0] sm:$0xff] 0.0
        %238 = vst [vmem:[#allocation2 + $0xd8] sm:$0xff] 0.0
        %239 = vst [vmem:[#allocation2 + $0xe0] sm:$0xff] 0.0
      $region36: #{snn_lstm_forward.6} parent=31 // pred_fallthru
        _
      %v240 = vld [vmem:[%s1] sm:$0xff]
      %v241 = vld [vmem:[%s197] sm:$0xff]
      %v242 = vld [vmem:[%s197 + $0x8] sm:$0xff]
      %v243 = vld [vmem:[%s197 + $0x10] sm:$0xff]
      %v244 = vld [vmem:[%s197 + $0x18] sm:$0xff]
      %v245 = vld [vmem:[%s197 + $0x20] sm:$0xff]
      %v246 = vld [vmem:[%s197 + $0x28] sm:$0xff]
      %v247 = vld [vmem:[%s197 + $0x30] sm:$0xff]
      %v248 = vld [vmem:[%s197 + $0x38] sm:$0xff]
      %v249 = vld [vmem:[%s197 + $0x40] sm:$0xff]
      %v250 = vld [vmem:[%s197 + $0x48] sm:$0xff]
      %v251 = vld [vmem:[%s197 + $0x50] sm:$0xff]
      %v252 = vld [vmem:[%s197 + $0x58] sm:$0xff]
      %v253 = vld [vmem:[%s197 + $0x60] sm:$0xff]
      %v254 = vld [vmem:[%s197 + $0x68] sm:$0xff]
      %v255 = vld [vmem:[%s197 + $0x70] sm:$0xff]
      %v256 = vld [vmem:[%s197 + $0x78] sm:$0xff]
      %v257 = vld [vmem:[%s197 + $0x80] sm:$0xff]
      %v258 = vld [vmem:[%s197 + $0x88] sm:$0xff]
      %v259 = vld [vmem:[%s197 + $0x90] sm:$0xff]
      %v260 = vld [vmem:[%s197 + $0x98] sm:$0xff]
      %v261 = vld [vmem:[%s197 + $0xa0] sm:$0xff]
      %v262 = vld [vmem:[%s197 + $0xa8] sm:$0xff]
      %v263 = vld [vmem:[%s197 + $0xb0] sm:$0xff]
      %v264 = vld [vmem:[%s197 + $0xb8] sm:$0xff]
      %v265 = vld [vmem:[%s197 + $0xc0] sm:$0xff]
      %v266 = vld [vmem:[%s197 + $0xc8] sm:$0xff]
      %v267 = vld [vmem:[%s197 + $0xd0] sm:$0xff]
      %v268 = vld [vmem:[%s197 + $0xd8] sm:$0xff]
      %v269 = vld [vmem:[%s197 + $0xe0] sm:$0xff]
      %v270 = vld [vmem:[%s197 + $0xe8] sm:$0xff]
      %v271 = vld [vmem:[%s197 + $0xf0] sm:$0xff]
      %v272 = vld [vmem:[%s197 + $0xf8] sm:$0xff]
      %v273 = vld [vmem:[%s197 + $0x100] sm:$0xff]
      %v274 = vld [vmem:[%s197 + $0x108] sm:$0xff]
      %v275 = vld [vmem:[%s197 + $0x110] sm:$0xff]
      %v276 = vld [vmem:[%s197 + $0x118] sm:$0xff]
      %v277 = vld [vmem:[%s197 + $0x120] sm:$0xff]
      %v278 = vld [vmem:[%s197 + $0x128] sm:$0xff]
      %v279 = vld [vmem:[%s197 + $0x130] sm:$0xff]
      %v280 = vld [vmem:[%s197 + $0x138] sm:$0xff]
      %v281 = vld [vmem:[%s197 + $0x140] sm:$0xff]
      %v282 = vld [vmem:[%s197 + $0x148] sm:$0xff]
      %v283 = vld [vmem:[%s197 + $0x150] sm:$0xff]
      %v284 = vld [vmem:[%s197 + $0x158] sm:$0xff]
      %v285 = vld [vmem:[%s197 + $0x160] sm:$0xff]
      %v286 = vld [vmem:[%s197 + $0x168] sm:$0xff]
      %v287 = vld [vmem:[%s197 + $0x170] sm:$0xff]
      %v288 = vld [vmem:[%s197 + $0x178] sm:$0xff]
      %v289 = vld [vmem:[%s197 + $0x180] sm:$0xff]
      %v290 = vld [vmem:[%s197 + $0x188] sm:$0xff]
      %v291 = vld [vmem:[%s197 + $0x190] sm:$0xff]
      %v292 = vld [vmem:[%s197 + $0x198] sm:$0xff]
      %v293 = vld [vmem:[%s197 + $0x1a0] sm:$0xff]
      %v294 = vld [vmem:[%s197 + $0x1a8] sm:$0xff]
      %v295 = vld [vmem:[%s197 + $0x1b0] sm:$0xff]
      %v296 = vld [vmem:[%s197 + $0x1b8] sm:$0xff]
      %v297 = vld [vmem:[%s197 + $0x1c0] sm:$0xff]
      %v298 = vld [vmem:[%s197 + $0x1c8] sm:$0xff]
      %v299 = vld [vmem:[%s197 + $0x1d0] sm:$0xff]
      %v300 = vld [vmem:[%s197 + $0x1d8] sm:$0xff]
      %v301 = vld [vmem:[%s197 + $0x1e0] sm:$0xff]
      %v302 = vld [vmem:[%s197 + $0x1e8] sm:$0xff]
      %v303 = vld [vmem:[%s197 + $0x1f0] sm:$0xff]
      %v304 = vld [vmem:[%s197 + $0x1f8] sm:$0xff]
      %v305 = vld [vmem:[%s197 + $0x200] sm:$0xff]
      %v306 = vld [vmem:[%s197 + $0x208] sm:$0xff]
      %v307 = vld [vmem:[%s197 + $0x210] sm:$0xff]
      %v308 = vld [vmem:[%s197 + $0x218] sm:$0xff]
      %v309 = vld [vmem:[%s197 + $0x220] sm:$0xff]
      %v310 = vld [vmem:[%s197 + $0x228] sm:$0xff]
      %v311 = vld [vmem:[%s197 + $0x230] sm:$0xff]
      %v312 = vld [vmem:[%s197 + $0x238] sm:$0xff]
      %v313 = vld [vmem:[%s197 + $0x240] sm:$0xff]
      %v314 = vld [vmem:[%s197 + $0x248] sm:$0xff]
      %v315 = vld [vmem:[%s197 + $0x250] sm:$0xff]
      %v316 = vld [vmem:[%s197 + $0x258] sm:$0xff]
      %v317 = vld [vmem:[%s197 + $0x260] sm:$0xff]
      %v318 = vld [vmem:[%s197 + $0x268] sm:$0xff]
      %v319 = vld [vmem:[%s197 + $0x270] sm:$0xff]
      %v320 = vld [vmem:[%s197 + $0x278] sm:$0xff]
      %v321 = vld [vmem:[%s197 + $0x280] sm:$0xff]
      %v322 = vld [vmem:[%s197 + $0x288] sm:$0xff]
      %v323 = vld [vmem:[%s197 + $0x290] sm:$0xff]
      %v324 = vld [vmem:[%s197 + $0x298] sm:$0xff]
      %v325 = vld [vmem:[%s197 + $0x2a0] sm:$0xff]
      %v326 = vld [vmem:[%s197 + $0x2a8] sm:$0xff]
      %v327 = vld [vmem:[%s197 + $0x2b0] sm:$0xff]
      %v328 = vld [vmem:[%s197 + $0x2b8] sm:$0xff]
      %v329 = vld [vmem:[%s197 + $0x2c0] sm:$0xff]
      %v330 = vld [vmem:[%s197 + $0x2c8] sm:$0xff]
      %v331 = vld [vmem:[%s197 + $0x2d0] sm:$0xff]
      %v332 = vld [vmem:[%s197 + $0x2d8] sm:$0xff]
      %v333 = vld [vmem:[%s197 + $0x2e0] sm:$0xff]
      %v334 = vld [vmem:[%s197 + $0x2e8] sm:$0xff]
      %v335 = vld [vmem:[%s197 + $0x2f0] sm:$0xff]
      %v336 = vld [vmem:[%s197 + $0x2f8] sm:$0xff]
      %v337 = vld [vmem:[%s197 + $0x300] sm:$0xff]
      %v338 = vld [vmem:[%s197 + $0x308] sm:$0xff]
      %v339 = vld [vmem:[%s197 + $0x310] sm:$0xff]
      %v340 = vld [vmem:[%s197 + $0x318] sm:$0xff]
      %v341 = vld [vmem:[%s197 + $0x320] sm:$0xff]
      %v342 = vld [vmem:[%s197 + $0x328] sm:$0xff]
      %v343 = vld [vmem:[%s197 + $0x330] sm:$0xff]
      %v344 = vld [vmem:[%s197 + $0x338] sm:$0xff]
      %v345 = vld [vmem:[%s197 + $0x340] sm:$0xff]
      %v346 = vld [vmem:[%s197 + $0x348] sm:$0xff]
      %v347 = vld [vmem:[%s197 + $0x350] sm:$0xff]
      %v348 = vld [vmem:[%s197 + $0x358] sm:$0xff]
      %v349 = vld [vmem:[%s197 + $0x360] sm:$0xff]
      %v350 = vld [vmem:[%s197 + $0x368] sm:$0xff]
      %v351 = vld [vmem:[%s197 + $0x370] sm:$0xff]
      %v352 = vld [vmem:[%s197 + $0x378] sm:$0xff]
      %v353 = vld [vmem:[%s197 + $0x380] sm:$0xff]
      %v354 = vld [vmem:[%s197 + $0x388] sm:$0xff]
      %v355 = vld [vmem:[%s197 + $0x390] sm:$0xff]
      %v356 = vld [vmem:[%s197 + $0x398] sm:$0xff]
      %v357 = vld [vmem:[%s197 + $0x3a0] sm:$0xff]
      %v358 = vld [vmem:[%s197 + $0x3a8] sm:$0xff]
      %v359 = vld [vmem:[%s197 + $0x3b0] sm:$0xff]
      %v360 = vld [vmem:[%s197 + $0x3b8] sm:$0xff]
      %v361 = vld [vmem:[%s197 + $0x3c0] sm:$0xff]
      %v362 = vld [vmem:[%s197 + $0x3c8] sm:$0xff]
      %v363 = vld [vmem:[%s197 + $0x3d0] sm:$0xff]
      %v364 = vld [vmem:[%s197 + $0x3d8] sm:$0xff]
      %v365 = vld [vmem:[%s197 + $0x3e0] sm:$0xff]
      %v366 = vld [vmem:[%s197 + $0x3e8] sm:$0xff]
      %v367 = vld [vmem:[%s197 + $0x3f0] sm:$0xff]
      %v368 = vld [vmem:[%s197 + $0x3f8] sm:$0xff]
      %v369 = vld [vmem:[%s197 + $0x400] sm:$0xff]
      %v370 = vld [vmem:[%s197 + $0x408] sm:$0xff]
      %v371 = vld [vmem:[%s197 + $0x410] sm:$0xff]
      %v372 = vld [vmem:[%s197 + $0x418] sm:$0xff]
      %v373 = vld [vmem:[%s197 + $0x420] sm:$0xff]
      %v374 = vld [vmem:[%s197 + $0x428] sm:$0xff]
      %v375 = vld [vmem:[%s197 + $0x430] sm:$0xff]
      %v376 = vld [vmem:[%s197 + $0x438] sm:$0xff]
      %v377 = vld [vmem:[%s197 + $0x440] sm:$0xff]
      %v378 = vld [vmem:[%s197 + $0x448] sm:$0xff]
      %v379 = vld [vmem:[%s197 + $0x450] sm:$0xff]
      %v380 = vld [vmem:[%s197 + $0x458] sm:$0xff]
      %v381 = vld [vmem:[%s197 + $0x460] sm:$0xff]
      %v382 = vld [vmem:[%s197 + $0x468] sm:$0xff]
      %v383 = vld [vmem:[%s197 + $0x470] sm:$0xff]
      %v384 = vld [vmem:[%s197 + $0x478] sm:$0xff]
      %v385 = vld [vmem:[%s197 + $0x480] sm:$0xff]
      %v386 = vld [vmem:[%s197 + $0x488] sm:$0xff]
      %v387 = vld [vmem:[%s197 + $0x490] sm:$0xff]
      %v388 = vld [vmem:[%s197 + $0x498] sm:$0xff]
      %v389 = vld [vmem:[%s197 + $0x4a0] sm:$0xff]
      %v390 = vld [vmem:[%s197 + $0x4a8] sm:$0xff]
      %v391 = vld [vmem:[%s197 + $0x4b0] sm:$0xff]
      %v392 = vld [vmem:[%s197 + $0x4b8] sm:$0xff]
      %v393 = vld [vmem:[%s197 + $0x4c0] sm:$0xff]
      %v394 = vld [vmem:[%s197 + $0x4c8] sm:$0xff]
      %v395 = vld [vmem:[%s197 + $0x4d0] sm:$0xff]
      %v396 = vld [vmem:[%s197 + $0x4d8] sm:$0xff]
      %v397 = vld [vmem:[%s197 + $0x4e0] sm:$0xff]
      %v398 = vld [vmem:[%s197 + $0x4e8] sm:$0xff]
      %v399 = vld [vmem:[%s197 + $0x4f0] sm:$0xff]
      %v400 = vld [vmem:[%s197 + $0x4f8] sm:$0xff]
      %v401 = vld [vmem:[%s197 + $0x500] sm:$0xff]
      %v402 = vld [vmem:[%s197 + $0x508] sm:$0xff]
      %v403 = vld [vmem:[%s197 + $0x510] sm:$0xff]
      %v404 = vld [vmem:[%s197 + $0x518] sm:$0xff]
      %v405 = vld [vmem:[%s197 + $0x520] sm:$0xff]
      %v406 = vld [vmem:[%s197 + $0x528] sm:$0xff]
      %v407 = vld [vmem:[%s197 + $0x530] sm:$0xff]
      %v408 = vld [vmem:[%s197 + $0x538] sm:$0xff]
      %v409 = vld [vmem:[%s197 + $0x540] sm:$0xff]
      %v410 = vld [vmem:[%s197 + $0x548] sm:$0xff]
      %v411 = vld [vmem:[%s197 + $0x550] sm:$0xff]
      %v412 = vld [vmem:[%s197 + $0x558] sm:$0xff]
      %v413 = vld [vmem:[%s197 + $0x560] sm:$0xff]
      %v414 = vld [vmem:[%s197 + $0x568] sm:$0xff]
      %v415 = vld [vmem:[%s197 + $0x570] sm:$0xff]
      %v416 = vld [vmem:[%s197 + $0x578] sm:$0xff]
      %v417 = vld [vmem:[%s197 + $0x580] sm:$0xff]
      %v418 = vld [vmem:[%s197 + $0x588] sm:$0xff]
      %v419 = vld [vmem:[%s197 + $0x590] sm:$0xff]
      %v420 = vld [vmem:[%s197 + $0x598] sm:$0xff]
      %v421 = vld [vmem:[%s197 + $0x5a0] sm:$0xff]
      %v422 = vld [vmem:[%s197 + $0x5a8] sm:$0xff]
      %v423 = vld [vmem:[%s197 + $0x5b0] sm:$0xff]
      %v424 = vld [vmem:[%s197 + $0x5b8] sm:$0xff]
      %v425 = vld [vmem:[%s197 + $0x5c0] sm:$0xff]
      %v426 = vld [vmem:[%s197 + $0x5c8] sm:$0xff]
      %v427 = vld [vmem:[%s197 + $0x5d0] sm:$0xff]
      %v428 = vld [vmem:[%s197 + $0x5d8] sm:$0xff]
      %v429 = vld [vmem:[%s197 + $0x5e0] sm:$0xff]
      %v430 = vld [vmem:[%s197 + $0x5e8] sm:$0xff]
      %v431 = vld [vmem:[%s197 + $0x5f0] sm:$0xff]
      %v432 = vld [vmem:[%s197 + $0x5f8] sm:$0xff]
      %v433 = vld [vmem:[%s197 + $0x600] sm:$0xff]
      %v434 = vld [vmem:[%s197 + $0x608] sm:$0xff]
      %v435 = vld [vmem:[%s197 + $0x610] sm:$0xff]
      %v436 = vld [vmem:[%s197 + $0x618] sm:$0xff]
      %v437 = vld [vmem:[%s197 + $0x620] sm:$0xff]
      %v438 = vld [vmem:[%s197 + $0x628] sm:$0xff]
      %v439 = vld [vmem:[%s197 + $0x630] sm:$0xff]
      %v440 = vld [vmem:[%s197 + $0x638] sm:$0xff]
      %v441 = vld [vmem:[%s197 + $0x640] sm:$0xff]
      %v442 = vld [vmem:[%s197 + $0x648] sm:$0xff]
      %v443 = vld [vmem:[%s197 + $0x650] sm:$0xff]
      %v444 = vld [vmem:[%s197 + $0x658] sm:$0xff]
      %v445 = vld [vmem:[%s197 + $0x660] sm:$0xff]
      %v446 = vld [vmem:[%s197 + $0x668] sm:$0xff]
      %v447 = vld [vmem:[%s197 + $0x670] sm:$0xff]
      %v448 = vld [vmem:[%s197 + $0x678] sm:$0xff]
      %v449 = vld [vmem:[%s197 + $0x680] sm:$0xff]
      %v450 = vld [vmem:[%s197 + $0x688] sm:$0xff]
      %v451 = vld [vmem:[%s197 + $0x690] sm:$0xff]
      %v452 = vld [vmem:[%s197 + $0x698] sm:$0xff]
      %v453 = vld [vmem:[%s197 + $0x6a0] sm:$0xff]
      %v454 = vld [vmem:[%s197 + $0x6a8] sm:$0xff]
      %v455 = vld [vmem:[%s197 + $0x6b0] sm:$0xff]
      %v456 = vld [vmem:[%s197 + $0x6b8] sm:$0xff]
      %v457 = vld [vmem:[%s197 + $0x6c0] sm:$0xff]
      %v458 = vld [vmem:[%s197 + $0x6c8] sm:$0xff]
      %v459 = vld [vmem:[%s197 + $0x6d0] sm:$0xff]
      %v460 = vld [vmem:[%s197 + $0x6d8] sm:$0xff]
      %v461 = vld [vmem:[%s197 + $0x6e0] sm:$0xff]
      %v462 = vld [vmem:[%s197 + $0x6e8] sm:$0xff]
      %v463 = vld [vmem:[%s197 + $0x6f0] sm:$0xff]
      %v464 = vld [vmem:[%s197 + $0x6f8] sm:$0xff]
      %v465 = vld [vmem:[%s197 + $0x700] sm:$0xff]
      %v466 = vld [vmem:[%s197 + $0x708] sm:$0xff]
      %v467 = vld [vmem:[%s197 + $0x710] sm:$0xff]
      %v468 = vld [vmem:[%s197 + $0x718] sm:$0xff]
      %v469 = vld [vmem:[%s197 + $0x720] sm:$0xff]
      %v470 = vld [vmem:[%s197 + $0x728] sm:$0xff]
      %v471 = vld [vmem:[%s197 + $0x730] sm:$0xff]
      %v472 = vld [vmem:[%s197 + $0x738] sm:$0xff]
      %v473 = vld [vmem:[%s197 + $0x740] sm:$0xff]
      %v474 = vld [vmem:[%s197 + $0x748] sm:$0xff]
      %v475 = vld [vmem:[%s197 + $0x750] sm:$0xff]
      %v476 = vld [vmem:[%s197 + $0x758] sm:$0xff]
      %v477 = vld [vmem:[%s197 + $0x760] sm:$0xff]
      %v478 = vld [vmem:[%s197 + $0x768] sm:$0xff]
      %v479 = vld [vmem:[%s197 + $0x770] sm:$0xff]
      %v480 = vld [vmem:[%s197 + $0x778] sm:$0xff]
      %v481 = vld [vmem:[%s197 + $0x780] sm:$0xff]
      %v482 = vld [vmem:[%s197 + $0x788] sm:$0xff]
      %v483 = vld [vmem:[%s197 + $0x790] sm:$0xff]
      %v484 = vld [vmem:[%s197 + $0x798] sm:$0xff]
      %v485 = vld [vmem:[%s197 + $0x7a0] sm:$0xff]
      %v486 = vld [vmem:[%s197 + $0x7a8] sm:$0xff]
      %v487 = vld [vmem:[%s197 + $0x7b0] sm:$0xff]
      %v488 = vld [vmem:[%s197 + $0x7b8] sm:$0xff]
      %v489 = vld [vmem:[%s197 + $0x7c0] sm:$0xff]
      %v490 = vld [vmem:[%s197 + $0x7c8] sm:$0xff]
      %v491 = vld [vmem:[%s197 + $0x7d0] sm:$0xff]
      %v492 = vld [vmem:[%s197 + $0x7d8] sm:$0xff]
      %v493 = vld [vmem:[%s197 + $0x7e0] sm:$0xff]
      %v494 = vld [vmem:[%s197 + $0x7e8] sm:$0xff]
      %v495 = vld [vmem:[%s197 + $0x7f0] sm:$0xff]
      %v496 = vld [vmem:[%s197 + $0x7f8] sm:$0xff]
      %v497 = vld [vmem:[%s197 + $0x800] sm:$0xff]
      %v498 = vld [vmem:[%s197 + $0x808] sm:$0xff]
      %v499 = vld [vmem:[%s197 + $0x810] sm:$0xff]
      %v500 = vld [vmem:[%s197 + $0x818] sm:$0xff]
      %v501 = vld [vmem:[%s197 + $0x820] sm:$0xff]
      %v502 = vld [vmem:[%s197 + $0x828] sm:$0xff]
      %v503 = vld [vmem:[%s197 + $0x830] sm:$0xff]
      %v504 = vld [vmem:[%s197 + $0x838] sm:$0xff]
      %v505 = vld [vmem:[%s197 + $0x840] sm:$0xff]
      %v506 = vld [vmem:[%s197 + $0x848] sm:$0xff]
      %v507 = vld [vmem:[%s197 + $0x850] sm:$0xff]
      %v508 = vld [vmem:[%s197 + $0x858] sm:$0xff]
      %v509 = vld [vmem:[%s197 + $0x860] sm:$0xff]
      %v510 = vld [vmem:[%s197 + $0x868] sm:$0xff]
      %v511 = vld [vmem:[%s197 + $0x870] sm:$0xff]
      %v512 = vld [vmem:[%s197 + $0x878] sm:$0xff]
      %v513 = vld [vmem:[%s197 + $0x880] sm:$0xff]
      %v514 = vld [vmem:[%s197 + $0x888] sm:$0xff]
      %v515 = vld [vmem:[%s197 + $0x890] sm:$0xff]
      %v516 = vld [vmem:[%s197 + $0x898] sm:$0xff]
      %v517 = vld [vmem:[%s197 + $0x8a0] sm:$0xff]
      %v518 = vld [vmem:[%s197 + $0x8a8] sm:$0xff]
      %v519 = vld [vmem:[%s197 + $0x8b0] sm:$0xff]
      %v520 = vld [vmem:[%s197 + $0x8b8] sm:$0xff]
      %v521 = vld [vmem:[%s197 + $0x8c0] sm:$0xff]
      %v522 = vld [vmem:[%s197 + $0x8c8] sm:$0xff]
      %v523 = vld [vmem:[%s197 + $0x8d0] sm:$0xff]
      %v524 = vld [vmem:[%s197 + $0x8d8] sm:$0xff]
      %v525 = vld [vmem:[%s197 + $0x8e0] sm:$0xff]
      %v526 = vld [vmem:[%s197 + $0x8e8] sm:$0xff]
      %v527 = vld [vmem:[%s197 + $0x8f0] sm:$0xff]
      %v528 = vld [vmem:[%s197 + $0x8f8] sm:$0xff]
      %v529 = vld [vmem:[%s197 + $0x900] sm:$0xff]
      %v530 = vld [vmem:[%s197 + $0x908] sm:$0xff]
      %v531 = vld [vmem:[%s197 + $0x910] sm:$0xff]
      %v532 = vld [vmem:[%s197 + $0x918] sm:$0xff]
      %v533 = vld [vmem:[%s197 + $0x920] sm:$0xff]
      %v534 = vld [vmem:[%s197 + $0x928] sm:$0xff]
      %v535 = vld [vmem:[%s197 + $0x930] sm:$0xff]
      %v536 = vld [vmem:[%s197 + $0x938] sm:$0xff]
      %v537 = vld [vmem:[%s197 + $0x940] sm:$0xff]
      %v538 = vld [vmem:[%s197 + $0x948] sm:$0xff]
      %v539 = vld [vmem:[%s197 + $0x950] sm:$0xff]
      %v540 = vld [vmem:[%s197 + $0x958] sm:$0xff]
      %v541 = vld [vmem:[%s197 + $0x960] sm:$0xff]
      %v542 = vld [vmem:[%s197 + $0x968] sm:$0xff]
      %v543 = vld [vmem:[%s197 + $0x970] sm:$0xff]
      %v544 = vld [vmem:[%s197 + $0x978] sm:$0xff]
      %v545 = vld [vmem:[%s197 + $0x980] sm:$0xff]
      %v546 = vld [vmem:[%s197 + $0x988] sm:$0xff]
      %v547 = vld [vmem:[%s197 + $0x990] sm:$0xff]
      %v548 = vld [vmem:[%s197 + $0x998] sm:$0xff]
      %v549 = vld [vmem:[%s197 + $0x9a0] sm:$0xff]
      %v550 = vld [vmem:[%s197 + $0x9a8] sm:$0xff]
      %v551 = vld [vmem:[%s197 + $0x9b0] sm:$0xff]
      %v552 = vld [vmem:[%s197 + $0x9b8] sm:$0xff]
      %v553 = vld [vmem:[%s197 + $0x9c0] sm:$0xff]
      %v554 = vld [vmem:[%s197 + $0x9c8] sm:$0xff]
      %v555 = vld [vmem:[%s197 + $0x9d0] sm:$0xff]
      %v556 = vld [vmem:[%s197 + $0x9d8] sm:$0xff]
      %v557 = vld [vmem:[%s197 + $0x9e0] sm:$0xff]
      %v558 = vld [vmem:[%s197 + $0x9e8] sm:$0xff]
      %v559 = vld [vmem:[%s197 + $0x9f0] sm:$0xff]
      %v560 = vld [vmem:[%s197 + $0x9f8] sm:$0xff]
      %v561 = vld [vmem:[%s197 + $0xa00] sm:$0xff]
      %v562 = vld [vmem:[%s197 + $0xa08] sm:$0xff]
      %v563 = vld [vmem:[%s197 + $0xa10] sm:$0xff]
      %v564 = vld [vmem:[%s197 + $0xa18] sm:$0xff]
      %v565 = vld [vmem:[%s197 + $0xa20] sm:$0xff]
      %v566 = vld [vmem:[%s197 + $0xa28] sm:$0xff]
      %v567 = vld [vmem:[%s197 + $0xa30] sm:$0xff]
      %v568 = vld [vmem:[%s197 + $0xa38] sm:$0xff]
      %v569 = vld [vmem:[%s197 + $0xa40] sm:$0xff]
      %v570 = vld [vmem:[%s197 + $0xa48] sm:$0xff]
      %v571 = vld [vmem:[%s197 + $0xa50] sm:$0xff]
      %v572 = vld [vmem:[%s197 + $0xa58] sm:$0xff]
      %v573 = vld [vmem:[%s197 + $0xa60] sm:$0xff]
      %v574 = vld [vmem:[%s197 + $0xa68] sm:$0xff]
      %v575 = vld [vmem:[%s197 + $0xa70] sm:$0xff]
      %v576 = vld [vmem:[%s197 + $0xa78] sm:$0xff]
      %v577 = vld [vmem:[%s197 + $0xa80] sm:$0xff]
      %v578 = vld [vmem:[%s197 + $0xa88] sm:$0xff]
      %v579 = vld [vmem:[%s197 + $0xa90] sm:$0xff]
      %v580 = vld [vmem:[%s197 + $0xa98] sm:$0xff]
      %v581 = vld [vmem:[%s197 + $0xaa0] sm:$0xff]
      %v582 = vld [vmem:[%s197 + $0xaa8] sm:$0xff]
      %v583 = vld [vmem:[%s197 + $0xab0] sm:$0xff]
      %v584 = vld [vmem:[%s197 + $0xab8] sm:$0xff]
      %v585 = vld [vmem:[%s197 + $0xac0] sm:$0xff]
      %v586 = vld [vmem:[%s197 + $0xac8] sm:$0xff]
      %v587 = vld [vmem:[%s197 + $0xad0] sm:$0xff]
      %v588 = vld [vmem:[%s197 + $0xad8] sm:$0xff]
      %v589 = vld [vmem:[%s197 + $0xae0] sm:$0xff]
      %v590 = vld [vmem:[%s197 + $0xae8] sm:$0xff]
      %v591 = vld [vmem:[%s197 + $0xaf0] sm:$0xff]
      %v592 = vld [vmem:[%s197 + $0xaf8] sm:$0xff]
      %v593 = vld [vmem:[%s197 + $0xb00] sm:$0xff]
      %v594 = vld [vmem:[%s197 + $0xb08] sm:$0xff]
      %v595 = vld [vmem:[%s197 + $0xb10] sm:$0xff]
      %v596 = vld [vmem:[%s197 + $0xb18] sm:$0xff]
      %v597 = vld [vmem:[%s197 + $0xb20] sm:$0xff]
      %v598 = vld [vmem:[%s197 + $0xb28] sm:$0xff]
      %v599 = vld [vmem:[%s197 + $0xb30] sm:$0xff]
      %v600 = vld [vmem:[%s197 + $0xb38] sm:$0xff]
      %v601 = vld [vmem:[%s197 + $0xb40] sm:$0xff]
      %v602 = vld [vmem:[%s197 + $0xb48] sm:$0xff]
      %v603 = vld [vmem:[%s197 + $0xb50] sm:$0xff]
      %v604 = vld [vmem:[%s197 + $0xb58] sm:$0xff]
      %v605 = vld [vmem:[%s197 + $0xb60] sm:$0xff]
      %v606 = vld [vmem:[%s197 + $0xb68] sm:$0xff]
      %v607 = vld [vmem:[%s197 + $0xb70] sm:$0xff]
      %v608 = vld [vmem:[%s197 + $0xb78] sm:$0xff]
      %v609 = vld [vmem:[%s197 + $0xb80] sm:$0xff]
      %v610 = vld [vmem:[%s197 + $0xb88] sm:$0xff]
      %v611 = vld [vmem:[%s197 + $0xb90] sm:$0xff]
      %v612 = vld [vmem:[%s197 + $0xb98] sm:$0xff]
      %v613 = vld [vmem:[%s197 + $0xba0] sm:$0xff]
      %v614 = vld [vmem:[%s197 + $0xba8] sm:$0xff]
      %v615 = vld [vmem:[%s197 + $0xbb0] sm:$0xff]
      %v616 = vld [vmem:[%s197 + $0xbb8] sm:$0xff]
      %v617 = vld [vmem:[%s197 + $0xbc0] sm:$0xff]
      %vm618 = vcmask 850944
      %v620 = vsel %vm618, %v240, 0
      %622 = vmatprep.subr.mxu0 %v242
      %623 = vmatpush1.msra.mxu0 %v241
      %624 = vmatprep.subr.mxu0 %v271
      %625 = vmatpush1.msra.mxu0 %v270
      %626 = vmatprep.subr.mxu0 %v300
      %627 = vmatpush1.msra.mxu0 %v299
      %628 = vmatprep.subr.mxu0 %v329
      %629 = vmatpush1.msra.mxu0 %v328
      %630 = vmatprep.subr.mxu0 %v358
      %631 = vmatpush1.msra.mxu0 %v357
      %632 = vmatprep.subr.mxu0 %v387
      %633 = vmatpush1.msra.mxu0 %v386
      %634 = vmatprep.subr.mxu0 %v416
      %635 = vmatpush1.msra.mxu0 %v415
      %636 = vmatprep.subr.mxu0 %v445
      %637 = vmatpush1.msra.mxu0 %v444
      %638 = vmatprep.subr.mxu0 %v474
      %639 = vmatpush1.msra.mxu0 %v473
      %640 = vmatprep.subr.mxu0 %v503
      %641 = vmatpush1.msra.mxu0 %v502
      %642 = vmatprep.subr.mxu0 %v532
      %643 = vmatpush1.msra.mxu0 %v531
      %644 = vmatprep.subr.mxu0 %v561
      %645 = vmatpush1.msra.mxu0 %v560
      %646 = vmatprep.subr.mxu0 %v590
      %647 = vmatpush1.msra.mxu0 %v589
      %648 = vmatprep.subr.mxu0 0.0
      %649 = vmatpush1.msra.mxu0 0.0
      %650 = vmatprep.subr.mxu0 0.0
      %651 = vmatpush1.msra.mxu0 0.0
      %652 = vmatprep.subr.mxu0 0.0
      %653 = vmatpush1.msra.mxu0 0.0
      %654 = vmatprep.subr.mxu0 0.0
      %655 = vmatpush1.msra.mxu0 0.0
      %656 = vmatprep.subr.mxu0 0.0
      %657 = vmatpush1.msra.mxu0 0.0
      %658 = vmatprep.subr.mxu0 0.0
      %659 = vmatpush1.msra.mxu0 0.0
      %660 = vmatprep.subr.mxu0 0.0
      %661 = vmatpush1.msra.mxu0 0.0
      %662 = vmatprep.subr.mxu0 0.0
      %663 = vmatpush1.msra.mxu0 0.0
      %664 = vmatprep.subr.mxu0 0.0
      %665 = vmatpush1.msra.mxu0 0.0
      %666 = vmatprep.subr.mxu0 0.0
      %667 = vmatpush1.msra.mxu0 0.0
      %668 = vmatprep.subr.mxu0 0.0
      %669 = vmatpush1.msra.mxu0 0.0
      %670 = vmatprep.subr.mxu0 0.0
      %671 = vmatpush1.msra.mxu0 0.0
      %672 = vmatprep.subr.mxu0 0.0
      %673 = vmatpush1.msra.mxu0 0.0
      %674 = vmatprep.subr.mxu0 0.0
      %675 = vmatpush1.msra.mxu0 0.0
      %676 = vmatprep.subr.mxu0 0.0
      %677 = vmatpush1.msra.mxu0 0.0
      %678 = vmatprep.subr.mxu0 0.0
      %679 = vmatpush1.msra.mxu0 0.0
      %680 = vmatprep.subr.mxu0 0.0
      %681 = vmatpush1.msra.mxu0 0.0
      %682 = vmatprep.subr.mxu0 0.0
      %683 = vmatpush1.msra.mxu0 0.0
      %684 = vmatprep.subr.mxu0 0.0
      %685 = vmatpush1.msra.mxu0 0.0
      %686 = vmatprep.mubr.f32.mxu0 0.0
      %687 = vmatmul.mubr.f32.gmra.mrb[0].mxu0 %v620
      %v688 = vpop.f32.mrb[0].mxu0
      %v689 = vadd.f32 0.0, %v688
      %v690 = vpop.f32.mrb[0].mxu0
      %v691 = vadd.f32 0.0, %v690
      %692 = vdwg.mxu0
      %693 = vmatprep.subr.mxu0 %v244
      %694 = vmatpush1.msra.mxu0 %v243
      %695 = vmatprep.subr.mxu0 %v273
      %696 = vmatpush1.msra.mxu0 %v272
      %697 = vmatprep.subr.mxu0 %v302
      %698 = vmatpush1.msra.mxu0 %v301
      %699 = vmatprep.subr.mxu0 %v331
      %700 = vmatpush1.msra.mxu0 %v330
      %701 = vmatprep.subr.mxu0 %v360
      %702 = vmatpush1.msra.mxu0 %v359
      %703 = vmatprep.subr.mxu0 %v389
      %704 = vmatpush1.msra.mxu0 %v388
      %705 = vmatprep.subr.mxu0 %v418
      %706 = vmatpush1.msra.mxu0 %v417
      %707 = vmatprep.subr.mxu0 %v447
      %708 = vmatpush1.msra.mxu0 %v446
      %709 = vmatprep.subr.mxu0 %v476
      %710 = vmatpush1.msra.mxu0 %v475
      %711 = vmatprep.subr.mxu0 %v505
      %712 = vmatpush1.msra.mxu0 %v504
      %713 = vmatprep.subr.mxu0 %v534
      %714 = vmatpush1.msra.mxu0 %v533
      %715 = vmatprep.subr.mxu0 %v563
      %716 = vmatpush1.msra.mxu0 %v562
      %717 = vmatprep.subr.mxu0 %v592
      %718 = vmatpush1.msra.mxu0 %v591
      %719 = vmatprep.subr.mxu0 0.0
      %720 = vmatpush1.msra.mxu0 0.0
      %721 = vmatprep.subr.mxu0 0.0
      %722 = vmatpush1.msra.mxu0 0.0
      %723 = vmatprep.subr.mxu0 0.0
      %724 = vmatpush1.msra.mxu0 0.0
      %725 = vmatprep.subr.mxu0 0.0
      %726 = vmatpush1.msra.mxu0 0.0
      %727 = vmatprep.subr.mxu0 0.0
      %728 = vmatpush1.msra.mxu0 0.0
      %729 = vmatprep.subr.mxu0 0.0
      %730 = vmatpush1.msra.mxu0 0.0
      %731 = vmatprep.subr.mxu0 0.0
      %732 = vmatpush1.msra.mxu0 0.0
      %733 = vmatprep.subr.mxu0 0.0
      %734 = vmatpush1.msra.mxu0 0.0
      %735 = vmatprep.subr.mxu0 0.0
      %736 = vmatpush1.msra.mxu0 0.0
      %737 = vmatprep.subr.mxu0 0.0
      %738 = vmatpush1.msra.mxu0 0.0
      %739 = vmatprep.subr.mxu0 0.0
      %740 = vmatpush1.msra.mxu0 0.0
      %741 = vmatprep.subr.mxu0 0.0
      %742 = vmatpush1.msra.mxu0 0.0
      %743 = vmatprep.subr.mxu0 0.0
      %744 = vmatpush1.msra.mxu0 0.0
      %745 = vmatprep.subr.mxu0 0.0
      %746 = vmatpush1.msra.mxu0 0.0
      %747 = vmatprep.subr.mxu0 0.0
      %748 = vmatpush1.msra.mxu0 0.0
      %749 = vmatprep.subr.mxu0 0.0
      %750 = vmatpush1.msra.mxu0 0.0
      %751 = vmatprep.subr.mxu0 0.0
      %752 = vmatpush1.msra.mxu0 0.0
      %753 = vmatprep.subr.mxu0 0.0
      %754 = vmatpush1.msra.mxu0 0.0
      %755 = vmatprep.subr.mxu0 0.0
      %756 = vmatpush1.msra.mxu0 0.0
      %757 = vmatprep.mubr.f32.mxu0 0.0
      %758 = vmatmul.mubr.f32.gmra.mrb[0].mxu0 %v620
      %v759 = vpop.f32.mrb[0].mxu0
      %v760 = vadd.f32 0.0, %v759
      %v761 = vpop.f32.mrb[0].mxu0
      %v762 = vadd.f32 0.0, %v761
      %763 = vdwg.mxu0
      %764 = vmatprep.subr.mxu0 %v246
      %765 = vmatpush1.msra.mxu0 %v245
      %766 = vmatprep.subr.mxu0 %v275
      %767 = vmatpush1.msra.mxu0 %v274
      %768 = vmatprep.subr.mxu0 %v304
      %769 = vmatpush1.msra.mxu0 %v303
      %770 = vmatprep.subr.mxu0 %v333
      %771 = vmatpush1.msra.mxu0 %v332
      %772 = vmatprep.subr.mxu0 %v362
      %773 = vmatpush1.msra.mxu0 %v361
      %774 = vmatprep.subr.mxu0 %v391
      %775 = vmatpush1.msra.mxu0 %v390
      %776 = vmatprep.subr.mxu0 %v420
      %777 = vmatpush1.msra.mxu0 %v419
      %778 = vmatprep.subr.mxu0 %v449
      %779 = vmatpush1.msra.mxu0 %v448
      %780 = vmatprep.subr.mxu0 %v478
      %781 = vmatpush1.msra.mxu0 %v477
      %782 = vmatprep.subr.mxu0 %v507
      %783 = vmatpush1.msra.mxu0 %v506
      %784 = vmatprep.subr.mxu0 %v536
      %785 = vmatpush1.msra.mxu0 %v535
      %786 = vmatprep.subr.mxu0 %v565
      %787 = vmatpush1.msra.mxu0 %v564
      %788 = vmatprep.subr.mxu0 %v594
      %789 = vmatpush1.msra.mxu0 %v593
      %790 = vmatprep.subr.mxu0 0.0
      %791 = vmatpush1.msra.mxu0 0.0
      %792 = vmatprep.subr.mxu0 0.0
      %793 = vmatpush1.msra.mxu0 0.0
      %794 = vmatprep.subr.mxu0 0.0
      %795 = vmatpush1.msra.mxu0 0.0
      %796 = vmatprep.subr.mxu0 0.0
      %797 = vmatpush1.msra.mxu0 0.0
      %798 = vmatprep.subr.mxu0 0.0
      %799 = vmatpush1.msra.mxu0 0.0
      %800 = vmatprep.subr.mxu0 0.0
      %801 = vmatpush1.msra.mxu0 0.0
      %802 = vmatprep.subr.mxu0 0.0
      %803 = vmatpush1.msra.mxu0 0.0
      %804 = vmatprep.subr.mxu0 0.0
      %805 = vmatpush1.msra.mxu0 0.0
      %806 = vmatprep.subr.mxu0 0.0
      %807 = vmatpush1.msra.mxu0 0.0
      %808 = vmatprep.subr.mxu0 0.0
      %809 = vmatpush1.msra.mxu0 0.0
      %810 = vmatprep.subr.mxu0 0.0
      %811 = vmatpush1.msra.mxu0 0.0
      %812 = vmatprep.subr.mxu0 0.0
      %813 = vmatpush1.msra.mxu0 0.0
      %814 = vmatprep.subr.mxu0 0.0
      %815 = vmatpush1.msra.mxu0 0.0
      %816 = vmatprep.subr.mxu0 0.0
      %817 = vmatpush1.msra.mxu0 0.0
      %818 = vmatprep.subr.mxu0 0.0
      %819 = vmatpush1.msra.mxu0 0.0
      %820 = vmatprep.subr.mxu0 0.0
      %821 = vmatpush1.msra.mxu0 0.0
      %822 = vmatprep.subr.mxu0 0.0
      %823 = vmatpush1.msra.mxu0 0.0
      %824 = vmatprep.subr.mxu0 0.0
      %825 = vmatpush1.msra.mxu0 0.0
      %826 = vmatprep.subr.mxu0 0.0
      %827 = vmatpush1.msra.mxu0 0.0
      %828 = vmatprep.mubr.f32.mxu0 0.0
      %829 = vmatmul.mubr.f32.gmra.mrb[0].mxu0 %v620
      %v830 = vpop.f32.mrb[0].mxu0
      %v831 = vadd.f32 0.0, %v830
      %v832 = vpop.f32.mrb[0].mxu0
      %v833 = vadd.f32 0.0, %v832
      %834 = vdwg.mxu0
      %835 = vmatprep.subr.mxu0 %v248
      %836 = vmatpush1.msra.mxu0 %v247
      %837 = vmatprep.subr.mxu0 %v277
      %838 = vmatpush1.msra.mxu0 %v276
      %839 = vmatprep.subr.mxu0 %v306
      %840 = vmatpush1.msra.mxu0 %v305
      %841 = vmatprep.subr.mxu0 %v335
      %842 = vmatpush1.msra.mxu0 %v334
      %843 = vmatprep.subr.mxu0 %v364
      %844 = vmatpush1.msra.mxu0 %v363
      %845 = vmatprep.subr.mxu0 %v393
      %846 = vmatpush1.msra.mxu0 %v392
      %847 = vmatprep.subr.mxu0 %v422
      %848 = vmatpush1.msra.mxu0 %v421
      %849 = vmatprep.subr.mxu0 %v451
      %850 = vmatpush1.msra.mxu0 %v450
      %851 = vmatprep.subr.mxu0 %v480
      %852 = vmatpush1.msra.mxu0 %v479
      %853 = vmatprep.subr.mxu0 %v509
      %854 = vmatpush1.msra.mxu0 %v508
      %855 = vmatprep.subr.mxu0 %v538
      %856 = vmatpush1.msra.mxu0 %v537
      %857 = vmatprep.subr.mxu0 %v567
      %858 = vmatpush1.msra.mxu0 %v566
      %859 = vmatprep.subr.mxu0 %v596
      %860 = vmatpush1.msra.mxu0 %v595
      %861 = vmatprep.subr.mxu0 0.0
      %862 = vmatpush1.msra.mxu0 0.0
      %863 = vmatprep.subr.mxu0 0.0
      %864 = vmatpush1.msra.mxu0 0.0
      %865 = vmatprep.subr.mxu0 0.0
      %866 = vmatpush1.msra.mxu0 0.0
      %867 = vmatprep.subr.mxu0 0.0
      %868 = vmatpush1.msra.mxu0 0.0
      %869 = vmatprep.subr.mxu0 0.0
      %870 = vmatpush1.msra.mxu0 0.0
      %871 = vmatprep.subr.mxu0 0.0
      %872 = vmatpush1.msra.mxu0 0.0
      %873 = vmatprep.subr.mxu0 0.0
      %874 = vmatpush1.msra.mxu0 0.0
      %875 = vmatprep.subr.mxu0 0.0
      %876 = vmatpush1.msra.mxu0 0.0
      %877 = vmatprep.subr.mxu0 0.0
      %878 = vmatpush1.msra.mxu0 0.0
      %879 = vmatprep.subr.mxu0 0.0
      %880 = vmatpush1.msra.mxu0 0.0
      %881 = vmatprep.subr.mxu0 0.0
      %882 = vmatpush1.msra.mxu0 0.0
      %883 = vmatprep.subr.mxu0 0.0
      %884 = vmatpush1.msra.mxu0 0.0
      %885 = vmatprep.subr.mxu0 0.0
      %886 = vmatpush1.msra.mxu0 0.0
      %887 = vmatprep.subr.mxu0 0.0
      %888 = vmatpush1.msra.mxu0 0.0
      %889 = vmatprep.subr.mxu0 0.0
      %890 = vmatpush1.msra.mxu0 0.0
      %891 = vmatprep.subr.mxu0 0.0
      %892 = vmatpush1.msra.mxu0 0.0
      %893 = vmatprep.subr.mxu0 0.0
      %894 = vmatpush1.msra.mxu0 0.0
      %895 = vmatprep.subr.mxu0 0.0
      %896 = vmatpush1.msra.mxu0 0.0
      %897 = vmatprep.subr.mxu0 0.0
      %898 = vmatpush1.msra.mxu0 0.0
      %899 = vmatprep.mubr.f32.mxu0 0.0
      %900 = vmatmul.mubr.f32.gmra.mrb[0].mxu0 %v620
      %v901 = vpop.f32.mrb[0].mxu0
      %v902 = vadd.f32 0.0, %v901
      %v903 = vpop.f32.mrb[0].mxu0
      %v904 = vadd.f32 0.0, %v903
      %905 = vdwg.mxu0
      %906 = vmatprep.subr.mxu0 %v250
      %907 = vmatpush1.msra.mxu0 %v249
      %908 = vmatprep.subr.mxu0 %v279
      %909 = vmatpush1.msra.mxu0 %v278
      %910 = vmatprep.subr.mxu0 %v308
      %911 = vmatpush1.msra.mxu0 %v307
      %912 = vmatprep.subr.mxu0 %v337
      %913 = vmatpush1.msra.mxu0 %v336
      %914 = vmatprep.subr.mxu0 %v366
      %915 = vmatpush1.msra.mxu0 %v365
      %916 = vmatprep.subr.mxu0 %v395
      %917 = vmatpush1.msra.mxu0 %v394
      %918 = vmatprep.subr.mxu0 %v424
      %919 = vmatpush1.msra.mxu0 %v423
      %920 = vmatprep.subr.mxu0 %v453
      %921 = vmatpush1.msra.mxu0 %v452
      %922 = vmatprep.subr.mxu0 %v482
      %923 = vmatpush1.msra.mxu0 %v481
      %924 = vmatprep.subr.mxu0 %v511
      %925 = vmatpush1.msra.mxu0 %v510
      %926 = vmatprep.subr.mxu0 %v540
      %927 = vmatpush1.msra.mxu0 %v539
      %928 = vmatprep.subr.mxu0 %v569
      %929 = vmatpush1.msra.mxu0 %v568
      %930 = vmatprep.subr.mxu0 %v598
      %931 = vmatpush1.msra.mxu0 %v597
      %932 = vmatprep.subr.mxu0 0.0
      %933 = vmatpush1.msra.mxu0 0.0
      %934 = vmatprep.subr.mxu0 0.0
      %935 = vmatpush1.msra.mxu0 0.0
      %936 = vmatprep.subr.mxu0 0.0
      %937 = vmatpush1.msra.mxu0 0.0
      %938 = vmatprep.subr.mxu0 0.0
      %939 = vmatpush1.msra.mxu0 0.0
      %940 = vmatprep.subr.mxu0 0.0
      %941 = vmatpush1.msra.mxu0 0.0
      %942 = vmatprep.subr.mxu0 0.0
      %943 = vmatpush1.msra.mxu0 0.0
      %944 = vmatprep.subr.mxu0 0.0
      %945 = vmatpush1.msra.mxu0 0.0
      %946 = vmatprep.subr.mxu0 0.0
      %947 = vmatpush1.msra.mxu0 0.0
      %948 = vmatprep.subr.mxu0 0.0
      %949 = vmatpush1.msra.mxu0 0.0
      %950 = vmatprep.subr.mxu0 0.0
      %951 = vmatpush1.msra.mxu0 0.0
      %952 = vmatprep.subr.mxu0 0.0
      %953 = vmatpush1.msra.mxu0 0.0
      %954 = vmatprep.subr.mxu0 0.0
      %955 = vmatpush1.msra.mxu0 0.0
      %956 = vmatprep.subr.mxu0 0.0
      %957 = vmatpush1.msra.mxu0 0.0
      %958 = vmatprep.subr.mxu0 0.0
      %959 = vmatpush1.msra.mxu0 0.0
      %960 = vmatprep.subr.mxu0 0.0
      %961 = vmatpush1.msra.mxu0 0.0
      %962 = vmatprep.subr.mxu0 0.0
      %963 = vmatpush1.msra.mxu0 0.0
      %964 = vmatprep.subr.mxu0 0.0
      %965 = vmatpush1.msra.mxu0 0.0
      %966 = vmatprep.subr.mxu0 0.0
      %967 = vmatpush1.msra.mxu0 0.0
      %968 = vmatprep.subr.mxu0 0.0
      %969 = vmatpush1.msra.mxu0 0.0
      %970 = vmatprep.mubr.f32.mxu0 0.0
      %971 = vmatmul.mubr.f32.gmra.mrb[0].mxu0 %v620
      %v972 = vpop.f32.mrb[0].mxu0
      %v973 = vadd.f32 0.0, %v972
      %v974 = vpop.f32.mrb[0].mxu0
      %v975 = vadd.f32 0.0, %v974
      %976 = vdwg.mxu0
      %977 = vmatprep.subr.mxu0 %v252
      %978 = vmatpush1.msra.mxu0 %v251
      %979 = vmatprep.subr.mxu0 %v281
      %980 = vmatpush1.msra.mxu0 %v280
      %981 = vmatprep.subr.mxu0 %v310
      %982 = vmatpush1.msra.mxu0 %v309
      %983 = vmatprep.subr.mxu0 %v339
      %984 = vmatpush1.msra.mxu0 %v338
      %985 = vmatprep.subr.mxu0 %v368
      %986 = vmatpush1.msra.mxu0 %v367
      %987 = vmatprep.subr.mxu0 %v397
      %988 = vmatpush1.msra.mxu0 %v396
      %989 = vmatprep.subr.mxu0 %v426
      %990 = vmatpush1.msra.mxu0 %v425
      %991 = vmatprep.subr.mxu0 %v455
      %992 = vmatpush1.msra.mxu0 %v454
      %993 = vmatprep.subr.mxu0 %v484
      %994 = vmatpush1.msra.mxu0 %v483
      %995 = vmatprep.subr.mxu0 %v513
      %996 = vmatpush1.msra.mxu0 %v512
      %997 = vmatprep.subr.mxu0 %v542
      %998 = vmatpush1.msra.mxu0 %v541
      %999 = vmatprep.subr.mxu0 %v571
      %1000 = vmatpush1.msra.mxu0 %v570
      %1001 = vmatprep.subr.mxu0 %v600
      %1002 = vmatpush1.msra.mxu0 %v599
      %1003 = vmatprep.subr.mxu0 0.0
      %1004 = vmatpush1.msra.mxu0 0.0
      %1005 = vmatprep.subr.mxu0 0.0
      %1006 = vmatpush1.msra.mxu0 0.0
      %1007 = vmatprep.subr.mxu0 0.0
      %1008 = vmatpush1.msra.mxu0 0.0
      %1009 = vmatprep.subr.mxu0 0.0
      %1010 = vmatpush1.msra.mxu0 0.0
      %1011 = vmatprep.subr.mxu0 0.0
      %1012 = vmatpush1.msra.mxu0 0.0
      %1013 = vmatprep.subr.mxu0 0.0
      %1014 = vmatpush1.msra.mxu0 0.0
      %1015 = vmatprep.subr.mxu0 0.0
      %1016 = vmatpush1.msra.mxu0 0.0
      %1017 = vmatprep.subr.mxu0 0.0
      %1018 = vmatpush1.msra.mxu0 0.0
      %1019 = vmatprep.subr.mxu0 0.0
      %1020 = vmatpush1.msra.mxu0 0.0
      %1021 = vmatprep.subr.mxu0 0.0
      %1022 = vmatpush1.msra.mxu0 0.0
      %1023 = vmatprep.subr.mxu0 0.0
      %1024 = vmatpush1.msra.mxu0 0.0
      %1025 = vmatprep.subr.mxu0 0.0
      %1026 = vmatpush1.msra.mxu0 0.0
      %1027 = vmatprep.subr.mxu0 0.0
      %1028 = vmatpush1.msra.mxu0 0.0
      %1029 = vmatprep.subr.mxu0 0.0
      %1030 = vmatpush1.msra.mxu0 0.0
      %1031 = vmatprep.subr.mxu0 0.0
      %1032 = vmatpush1.msra.mxu0 0.0
      %1033 = vmatprep.subr.mxu0 0.0
      %1034 = vmatpush1.msra.mxu0 0.0
      %1035 = vmatprep.subr.mxu0 0.0
      %1036 = vmatpush1.msra.mxu0 0.0
      %1037 = vmatprep.subr.mxu0 0.0
      %1038 = vmatpush1.msra.mxu0 0.0
      %1039 = vmatprep.subr.mxu0 0.0
      %1040 = vmatpush1.msra.mxu0 0.0
      %1041 = vmatprep.mubr.f32.mxu0 0.0
      %1042 = vmatmul.mubr.f32.gmra.mrb[0].mxu0 %v620
      %v1043 = vpop.f32.mrb[0].mxu0
      %v1044 = vadd.f32 0.0, %v1043
      %v1045 = vpop.f32.mrb[0].mxu0
      %v1046 = vadd.f32 0.0, %v1045
      %1047 = vdwg.mxu0
      %1048 = vmatprep.subr.mxu0 %v254
      %1049 = vmatpush1.msra.mxu0 %v253
      %1050 = vmatprep.subr.mxu0 %v283
      %1051 = vmatpush1.msra.mxu0 %v282
      %1052 = vmatprep.subr.mxu0 %v312
      %1053 = vmatpush1.msra.mxu0 %v311
      %1054 = vmatprep.subr.mxu0 %v341
      %1055 = vmatpush1.msra.mxu0 %v340
      %1056 = vmatprep.subr.mxu0 %v370
      %1057 = vmatpush1.msra.mxu0 %v369
      %1058 = vmatprep.subr.mxu0 %v399
      %1059 = vmatpush1.msra.mxu0 %v398
      %1060 = vmatprep.subr.mxu0 %v428
      %1061 = vmatpush1.msra.mxu0 %v427
      %1062 = vmatprep.subr.mxu0 %v457
      %1063 = vmatpush1.msra.mxu0 %v456
      %1064 = vmatprep.subr.mxu0 %v486
      %1065 = vmatpush1.msra.mxu0 %v485
      %1066 = vmatprep.subr.mxu0 %v515
      %1067 = vmatpush1.msra.mxu0 %v514
      %1068 = vmatprep.subr.mxu0 %v544
      %1069 = vmatpush1.msra.mxu0 %v543
      %1070 = vmatprep.subr.mxu0 %v573
      %1071 = vmatpush1.msra.mxu0 %v572
      %1072 = vmatprep.subr.mxu0 %v602
      %1073 = vmatpush1.msra.mxu0 %v601
      %1074 = vmatprep.subr.mxu0 0.0
      %1075 = vmatpush1.msra.mxu0 0.0
      %1076 = vmatprep.subr.mxu0 0.0
      %1077 = vmatpush1.msra.mxu0 0.0
      %1078 = vmatprep.subr.mxu0 0.0
      %1079 = vmatpush1.msra.mxu0 0.0
      %1080 = vmatprep.subr.mxu0 0.0
      %1081 = vmatpush1.msra.mxu0 0.0
      %1082 = vmatprep.subr.mxu0 0.0
      %1083 = vmatpush1.msra.mxu0 0.0
      %1084 = vmatprep.subr.mxu0 0.0
      %1085 = vmatpush1.msra.mxu0 0.0
      %1086 = vmatprep.subr.mxu0 0.0
      %1087 = vmatpush1.msra.mxu0 0.0
      %1088 = vmatprep.subr.mxu0 0.0
      %1089 = vmatpush1.msra.mxu0 0.0
      %1090 = vmatprep.subr.mxu0 0.0
      %1091 = vmatpush1.msra.mxu0 0.0
      %1092 = vmatprep.subr.mxu0 0.0
      %1093 = vmatpush1.msra.mxu0 0.0
      %1094 = vmatprep.subr.mxu0 0.0
      %1095 = vmatpush1.msra.mxu0 0.0
      %1096 = vmatprep.subr.mxu0 0.0
      %1097 = vmatpush1.msra.mxu0 0.0
      %1098 = vmatprep.subr.mxu0 0.0
      %1099 = vmatpush1.msra.mxu0 0.0
      %1100 = vmatprep.subr.mxu0 0.0
      %1101 = vmatpush1.msra.mxu0 0.0
      %1102 = vmatprep.subr.mxu0 0.0
      %1103 = vmatpush1.msra.mxu0 0.0
      %1104 = vmatprep.subr.mxu0 0.0
      %1105 = vmatpush1.msra.mxu0 0.0
      %1106 = vmatprep.subr.mxu0 0.0
      %1107 = vmatpush1.msra.mxu0 0.0
      %1108 = vmatprep.subr.mxu0 0.0
      %1109 = vmatpush1.msra.mxu0 0.0
      %1110 = vmatprep.subr.mxu0 0.0
      %1111 = vmatpush1.msra.mxu0 0.0
      %1112 = vmatprep.mubr.f32.mxu0 0.0
      %1113 = vmatmul.mubr.f32.gmra.mrb[0].mxu0 %v620
      %v1114 = vpop.f32.mrb[0].mxu0
      %v1115 = vadd.f32 0.0, %v1114
      %v1116 = vpop.f32.mrb[0].mxu0
      %v1117 = vadd.f32 0.0, %v1116
      %1118 = vdwg.mxu0
      %1119 = vmatprep.subr.mxu0 %v256
      %1120 = vmatpush1.msra.mxu0 %v255
      %1121 = vmatprep.subr.mxu0 %v285
      %1122 = vmatpush1.msra.mxu0 %v284
      %1123 = vmatprep.subr.mxu0 %v314
      %1124 = vmatpush1.msra.mxu0 %v313
      %1125 = vmatprep.subr.mxu0 %v343
      %1126 = vmatpush1.msra.mxu0 %v342
      %1127 = vmatprep.subr.mxu0 %v372
      %1128 = vmatpush1.msra.mxu0 %v371
      %1129 = vmatprep.subr.mxu0 %v401
      %1130 = vmatpush1.msra.mxu0 %v400
      %1131 = vmatprep.subr.mxu0 %v430
      %1132 = vmatpush1.msra.mxu0 %v429
      %1133 = vmatprep.subr.mxu0 %v459
      %1134 = vmatpush1.msra.mxu0 %v458
      %1135 = vmatprep.subr.mxu0 %v488
      %1136 = vmatpush1.msra.mxu0 %v487
      %1137 = vmatprep.subr.mxu0 %v517
      %1138 = vmatpush1.msra.mxu0 %v516
      %1139 = vmatprep.subr.mxu0 %v546
      %1140 = vmatpush1.msra.mxu0 %v545
      %1141 = vmatprep.subr.mxu0 %v575
      %1142 = vmatpush1.msra.mxu0 %v574
      %1143 = vmatprep.subr.mxu0 %v604
      %1144 = vmatpush1.msra.mxu0 %v603
      %1145 = vmatprep.subr.mxu0 0.0
      %1146 = vmatpush1.msra.mxu0 0.0
      %1147 = vmatprep.subr.mxu0 0.0
      %1148 = vmatpush1.msra.mxu0 0.0
      %1149 = vmatprep.subr.mxu0 0.0
      %1150 = vmatpush1.msra.mxu0 0.0
      %1151 = vmatprep.subr.mxu0 0.0
      %1152 = vmatpush1.msra.mxu0 0.0
      %1153 = vmatprep.subr.mxu0 0.0
      %1154 = vmatpush1.msra.mxu0 0.0
      %1155 = vmatprep.subr.mxu0 0.0
      %1156 = vmatpush1.msra.mxu0 0.0
      %1157 = vmatprep.subr.mxu0 0.0
      %1158 = vmatpush1.msra.mxu0 0.0
      %1159 = vmatprep.subr.mxu0 0.0
      %1160 = vmatpush1.msra.mxu0 0.0
      %1161 = vmatprep.subr.mxu0 0.0
      %1162 = vmatpush1.msra.mxu0 0.0
      %1163 = vmatprep.subr.mxu0 0.0
      %1164 = vmatpush1.msra.mxu0 0.0
      %1165 = vmatprep.subr.mxu0 0.0
      %1166 = vmatpush1.msra.mxu0 0.0
      %1167 = vmatprep.subr.mxu0 0.0
      %1168 = vmatpush1.msra.mxu0 0.0
      %1169 = vmatprep.subr.mxu0 0.0
      %1170 = vmatpush1.msra.mxu0 0.0
      %1171 = vmatprep.subr.mxu0 0.0
      %1172 = vmatpush1.msra.mxu0 0.0
      %1173 = vmatprep.subr.mxu0 0.0
      %1174 = vmatpush1.msra.mxu0 0.0
      %1175 = vmatprep.subr.mxu0 0.0
      %1176 = vmatpush1.msra.mxu0 0.0
      %1177 = vmatprep.subr.mxu0 0.0
      %1178 = vmatpush1.msra.mxu0 0.0
      %1179 = vmatprep.subr.mxu0 0.0
      %1180 = vmatpush1.msra.mxu0 0.0
      %1181 = vmatprep.subr.mxu0 0.0
      %1182 = vmatpush1.msra.mxu0 0.0
      %1183 = vmatprep.mubr.f32.mxu0 0.0
      %1184 = vmatmul.mubr.f32.gmra.mrb[0].mxu0 %v620
      %v1185 = vpop.f32.mrb[0].mxu0
      %v1186 = vadd.f32 0.0, %v1185
      %v1187 = vpop.f32.mrb[0].mxu0
      %v1188 = vadd.f32 0.0, %v1187
      %1189 = vdwg.mxu0
      %1190 = vmatprep.subr.mxu0 %v258
      %1191 = vmatpush1.msra.mxu0 %v257
      %1192 = vmatprep.subr.mxu0 %v287
      %1193 = vmatpush1.msra.mxu0 %v286
      %1194 = vmatprep.subr.mxu0 %v316
      %1195 = vmatpush1.msra.mxu0 %v315
      %1196 = vmatprep.subr.mxu0 %v345
      %1197 = vmatpush1.msra.mxu0 %v344
      %1198 = vmatprep.subr.mxu0 %v374
      %1199 = vmatpush1.msra.mxu0 %v373
      %1200 = vmatprep.subr.mxu0 %v403
      %1201 = vmatpush1.msra.mxu0 %v402
      %1202 = vmatprep.subr.mxu0 %v432
      %1203 = vmatpush1.msra.mxu0 %v431
      %1204 = vmatprep.subr.mxu0 %v461
      %1205 = vmatpush1.msra.mxu0 %v460
      %1206 = vmatprep.subr.mxu0 %v490
      %1207 = vmatpush1.msra.mxu0 %v489
      %1208 = vmatprep.subr.mxu0 %v519
      %1209 = vmatpush1.msra.mxu0 %v518
      %1210 = vmatprep.subr.mxu0 %v548
      %1211 = vmatpush1.msra.mxu0 %v547
      %1212 = vmatprep.subr.mxu0 %v577
      %1213 = vmatpush1.msra.mxu0 %v576
      %1214 = vmatprep.subr.mxu0 %v606
      %1215 = vmatpush1.msra.mxu0 %v605
      %1216 = vmatprep.subr.mxu0 0.0
      %1217 = vmatpush1.msra.mxu0 0.0
      %1218 = vmatprep.subr.mxu0 0.0
      %1219 = vmatpush1.msra.mxu0 0.0
      %1220 = vmatprep.subr.mxu0 0.0
      %1221 = vmatpush1.msra.mxu0 0.0
      %1222 = vmatprep.subr.mxu0 0.0
      %1223 = vmatpush1.msra.mxu0 0.0
      %1224 = vmatprep.subr.mxu0 0.0
      %1225 = vmatpush1.msra.mxu0 0.0
      %1226 = vmatprep.subr.mxu0 0.0
      %1227 = vmatpush1.msra.mxu0 0.0
      %1228 = vmatprep.subr.mxu0 0.0
      %1229 = vmatpush1.msra.mxu0 0.0
      %1230 = vmatprep.subr.mxu0 0.0
      %1231 = vmatpush1.msra.mxu0 0.0
      %1232 = vmatprep.subr.mxu0 0.0
      %1233 = vmatpush1.msra.mxu0 0.0
      %1234 = vmatprep.subr.mxu0 0.0
      %1235 = vmatpush1.msra.mxu0 0.0
      %1236 = vmatprep.subr.mxu0 0.0
      %1237 = vmatpush1.msra.mxu0 0.0
      %1238 = vmatprep.subr.mxu0 0.0
      %1239 = vmatpush1.msra.mxu0 0.0
      %1240 = vmatprep.subr.mxu0 0.0
      %1241 = vmatpush1.msra.mxu0 0.0
      %1242 = vmatprep.subr.mxu0 0.0
      %1243 = vmatpush1.msra.mxu0 0.0
      %1244 = vmatprep.subr.mxu0 0.0
      %1245 = vmatpush1.msra.mxu0 0.0
      %1246 = vmatprep.subr.mxu0 0.0
      %1247 = vmatpush1.msra.mxu0 0.0
      %1248 = vmatprep.subr.mxu0 0.0
      %1249 = vmatpush1.msra.mxu0 0.0
      %1250 = vmatprep.subr.mxu0 0.0
      %1251 = vmatpush1.msra.mxu0 0.0
      %1252 = vmatprep.subr.mxu0 0.0
      %1253 = vmatpush1.msra.mxu0 0.0
      %1254 = vmatprep.mubr.f32.mxu0 0.0
      %1255 = vmatmul.mubr.f32.gmra.mrb[0].mxu0 %v620
      %v1256 = vpop.f32.mrb[0].mxu0
      %v1257 = vadd.f32 0.0, %v1256
      %v1258 = vpop.f32.mrb[0].mxu0
      %v1259 = vadd.f32 0.0, %v1258
      %1260 = vdwg.mxu0
      %1261 = vmatprep.subr.mxu0 %v260
      %1262 = vmatpush1.msra.mxu0 %v259
      %1263 = vmatprep.subr.mxu0 %v289
      %1264 = vmatpush1.msra.mxu0 %v288
      %1265 = vmatprep.subr.mxu0 %v318
      %1266 = vmatpush1.msra.mxu0 %v317
      %1267 = vmatprep.subr.mxu0 %v347
      %1268 = vmatpush1.msra.mxu0 %v346
      %1269 = vmatprep.subr.mxu0 %v376
      %1270 = vmatpush1.msra.mxu0 %v375
      %1271 = vmatprep.subr.mxu0 %v405
      %1272 = vmatpush1.msra.mxu0 %v404
      %1273 = vmatprep.subr.mxu0 %v434
      %1274 = vmatpush1.msra.mxu0 %v433
      %1275 = vmatprep.subr.mxu0 %v463
      %1276 = vmatpush1.msra.mxu0 %v462
      %1277 = vmatprep.subr.mxu0 %v492
      %1278 = vmatpush1.msra.mxu0 %v491
      %1279 = vmatprep.subr.mxu0 %v521
      %1280 = vmatpush1.msra.mxu0 %v520
      %1281 = vmatprep.subr.mxu0 %v550
      %1282 = vmatpush1.msra.mxu0 %v549
      %1283 = vmatprep.subr.mxu0 %v579
      %1284 = vmatpush1.msra.mxu0 %v578
      %1285 = vmatprep.subr.mxu0 %v608
      %1286 = vmatpush1.msra.mxu0 %v607
      %1287 = vmatprep.subr.mxu0 0.0
      %1288 = vmatpush1.msra.mxu0 0.0
      %1289 = vmatprep.subr.mxu0 0.0
      %1290 = vmatpush1.msra.mxu0 0.0
      %1291 = vmatprep.subr.mxu0 0.0
      %1292 = vmatpush1.msra.mxu0 0.0
      %1293 = vmatprep.subr.mxu0 0.0
      %1294 = vmatpush1.msra.mxu0 0.0
      %1295 = vmatprep.subr.mxu0 0.0
      %1296 = vmatpush1.msra.mxu0 0.0
      %1297 = vmatprep.subr.mxu0 0.0
      %1298 = vmatpush1.msra.mxu0 0.0
      %1299 = vmatprep.subr.mxu0 0.0
      %1300 = vmatpush1.msra.mxu0 0.0
      %1301 = vmatprep.subr.mxu0 0.0
      %1302 = vmatpush1.msra.mxu0 0.0
      %1303 = vmatprep.subr.mxu0 0.0
      %1304 = vmatpush1.msra.mxu0 0.0
      %1305 = vmatprep.subr.mxu0 0.0
      %1306 = vmatpush1.msra.mxu0 0.0
      %1307 = vmatprep.subr.mxu0 0.0
      %1308 = vmatpush1.msra.mxu0 0.0
      %1309 = vmatprep.subr.mxu0 0.0
      %1310 = vmatpush1.msra.mxu0 0.0
      %1311 = vmatprep.subr.mxu0 0.0
      %1312 = vmatpush1.msra.mxu0 0.0
      %1313 = vmatprep.subr.mxu0 0.0
      %1314 = vmatpush1.msra.mxu0 0.0
      %1315 = vmatprep.subr.mxu0 0.0
      %1316 = vmatpush1.msra.mxu0 0.0
      %1317 = vmatprep.subr.mxu0 0.0
      %1318 = vmatpush1.msra.mxu0 0.0
      %1319 = vmatprep.subr.mxu0 0.0
      %1320 = vmatpush1.msra.mxu0 0.0
      %1321 = vmatprep.subr.mxu0 0.0
      %1322 = vmatpush1.msra.mxu0 0.0
      %1323 = vmatprep.subr.mxu0 0.0
      %1324 = vmatpush1.msra.mxu0 0.0
      %1325 = vmatprep.mubr.f32.mxu0 0.0
      %1326 = vmatmul.mubr.f32.gmra.mrb[0].mxu0 %v620
      %v1327 = vpop.f32.mrb[0].mxu0
      %v1328 = vadd.f32 0.0, %v1327
      %v1329 = vpop.f32.mrb[0].mxu0
      %v1330 = vadd.f32 0.0, %v1329
      %1331 = vdwg.mxu0
      %1332 = vmatprep.subr.mxu0 %v262
      %1333 = vmatpush1.msra.mxu0 %v261
      %1334 = vmatprep.subr.mxu0 %v291
      %1335 = vmatpush1.msra.mxu0 %v290
      %1336 = vmatprep.subr.mxu0 %v320
      %1337 = vmatpush1.msra.mxu0 %v319
      %1338 = vmatprep.subr.mxu0 %v349
      %1339 = vmatpush1.msra.mxu0 %v348
      %1340 = vmatprep.subr.mxu0 %v378
      %1341 = vmatpush1.msra.mxu0 %v377
      %1342 = vmatprep.subr.mxu0 %v407
      %1343 = vmatpush1.msra.mxu0 %v406
      %1344 = vmatprep.subr.mxu0 %v436
      %1345 = vmatpush1.msra.mxu0 %v435
      %1346 = vmatprep.subr.mxu0 %v465
      %1347 = vmatpush1.msra.mxu0 %v464
      %1348 = vmatprep.subr.mxu0 %v494
      %1349 = vmatpush1.msra.mxu0 %v493
      %1350 = vmatprep.subr.mxu0 %v523
      %1351 = vmatpush1.msra.mxu0 %v522
      %1352 = vmatprep.subr.mxu0 %v552
      %1353 = vmatpush1.msra.mxu0 %v551
      %1354 = vmatprep.subr.mxu0 %v581
      %1355 = vmatpush1.msra.mxu0 %v580
      %1356 = vmatprep.subr.mxu0 %v610
      %1357 = vmatpush1.msra.mxu0 %v609
      %1358 = vmatprep.subr.mxu0 0.0
      %1359 = vmatpush1.msra.mxu0 0.0
      %1360 = vmatprep.subr.mxu0 0.0
      %1361 = vmatpush1.msra.mxu0 0.0
      %1362 = vmatprep.subr.mxu0 0.0
      %1363 = vmatpush1.msra.mxu0 0.0
      %1364 = vmatprep.subr.mxu0 0.0
      %1365 = vmatpush1.msra.mxu0 0.0
      %1366 = vmatprep.subr.mxu0 0.0
      %1367 = vmatpush1.msra.mxu0 0.0
      %1368 = vmatprep.subr.mxu0 0.0
      %1369 = vmatpush1.msra.mxu0 0.0
      %1370 = vmatprep.subr.mxu0 0.0
      %1371 = vmatpush1.msra.mxu0 0.0
      %1372 = vmatprep.subr.mxu0 0.0
      %1373 = vmatpush1.msra.mxu0 0.0
      %1374 = vmatprep.subr.mxu0 0.0
      %1375 = vmatpush1.msra.mxu0 0.0
      %1376 = vmatprep.subr.mxu0 0.0
      %1377 = vmatpush1.msra.mxu0 0.0
      %1378 = vmatprep.subr.mxu0 0.0
      %1379 = vmatpush1.msra.mxu0 0.0
      %1380 = vmatprep.subr.mxu0 0.0
      %1381 = vmatpush1.msra.mxu0 0.0
      %1382 = vmatprep.subr.mxu0 0.0
      %1383 = vmatpush1.msra.mxu0 0.0
      %1384 = vmatprep.subr.mxu0 0.0
      %1385 = vmatpush1.msra.mxu0 0.0
      %1386 = vmatprep.subr.mxu0 0.0
      %1387 = vmatpush1.msra.mxu0 0.0
      %1388 = vmatprep.subr.mxu0 0.0
      %1389 = vmatpush1.msra.mxu0 0.0
      %1390 = vmatprep.subr.mxu0 0.0
      %1391 = vmatpush1.msra.mxu0 0.0
      %1392 = vmatprep.subr.mxu0 0.0
      %1393 = vmatpush1.msra.mxu0 0.0
      %1394 = vmatprep.subr.mxu0 0.0
      %1395 = vmatpush1.msra.mxu0 0.0
      %1396 = vmatprep.mubr.f32.mxu0 0.0
      %1397 = vmatmul.mubr.f32.gmra.mrb[0].mxu0 %v620
      %v1398 = vpop.f32.mrb[0].mxu0
      %v1399 = vadd.f32 0.0, %v1398
      %v1400 = vpop.f32.mrb[0].mxu0
      %v1401 = vadd.f32 0.0, %v1400
      %1402 = vdwg.mxu0
      %1403 = vmatprep.subr.mxu0 %v264
      %1404 = vmatpush1.msra.mxu0 %v263
      %1405 = vmatprep.subr.mxu0 %v293
      %1406 = vmatpush1.msra.mxu0 %v292
      %1407 = vmatprep.subr.mxu0 %v322
      %1408 = vmatpush1.msra.mxu0 %v321
      %1409 = vmatprep.subr.mxu0 %v351
      %1410 = vmatpush1.msra.mxu0 %v350
      %1411 = vmatprep.subr.mxu0 %v380
      %1412 = vmatpush1.msra.mxu0 %v379
      %1413 = vmatprep.subr.mxu0 %v409
      %1414 = vmatpush1.msra.mxu0 %v408
      %1415 = vmatprep.subr.mxu0 %v438
      %1416 = vmatpush1.msra.mxu0 %v437
      %1417 = vmatprep.subr.mxu0 %v467
      %1418 = vmatpush1.msra.mxu0 %v466
      %1419 = vmatprep.subr.mxu0 %v496
      %1420 = vmatpush1.msra.mxu0 %v495
      %1421 = vmatprep.subr.mxu0 %v525
      %1422 = vmatpush1.msra.mxu0 %v524
      %1423 = vmatprep.subr.mxu0 %v554
      %1424 = vmatpush1.msra.mxu0 %v553
      %1425 = vmatprep.subr.mxu0 %v583
      %1426 = vmatpush1.msra.mxu0 %v582
      %1427 = vmatprep.subr.mxu0 %v612
      %1428 = vmatpush1.msra.mxu0 %v611
      %1429 = vmatprep.subr.mxu0 0.0
      %1430 = vmatpush1.msra.mxu0 0.0
      %1431 = vmatprep.subr.mxu0 0.0
      %1432 = vmatpush1.msra.mxu0 0.0
      %1433 = vmatprep.subr.mxu0 0.0
      %1434 = vmatpush1.msra.mxu0 0.0
      %1435 = vmatprep.subr.mxu0 0.0
      %1436 = vmatpush1.msra.mxu0 0.0
      %1437 = vmatprep.subr.mxu0 0.0
      %1438 = vmatpush1.msra.mxu0 0.0
      %1439 = vmatprep.subr.mxu0 0.0
      %1440 = vmatpush1.msra.mxu0 0.0
      %1441 = vmatprep.subr.mxu0 0.0
      %1442 = vmatpush1.msra.mxu0 0.0
      %1443 = vmatprep.subr.mxu0 0.0
      %1444 = vmatpush1.msra.mxu0 0.0
      %1445 = vmatprep.subr.mxu0 0.0
      %1446 = vmatpush1.msra.mxu0 0.0
      %1447 = vmatprep.subr.mxu0 0.0
      %1448 = vmatpush1.msra.mxu0 0.0
      %1449 = vmatprep.subr.mxu0 0.0
      %1450 = vmatpush1.msra.mxu0 0.0
      %1451 = vmatprep.subr.mxu0 0.0
      %1452 = vmatpush1.msra.mxu0 0.0
      %1453 = vmatprep.subr.mxu0 0.0
      %1454 = vmatpush1.msra.mxu0 0.0
      %1455 = vmatprep.subr.mxu0 0.0
      %1456 = vmatpush1.msra.mxu0 0.0
      %1457 = vmatprep.subr.mxu0 0.0
      %1458 = vmatpush1.msra.mxu0 0.0
      %1459 = vmatprep.subr.mxu0 0.0
      %1460 = vmatpush1.msra.mxu0 0.0
      %1461 = vmatprep.subr.mxu0 0.0
      %1462 = vmatpush1.msra.mxu0 0.0
      %1463 = vmatprep.subr.mxu0 0.0
      %1464 = vmatpush1.msra.mxu0 0.0
      %1465 = vmatprep.subr.mxu0 0.0
      %1466 = vmatpush1.msra.mxu0 0.0
      %1467 = vmatprep.mubr.f32.mxu0 0.0
      %1468 = vmatmul.mubr.f32.gmra.mrb[0].mxu0 %v620
      %v1469 = vpop.f32.mrb[0].mxu0
      %v1470 = vadd.f32 0.0, %v1469
      %v1471 = vpop.f32.mrb[0].mxu0
      %v1472 = vadd.f32 0.0, %v1471
      %1473 = vdwg.mxu0
      %1474 = vmatprep.subr.mxu0 %v266
      %1475 = vmatpush1.msra.mxu0 %v265
      %1476 = vmatprep.subr.mxu0 %v295
      %1477 = vmatpush1.msra.mxu0 %v294
      %1478 = vmatprep.subr.mxu0 %v324
      %1479 = vmatpush1.msra.mxu0 %v323
      %1480 = vmatprep.subr.mxu0 %v353
      %1481 = vmatpush1.msra.mxu0 %v352
      %1482 = vmatprep.subr.mxu0 %v382
      %1483 = vmatpush1.msra.mxu0 %v381
      %1484 = vmatprep.subr.mxu0 %v411
      %1485 = vmatpush1.msra.mxu0 %v410
      %1486 = vmatprep.subr.mxu0 %v440
      %1487 = vmatpush1.msra.mxu0 %v439
      %1488 = vmatprep.subr.mxu0 %v469
      %1489 = vmatpush1.msra.mxu0 %v468
      %1490 = vmatprep.subr.mxu0 %v498
      %1491 = vmatpush1.msra.mxu0 %v497
      %1492 = vmatprep.subr.mxu0 %v527
      %1493 = vmatpush1.msra.mxu0 %v526
      %1494 = vmatprep.subr.mxu0 %v556
      %1495 = vmatpush1.msra.mxu0 %v555
      %1496 = vmatprep.subr.mxu0 %v585
      %1497 = vmatpush1.msra.mxu0 %v584
      %1498 = vmatprep.subr.mxu0 %v614
      %1499 = vmatpush1.msra.mxu0 %v613
      %1500 = vmatprep.subr.mxu0 0.0
      %1501 = vmatpush1.msra.mxu0 0.0
      %1502 = vmatprep.subr.mxu0 0.0
      %1503 = vmatpush1.msra.mxu0 0.0
      %1504 = vmatprep.subr.mxu0 0.0
      %1505 = vmatpush1.msra.mxu0 0.0
      %1506 = vmatprep.subr.mxu0 0.0
      %1507 = vmatpush1.msra.mxu0 0.0
      %1508 = vmatprep.subr.mxu0 0.0
      %1509 = vmatpush1.msra.mxu0 0.0
      %1510 = vmatprep.subr.mxu0 0.0
      %1511 = vmatpush1.msra.mxu0 0.0
      %1512 = vmatprep.subr.mxu0 0.0
      %1513 = vmatpush1.msra.mxu0 0.0
      %1514 = vmatprep.subr.mxu0 0.0
      %1515 = vmatpush1.msra.mxu0 0.0
      %1516 = vmatprep.subr.mxu0 0.0
      %1517 = vmatpush1.msra.mxu0 0.0
      %1518 = vmatprep.subr.mxu0 0.0
      %1519 = vmatpush1.msra.mxu0 0.0
      %1520 = vmatprep.subr.mxu0 0.0
      %1521 = vmatpush1.msra.mxu0 0.0
      %1522 = vmatprep.subr.mxu0 0.0
      %1523 = vmatpush1.msra.mxu0 0.0
      %1524 = vmatprep.subr.mxu0 0.0
      %1525 = vmatpush1.msra.mxu0 0.0
      %1526 = vmatprep.subr.mxu0 0.0
      %1527 = vmatpush1.msra.mxu0 0.0
      %1528 = vmatprep.subr.mxu0 0.0
      %1529 = vmatpush1.msra.mxu0 0.0
      %1530 = vmatprep.subr.mxu0 0.0
      %1531 = vmatpush1.msra.mxu0 0.0
      %1532 = vmatprep.subr.mxu0 0.0
      %1533 = vmatpush1.msra.mxu0 0.0
      %1534 = vmatprep.subr.mxu0 0.0
      %1535 = vmatpush1.msra.mxu0 0.0
      %1536 = vmatprep.subr.mxu0 0.0
      %1537 = vmatpush1.msra.mxu0 0.0
      %1538 = vmatprep.mubr.f32.mxu0 0.0
      %1539 = vmatmul.mubr.f32.gmra.mrb[0].mxu0 %v620
      %v1540 = vpop.f32.mrb[0].mxu0
      %v1541 = vadd.f32 0.0, %v1540
      %v1542 = vpop.f32.mrb[0].mxu0
      %v1543 = vadd.f32 0.0, %v1542
      %1544 = vdwg.mxu0
      %1545 = vmatprep.subr.mxu0 %v268
      %1546 = vmatpush1.msra.mxu0 %v267
      %1547 = vmatprep.subr.mxu0 %v297
      %1548 = vmatpush1.msra.mxu0 %v296
      %1549 = vmatprep.subr.mxu0 %v326
      %1550 = vmatpush1.msra.mxu0 %v325
      %1551 = vmatprep.subr.mxu0 %v355
      %1552 = vmatpush1.msra.mxu0 %v354
      %1553 = vmatprep.subr.mxu0 %v384
      %1554 = vmatpush1.msra.mxu0 %v383
      %1555 = vmatprep.subr.mxu0 %v413
      %1556 = vmatpush1.msra.mxu0 %v412
      %1557 = vmatprep.subr.mxu0 %v442
      %1558 = vmatpush1.msra.mxu0 %v441
      %1559 = vmatprep.subr.mxu0 %v471
      %1560 = vmatpush1.msra.mxu0 %v470
      %1561 = vmatprep.subr.mxu0 %v500
      %1562 = vmatpush1.msra.mxu0 %v499
      %1563 = vmatprep.subr.mxu0 %v529
      %1564 = vmatpush1.msra.mxu0 %v528
      %1565 = vmatprep.subr.mxu0 %v558
      %1566 = vmatpush1.msra.mxu0 %v557
      %1567 = vmatprep.subr.mxu0 %v587
      %1568 = vmatpush1.msra.mxu0 %v586
      %1569 = vmatprep.subr.mxu0 %v616
      %1570 = vmatpush1.msra.mxu0 %v615
      %1571 = vmatprep.subr.mxu0 0.0
      %1572 = vmatpush1.msra.mxu0 0.0
      %1573 = vmatprep.subr.mxu0 0.0
      %1574 = vmatpush1.msra.mxu0 0.0
      %1575 = vmatprep.subr.mxu0 0.0
      %1576 = vmatpush1.msra.mxu0 0.0
      %1577 = vmatprep.subr.mxu0 0.0
      %1578 = vmatpush1.msra.mxu0 0.0
      %1579 = vmatprep.subr.mxu0 0.0
      %1580 = vmatpush1.msra.mxu0 0.0
      %1581 = vmatprep.subr.mxu0 0.0
      %1582 = vmatpush1.msra.mxu0 0.0
      %1583 = vmatprep.subr.mxu0 0.0
      %1584 = vmatpush1.msra.mxu0 0.0
      %1585 = vmatprep.subr.mxu0 0.0
      %1586 = vmatpush1.msra.mxu0 0.0
      %1587 = vmatprep.subr.mxu0 0.0
      %1588 = vmatpush1.msra.mxu0 0.0
      %1589 = vmatprep.subr.mxu0 0.0
      %1590 = vmatpush1.msra.mxu0 0.0
      %1591 = vmatprep.subr.mxu0 0.0
      %1592 = vmatpush1.msra.mxu0 0.0
      %1593 = vmatprep.subr.mxu0 0.0
      %1594 = vmatpush1.msra.mxu0 0.0
      %1595 = vmatprep.subr.mxu0 0.0
      %1596 = vmatpush1.msra.mxu0 0.0
      %1597 = vmatprep.subr.mxu0 0.0
      %1598 = vmatpush1.msra.mxu0 0.0
      %1599 = vmatprep.subr.mxu0 0.0
      %1600 = vmatpush1.msra.mxu0 0.0
      %1601 = vmatprep.subr.mxu0 0.0
      %1602 = vmatpush1.msra.mxu0 0.0
      %1603 = vmatprep.subr.mxu0 0.0
      %1604 = vmatpush1.msra.mxu0 0.0
      %1605 = vmatprep.subr.mxu0 0.0
      %1606 = vmatpush1.msra.mxu0 0.0
      %1607 = vmatprep.subr.mxu0 0.0
      %1608 = vmatpush1.msra.mxu0 0.0
      %1609 = vmatprep.mubr.f32.mxu0 0.0
      %1610 = vmatmul.mubr.f32.gmra.mrb[0].mxu0 %v620
      %v1611 = vpop.f32.mrb[0].mxu0
      %v1612 = vadd.f32 0.0, %v1611
      %v1613 = vpop.f32.mrb[0].mxu0
      %v1614 = vadd.f32 0.0, %v1613
      %1615 = vdwg.mxu0
      %1616 = vmatprep.subr.mxu0 0.0
      %1617 = vmatpush1.msra.mxu0 %v269
      %1618 = vmatprep.subr.mxu0 0.0
      %1619 = vmatpush1.msra.mxu0 %v298
      %1620 = vmatprep.subr.mxu0 0.0
      %1621 = vmatpush1.msra.mxu0 %v327
      %1622 = vmatprep.subr.mxu0 0.0
      %1623 = vmatpush1.msra.mxu0 %v356
      %1624 = vmatprep.subr.mxu0 0.0
      %1625 = vmatpush1.msra.mxu0 %v385
      %1626 = vmatprep.subr.mxu0 0.0
      %1627 = vmatpush1.msra.mxu0 %v414
      %1628 = vmatprep.subr.mxu0 0.0
      %1629 = vmatpush1.msra.mxu0 %v443
      %1630 = vmatprep.subr.mxu0 0.0
      %1631 = vmatpush1.msra.mxu0 %v472
      %1632 = vmatprep.subr.mxu0 0.0
      %1633 = vmatpush1.msra.mxu0 %v501
      %1634 = vmatprep.subr.mxu0 0.0
      %1635 = vmatpush1.msra.mxu0 %v530
      %1636 = vmatprep.subr.mxu0 0.0
      %1637 = vmatpush1.msra.mxu0 %v559
      %1638 = vmatprep.subr.mxu0 0.0
      %1639 = vmatpush1.msra.mxu0 %v588
      %1640 = vmatprep.subr.mxu0 0.0
      %1641 = vmatpush1.msra.mxu0 %v617
      %1642 = vmatprep.subr.mxu0 0.0
      %1643 = vmatpush1.msra.mxu0 0.0
      %1644 = vmatprep.subr.mxu0 0.0
      %1645 = vmatpush1.msra.mxu0 0.0
      %1646 = vmatprep.subr.mxu0 0.0
      %1647 = vmatpush1.msra.mxu0 0.0
      %1648 = vmatprep.subr.mxu0 0.0
      %1649 = vmatpush1.msra.mxu0 0.0
      %1650 = vmatprep.subr.mxu0 0.0
      %1651 = vmatpush1.msra.mxu0 0.0
      %1652 = vmatprep.subr.mxu0 0.0
      %1653 = vmatpush1.msra.mxu0 0.0
      %1654 = vmatprep.subr.mxu0 0.0
      %1655 = vmatpush1.msra.mxu0 0.0
      %1656 = vmatprep.subr.mxu0 0.0
      %1657 = vmatpush1.msra.mxu0 0.0
      %1658 = vmatprep.subr.mxu0 0.0
      %1659 = vmatpush1.msra.mxu0 0.0
      %1660 = vmatprep.subr.mxu0 0.0
      %1661 = vmatpush1.msra.mxu0 0.0
      %1662 = vmatprep.subr.mxu0 0.0
      %1663 = vmatpush1.msra.mxu0 0.0
      %1664 = vmatprep.subr.mxu0 0.0
      %1665 = vmatpush1.msra.mxu0 0.0
      %1666 = vmatprep.subr.mxu0 0.0
      %1667 = vmatpush1.msra.mxu0 0.0
      %1668 = vmatprep.subr.mxu0 0.0
      %1669 = vmatpush1.msra.mxu0 0.0
      %1670 = vmatprep.subr.mxu0 0.0
      %1671 = vmatpush1.msra.mxu0 0.0
      %1672 = vmatprep.subr.mxu0 0.0
      %1673 = vmatpush1.msra.mxu0 0.0
      %1674 = vmatprep.subr.mxu0 0.0
      %1675 = vmatpush1.msra.mxu0 0.0
      %1676 = vmatprep.subr.mxu0 0.0
      %1677 = vmatpush1.msra.mxu0 0.0
      %1678 = vmatprep.subr.mxu0 0.0
      %1679 = vmatpush1.msra.mxu0 0.0
      %1680 = vmatprep.mubr.f32.mxu0 0.0
      %1681 = vmatmul.mubr.f32.gmra.mrb[0].mxu0 %v620
      %v1682 = vpop.f32.mrb[0].mxu0
      %v1683 = vadd.f32 0.0, %v1682
      %v1684 = vpop.f32.mrb[0].mxu0
      %1685 = vdwg.mxu0
      %v1686 = vld [vmem:[#allocation2] sm:$0xff]
      %v1687 = vld [vmem:[#allocation2 + $0x8] sm:$0xff]
      %v1688 = vld [vmem:[#allocation2 + $0x10] sm:$0xff]
      %v1689 = vld [vmem:[#allocation2 + $0x18] sm:$0xff]
      %v1690 = vld [vmem:[#allocation2 + $0x20] sm:$0xff]
      %v1691 = vld [vmem:[#allocation2 + $0x28] sm:$0xff]
      %v1692 = vld [vmem:[#allocation2 + $0x30] sm:$0xff]
      %v1693 = vld [vmem:[#allocation2 + $0x38] sm:$0xff]
      %v1694 = vld [vmem:[#allocation2 + $0x40] sm:$0xff]
      %v1695 = vld [vmem:[#allocation2 + $0x48] sm:$0xff]
      %v1696 = vld [vmem:[#allocation2 + $0x50] sm:$0xff]
      %v1697 = vld [vmem:[#allocation2 + $0x58] sm:$0xff]
      %v1698 = vld [vmem:[#allocation2 + $0x60] sm:$0xff]
      %v1699 = vld [vmem:[#allocation2 + $0x68] sm:$0xff]
      %v1700 = vld [vmem:[#allocation2 + $0x70] sm:$0xff]
      %v1701 = vld [vmem:[#allocation2 + $0x78] sm:$0xff]
      %v1702 = vld [vmem:[#allocation2 + $0x80] sm:$0xff]
      %v1703 = vld [vmem:[#allocation2 + $0x88] sm:$0xff]
      %v1704 = vld [vmem:[#allocation2 + $0x90] sm:$0xff]
      %v1705 = vld [vmem:[#allocation2 + $0x98] sm:$0xff]
      %v1706 = vld [vmem:[#allocation2 + $0xa0] sm:$0xff]
      %v1707 = vld [vmem:[#allocation2 + $0xa8] sm:$0xff]
      %v1708 = vld [vmem:[#allocation2 + $0xb0] sm:$0xff]
      %v1709 = vld [vmem:[#allocation2 + $0xb8] sm:$0xff]
      %v1710 = vld [vmem:[#allocation2 + $0xc0] sm:$0xff]
      %v1711 = vld [vmem:[#allocation2 + $0xc8] sm:$0xff]
      %v1712 = vld [vmem:[#allocation2 + $0xd0] sm:$0xff]
      %v1713 = vld [vmem:[#allocation2 + $0xd8] sm:$0xff]
      %v1714 = vld [vmem:[#allocation2 + $0xe0] sm:$0xff]
      %v1715 = vadd.f32 %v1686, %v689
      %v1716 = vadd.f32 %v1687, %v691
      %v1717 = vadd.f32 %v1688, %v760
      %v1718 = vadd.f32 %v1689, %v762
      %v1719 = vadd.f32 %v1690, %v831
      %v1720 = vadd.f32 %v1691, %v833
      %v1721 = vadd.f32 %v1692, %v902
      %v1722 = vadd.f32 %v1693, %v904
      %v1723 = vadd.f32 %v1694, %v973
      %v1724 = vadd.f32 %v1695, %v975
      %v1725 = vadd.f32 %v1696, %v1044
      %v1726 = vadd.f32 %v1697, %v1046
      %v1727 = vadd.f32 %v1698, %v1115
      %v1728 = vadd.f32 %v1699, %v1117
      %v1729 = vadd.f32 %v1700, %v1186
      %v1730 = vadd.f32 %v1701, %v1188
      %v1731 = vadd.f32 %v1702, %v1257
      %v1732 = vadd.f32 %v1703, %v1259
      %v1733 = vadd.f32 %v1704, %v1328
      %v1734 = vadd.f32 %v1705, %v1330
      %v1735 = vadd.f32 %v1706, %v1399
      %v1736 = vadd.f32 %v1707, %v1401
      %v1737 = vadd.f32 %v1708, %v1470
      %v1738 = vadd.f32 %v1709, %v1472
      %v1739 = vadd.f32 %v1710, %v1541
      %v1740 = vadd.f32 %v1711, %v1543
      %v1741 = vadd.f32 %v1712, %v1612
      %v1742 = vadd.f32 %v1713, %v1614
      %v1743 = vadd.f32 %v1714, %v1683
      %v1744 = vld [vmem:[%s2] sm:$0xff]
      %1746 = vset.pattern.permute.xlu0 0
      %1747 = vperm.xlu0 %1746, %v1744
      %v1748 = vpop.permute.xlu0 %1747
      %v1750 = vadd.f32 %v1715, %v1748
      %v1751 = vadd.f32 %v1716, %v1748
      %v1752 = vadd.f32 %v1717, %v1748
      %v1753 = vadd.f32 %v1718, %v1748
      %v1754 = vadd.f32 %v1719, %v1748
      %v1755 = vadd.f32 %v1720, %v1748
      %v1756 = vadd.f32 %v1721, %v1748
      %v1757 = vadd.f32 %v1722, %v1748
      %v1758 = vadd.f32 %v1723, %v1748
      %v1759 = vadd.f32 %v1724, %v1748
      %v1760 = vadd.f32 %v1725, %v1748
      %v1761 = vadd.f32 %v1726, %v1748
      %v1762 = vadd.f32 %v1727, %v1748
      %v1763 = vadd.f32 %v1728, %v1748
      %v1764 = vadd.f32 %v1729, %v1748
      %v1765 = vadd.f32 %v1730, %v1748
      %v1766 = vadd.f32 %v1731, %v1748
      %v1767 = vadd.f32 %v1732, %v1748
      %v1768 = vadd.f32 %v1733, %v1748
      %v1769 = vadd.f32 %v1734, %v1748
      %v1770 = vadd.f32 %v1735, %v1748
      %v1771 = vadd.f32 %v1736, %v1748
      %v1772 = vadd.f32 %v1737, %v1748
      %v1773 = vadd.f32 %v1738, %v1748
      %v1774 = vadd.f32 %v1739, %v1748
      %v1775 = vadd.f32 %v1740, %v1748
      %v1776 = vadd.f32 %v1741, %v1748
      %v1777 = vadd.f32 %v1742, %v1748
      %v1778 = vadd.f32 %v1743, %v1748
      %vm1779 = vcmp.gt.f32.partialorder %v1750, 1.0
      %vm1780 = vcmp.gt.f32.partialorder %v1751, 1.0
      %vm1781 = vcmp.gt.f32.partialorder %v1752, 1.0
      %vm1782 = vcmp.gt.f32.partialorder %v1753, 1.0
      %vm1783 = vcmp.gt.f32.partialorder %v1754, 1.0
      %vm1784 = vcmp.gt.f32.partialorder %v1755, 1.0
      %vm1785 = vcmp.gt.f32.partialorder %v1756, 1.0
      %vm1786 = vcmp.gt.f32.partialorder %v1757, 1.0
      %vm1787 = vcmp.gt.f32.partialorder %v1758, 1.0
      %vm1788 = vcmp.gt.f32.partialorder %v1759, 1.0
      %vm1789 = vcmp.gt.f32.partialorder %v1760, 1.0
      %vm1790 = vcmp.gt.f32.partialorder %v1761, 1.0
      %vm1791 = vcmp.gt.f32.partialorder %v1762, 1.0
      %vm1792 = vcmp.gt.f32.partialorder %v1763, 1.0
      %vm1793 = vcmp.gt.f32.partialorder %v1764, 1.0
      %vm1794 = vcmp.gt.f32.partialorder %v1765, 1.0
      %vm1795 = vcmp.gt.f32.partialorder %v1766, 1.0
      %vm1796 = vcmp.gt.f32.partialorder %v1767, 1.0
      %vm1797 = vcmp.gt.f32.partialorder %v1768, 1.0
      %vm1798 = vcmp.gt.f32.partialorder %v1769, 1.0
      %vm1799 = vcmp.gt.f32.partialorder %v1770, 1.0
      %vm1800 = vcmp.gt.f32.partialorder %v1771, 1.0
      %vm1801 = vcmp.gt.f32.partialorder %v1772, 1.0
      %vm1802 = vcmp.gt.f32.partialorder %v1773, 1.0
      %vm1803 = vcmp.gt.f32.partialorder %v1774, 1.0
      %vm1804 = vcmp.gt.f32.partialorder %v1775, 1.0
      %vm1805 = vcmp.gt.f32.partialorder %v1776, 1.0
      %vm1806 = vcmp.gt.f32.partialorder %v1777, 1.0
      %vm1807 = vcmp.gt.f32.partialorder %v1778, 1.0
      %v1808 = vsel %vm1779, 1, 0
      %v1809 = vsel %vm1780, 1, 0
      %v1810 = vsel %vm1781, 1, 0
      %v1811 = vsel %vm1782, 1, 0
      %v1812 = vsel %vm1783, 1, 0
      %v1813 = vsel %vm1784, 1, 0
      %v1814 = vsel %vm1785, 1, 0
      %v1815 = vsel %vm1786, 1, 0
      %v1816 = vsel %vm1787, 1, 0
      %v1817 = vsel %vm1788, 1, 0
      %v1818 = vsel %vm1789, 1, 0
      %v1819 = vsel %vm1790, 1, 0
      %v1820 = vsel %vm1791, 1, 0
      %v1821 = vsel %vm1792, 1, 0
      %v1822 = vsel %vm1793, 1, 0
      %v1823 = vsel %vm1794, 1, 0
      %v1824 = vsel %vm1795, 1, 0
      %v1825 = vsel %vm1796, 1, 0
      %v1826 = vsel %vm1797, 1, 0
      %v1827 = vsel %vm1798, 1, 0
      %v1828 = vsel %vm1799, 1, 0
      %v1829 = vsel %vm1800, 1, 0
      %v1830 = vsel %vm1801, 1, 0
      %v1831 = vsel %vm1802, 1, 0
      %v1832 = vsel %vm1803, 1, 0
      %v1833 = vsel %vm1804, 1, 0
      %v1834 = vsel %vm1805, 1, 0
      %v1835 = vsel %vm1806, 1, 0
      %v1836 = vsel %vm1807, 1, 0
      %v1837 = vcvt.s32.f32 %v1808
      %v1838 = vcvt.s32.f32 %v1809
      %v1839 = vcvt.s32.f32 %v1810
      %v1840 = vcvt.s32.f32 %v1811
      %v1841 = vcvt.s32.f32 %v1812
      %v1842 = vcvt.s32.f32 %v1813
      %v1843 = vcvt.s32.f32 %v1814
      %v1844 = vcvt.s32.f32 %v1815
      %v1845 = vcvt.s32.f32 %v1816
      %v1846 = vcvt.s32.f32 %v1817
      %v1847 = vcvt.s32.f32 %v1818
      %v1848 = vcvt.s32.f32 %v1819
      %v1849 = vcvt.s32.f32 %v1820
      %v1850 = vcvt.s32.f32 %v1821
      %v1851 = vcvt.s32.f32 %v1822
      %v1852 = vcvt.s32.f32 %v1823
      %v1853 = vcvt.s32.f32 %v1824
      %v1854 = vcvt.s32.f32 %v1825
      %v1855 = vcvt.s32.f32 %v1826
      %v1856 = vcvt.s32.f32 %v1827
      %v1857 = vcvt.s32.f32 %v1828
      %v1858 = vcvt.s32.f32 %v1829
      %v1859 = vcvt.s32.f32 %v1830
      %v1860 = vcvt.s32.f32 %v1831
      %v1861 = vcvt.s32.f32 %v1832
      %v1862 = vcvt.s32.f32 %v1833
      %v1863 = vcvt.s32.f32 %v1834
      %v1864 = vcvt.s32.f32 %v1835
      %v1865 = vcvt.s32.f32 %v1836
      %1866 = vst [vmem:[%s206] sm:$0xff] %v1837
      %1867 = vst [vmem:[%s206 + $0x8] sm:$0xff] %v1838
      %1868 = vst [vmem:[%s206 + $0x10] sm:$0xff] %v1839
      %1869 = vst [vmem:[%s206 + $0x18] sm:$0xff] %v1840
      %1870 = vst [vmem:[%s206 + $0x20] sm:$0xff] %v1841
      %1871 = vst [vmem:[%s206 + $0x28] sm:$0xff] %v1842
      %1872 = vst [vmem:[%s206 + $0x30] sm:$0xff] %v1843
      %1873 = vst [vmem:[%s206 + $0x38] sm:$0xff] %v1844
      %1874 = vst [vmem:[%s206 + $0x40] sm:$0xff] %v1845
      %1875 = vst [vmem:[%s206 + $0x48] sm:$0xff] %v1846
      %1876 = vst [vmem:[%s206 + $0x50] sm:$0xff] %v1847
      %1877 = vst [vmem:[%s206 + $0x58] sm:$0xff] %v1848
      %1878 = vst [vmem:[%s206 + $0x60] sm:$0xff] %v1849
      %1879 = vst [vmem:[%s206 + $0x68] sm:$0xff] %v1850
      %1880 = vst [vmem:[%s206 + $0x70] sm:$0xff] %v1851
      %1881 = vst [vmem:[%s206 + $0x78] sm:$0xff] %v1852
      %1882 = vst [vmem:[%s206 + $0x80] sm:$0xff] %v1853
      %1883 = vst [vmem:[%s206 + $0x88] sm:$0xff] %v1854
      %1884 = vst [vmem:[%s206 + $0x90] sm:$0xff] %v1855
      %1885 = vst [vmem:[%s206 + $0x98] sm:$0xff] %v1856
      %1886 = vst [vmem:[%s206 + $0xa0] sm:$0xff] %v1857
      %1887 = vst [vmem:[%s206 + $0xa8] sm:$0xff] %v1858
      %1888 = vst [vmem:[%s206 + $0xb0] sm:$0xff] %v1859
      %1889 = vst [vmem:[%s206 + $0xb8] sm:$0xff] %v1860
      %1890 = vst [vmem:[%s206 + $0xc0] sm:$0xff] %v1861
      %1891 = vst [vmem:[%s206 + $0xc8] sm:$0xff] %v1862
      %1892 = vst [vmem:[%s206 + $0xd0] sm:$0xff] %v1863
      %1893 = vst [vmem:[%s206 + $0xd8] sm:$0xff] %v1864
      %1894 = vst [vmem:[%s206 + $0xe0] sm:$0xff] %v1865
      %v1895 = vsel %vm1779, 0.0, %v1750
      %v1896 = vsel %vm1780, 0.0, %v1751
      %v1897 = vsel %vm1781, 0.0, %v1752
      %v1898 = vsel %vm1782, 0.0, %v1753
      %v1899 = vsel %vm1783, 0.0, %v1754
      %v1900 = vsel %vm1784, 0.0, %v1755
      %v1901 = vsel %vm1785, 0.0, %v1756
      %v1902 = vsel %vm1786, 0.0, %v1757
      %v1903 = vsel %vm1787, 0.0, %v1758
      %v1904 = vsel %vm1788, 0.0, %v1759
      %v1905 = vsel %vm1789, 0.0, %v1760
      %v1906 = vsel %vm1790, 0.0, %v1761
      %v1907 = vsel %vm1791, 0.0, %v1762
      %v1908 = vsel %vm1792, 0.0, %v1763
      %v1909 = vsel %vm1793, 0.0, %v1764
      %v1910 = vsel %vm1794, 0.0, %v1765
      %v1911 = vsel %vm1795, 0.0, %v1766
      %v1912 = vsel %vm1796, 0.0, %v1767
      %v1913 = vsel %vm1797, 0.0, %v1768
      %v1914 = vsel %vm1798, 0.0, %v1769
      %v1915 = vsel %vm1799, 0.0, %v1770
      %v1916 = vsel %vm1800, 0.0, %v1771
      %v1917 = vsel %vm1801, 0.0, %v1772
      %v1918 = vsel %vm1802, 0.0, %v1773
      %v1919 = vsel %vm1803, 0.0, %v1774
      %v1920 = vsel %vm1804, 0.0, %v1775
      %v1921 = vsel %vm1805, 0.0, %v1776
      %v1922 = vsel %vm1806, 0.0, %v1777
      %v1923 = vsel %vm1807, 0.0, %v1778
      %1924 = vst [vmem:[#allocation2] sm:$0xff] %v1895
      %1925 = vst [vmem:[#allocation2 + $0x8] sm:$0xff] %v1896
      %1926 = vst [vmem:[#allocation2 + $0x10] sm:$0xff] %v1897
      %1927 = vst [vmem:[#allocation2 + $0x18] sm:$0xff] %v1898
      %1928 = vst [vmem:[#allocation2 + $0x20] sm:$0xff] %v1899
      %1929 = vst [vmem:[#allocation2 + $0x28] sm:$0xff] %v1900
      %1930 = vst [vmem:[#allocation2 + $0x30] sm:$0xff] %v1901
      %1931 = vst [vmem:[#allocation2 + $0x38] sm:$0xff] %v1902
      %1932 = vst [vmem:[#allocation2 + $0x40] sm:$0xff] %v1903
      %1933 = vst [vmem:[#allocation2 + $0x48] sm:$0xff] %v1904
      %1934 = vst [vmem:[#allocation2 + $0x50] sm:$0xff] %v1905
      %1935 = vst [vmem:[#allocation2 + $0x58] sm:$0xff] %v1906
      %1936 = vst [vmem:[#allocation2 + $0x60] sm:$0xff] %v1907
      %1937 = vst [vmem:[#allocation2 + $0x68] sm:$0xff] %v1908
      %1938 = vst [vmem:[#allocation2 + $0x70] sm:$0xff] %v1909
      %1939 = vst [vmem:[#allocation2 + $0x78] sm:$0xff] %v1910
      %1940 = vst [vmem:[#allocation2 + $0x80] sm:$0xff] %v1911
      %1941 = vst [vmem:[#allocation2 + $0x88] sm:$0xff] %v1912
      %1942 = vst [vmem:[#allocation2 + $0x90] sm:$0xff] %v1913
      %1943 = vst [vmem:[#allocation2 + $0x98] sm:$0xff] %v1914
      %1944 = vst [vmem:[#allocation2 + $0xa0] sm:$0xff] %v1915
      %1945 = vst [vmem:[#allocation2 + $0xa8] sm:$0xff] %v1916
      %1946 = vst [vmem:[#allocation2 + $0xb0] sm:$0xff] %v1917
      %1947 = vst [vmem:[#allocation2 + $0xb8] sm:$0xff] %v1918
      %1948 = vst [vmem:[#allocation2 + $0xc0] sm:$0xff] %v1919
      %1949 = vst [vmem:[#allocation2 + $0xc8] sm:$0xff] %v1920
      %1950 = vst [vmem:[#allocation2 + $0xd0] sm:$0xff] %v1921
      %1951 = vst [vmem:[#allocation2 + $0xd8] sm:$0xff] %v1922
      %1952 = vst [vmem:[#allocation2 + $0xe0] sm:$0xff] %v1923
      %p1953 = scmp.lt.s32.totalorder %s18, 1
      %s1954 = scalar_select %p1953, %s18, 1
      %p1955 = scmp.lt.s32.totalorder %s19, 3
      %s1956 = scalar_select %p1955, %s19, 3
      %s1957 = smul.addr %s1956, 29
      %s1958 = smul.addr %s1954, 116
      %s1959 = sadd.s32 %s1957, %s1958
      %s1960 = smul.addr %s1959, 8
      %s1961 = scalar_lea.vmem %s3, %s1960
      // Predicated region
      $region37: #{snn_lstm_forward.6} parent=31 // pred_check
        %p1962 = pneg %p116
      $region38: #{snn_lstm_forward.6} parent=31 // pred_check_branch
        %1964 = sbr.rel (%p1962) target = $region40
      $region39: #{snn_lstm_forward.6} parent=31 // pred_region
        _
      $region40: #{snn_lstm_forward.6} parent=31 // pred_fallthru
        _
    $region32: #{snn_lstm_forward.6} parent=5 // pred_fallthru
      _
    %p1965 = scmp.le.s32.totalorder 2, %s9
    // Predicated region
    $region41: #{snn_lstm_forward.6} parent=5 // pred_check
      %p1966 = pneg %p1965
    $region42: #{snn_lstm_forward.6} parent=5 // pred_check_branch
      %1968 = sbr.rel (%p1966) target = $region44
    $region43: #{snn_lstm_forward.6} parent=5 // pred_region
      %s1969 = ssub.s32 %s9, 2
      // Predicated region
      $region45: #{snn_lstm_forward.6} parent=43 // pred_check
        %p1970 = pneg %p122
      $region46: #{snn_lstm_forward.6} parent=43 // pred_check_branch
        %1972 = sbr.rel (%p1970) target = $region48
      $region47: #{snn_lstm_forward.6} parent=43 // pred_region
        %p1973 = scmp.lt.s32.totalorder %s20, 1
        %s1974 = scalar_select %p1973, %s20, 1
        %p1975 = scmp.lt.s32.totalorder %s21, 3
        %s1976 = scalar_select %p1975, %s21, 3
        %s1977 = smul.addr %s1976, 29
        %s1978 = smul.addr %s1974, 116
        %s1979 = sadd.s32 %s1977, %s1978
        %s1980 = smul.addr %s1979, 8
        %s1981 = scalar_lea.vmem %s3, %s1980
      $region48: #{snn_lstm_forward.6} parent=43 // pred_fallthru
        _
    $region44: #{snn_lstm_forward.6} parent=5 // pred_fallthru
      _
  $region6: #{snn_lstm_forward.6} parent=0 // loop_footer
    %s13 = sadd.s32 1, %s9
  $region7: #{snn_lstm_forward.6} parent=0 // loop_footer_branch
    %8 = sbr.rel target = $region3
  $region8: #{snn_lstm_forward.6} parent=0 // loop_exit
    _

// kernel: snn_lstm_forward.7
$region0: #{snn_lstm_forward.7}
  #allocation0 [shape = 'u32[]', space=smem, size = 0x4, offset = 0x4, fixed_abs, tag = 'smem constant byte address 0x4 - core index']
  #allocation1 [shape = 'u32[144,128]{1,0:T(1,128)}', space=vmem, size = 0x12000, scoped, tag = 'internal scratch']
  #allocation2 [shape = 'f32[8,768]{1,0:T(8,128)}', space=vmem, size = 0x6000, scoped, tag = 'scratch operand']
  %s0 = inlined_call_operand.vmem [shape: f32[2,4,400,768], index: 0, kind: input, shape index: {}]
  %s1 = inlined_call_operand.vmem [shape: f32[8,400], index: 1, kind: input, shape index: {}]
  %s2 = inlined_call_operand.vmem [shape: f32[8,1], index: 2, kind: input, shape index: {}]
  %s3 = inlined_call_operand.vmem [shape: f32[2,4,8,768], index: 3, kind: output, shape index: {}]
  %s4 = sld [smem:[#allocation0]]
  $region49: #{snn_lstm_forward.7} parent=0
    _
  %s6 = ssub.s32 1, %s4
  %s7 = scalar_select 0, %s6, %s4
  loop: start=0, step=1, limit=10
  $region2: #{snn_lstm_forward.7} parent=0 // loop_pre_header
    _
  $region3: #{snn_lstm_forward.7} parent=0 // loop_header
    %s9 = sphi 0, %s13
    %p10 = scmp.ge.s32.totalorder %s9, 10
    %s16 = sphi 0, %s28
    %s17 = sphi 0, %s24
    %s18 = sphi 0, %s16
    %s19 = sphi 0, %s17
    %s20 = sphi 0, %s18
    %s21 = sphi 0, %s19
    %s33 = sphi 0, %s35
    %s36 = sphi 0, %s33
    %s37 = sphi 0, %s36
    %s53 = sphi 0, %s37
    %s57 = sphi 0, %s57
    %s59 = sphi 0, %s57
    %s60 = sphi 0, %s59
    %s74 = sphi 0, %s60
    %s78 = sphi 0, %s78
    %s80 = sphi 0, %s78
    %s81 = sphi 0, %s80
    %s95 = sphi 0, %s81
    %s103 = sphi 0, %s105
    %s106 = sphi 0, %s103
    %s107 = sphi 0, %s106
    %s123 = sphi 0, %s107
  $region4: #{snn_lstm_forward.7} parent=0 // loop_header_branch
    %12 = sbr.rel (%p10) target = $region8
  $region5: #{snn_lstm_forward.7} parent=0 // loop_body
    %s14 = ssub.s32 %s9, 1
    %s15 = ssub.s32 %s9, 2
    %s22 = sadd.s32 1, %s17
    %p23 = scmp.ge.s32.totalorder %s22, 4
    %s24 = scalar_select %p23, 0, %s22
    %s25 = sadd.s32 1, %s16
    %s26 = scalar_select %p23, %s25, %s16
    %p27 = scmp.ge.s32.totalorder %s26, 2
    %s28 = scalar_select %p27, 0, %s26
    %s29 = ssub.s32 %s16, %s28
    %s30 = ssub.s32 %s17, %s24
    %s31 = sor.u32 %s29, %s30
    %p32 = scmp.eq.s32.totalorder %s31, 0
    %s34 = sadd.s32 %s33, 1
    %s35 = scalar_select %p32, %s33, %s34
    %p38 = pneg %p32
    %p39 = scmp.eq.s32.totalorder %s9, 7
    %p40 = por %p38, %p39
    %p41 = scmp.ne.s32.totalorder %s33, %s36
    %p42 = scmp.eq.s32.totalorder %s9, 0
    %p43 = por %p41, %p42
    %p44 = scmp.ne.s32.totalorder %s33, %s36
    %p45 = scmp.eq.s32.totalorder %s14, 7
    %p46 = por %p44, %p45
    %p47 = scmp.ne.s32.totalorder %s36, %s37
    %p48 = scmp.eq.s32.totalorder %s14, 0
    %p49 = por %p47, %p48
    %p50 = scmp.ne.s32.totalorder %s36, %s37
    %p51 = scmp.eq.s32.totalorder %s15, 7
    %p52 = por %p50, %p51
    %p54 = scmp.ne.s32.totalorder %s37, %s53
    %p55 = scmp.eq.s32.totalorder %s15, 0
    %p56 = por %p54, %p55
    %s58 = sadd.s32 %s57, 1
    %p61 = scmp.eq.s32.totalorder %s9, 7
    %p62 = scmp.ne.s32.totalorder %s57, %s59
    %p63 = scmp.eq.s32.totalorder %s9, 0
    %p64 = por %p62, %p63
    %p65 = scmp.ne.s32.totalorder %s57, %s59
    %p66 = scmp.eq.s32.totalorder %s14, 7
    %p67 = por %p65, %p66
    %p68 = scmp.ne.s32.totalorder %s59, %s60
    %p69 = scmp.eq.s32.totalorder %s14, 0
    %p70 = por %p68, %p69
    %p71 = scmp.ne.s32.totalorder %s59, %s60
    %p72 = scmp.eq.s32.totalorder %s15, 7
    %p73 = por %p71, %p72
    %p75 = scmp.ne.s32.totalorder %s60, %s74
    %p76 = scmp.eq.s32.totalorder %s15, 0
    %p77 = por %p75, %p76
    %s79 = sadd.s32 %s78, 1
    %p82 = scmp.eq.s32.totalorder %s9, 7
    %p83 = scmp.ne.s32.totalorder %s78, %s80
    %p84 = scmp.eq.s32.totalorder %s9, 0
    %p85 = por %p83, %p84
    %p86 = scmp.ne.s32.totalorder %s78, %s80
    %p87 = scmp.eq.s32.totalorder %s14, 7
    %p88 = por %p86, %p87
    %p89 = scmp.ne.s32.totalorder %s80, %s81
    %p90 = scmp.eq.s32.totalorder %s14, 0
    %p91 = por %p89, %p90
    %p92 = scmp.ne.s32.totalorder %s80, %s81
    %p93 = scmp.eq.s32.totalorder %s15, 7
    %p94 = por %p92, %p93
    %p96 = scmp.ne.s32.totalorder %s81, %s95
    %p97 = scmp.eq.s32.totalorder %s15, 0
    %p98 = por %p96, %p97
    %s99 = ssub.s32 %s16, %s28
    %s100 = ssub.s32 %s17, %s24
    %s101 = sor.u32 %s99, %s100
    %p102 = scmp.eq.s32.totalorder %s101, 0
    %s104 = sadd.s32 %s103, 1
    %s105 = scalar_select %p102, %s103, %s104
    %p108 = pneg %p102
    %p109 = scmp.eq.s32.totalorder %s9, 7
    %p110 = por %p108, %p109
    %p111 = scmp.ne.s32.totalorder %s103, %s106
    %p112 = scmp.eq.s32.totalorder %s9, 0
    %p113 = por %p111, %p112
    %p114 = scmp.ne.s32.totalorder %s103, %s106
    %p115 = scmp.eq.s32.totalorder %s14, 7
    %p116 = por %p114, %p115
    %p117 = scmp.ne.s32.totalorder %s106, %s107
    %p118 = scmp.eq.s32.totalorder %s14, 0
    %p119 = por %p117, %p118
    %p120 = scmp.ne.s32.totalorder %s106, %s107
    %p121 = scmp.eq.s32.totalorder %s15, 7
    %p122 = por %p120, %p121
    %p124 = scmp.ne.s32.totalorder %s107, %s123
    %p125 = scmp.eq.s32.totalorder %s15, 0
    %p126 = por %p124, %p125
    %p127 = scmp.le.s32.totalorder 1, %s9
    %p128 = scmp.lt.s32.totalorder %s9, 9
    %p129 = pnand %p127, %p128
    %p130 = pneg %p129
    // Predicated region
    $region9: #{snn_lstm_forward.7} parent=5 // pred_check
      _
    $region10: #{snn_lstm_forward.7} parent=5 // pred_check_branch
      %132 = sbr.rel (%p129) target = $region12
    $region11: #{snn_lstm_forward.7} parent=5 // pred_region
      %s133 = ssub.s32 %s9, 1
      // Predicated region
      $region13: #{snn_lstm_forward.7} parent=11 // pred_check
        %p134 = pneg %p70
      $region14: #{snn_lstm_forward.7} parent=11 // pred_check_branch
        %136 = sbr.rel (%p134) target = $region16
      $region15: #{snn_lstm_forward.7} parent=11 // pred_region
        _
      $region16: #{snn_lstm_forward.7} parent=11 // pred_fallthru
        _
      // Predicated region
      $region17: #{snn_lstm_forward.7} parent=11 // pred_check
        %p137 = pneg %p91
      $region18: #{snn_lstm_forward.7} parent=11 // pred_check_branch
        %139 = sbr.rel (%p137) target = $region20
      $region19: #{snn_lstm_forward.7} parent=11 // pred_region
        _
      $region20: #{snn_lstm_forward.7} parent=11 // pred_fallthru
        _
    $region12: #{snn_lstm_forward.7} parent=5 // pred_fallthru
      _
    %p140 = scmp.lt.s32.totalorder %s9, 8
    // Predicated region
    $region21: #{snn_lstm_forward.7} parent=5 // pred_check
      %p141 = pneg %p140
    $region22: #{snn_lstm_forward.7} parent=5 // pred_check_branch
      %143 = sbr.rel (%p141) target = $region24
    $region23: #{snn_lstm_forward.7} parent=5 // pred_region
      // Predicated region
      $region25: #{snn_lstm_forward.7} parent=23 // pred_check
        %p144 = pneg %p43
      $region26: #{snn_lstm_forward.7} parent=23 // pred_check_branch
        %146 = sbr.rel (%p144) target = $region28
      $region27: #{snn_lstm_forward.7} parent=23 // pred_region
        %p147 = scmp.lt.s32.totalorder %s16, 1
        %s148 = scalar_select %p147, %s16, 1
        %p149 = scmp.lt.s32.totalorder %s17, 3
        %s150 = scalar_select %p149, %s17, 3
        %s151 = smul.addr %s150, 300
        %s152 = smul.addr %s148, 1200
        %s153 = sadd.s32 %s151, %s152
        %s154 = smul.addr %s153, 8
        %s155 = scalar_lea.vmem %s0, %s154
      $region28: #{snn_lstm_forward.7} parent=23 // pred_fallthru
        _
    $region24: #{snn_lstm_forward.7} parent=5 // pred_fallthru
      _
    %p156 = scmp.le.s32.totalorder 1, %s9
    %p157 = scmp.lt.s32.totalorder %s9, 9
    %p158 = pnand %p156, %p157
    %p159 = pneg %p158
    // Predicated region
    $region29: #{snn_lstm_forward.7} parent=5 // pred_check
      _
    $region30: #{snn_lstm_forward.7} parent=5 // pred_check_branch
      %161 = sbr.rel (%p158) target = $region32
    $region31: #{snn_lstm_forward.7} parent=5 // pred_region
      %s162 = ssub.s32 %s9, 1
      %p163 = scmp.lt.s32.totalorder %s18, 1
      %s164 = scalar_select %p163, %s18, 1
      %p165 = scmp.lt.s32.totalorder %s19, 3
      %s166 = scalar_select %p165, %s19, 3
      %s167 = smul.addr %s166, 300
      %s168 = smul.addr %s164, 1200
      %s169 = sadd.s32 %s167, %s168
      %s170 = smul.addr %s169, 8
      %s171 = scalar_lea.vmem %s0, %s170
      %p172 = pneg %p49
      %p173 = pneg %p46
      %p174 = pneg %p70
      %p175 = pneg %p67
      %p176 = pneg %p91
      %p177 = pneg %p88
      %p178 = pneg %p119
      %p179 = pneg %p116
      %p180 = scmp.lt.s32.totalorder %s18, 1
      %s181 = scalar_select %p180, %s18, 1
      %p182 = scmp.lt.s32.totalorder %s19, 3
      %s183 = scalar_select %p182, %s19, 3
      %s184 = smul.addr %s183, 6
      %s185 = smul.addr %s181, 24
      %s186 = sadd.s32 %s184, %s185
      %s187 = smul.addr %s186, 8
      %s188 = scalar_lea.vmem %s3, %s187
      %p189 = scmp.lt.s32.totalorder %s18, 1
      %s190 = scalar_select %p189, %s18, 1
      %p191 = scmp.lt.s32.totalorder %s19, 3
      %s192 = scalar_select %p191, %s19, 3
      %s193 = smul.addr %s192, 300
      %s194 = smul.addr %s190, 1200
      %s195 = sadd.s32 %s193, %s194
      %s196 = smul.addr %s195, 8
      %s197 = scalar_lea.vmem %s0, %s196
      %p198 = scmp.lt.s32.totalorder %s18, 1
      %s199 = scalar_select %p198, %s18, 1
      %p200 = scmp.lt.s32.totalorder %s19, 3
      %s201 = scalar_select %p200, %s19, 3
      %s202 = smul.addr %s201, 6
      %s203 = smul.addr %s199, 24
      %s204 = sadd.s32 %s202, %s203
      %s205 = smul.addr %s204, 8
      %s206 = scalar_lea.vmem %s3, %s205
      %p207 = scmp.eq.s32.totalorder %s19, 0
      // Predicated region
      $region33: #{snn_lstm_forward.7} parent=31 // pred_check
        %p208 = pneg %p207
      $region34: #{snn_lstm_forward.7} parent=31 // pred_check_branch
        %210 = sbr.rel (%p208) target = $region36
      $region35: #{snn_lstm_forward.7} parent=31 // pred_region
        %211 = vst [vmem:[#allocation2] sm:$0xff] 0.0
        %212 = vst [vmem:[#allocation2 + $0x8] sm:$0xff] 0.0
        %213 = vst [vmem:[#allocation2 + $0x10] sm:$0xff] 0.0
        %214 = vst [vmem:[#allocation2 + $0x18] sm:$0xff] 0.0
        %215 = vst [vmem:[#allocation2 + $0x20] sm:$0xff] 0.0
        %216 = vst [vmem:[#allocation2 + $0x28] sm:$0xff] 0.0
      $region36: #{snn_lstm_forward.7} parent=31 // pred_fallthru
        _
      %v217 = vld [vmem:[%s1] sm:$0xff]
      %v218 = vld [vmem:[%s1 + $0x8] sm:$0xff]
      %v219 = vld [vmem:[%s1 + $0x10] sm:$0xff]
      %v220 = vld [vmem:[%s1 + $0x18] sm:$0xff]
      %v221 = vld [vmem:[%s197] sm:$0xff]
      %v222 = vld [vmem:[%s197 + $0x8] sm:$0xff]
      %v223 = vld [vmem:[%s197 + $0x10] sm:$0xff]
      %v224 = vld [vmem:[%s197 + $0x18] sm:$0xff]
      %v225 = vld [vmem:[%s197 + $0x20] sm:$0xff]
      %v226 = vld [vmem:[%s197 + $0x28] sm:$0xff]
      %v227 = vld [vmem:[%s197 + $0x30] sm:$0xff]
      %v228 = vld [vmem:[%s197 + $0x38] sm:$0xff]
      %v229 = vld [vmem:[%s197 + $0x40] sm:$0xff]
      %v230 = vld [vmem:[%s197 + $0x48] sm:$0xff]
      %v231 = vld [vmem:[%s197 + $0x50] sm:$0xff]
      %v232 = vld [vmem:[%s197 + $0x58] sm:$0xff]
      %v233 = vld [vmem:[%s197 + $0x60] sm:$0xff]
      %v234 = vld [vmem:[%s197 + $0x68] sm:$0xff]
      %v235 = vld [vmem:[%s197 + $0x70] sm:$0xff]
      %v236 = vld [vmem:[%s197 + $0x78] sm:$0xff]
      %v237 = vld [vmem:[%s197 + $0x80] sm:$0xff]
      %v238 = vld [vmem:[%s197 + $0x88] sm:$0xff]
      %v239 = vld [vmem:[%s197 + $0x90] sm:$0xff]
      %v240 = vld [vmem:[%s197 + $0x98] sm:$0xff]
      %v241 = vld [vmem:[%s197 + $0xa0] sm:$0xff]
      %v242 = vld [vmem:[%s197 + $0xa8] sm:$0xff]
      %v243 = vld [vmem:[%s197 + $0xb0] sm:$0xff]
      %v244 = vld [vmem:[%s197 + $0xb8] sm:$0xff]
      %v245 = vld [vmem:[%s197 + $0xc0] sm:$0xff]
      %v246 = vld [vmem:[%s197 + $0xc8] sm:$0xff]
      %v247 = vld [vmem:[%s197 + $0xd0] sm:$0xff]
      %v248 = vld [vmem:[%s197 + $0xd8] sm:$0xff]
      %v249 = vld [vmem:[%s197 + $0xe0] sm:$0xff]
      %v250 = vld [vmem:[%s197 + $0xe8] sm:$0xff]
      %v251 = vld [vmem:[%s197 + $0xf0] sm:$0xff]
      %v252 = vld [vmem:[%s197 + $0xf8] sm:$0xff]
      %v253 = vld [vmem:[%s197 + $0x100] sm:$0xff]
      %v254 = vld [vmem:[%s197 + $0x108] sm:$0xff]
      %v255 = vld [vmem:[%s197 + $0x110] sm:$0xff]
      %v256 = vld [vmem:[%s197 + $0x118] sm:$0xff]
      %v257 = vld [vmem:[%s197 + $0x120] sm:$0xff]
      %v258 = vld [vmem:[%s197 + $0x128] sm:$0xff]
      %v259 = vld [vmem:[%s197 + $0x130] sm:$0xff]
      %v260 = vld [vmem:[%s197 + $0x138] sm:$0xff]
      %v261 = vld [vmem:[%s197 + $0x140] sm:$0xff]
      %v262 = vld [vmem:[%s197 + $0x148] sm:$0xff]
      %v263 = vld [vmem:[%s197 + $0x150] sm:$0xff]
      %v264 = vld [vmem:[%s197 + $0x158] sm:$0xff]
      %v265 = vld [vmem:[%s197 + $0x160] sm:$0xff]
      %v266 = vld [vmem:[%s197 + $0x168] sm:$0xff]
      %v267 = vld [vmem:[%s197 + $0x170] sm:$0xff]
      %v268 = vld [vmem:[%s197 + $0x178] sm:$0xff]
      %v269 = vld [vmem:[%s197 + $0x180] sm:$0xff]
      %v270 = vld [vmem:[%s197 + $0x188] sm:$0xff]
      %v271 = vld [vmem:[%s197 + $0x190] sm:$0xff]
      %v272 = vld [vmem:[%s197 + $0x198] sm:$0xff]
      %v273 = vld [vmem:[%s197 + $0x1a0] sm:$0xff]
      %v274 = vld [vmem:[%s197 + $0x1a8] sm:$0xff]
      %v275 = vld [vmem:[%s197 + $0x1b0] sm:$0xff]
      %v276 = vld [vmem:[%s197 + $0x1b8] sm:$0xff]
      %v277 = vld [vmem:[%s197 + $0x1c0] sm:$0xff]
      %v278 = vld [vmem:[%s197 + $0x1c8] sm:$0xff]
      %v279 = vld [vmem:[%s197 + $0x1d0] sm:$0xff]
      %v280 = vld [vmem:[%s197 + $0x1d8] sm:$0xff]
      %v281 = vld [vmem:[%s197 + $0x1e0] sm:$0xff]
      %v282 = vld [vmem:[%s197 + $0x1e8] sm:$0xff]
      %v283 = vld [vmem:[%s197 + $0x1f0] sm:$0xff]
      %v284 = vld [vmem:[%s197 + $0x1f8] sm:$0xff]
      %v285 = vld [vmem:[%s197 + $0x200] sm:$0xff]
      %v286 = vld [vmem:[%s197 + $0x208] sm:$0xff]
      %v287 = vld [vmem:[%s197 + $0x210] sm:$0xff]
      %v288 = vld [vmem:[%s197 + $0x218] sm:$0xff]
      %v289 = vld [vmem:[%s197 + $0x220] sm:$0xff]
      %v290 = vld [vmem:[%s197 + $0x228] sm:$0xff]
      %v291 = vld [vmem:[%s197 + $0x230] sm:$0xff]
      %v292 = vld [vmem:[%s197 + $0x238] sm:$0xff]
      %v293 = vld [vmem:[%s197 + $0x240] sm:$0xff]
      %v294 = vld [vmem:[%s197 + $0x248] sm:$0xff]
      %v295 = vld [vmem:[%s197 + $0x250] sm:$0xff]
      %v296 = vld [vmem:[%s197 + $0x258] sm:$0xff]
      %v297 = vld [vmem:[%s197 + $0x260] sm:$0xff]
      %v298 = vld [vmem:[%s197 + $0x268] sm:$0xff]
      %v299 = vld [vmem:[%s197 + $0x270] sm:$0xff]
      %v300 = vld [vmem:[%s197 + $0x278] sm:$0xff]
      %v301 = vld [vmem:[%s197 + $0x280] sm:$0xff]
      %v302 = vld [vmem:[%s197 + $0x288] sm:$0xff]
      %v303 = vld [vmem:[%s197 + $0x290] sm:$0xff]
      %v304 = vld [vmem:[%s197 + $0x298] sm:$0xff]
      %v305 = vld [vmem:[%s197 + $0x2a0] sm:$0xff]
      %v306 = vld [vmem:[%s197 + $0x2a8] sm:$0xff]
      %v307 = vld [vmem:[%s197 + $0x2b0] sm:$0xff]
      %v308 = vld [vmem:[%s197 + $0x2b8] sm:$0xff]
      %v309 = vld [vmem:[%s197 + $0x2c0] sm:$0xff]
      %v310 = vld [vmem:[%s197 + $0x2c8] sm:$0xff]
      %v311 = vld [vmem:[%s197 + $0x2d0] sm:$0xff]
      %v312 = vld [vmem:[%s197 + $0x2d8] sm:$0xff]
      %v313 = vld [vmem:[%s197 + $0x2e0] sm:$0xff]
      %v314 = vld [vmem:[%s197 + $0x2e8] sm:$0xff]
      %v315 = vld [vmem:[%s197 + $0x2f0] sm:$0xff]
      %v316 = vld [vmem:[%s197 + $0x2f8] sm:$0xff]
      %v317 = vld [vmem:[%s197 + $0x300] sm:$0xff]
      %v318 = vld [vmem:[%s197 + $0x308] sm:$0xff]
      %v319 = vld [vmem:[%s197 + $0x310] sm:$0xff]
      %v320 = vld [vmem:[%s197 + $0x318] sm:$0xff]
      %v321 = vld [vmem:[%s197 + $0x320] sm:$0xff]
      %v322 = vld [vmem:[%s197 + $0x328] sm:$0xff]
      %v323 = vld [vmem:[%s197 + $0x330] sm:$0xff]
      %v324 = vld [vmem:[%s197 + $0x338] sm:$0xff]
      %v325 = vld [vmem:[%s197 + $0x340] sm:$0xff]
      %v326 = vld [vmem:[%s197 + $0x348] sm:$0xff]
      %v327 = vld [vmem:[%s197 + $0x350] sm:$0xff]
      %v328 = vld [vmem:[%s197 + $0x358] sm:$0xff]
      %v329 = vld [vmem:[%s197 + $0x360] sm:$0xff]
      %v330 = vld [vmem:[%s197 + $0x368] sm:$0xff]
      %v331 = vld [vmem:[%s197 + $0x370] sm:$0xff]
      %v332 = vld [vmem:[%s197 + $0x378] sm:$0xff]
      %v333 = vld [vmem:[%s197 + $0x380] sm:$0xff]
      %v334 = vld [vmem:[%s197 + $0x388] sm:$0xff]
      %v335 = vld [vmem:[%s197 + $0x390] sm:$0xff]
      %v336 = vld [vmem:[%s197 + $0x398] sm:$0xff]
      %v337 = vld [vmem:[%s197 + $0x3a0] sm:$0xff]
      %v338 = vld [vmem:[%s197 + $0x3a8] sm:$0xff]
      %v339 = vld [vmem:[%s197 + $0x3b0] sm:$0xff]
      %v340 = vld [vmem:[%s197 + $0x3b8] sm:$0xff]
      %v341 = vld [vmem:[%s197 + $0x3c0] sm:$0xff]
      %v342 = vld [vmem:[%s197 + $0x3c8] sm:$0xff]
      %v343 = vld [vmem:[%s197 + $0x3d0] sm:$0xff]
      %v344 = vld [vmem:[%s197 + $0x3d8] sm:$0xff]
      %v345 = vld [vmem:[%s197 + $0x3e0] sm:$0xff]
      %v346 = vld [vmem:[%s197 + $0x3e8] sm:$0xff]
      %v347 = vld [vmem:[%s197 + $0x3f0] sm:$0xff]
      %v348 = vld [vmem:[%s197 + $0x3f8] sm:$0xff]
      %v349 = vld [vmem:[%s197 + $0x400] sm:$0xff]
      %v350 = vld [vmem:[%s197 + $0x408] sm:$0xff]
      %v351 = vld [vmem:[%s197 + $0x410] sm:$0xff]
      %v352 = vld [vmem:[%s197 + $0x418] sm:$0xff]
      %v353 = vld [vmem:[%s197 + $0x420] sm:$0xff]
      %v354 = vld [vmem:[%s197 + $0x428] sm:$0xff]
      %v355 = vld [vmem:[%s197 + $0x430] sm:$0xff]
      %v356 = vld [vmem:[%s197 + $0x438] sm:$0xff]
      %v357 = vld [vmem:[%s197 + $0x440] sm:$0xff]
      %v358 = vld [vmem:[%s197 + $0x448] sm:$0xff]
      %v359 = vld [vmem:[%s197 + $0x450] sm:$0xff]
      %v360 = vld [vmem:[%s197 + $0x458] sm:$0xff]
      %v361 = vld [vmem:[%s197 + $0x460] sm:$0xff]
      %v362 = vld [vmem:[%s197 + $0x468] sm:$0xff]
      %v363 = vld [vmem:[%s197 + $0x470] sm:$0xff]
      %v364 = vld [vmem:[%s197 + $0x478] sm:$0xff]
      %v365 = vld [vmem:[%s197 + $0x480] sm:$0xff]
      %v366 = vld [vmem:[%s197 + $0x488] sm:$0xff]
      %v367 = vld [vmem:[%s197 + $0x490] sm:$0xff]
      %v368 = vld [vmem:[%s197 + $0x498] sm:$0xff]
      %v369 = vld [vmem:[%s197 + $0x4a0] sm:$0xff]
      %v370 = vld [vmem:[%s197 + $0x4a8] sm:$0xff]
      %v371 = vld [vmem:[%s197 + $0x4b0] sm:$0xff]
      %v372 = vld [vmem:[%s197 + $0x4b8] sm:$0xff]
      %v373 = vld [vmem:[%s197 + $0x4c0] sm:$0xff]
      %v374 = vld [vmem:[%s197 + $0x4c8] sm:$0xff]
      %v375 = vld [vmem:[%s197 + $0x4d0] sm:$0xff]
      %v376 = vld [vmem:[%s197 + $0x4d8] sm:$0xff]
      %v377 = vld [vmem:[%s197 + $0x4e0] sm:$0xff]
      %v378 = vld [vmem:[%s197 + $0x4e8] sm:$0xff]
      %v379 = vld [vmem:[%s197 + $0x4f0] sm:$0xff]
      %v380 = vld [vmem:[%s197 + $0x4f8] sm:$0xff]
      %v381 = vld [vmem:[%s197 + $0x500] sm:$0xff]
      %v382 = vld [vmem:[%s197 + $0x508] sm:$0xff]
      %v383 = vld [vmem:[%s197 + $0x510] sm:$0xff]
      %v384 = vld [vmem:[%s197 + $0x518] sm:$0xff]
      %v385 = vld [vmem:[%s197 + $0x520] sm:$0xff]
      %v386 = vld [vmem:[%s197 + $0x528] sm:$0xff]
      %v387 = vld [vmem:[%s197 + $0x530] sm:$0xff]
      %v388 = vld [vmem:[%s197 + $0x538] sm:$0xff]
      %v389 = vld [vmem:[%s197 + $0x540] sm:$0xff]
      %v390 = vld [vmem:[%s197 + $0x548] sm:$0xff]
      %v391 = vld [vmem:[%s197 + $0x550] sm:$0xff]
      %v392 = vld [vmem:[%s197 + $0x558] sm:$0xff]
      %v393 = vld [vmem:[%s197 + $0x560] sm:$0xff]
      %v394 = vld [vmem:[%s197 + $0x568] sm:$0xff]
      %v395 = vld [vmem:[%s197 + $0x570] sm:$0xff]
      %v396 = vld [vmem:[%s197 + $0x578] sm:$0xff]
      %v397 = vld [vmem:[%s197 + $0x580] sm:$0xff]
      %v398 = vld [vmem:[%s197 + $0x588] sm:$0xff]
      %v399 = vld [vmem:[%s197 + $0x590] sm:$0xff]
      %v400 = vld [vmem:[%s197 + $0x598] sm:$0xff]
      %v401 = vld [vmem:[%s197 + $0x5a0] sm:$0xff]
      %v402 = vld [vmem:[%s197 + $0x5a8] sm:$0xff]
      %v403 = vld [vmem:[%s197 + $0x5b0] sm:$0xff]
      %v404 = vld [vmem:[%s197 + $0x5b8] sm:$0xff]
      %v405 = vld [vmem:[%s197 + $0x5c0] sm:$0xff]
      %v406 = vld [vmem:[%s197 + $0x5c8] sm:$0xff]
      %v407 = vld [vmem:[%s197 + $0x5d0] sm:$0xff]
      %v408 = vld [vmem:[%s197 + $0x5d8] sm:$0xff]
      %v409 = vld [vmem:[%s197 + $0x5e0] sm:$0xff]
      %v410 = vld [vmem:[%s197 + $0x5e8] sm:$0xff]
      %v411 = vld [vmem:[%s197 + $0x5f0] sm:$0xff]
      %v412 = vld [vmem:[%s197 + $0x5f8] sm:$0xff]
      %v413 = vld [vmem:[%s197 + $0x600] sm:$0xff]
      %v414 = vld [vmem:[%s197 + $0x608] sm:$0xff]
      %v415 = vld [vmem:[%s197 + $0x610] sm:$0xff]
      %v416 = vld [vmem:[%s197 + $0x618] sm:$0xff]
      %v417 = vld [vmem:[%s197 + $0x620] sm:$0xff]
      %v418 = vld [vmem:[%s197 + $0x628] sm:$0xff]
      %v419 = vld [vmem:[%s197 + $0x630] sm:$0xff]
      %v420 = vld [vmem:[%s197 + $0x638] sm:$0xff]
      %v421 = vld [vmem:[%s197 + $0x640] sm:$0xff]
      %v422 = vld [vmem:[%s197 + $0x648] sm:$0xff]
      %v423 = vld [vmem:[%s197 + $0x650] sm:$0xff]
      %v424 = vld [vmem:[%s197 + $0x658] sm:$0xff]
      %v425 = vld [vmem:[%s197 + $0x660] sm:$0xff]
      %v426 = vld [vmem:[%s197 + $0x668] sm:$0xff]
      %v427 = vld [vmem:[%s197 + $0x670] sm:$0xff]
      %v428 = vld [vmem:[%s197 + $0x678] sm:$0xff]
      %v429 = vld [vmem:[%s197 + $0x680] sm:$0xff]
      %v430 = vld [vmem:[%s197 + $0x688] sm:$0xff]
      %v431 = vld [vmem:[%s197 + $0x690] sm:$0xff]
      %v432 = vld [vmem:[%s197 + $0x698] sm:$0xff]
      %v433 = vld [vmem:[%s197 + $0x6a0] sm:$0xff]
      %v434 = vld [vmem:[%s197 + $0x6a8] sm:$0xff]
      %v435 = vld [vmem:[%s197 + $0x6b0] sm:$0xff]
      %v436 = vld [vmem:[%s197 + $0x6b8] sm:$0xff]
      %v437 = vld [vmem:[%s197 + $0x6c0] sm:$0xff]
      %v438 = vld [vmem:[%s197 + $0x6c8] sm:$0xff]
      %v439 = vld [vmem:[%s197 + $0x6d0] sm:$0xff]
      %v440 = vld [vmem:[%s197 + $0x6d8] sm:$0xff]
      %v441 = vld [vmem:[%s197 + $0x6e0] sm:$0xff]
      %v442 = vld [vmem:[%s197 + $0x6e8] sm:$0xff]
      %v443 = vld [vmem:[%s197 + $0x6f0] sm:$0xff]
      %v444 = vld [vmem:[%s197 + $0x6f8] sm:$0xff]
      %v445 = vld [vmem:[%s197 + $0x700] sm:$0xff]
      %v446 = vld [vmem:[%s197 + $0x708] sm:$0xff]
      %v447 = vld [vmem:[%s197 + $0x710] sm:$0xff]
      %v448 = vld [vmem:[%s197 + $0x718] sm:$0xff]
      %v449 = vld [vmem:[%s197 + $0x720] sm:$0xff]
      %v450 = vld [vmem:[%s197 + $0x728] sm:$0xff]
      %v451 = vld [vmem:[%s197 + $0x730] sm:$0xff]
      %v452 = vld [vmem:[%s197 + $0x738] sm:$0xff]
      %v453 = vld [vmem:[%s197 + $0x740] sm:$0xff]
      %v454 = vld [vmem:[%s197 + $0x748] sm:$0xff]
      %v455 = vld [vmem:[%s197 + $0x750] sm:$0xff]
      %v456 = vld [vmem:[%s197 + $0x758] sm:$0xff]
      %v457 = vld [vmem:[%s197 + $0x760] sm:$0xff]
      %v458 = vld [vmem:[%s197 + $0x768] sm:$0xff]
      %v459 = vld [vmem:[%s197 + $0x770] sm:$0xff]
      %v460 = vld [vmem:[%s197 + $0x778] sm:$0xff]
      %v461 = vld [vmem:[%s197 + $0x780] sm:$0xff]
      %v462 = vld [vmem:[%s197 + $0x788] sm:$0xff]
      %v463 = vld [vmem:[%s197 + $0x790] sm:$0xff]
      %v464 = vld [vmem:[%s197 + $0x798] sm:$0xff]
      %v465 = vld [vmem:[%s197 + $0x7a0] sm:$0xff]
      %v466 = vld [vmem:[%s197 + $0x7a8] sm:$0xff]
      %v467 = vld [vmem:[%s197 + $0x7b0] sm:$0xff]
      %v468 = vld [vmem:[%s197 + $0x7b8] sm:$0xff]
      %v469 = vld [vmem:[%s197 + $0x7c0] sm:$0xff]
      %v470 = vld [vmem:[%s197 + $0x7c8] sm:$0xff]
      %v471 = vld [vmem:[%s197 + $0x7d0] sm:$0xff]
      %v472 = vld [vmem:[%s197 + $0x7d8] sm:$0xff]
      %v473 = vld [vmem:[%s197 + $0x7e0] sm:$0xff]
      %v474 = vld [vmem:[%s197 + $0x7e8] sm:$0xff]
      %v475 = vld [vmem:[%s197 + $0x7f0] sm:$0xff]
      %v476 = vld [vmem:[%s197 + $0x7f8] sm:$0xff]
      %v477 = vld [vmem:[%s197 + $0x800] sm:$0xff]
      %v478 = vld [vmem:[%s197 + $0x808] sm:$0xff]
      %v479 = vld [vmem:[%s197 + $0x810] sm:$0xff]
      %v480 = vld [vmem:[%s197 + $0x818] sm:$0xff]
      %v481 = vld [vmem:[%s197 + $0x820] sm:$0xff]
      %v482 = vld [vmem:[%s197 + $0x828] sm:$0xff]
      %v483 = vld [vmem:[%s197 + $0x830] sm:$0xff]
      %v484 = vld [vmem:[%s197 + $0x838] sm:$0xff]
      %v485 = vld [vmem:[%s197 + $0x840] sm:$0xff]
      %v486 = vld [vmem:[%s197 + $0x848] sm:$0xff]
      %v487 = vld [vmem:[%s197 + $0x850] sm:$0xff]
      %v488 = vld [vmem:[%s197 + $0x858] sm:$0xff]
      %v489 = vld [vmem:[%s197 + $0x860] sm:$0xff]
      %v490 = vld [vmem:[%s197 + $0x868] sm:$0xff]
      %v491 = vld [vmem:[%s197 + $0x870] sm:$0xff]
      %v492 = vld [vmem:[%s197 + $0x878] sm:$0xff]
      %v493 = vld [vmem:[%s197 + $0x880] sm:$0xff]
      %v494 = vld [vmem:[%s197 + $0x888] sm:$0xff]
      %v495 = vld [vmem:[%s197 + $0x890] sm:$0xff]
      %v496 = vld [vmem:[%s197 + $0x898] sm:$0xff]
      %v497 = vld [vmem:[%s197 + $0x8a0] sm:$0xff]
      %v498 = vld [vmem:[%s197 + $0x8a8] sm:$0xff]
      %v499 = vld [vmem:[%s197 + $0x8b0] sm:$0xff]
      %v500 = vld [vmem:[%s197 + $0x8b8] sm:$0xff]
      %v501 = vld [vmem:[%s197 + $0x8c0] sm:$0xff]
      %v502 = vld [vmem:[%s197 + $0x8c8] sm:$0xff]
      %v503 = vld [vmem:[%s197 + $0x8d0] sm:$0xff]
      %v504 = vld [vmem:[%s197 + $0x8d8] sm:$0xff]
      %v505 = vld [vmem:[%s197 + $0x8e0] sm:$0xff]
      %v506 = vld [vmem:[%s197 + $0x8e8] sm:$0xff]
      %v507 = vld [vmem:[%s197 + $0x8f0] sm:$0xff]
      %v508 = vld [vmem:[%s197 + $0x8f8] sm:$0xff]
      %v509 = vld [vmem:[%s197 + $0x900] sm:$0xff]
      %v510 = vld [vmem:[%s197 + $0x908] sm:$0xff]
      %v511 = vld [vmem:[%s197 + $0x910] sm:$0xff]
      %v512 = vld [vmem:[%s197 + $0x918] sm:$0xff]
      %v513 = vld [vmem:[%s197 + $0x920] sm:$0xff]
      %v514 = vld [vmem:[%s197 + $0x928] sm:$0xff]
      %v515 = vld [vmem:[%s197 + $0x930] sm:$0xff]
      %v516 = vld [vmem:[%s197 + $0x938] sm:$0xff]
      %v517 = vld [vmem:[%s197 + $0x940] sm:$0xff]
      %v518 = vld [vmem:[%s197 + $0x948] sm:$0xff]
      %v519 = vld [vmem:[%s197 + $0x950] sm:$0xff]
      %v520 = vld [vmem:[%s197 + $0x958] sm:$0xff]
      %vm521 = vcmask 130048
      %v523 = vsel %vm521, %v220, 0
      %525 = vmatprep.subr.mxu0 %v222
      %526 = vmatpush1.msra.mxu0 %v221
      %527 = vmatprep.subr.mxu0 %v228
      %528 = vmatpush1.msra.mxu0 %v227
      %529 = vmatprep.subr.mxu0 %v234
      %530 = vmatpush1.msra.mxu0 %v233
      %531 = vmatprep.subr.mxu0 %v240
      %532 = vmatpush1.msra.mxu0 %v239
      %533 = vmatprep.subr.mxu0 %v246
      %534 = vmatpush1.msra.mxu0 %v245
      %535 = vmatprep.subr.mxu0 %v252
      %536 = vmatpush1.msra.mxu0 %v251
      %537 = vmatprep.subr.mxu0 %v258
      %538 = vmatpush1.msra.mxu0 %v257
      %539 = vmatprep.subr.mxu0 %v264
      %540 = vmatpush1.msra.mxu0 %v263
      %541 = vmatprep.subr.mxu0 %v270
      %542 = vmatpush1.msra.mxu0 %v269
      %543 = vmatprep.subr.mxu0 %v276
      %544 = vmatpush1.msra.mxu0 %v275
      %545 = vmatprep.subr.mxu0 %v282
      %546 = vmatpush1.msra.mxu0 %v281
      %547 = vmatprep.subr.mxu0 %v288
      %548 = vmatpush1.msra.mxu0 %v287
      %549 = vmatprep.subr.mxu0 %v294
      %550 = vmatpush1.msra.mxu0 %v293
      %551 = vmatprep.subr.mxu0 %v300
      %552 = vmatpush1.msra.mxu0 %v299
      %553 = vmatprep.subr.mxu0 %v306
      %554 = vmatpush1.msra.mxu0 %v305
      %555 = vmatprep.subr.mxu0 %v312
      %556 = vmatpush1.msra.mxu0 %v311
      %557 = vmatprep.subr.mxu0 %v318
      %558 = vmatpush1.msra.mxu0 %v317
      %559 = vmatprep.subr.mxu0 %v324
      %560 = vmatpush1.msra.mxu0 %v323
      %561 = vmatprep.subr.mxu0 %v330
      %562 = vmatpush1.msra.mxu0 %v329
      %563 = vmatprep.subr.mxu0 %v336
      %564 = vmatpush1.msra.mxu0 %v335
      %565 = vmatprep.subr.mxu0 %v342
      %566 = vmatpush1.msra.mxu0 %v341
      %567 = vmatprep.subr.mxu0 %v348
      %568 = vmatpush1.msra.mxu0 %v347
      %569 = vmatprep.subr.mxu0 %v354
      %570 = vmatpush1.msra.mxu0 %v353
      %571 = vmatprep.subr.mxu0 %v360
      %572 = vmatpush1.msra.mxu0 %v359
      %573 = vmatprep.subr.mxu0 %v366
      %574 = vmatpush1.msra.mxu0 %v365
      %575 = vmatprep.subr.mxu0 %v372
      %576 = vmatpush1.msra.mxu0 %v371
      %577 = vmatprep.subr.mxu0 %v378
      %578 = vmatpush1.msra.mxu0 %v377
      %579 = vmatprep.subr.mxu0 %v384
      %580 = vmatpush1.msra.mxu0 %v383
      %581 = vmatprep.subr.mxu0 %v390
      %582 = vmatpush1.msra.mxu0 %v389
      %583 = vmatprep.subr.mxu0 %v396
      %584 = vmatpush1.msra.mxu0 %v395
      %585 = vmatprep.subr.mxu0 %v402
      %586 = vmatpush1.msra.mxu0 %v401
      %587 = vmatprep.subr.mxu0 %v408
      %588 = vmatpush1.msra.mxu0 %v407
      %589 = vmatprep.mubr.f32.mxu0 %v218
      %590 = vmatmul.mubr.f32.gmra.mrb[0].mxu0 %v217
      %v591 = vpop.f32.mrb[0].mxu0
      %v592 = vadd.f32 0.0, %v591
      %v593 = vpop.f32.mrb[0].mxu0
      %v594 = vadd.f32 0.0, %v593
      %595 = vdwg.mxu0
      %596 = vmatprep.subr.mxu0 %v414
      %597 = vmatpush1.msra.mxu0 %v413
      %598 = vmatprep.subr.mxu0 %v420
      %599 = vmatpush1.msra.mxu0 %v419
      %600 = vmatprep.subr.mxu0 %v426
      %601 = vmatpush1.msra.mxu0 %v425
      %602 = vmatprep.subr.mxu0 %v432
      %603 = vmatpush1.msra.mxu0 %v431
      %604 = vmatprep.subr.mxu0 %v438
      %605 = vmatpush1.msra.mxu0 %v437
      %606 = vmatprep.subr.mxu0 %v444
      %607 = vmatpush1.msra.mxu0 %v443
      %608 = vmatprep.subr.mxu0 %v450
      %609 = vmatpush1.msra.mxu0 %v449
      %610 = vmatprep.subr.mxu0 %v456
      %611 = vmatpush1.msra.mxu0 %v455
      %612 = vmatprep.subr.mxu0 %v462
      %613 = vmatpush1.msra.mxu0 %v461
      %614 = vmatprep.subr.mxu0 %v468
      %615 = vmatpush1.msra.mxu0 %v467
      %616 = vmatprep.subr.mxu0 %v474
      %617 = vmatpush1.msra.mxu0 %v473
      %618 = vmatprep.subr.mxu0 %v480
      %619 = vmatpush1.msra.mxu0 %v479
      %620 = vmatprep.subr.mxu0 %v486
      %621 = vmatpush1.msra.mxu0 %v485
      %622 = vmatprep.subr.mxu0 %v492
      %623 = vmatpush1.msra.mxu0 %v491
      %624 = vmatprep.subr.mxu0 %v498
      %625 = vmatpush1.msra.mxu0 %v497
      %626 = vmatprep.subr.mxu0 %v504
      %627 = vmatpush1.msra.mxu0 %v503
      %628 = vmatprep.subr.mxu0 %v510
      %629 = vmatpush1.msra.mxu0 %v509
      %630 = vmatprep.subr.mxu0 %v516
      %631 = vmatpush1.msra.mxu0 %v515
      %632 = vmatprep.subr.mxu0 0.0
      %633 = vmatpush1.msra.mxu0 0.0
      %634 = vmatprep.subr.mxu0 0.0
      %635 = vmatpush1.msra.mxu0 0.0
      %636 = vmatprep.subr.mxu0 0.0
      %637 = vmatpush1.msra.mxu0 0.0
      %638 = vmatprep.subr.mxu0 0.0
      %639 = vmatpush1.msra.mxu0 0.0
      %640 = vmatprep.subr.mxu0 0.0
      %641 = vmatpush1.msra.mxu0 0.0
      %642 = vmatprep.subr.mxu0 0.0
      %643 = vmatpush1.msra.mxu0 0.0
      %644 = vmatprep.subr.mxu0 0.0
      %645 = vmatpush1.msra.mxu0 0.0
      %646 = vmatprep.subr.mxu0 0.0
      %647 = vmatpush1.msra.mxu0 0.0
      %648 = vmatprep.subr.mxu0 0.0
      %649 = vmatpush1.msra.mxu0 0.0
      %650 = vmatprep.subr.mxu0 0.0
      %651 = vmatpush1.msra.mxu0 0.0
      %652 = vmatprep.subr.mxu0 0.0
      %653 = vmatpush1.msra.mxu0 0.0
      %654 = vmatprep.subr.mxu0 0.0
      %655 = vmatpush1.msra.mxu0 0.0
      %656 = vmatprep.subr.mxu0 0.0
      %657 = vmatpush1.msra.mxu0 0.0
      %658 = vmatprep.subr.mxu0 0.0
      %659 = vmatpush1.msra.mxu0 0.0
      %660 = vmatprep.mubr.f32.mxu0 %v523
      %661 = vmatmul.mubr.f32.gmra.mrb[0].mxu0 %v219
      %v662 = vpop.f32.mrb[0].mxu0
      %v663 = vadd.f32 %v592, %v662
      %v664 = vpop.f32.mrb[0].mxu0
      %v665 = vadd.f32 %v594, %v664
      %666 = vdwg.mxu0
      %667 = vmatprep.subr.mxu0 %v224
      %668 = vmatpush1.msra.mxu0 %v223
      %669 = vmatprep.subr.mxu0 %v230
      %670 = vmatpush1.msra.mxu0 %v229
      %671 = vmatprep.subr.mxu0 %v236
      %672 = vmatpush1.msra.mxu0 %v235
      %673 = vmatprep.subr.mxu0 %v242
      %674 = vmatpush1.msra.mxu0 %v241
      %675 = vmatprep.subr.mxu0 %v248
      %676 = vmatpush1.msra.mxu0 %v247
      %677 = vmatprep.subr.mxu0 %v254
      %678 = vmatpush1.msra.mxu0 %v253
      %679 = vmatprep.subr.mxu0 %v260
      %680 = vmatpush1.msra.mxu0 %v259
      %681 = vmatprep.subr.mxu0 %v266
      %682 = vmatpush1.msra.mxu0 %v265
      %683 = vmatprep.subr.mxu0 %v272
      %684 = vmatpush1.msra.mxu0 %v271
      %685 = vmatprep.subr.mxu0 %v278
      %686 = vmatpush1.msra.mxu0 %v277
      %687 = vmatprep.subr.mxu0 %v284
      %688 = vmatpush1.msra.mxu0 %v283
      %689 = vmatprep.subr.mxu0 %v290
      %690 = vmatpush1.msra.mxu0 %v289
      %691 = vmatprep.subr.mxu0 %v296
      %692 = vmatpush1.msra.mxu0 %v295
      %693 = vmatprep.subr.mxu0 %v302
      %694 = vmatpush1.msra.mxu0 %v301
      %695 = vmatprep.subr.mxu0 %v308
      %696 = vmatpush1.msra.mxu0 %v307
      %697 = vmatprep.subr.mxu0 %v314
      %698 = vmatpush1.msra.mxu0 %v313
      %699 = vmatprep.subr.mxu0 %v320
      %700 = vmatpush1.msra.mxu0 %v319
      %701 = vmatprep.subr.mxu0 %v326
      %702 = vmatpush1.msra.mxu0 %v325
      %703 = vmatprep.subr.mxu0 %v332
      %704 = vmatpush1.msra.mxu0 %v331
      %705 = vmatprep.subr.mxu0 %v338
      %706 = vmatpush1.msra.mxu0 %v337
      %707 = vmatprep.subr.mxu0 %v344
      %708 = vmatpush1.msra.mxu0 %v343
      %709 = vmatprep.subr.mxu0 %v350
      %710 = vmatpush1.msra.mxu0 %v349
      %711 = vmatprep.subr.mxu0 %v356
      %712 = vmatpush1.msra.mxu0 %v355
      %713 = vmatprep.subr.mxu0 %v362
      %714 = vmatpush1.msra.mxu0 %v361
      %715 = vmatprep.subr.mxu0 %v368
      %716 = vmatpush1.msra.mxu0 %v367
      %717 = vmatprep.subr.mxu0 %v374
      %718 = vmatpush1.msra.mxu0 %v373
      %719 = vmatprep.subr.mxu0 %v380
      %720 = vmatpush1.msra.mxu0 %v379
      %721 = vmatprep.subr.mxu0 %v386
      %722 = vmatpush1.msra.mxu0 %v385
      %723 = vmatprep.subr.mxu0 %v392
      %724 = vmatpush1.msra.mxu0 %v391
      %725 = vmatprep.subr.mxu0 %v398
      %726 = vmatpush1.msra.mxu0 %v397
      %727 = vmatprep.subr.mxu0 %v404
      %728 = vmatpush1.msra.mxu0 %v403
      %729 = vmatprep.subr.mxu0 %v410
      %730 = vmatpush1.msra.mxu0 %v409
      %731 = vmatprep.mubr.f32.mxu0 %v218
      %732 = vmatmul.mubr.f32.gmra.mrb[0].mxu0 %v217
      %v733 = vpop.f32.mrb[0].mxu0
      %v734 = vadd.f32 0.0, %v733
      %v735 = vpop.f32.mrb[0].mxu0
      %v736 = vadd.f32 0.0, %v735
      %737 = vdwg.mxu0
      %738 = vmatprep.subr.mxu0 %v416
      %739 = vmatpush1.msra.mxu0 %v415
      %740 = vmatprep.subr.mxu0 %v422
      %741 = vmatpush1.msra.mxu0 %v421
      %742 = vmatprep.subr.mxu0 %v428
      %743 = vmatpush1.msra.mxu0 %v427
      %744 = vmatprep.subr.mxu0 %v434
      %745 = vmatpush1.msra.mxu0 %v433
      %746 = vmatprep.subr.mxu0 %v440
      %747 = vmatpush1.msra.mxu0 %v439
      %748 = vmatprep.subr.mxu0 %v446
      %749 = vmatpush1.msra.mxu0 %v445
      %750 = vmatprep.subr.mxu0 %v452
      %751 = vmatpush1.msra.mxu0 %v451
      %752 = vmatprep.subr.mxu0 %v458
      %753 = vmatpush1.msra.mxu0 %v457
      %754 = vmatprep.subr.mxu0 %v464
      %755 = vmatpush1.msra.mxu0 %v463
      %756 = vmatprep.subr.mxu0 %v470
      %757 = vmatpush1.msra.mxu0 %v469
      %758 = vmatprep.subr.mxu0 %v476
      %759 = vmatpush1.msra.mxu0 %v475
      %760 = vmatprep.subr.mxu0 %v482
      %761 = vmatpush1.msra.mxu0 %v481
      %762 = vmatprep.subr.mxu0 %v488
      %763 = vmatpush1.msra.mxu0 %v487
      %764 = vmatprep.subr.mxu0 %v494
      %765 = vmatpush1.msra.mxu0 %v493
      %766 = vmatprep.subr.mxu0 %v500
      %767 = vmatpush1.msra.mxu0 %v499
      %768 = vmatprep.subr.mxu0 %v506
      %769 = vmatpush1.msra.mxu0 %v505
      %770 = vmatprep.subr.mxu0 %v512
      %771 = vmatpush1.msra.mxu0 %v511
      %772 = vmatprep.subr.mxu0 %v518
      %773 = vmatpush1.msra.mxu0 %v517
      %774 = vmatprep.subr.mxu0 0.0
      %775 = vmatpush1.msra.mxu0 0.0
      %776 = vmatprep.subr.mxu0 0.0
      %777 = vmatpush1.msra.mxu0 0.0
      %778 = vmatprep.subr.mxu0 0.0
      %779 = vmatpush1.msra.mxu0 0.0
      %780 = vmatprep.subr.mxu0 0.0
      %781 = vmatpush1.msra.mxu0 0.0
      %782 = vmatprep.subr.mxu0 0.0
      %783 = vmatpush1.msra.mxu0 0.0
      %784 = vmatprep.subr.mxu0 0.0
      %785 = vmatpush1.msra.mxu0 0.0
      %786 = vmatprep.subr.mxu0 0.0
      %787 = vmatpush1.msra.mxu0 0.0
      %788 = vmatprep.subr.mxu0 0.0
      %789 = vmatpush1.msra.mxu0 0.0
      %790 = vmatprep.subr.mxu0 0.0
      %791 = vmatpush1.msra.mxu0 0.0
      %792 = vmatprep.subr.mxu0 0.0
      %793 = vmatpush1.msra.mxu0 0.0
      %794 = vmatprep.subr.mxu0 0.0
      %795 = vmatpush1.msra.mxu0 0.0
      %796 = vmatprep.subr.mxu0 0.0
      %797 = vmatpush1.msra.mxu0 0.0
      %798 = vmatprep.subr.mxu0 0.0
      %799 = vmatpush1.msra.mxu0 0.0
      %800 = vmatprep.subr.mxu0 0.0
      %801 = vmatpush1.msra.mxu0 0.0
      %802 = vmatprep.mubr.f32.mxu0 %v523
      %803 = vmatmul.mubr.f32.gmra.mrb[0].mxu0 %v219
      %v804 = vpop.f32.mrb[0].mxu0
      %v805 = vadd.f32 %v734, %v804
      %v806 = vpop.f32.mrb[0].mxu0
      %v807 = vadd.f32 %v736, %v806
      %808 = vdwg.mxu0
      %809 = vmatprep.subr.mxu0 %v226
      %810 = vmatpush1.msra.mxu0 %v225
      %811 = vmatprep.subr.mxu0 %v232
      %812 = vmatpush1.msra.mxu0 %v231
      %813 = vmatprep.subr.mxu0 %v238
      %814 = vmatpush1.msra.mxu0 %v237
      %815 = vmatprep.subr.mxu0 %v244
      %816 = vmatpush1.msra.mxu0 %v243
      %817 = vmatprep.subr.mxu0 %v250
      %818 = vmatpush1.msra.mxu0 %v249
      %819 = vmatprep.subr.mxu0 %v256
      %820 = vmatpush1.msra.mxu0 %v255
      %821 = vmatprep.subr.mxu0 %v262
      %822 = vmatpush1.msra.mxu0 %v261
      %823 = vmatprep.subr.mxu0 %v268
      %824 = vmatpush1.msra.mxu0 %v267
      %825 = vmatprep.subr.mxu0 %v274
      %826 = vmatpush1.msra.mxu0 %v273
      %827 = vmatprep.subr.mxu0 %v280
      %828 = vmatpush1.msra.mxu0 %v279
      %829 = vmatprep.subr.mxu0 %v286
      %830 = vmatpush1.msra.mxu0 %v285
      %831 = vmatprep.subr.mxu0 %v292
      %832 = vmatpush1.msra.mxu0 %v291
      %833 = vmatprep.subr.mxu0 %v298
      %834 = vmatpush1.msra.mxu0 %v297
      %835 = vmatprep.subr.mxu0 %v304
      %836 = vmatpush1.msra.mxu0 %v303
      %837 = vmatprep.subr.mxu0 %v310
      %838 = vmatpush1.msra.mxu0 %v309
      %839 = vmatprep.subr.mxu0 %v316
      %840 = vmatpush1.msra.mxu0 %v315
      %841 = vmatprep.subr.mxu0 %v322
      %842 = vmatpush1.msra.mxu0 %v321
      %843 = vmatprep.subr.mxu0 %v328
      %844 = vmatpush1.msra.mxu0 %v327
      %845 = vmatprep.subr.mxu0 %v334
      %846 = vmatpush1.msra.mxu0 %v333
      %847 = vmatprep.subr.mxu0 %v340
      %848 = vmatpush1.msra.mxu0 %v339
      %849 = vmatprep.subr.mxu0 %v346
      %850 = vmatpush1.msra.mxu0 %v345
      %851 = vmatprep.subr.mxu0 %v352
      %852 = vmatpush1.msra.mxu0 %v351
      %853 = vmatprep.subr.mxu0 %v358
      %854 = vmatpush1.msra.mxu0 %v357
      %855 = vmatprep.subr.mxu0 %v364
      %856 = vmatpush1.msra.mxu0 %v363
      %857 = vmatprep.subr.mxu0 %v370
      %858 = vmatpush1.msra.mxu0 %v369
      %859 = vmatprep.subr.mxu0 %v376
      %860 = vmatpush1.msra.mxu0 %v375
      %861 = vmatprep.subr.mxu0 %v382
      %862 = vmatpush1.msra.mxu0 %v381
      %863 = vmatprep.subr.mxu0 %v388
      %864 = vmatpush1.msra.mxu0 %v387
      %865 = vmatprep.subr.mxu0 %v394
      %866 = vmatpush1.msra.mxu0 %v393
      %867 = vmatprep.subr.mxu0 %v400
      %868 = vmatpush1.msra.mxu0 %v399
      %869 = vmatprep.subr.mxu0 %v406
      %870 = vmatpush1.msra.mxu0 %v405
      %871 = vmatprep.subr.mxu0 %v412
      %872 = vmatpush1.msra.mxu0 %v411
      %873 = vmatprep.mubr.f32.mxu0 %v218
      %874 = vmatmul.mubr.f32.gmra.mrb[0].mxu0 %v217
      %v875 = vpop.f32.mrb[0].mxu0
      %v876 = vadd.f32 0.0, %v875
      %v877 = vpop.f32.mrb[0].mxu0
      %v878 = vadd.f32 0.0, %v877
      %879 = vdwg.mxu0
      %880 = vmatprep.subr.mxu0 %v418
      %881 = vmatpush1.msra.mxu0 %v417
      %882 = vmatprep.subr.mxu0 %v424
      %883 = vmatpush1.msra.mxu0 %v423
      %884 = vmatprep.subr.mxu0 %v430
      %885 = vmatpush1.msra.mxu0 %v429
      %886 = vmatprep.subr.mxu0 %v436
      %887 = vmatpush1.msra.mxu0 %v435
      %888 = vmatprep.subr.mxu0 %v442
      %889 = vmatpush1.msra.mxu0 %v441
      %890 = vmatprep.subr.mxu0 %v448
      %891 = vmatpush1.msra.mxu0 %v447
      %892 = vmatprep.subr.mxu0 %v454
      %893 = vmatpush1.msra.mxu0 %v453
      %894 = vmatprep.subr.mxu0 %v460
      %895 = vmatpush1.msra.mxu0 %v459
      %896 = vmatprep.subr.mxu0 %v466
      %897 = vmatpush1.msra.mxu0 %v465
      %898 = vmatprep.subr.mxu0 %v472
      %899 = vmatpush1.msra.mxu0 %v471
      %900 = vmatprep.subr.mxu0 %v478
      %901 = vmatpush1.msra.mxu0 %v477
      %902 = vmatprep.subr.mxu0 %v484
      %903 = vmatpush1.msra.mxu0 %v483
      %904 = vmatprep.subr.mxu0 %v490
      %905 = vmatpush1.msra.mxu0 %v489
      %906 = vmatprep.subr.mxu0 %v496
      %907 = vmatpush1.msra.mxu0 %v495
      %908 = vmatprep.subr.mxu0 %v502
      %909 = vmatpush1.msra.mxu0 %v501
      %910 = vmatprep.subr.mxu0 %v508
      %911 = vmatpush1.msra.mxu0 %v507
      %912 = vmatprep.subr.mxu0 %v514
      %913 = vmatpush1.msra.mxu0 %v513
      %914 = vmatprep.subr.mxu0 %v520
      %915 = vmatpush1.msra.mxu0 %v519
      %916 = vmatprep.subr.mxu0 0.0
      %917 = vmatpush1.msra.mxu0 0.0
      %918 = vmatprep.subr.mxu0 0.0
      %919 = vmatpush1.msra.mxu0 0.0
      %920 = vmatprep.subr.mxu0 0.0
      %921 = vmatpush1.msra.mxu0 0.0
      %922 = vmatprep.subr.mxu0 0.0
      %923 = vmatpush1.msra.mxu0 0.0
      %924 = vmatprep.subr.mxu0 0.0
      %925 = vmatpush1.msra.mxu0 0.0
      %926 = vmatprep.subr.mxu0 0.0
      %927 = vmatpush1.msra.mxu0 0.0
      %928 = vmatprep.subr.mxu0 0.0
      %929 = vmatpush1.msra.mxu0 0.0
      %930 = vmatprep.subr.mxu0 0.0
      %931 = vmatpush1.msra.mxu0 0.0
      %932 = vmatprep.subr.mxu0 0.0
      %933 = vmatpush1.msra.mxu0 0.0
      %934 = vmatprep.subr.mxu0 0.0
      %935 = vmatpush1.msra.mxu0 0.0
      %936 = vmatprep.subr.mxu0 0.0
      %937 = vmatpush1.msra.mxu0 0.0
      %938 = vmatprep.subr.mxu0 0.0
      %939 = vmatpush1.msra.mxu0 0.0
      %940 = vmatprep.subr.mxu0 0.0
      %941 = vmatpush1.msra.mxu0 0.0
      %942 = vmatprep.subr.mxu0 0.0
      %943 = vmatpush1.msra.mxu0 0.0
      %944 = vmatprep.mubr.f32.mxu0 %v523
      %945 = vmatmul.mubr.f32.gmra.mrb[0].mxu0 %v219
      %v946 = vpop.f32.mrb[0].mxu0
      %v947 = vadd.f32 %v876, %v946
      %v948 = vpop.f32.mrb[0].mxu0
      %v949 = vadd.f32 %v878, %v948
      %950 = vdwg.mxu0
      %v951 = vld [vmem:[#allocation2] sm:$0xff]
      %v952 = vld [vmem:[#allocation2 + $0x8] sm:$0xff]
      %v953 = vld [vmem:[#allocation2 + $0x10] sm:$0xff]
      %v954 = vld [vmem:[#allocation2 + $0x18] sm:$0xff]
      %v955 = vld [vmem:[#allocation2 + $0x20] sm:$0xff]
      %v956 = vld [vmem:[#allocation2 + $0x28] sm:$0xff]
      %v957 = vadd.f32 %v951, %v663
      %v958 = vadd.f32 %v952, %v665
      %v959 = vadd.f32 %v953, %v805
      %v960 = vadd.f32 %v954, %v807
      %v961 = vadd.f32 %v955, %v947
      %v962 = vadd.f32 %v956, %v949
      %v963 = vld [vmem:[%s2] sm:$0xff]
      %965 = vset.pattern.permute.xlu0 0
      %966 = vperm.xlu0 %965, %v963
      %v967 = vpop.permute.xlu0 %966
      %v969 = vadd.f32 %v957, %v967
      %v970 = vadd.f32 %v958, %v967
      %v971 = vadd.f32 %v959, %v967
      %v972 = vadd.f32 %v960, %v967
      %v973 = vadd.f32 %v961, %v967
      %v974 = vadd.f32 %v962, %v967
      %vm975 = vcmp.gt.f32.partialorder %v969, 1.0
      %vm976 = vcmp.gt.f32.partialorder %v970, 1.0
      %vm977 = vcmp.gt.f32.partialorder %v971, 1.0
      %vm978 = vcmp.gt.f32.partialorder %v972, 1.0
      %vm979 = vcmp.gt.f32.partialorder %v973, 1.0
      %vm980 = vcmp.gt.f32.partialorder %v974, 1.0
      %v981 = vsel %vm975, 1, 0
      %v982 = vsel %vm976, 1, 0
      %v983 = vsel %vm977, 1, 0
      %v984 = vsel %vm978, 1, 0
      %v985 = vsel %vm979, 1, 0
      %v986 = vsel %vm980, 1, 0
      %v987 = vcvt.s32.f32 %v981
      %v988 = vcvt.s32.f32 %v982
      %v989 = vcvt.s32.f32 %v983
      %v990 = vcvt.s32.f32 %v984
      %v991 = vcvt.s32.f32 %v985
      %v992 = vcvt.s32.f32 %v986
      %993 = vst [vmem:[%s206] sm:$0xff] %v987
      %994 = vst [vmem:[%s206 + $0x8] sm:$0xff] %v988
      %995 = vst [vmem:[%s206 + $0x10] sm:$0xff] %v989
      %996 = vst [vmem:[%s206 + $0x18] sm:$0xff] %v990
      %997 = vst [vmem:[%s206 + $0x20] sm:$0xff] %v991
      %998 = vst [vmem:[%s206 + $0x28] sm:$0xff] %v992
      %v999 = vsel %vm975, 0.0, %v969
      %v1000 = vsel %vm976, 0.0, %v970
      %v1001 = vsel %vm977, 0.0, %v971
      %v1002 = vsel %vm978, 0.0, %v972
      %v1003 = vsel %vm979, 0.0, %v973
      %v1004 = vsel %vm980, 0.0, %v974
      %1005 = vst [vmem:[#allocation2] sm:$0xff] %v999
      %1006 = vst [vmem:[#allocation2 + $0x8] sm:$0xff] %v1000
      %1007 = vst [vmem:[#allocation2 + $0x10] sm:$0xff] %v1001
      %1008 = vst [vmem:[#allocation2 + $0x18] sm:$0xff] %v1002
      %1009 = vst [vmem:[#allocation2 + $0x20] sm:$0xff] %v1003
      %1010 = vst [vmem:[#allocation2 + $0x28] sm:$0xff] %v1004
      %p1011 = scmp.lt.s32.totalorder %s18, 1
      %s1012 = scalar_select %p1011, %s18, 1
      %p1013 = scmp.lt.s32.totalorder %s19, 3
      %s1014 = scalar_select %p1013, %s19, 3
      %s1015 = smul.addr %s1014, 6
      %s1016 = smul.addr %s1012, 24
      %s1017 = sadd.s32 %s1015, %s1016
      %s1018 = smul.addr %s1017, 8
      %s1019 = scalar_lea.vmem %s3, %s1018
      // Predicated region
      $region37: #{snn_lstm_forward.7} parent=31 // pred_check
        %p1020 = pneg %p116
      $region38: #{snn_lstm_forward.7} parent=31 // pred_check_branch
        %1022 = sbr.rel (%p1020) target = $region40
      $region39: #{snn_lstm_forward.7} parent=31 // pred_region
        _
      $region40: #{snn_lstm_forward.7} parent=31 // pred_fallthru
        _
    $region32: #{snn_lstm_forward.7} parent=5 // pred_fallthru
      _
    %p1023 = scmp.le.s32.totalorder 2, %s9
    // Predicated region
    $region41: #{snn_lstm_forward.7} parent=5 // pred_check
      %p1024 = pneg %p1023
    $region42: #{snn_lstm_forward.7} parent=5 // pred_check_branch
      %1026 = sbr.rel (%p1024) target = $region44
    $region43: #{snn_lstm_forward.7} parent=5 // pred_region
      %s1027 = ssub.s32 %s9, 2
      // Predicated region
      $region45: #{snn_lstm_forward.7} parent=43 // pred_check
        %p1028 = pneg %p122
      $region46: #{snn_lstm_forward.7} parent=43 // pred_check_branch
        %1030 = sbr.rel (%p1028) target = $region48
      $region47: #{snn_lstm_forward.7} parent=43 // pred_region
        %p1031 = scmp.lt.s32.totalorder %s20, 1
        %s1032 = scalar_select %p1031, %s20, 1
        %p1033 = scmp.lt.s32.totalorder %s21, 3
        %s1034 = scalar_select %p1033, %s21, 3
        %s1035 = smul.addr %s1034, 6
        %s1036 = smul.addr %s1032, 24
        %s1037 = sadd.s32 %s1035, %s1036
        %s1038 = smul.addr %s1037, 8
        %s1039 = scalar_lea.vmem %s3, %s1038
      $region48: #{snn_lstm_forward.7} parent=43 // pred_fallthru
        _
    $region44: #{snn_lstm_forward.7} parent=5 // pred_fallthru
      _
  $region6: #{snn_lstm_forward.7} parent=0 // loop_footer
    %s13 = sadd.s32 1, %s9
  $region7: #{snn_lstm_forward.7} parent=0 // loop_footer_branch
    %8 = sbr.rel target = $region3
  $region8: #{snn_lstm_forward.7} parent=0 // loop_exit
    _

// kernel: snn_lstm_forward.8
$region0: #{snn_lstm_forward.8}
  #allocation0 [shape = 'u32[]', space=smem, size = 0x4, offset = 0x4, fixed_abs, tag = 'smem constant byte address 0x4 - core index']
  #allocation1 [shape = 'u32[144,128]{1,0:T(1,128)}', space=vmem, size = 0x12000, scoped, tag = 'internal scratch']
  #allocation2 [shape = 'f32[8,128]{1,0:T(8,128)}', space=vmem, size = 0x1000, scoped, tag = 'scratch operand']
  %s0 = inlined_call_operand.vmem [shape: f32[2,4,800,128], index: 0, kind: input, shape index: {}]
  %s1 = inlined_call_operand.vmem [shape: f32[8,800], index: 1, kind: input, shape index: {}]
  %s2 = inlined_call_operand.vmem [shape: f32[8,1], index: 2, kind: input, shape index: {}]
  %s3 = inlined_call_operand.vmem [shape: f32[2,4,8,128], index: 3, kind: output, shape index: {}]
  %s4 = sld [smem:[#allocation0]]
  $region49: #{snn_lstm_forward.8} parent=0
    _
  %s6 = ssub.s32 1, %s4
  %s7 = scalar_select 0, %s6, %s4
  loop: start=0, step=1, limit=10
  $region2: #{snn_lstm_forward.8} parent=0 // loop_pre_header
    _
  $region3: #{snn_lstm_forward.8} parent=0 // loop_header
    %s9 = sphi 0, %s13
    %p10 = scmp.ge.s32.totalorder %s9, 10
    %s16 = sphi 0, %s28
    %s17 = sphi 0, %s24
    %s18 = sphi 0, %s16
    %s19 = sphi 0, %s17
    %s20 = sphi 0, %s18
    %s21 = sphi 0, %s19
    %s33 = sphi 0, %s35
    %s36 = sphi 0, %s33
    %s37 = sphi 0, %s36
    %s53 = sphi 0, %s37
    %s57 = sphi 0, %s57
    %s59 = sphi 0, %s57
    %s60 = sphi 0, %s59
    %s74 = sphi 0, %s60
    %s78 = sphi 0, %s78
    %s80 = sphi 0, %s78
    %s81 = sphi 0, %s80
    %s95 = sphi 0, %s81
    %s103 = sphi 0, %s105
    %s106 = sphi 0, %s103
    %s107 = sphi 0, %s106
    %s123 = sphi 0, %s107
  $region4: #{snn_lstm_forward.8} parent=0 // loop_header_branch
    %12 = sbr.rel (%p10) target = $region8
  $region5: #{snn_lstm_forward.8} parent=0 // loop_body
    %s14 = ssub.s32 %s9, 1
    %s15 = ssub.s32 %s9, 2
    %s22 = sadd.s32 1, %s17
    %p23 = scmp.ge.s32.totalorder %s22, 4
    %s24 = scalar_select %p23, 0, %s22
    %s25 = sadd.s32 1, %s16
    %s26 = scalar_select %p23, %s25, %s16
    %p27 = scmp.ge.s32.totalorder %s26, 2
    %s28 = scalar_select %p27, 0, %s26
    %s29 = ssub.s32 %s16, %s28
    %s30 = ssub.s32 %s17, %s24
    %s31 = sor.u32 %s29, %s30
    %p32 = scmp.eq.s32.totalorder %s31, 0
    %s34 = sadd.s32 %s33, 1
    %s35 = scalar_select %p32, %s33, %s34
    %p38 = pneg %p32
    %p39 = scmp.eq.s32.totalorder %s9, 7
    %p40 = por %p38, %p39
    %p41 = scmp.ne.s32.totalorder %s33, %s36
    %p42 = scmp.eq.s32.totalorder %s9, 0
    %p43 = por %p41, %p42
    %p44 = scmp.ne.s32.totalorder %s33, %s36
    %p45 = scmp.eq.s32.totalorder %s14, 7
    %p46 = por %p44, %p45
    %p47 = scmp.ne.s32.totalorder %s36, %s37
    %p48 = scmp.eq.s32.totalorder %s14, 0
    %p49 = por %p47, %p48
    %p50 = scmp.ne.s32.totalorder %s36, %s37
    %p51 = scmp.eq.s32.totalorder %s15, 7
    %p52 = por %p50, %p51
    %p54 = scmp.ne.s32.totalorder %s37, %s53
    %p55 = scmp.eq.s32.totalorder %s15, 0
    %p56 = por %p54, %p55
    %s58 = sadd.s32 %s57, 1
    %p61 = scmp.eq.s32.totalorder %s9, 7
    %p62 = scmp.ne.s32.totalorder %s57, %s59
    %p63 = scmp.eq.s32.totalorder %s9, 0
    %p64 = por %p62, %p63
    %p65 = scmp.ne.s32.totalorder %s57, %s59
    %p66 = scmp.eq.s32.totalorder %s14, 7
    %p67 = por %p65, %p66
    %p68 = scmp.ne.s32.totalorder %s59, %s60
    %p69 = scmp.eq.s32.totalorder %s14, 0
    %p70 = por %p68, %p69
    %p71 = scmp.ne.s32.totalorder %s59, %s60
    %p72 = scmp.eq.s32.totalorder %s15, 7
    %p73 = por %p71, %p72
    %p75 = scmp.ne.s32.totalorder %s60, %s74
    %p76 = scmp.eq.s32.totalorder %s15, 0
    %p77 = por %p75, %p76
    %s79 = sadd.s32 %s78, 1
    %p82 = scmp.eq.s32.totalorder %s9, 7
    %p83 = scmp.ne.s32.totalorder %s78, %s80
    %p84 = scmp.eq.s32.totalorder %s9, 0
    %p85 = por %p83, %p84
    %p86 = scmp.ne.s32.totalorder %s78, %s80
    %p87 = scmp.eq.s32.totalorder %s14, 7
    %p88 = por %p86, %p87
    %p89 = scmp.ne.s32.totalorder %s80, %s81
    %p90 = scmp.eq.s32.totalorder %s14, 0
    %p91 = por %p89, %p90
    %p92 = scmp.ne.s32.totalorder %s80, %s81
    %p93 = scmp.eq.s32.totalorder %s15, 7
    %p94 = por %p92, %p93
    %p96 = scmp.ne.s32.totalorder %s81, %s95
    %p97 = scmp.eq.s32.totalorder %s15, 0
    %p98 = por %p96, %p97
    %s99 = ssub.s32 %s16, %s28
    %s100 = ssub.s32 %s17, %s24
    %s101 = sor.u32 %s99, %s100
    %p102 = scmp.eq.s32.totalorder %s101, 0
    %s104 = sadd.s32 %s103, 1
    %s105 = scalar_select %p102, %s103, %s104
    %p108 = pneg %p102
    %p109 = scmp.eq.s32.totalorder %s9, 7
    %p110 = por %p108, %p109
    %p111 = scmp.ne.s32.totalorder %s103, %s106
    %p112 = scmp.eq.s32.totalorder %s9, 0
    %p113 = por %p111, %p112
    %p114 = scmp.ne.s32.totalorder %s103, %s106
    %p115 = scmp.eq.s32.totalorder %s14, 7
    %p116 = por %p114, %p115
    %p117 = scmp.ne.s32.totalorder %s106, %s107
    %p118 = scmp.eq.s32.totalorder %s14, 0
    %p119 = por %p117, %p118
    %p120 = scmp.ne.s32.totalorder %s106, %s107
    %p121 = scmp.eq.s32.totalorder %s15, 7
    %p122 = por %p120, %p121
    %p124 = scmp.ne.s32.totalorder %s107, %s123
    %p125 = scmp.eq.s32.totalorder %s15, 0
    %p126 = por %p124, %p125
    %p127 = scmp.le.s32.totalorder 1, %s9
    %p128 = scmp.lt.s32.totalorder %s9, 9
    %p129 = pnand %p127, %p128
    %p130 = pneg %p129
    // Predicated region
    $region9: #{snn_lstm_forward.8} parent=5 // pred_check
      _
    $region10: #{snn_lstm_forward.8} parent=5 // pred_check_branch
      %132 = sbr.rel (%p129) target = $region12
    $region11: #{snn_lstm_forward.8} parent=5 // pred_region
      %s133 = ssub.s32 %s9, 1
      // Predicated region
      $region13: #{snn_lstm_forward.8} parent=11 // pred_check
        %p134 = pneg %p70
      $region14: #{snn_lstm_forward.8} parent=11 // pred_check_branch
        %136 = sbr.rel (%p134) target = $region16
      $region15: #{snn_lstm_forward.8} parent=11 // pred_region
        _
      $region16: #{snn_lstm_forward.8} parent=11 // pred_fallthru
        _
      // Predicated region
      $region17: #{snn_lstm_forward.8} parent=11 // pred_check
        %p137 = pneg %p91
      $region18: #{snn_lstm_forward.8} parent=11 // pred_check_branch
        %139 = sbr.rel (%p137) target = $region20
      $region19: #{snn_lstm_forward.8} parent=11 // pred_region
        _
      $region20: #{snn_lstm_forward.8} parent=11 // pred_fallthru
        _
    $region12: #{snn_lstm_forward.8} parent=5 // pred_fallthru
      _
    %p140 = scmp.lt.s32.totalorder %s9, 8
    // Predicated region
    $region21: #{snn_lstm_forward.8} parent=5 // pred_check
      %p141 = pneg %p140
    $region22: #{snn_lstm_forward.8} parent=5 // pred_check_branch
      %143 = sbr.rel (%p141) target = $region24
    $region23: #{snn_lstm_forward.8} parent=5 // pred_region
      // Predicated region
      $region25: #{snn_lstm_forward.8} parent=23 // pred_check
        %p144 = pneg %p43
      $region26: #{snn_lstm_forward.8} parent=23 // pred_check_branch
        %146 = sbr.rel (%p144) target = $region28
      $region27: #{snn_lstm_forward.8} parent=23 // pred_region
        %p147 = scmp.lt.s32.totalorder %s16, 1
        %s148 = scalar_select %p147, %s16, 1
        %p149 = scmp.lt.s32.totalorder %s17, 3
        %s150 = scalar_select %p149, %s17, 3
        %s151 = smul.addr %s150, 100
        %s152 = smul.addr %s148, 400
        %s153 = sadd.s32 %s151, %s152
        %s154 = smul.addr %s153, 8
        %s155 = scalar_lea.vmem %s0, %s154
      $region28: #{snn_lstm_forward.8} parent=23 // pred_fallthru
        _
    $region24: #{snn_lstm_forward.8} parent=5 // pred_fallthru
      _
    %p156 = scmp.le.s32.totalorder 1, %s9
    %p157 = scmp.lt.s32.totalorder %s9, 9
    %p158 = pnand %p156, %p157
    %p159 = pneg %p158
    // Predicated region
    $region29: #{snn_lstm_forward.8} parent=5 // pred_check
      _
    $region30: #{snn_lstm_forward.8} parent=5 // pred_check_branch
      %161 = sbr.rel (%p158) target = $region32
    $region31: #{snn_lstm_forward.8} parent=5 // pred_region
      %s162 = ssub.s32 %s9, 1
      %p163 = scmp.lt.s32.totalorder %s18, 1
      %s164 = scalar_select %p163, %s18, 1
      %p165 = scmp.lt.s32.totalorder %s19, 3
      %s166 = scalar_select %p165, %s19, 3
      %s167 = smul.addr %s166, 100
      %s168 = smul.addr %s164, 400
      %s169 = sadd.s32 %s167, %s168
      %s170 = smul.addr %s169, 8
      %s171 = scalar_lea.vmem %s0, %s170
      %p172 = pneg %p49
      %p173 = pneg %p46
      %p174 = pneg %p70
      %p175 = pneg %p67
      %p176 = pneg %p91
      %p177 = pneg %p88
      %p178 = pneg %p119
      %p179 = pneg %p116
      %p180 = scmp.lt.s32.totalorder %s18, 1
      %s181 = scalar_select %p180, %s18, 1
      %p182 = scmp.lt.s32.totalorder %s19, 3
      %s183 = scalar_select %p182, %s19, 3
      %s184 = smul.addr %s181, 4
      %s185 = sadd.s32 %s183, %s184
      %s186 = smul.addr %s185, 8
      %s187 = scalar_lea.vmem %s3, %s186
      %p188 = scmp.lt.s32.totalorder %s18, 1
      %s189 = scalar_select %p188, %s18, 1
      %p190 = scmp.lt.s32.totalorder %s19, 3
      %s191 = scalar_select %p190, %s19, 3
      %s192 = smul.addr %s191, 100
      %s193 = smul.addr %s189, 400
      %s194 = sadd.s32 %s192, %s193
      %s195 = smul.addr %s194, 8
      %s196 = scalar_lea.vmem %s0, %s195
      %p197 = scmp.lt.s32.totalorder %s18, 1
      %s198 = scalar_select %p197, %s18, 1
      %p199 = scmp.lt.s32.totalorder %s19, 3
      %s200 = scalar_select %p199, %s19, 3
      %s201 = smul.addr %s198, 4
      %s202 = sadd.s32 %s200, %s201
      %s203 = smul.addr %s202, 8
      %s204 = scalar_lea.vmem %s3, %s203
      %p205 = scmp.eq.s32.totalorder %s19, 0
      // Predicated region
      $region33: #{snn_lstm_forward.8} parent=31 // pred_check
        %p206 = pneg %p205
      $region34: #{snn_lstm_forward.8} parent=31 // pred_check_branch
        %208 = sbr.rel (%p206) target = $region36
      $region35: #{snn_lstm_forward.8} parent=31 // pred_region
        %209 = vst [vmem:[#allocation2] sm:$0xff] 0.0
      $region36: #{snn_lstm_forward.8} parent=31 // pred_fallthru
        _
      %v210 = vld [vmem:[%s1] sm:$0xff]
      %v211 = vld [vmem:[%s1 + $0x8] sm:$0xff]
      %v212 = vld [vmem:[%s1 + $0x10] sm:$0xff]
      %v213 = vld [vmem:[%s1 + $0x18] sm:$0xff]
      %v214 = vld [vmem:[%s1 + $0x20] sm:$0xff]
      %v215 = vld [vmem:[%s1 + $0x28] sm:$0xff]
      %v216 = vld [vmem:[%s1 + $0x30] sm:$0xff]
      %v217 = vld [vmem:[%s196] sm:$0xff]
      %v218 = vld [vmem:[%s196 + $0x8] sm:$0xff]
      %v219 = vld [vmem:[%s196 + $0x10] sm:$0xff]
      %v220 = vld [vmem:[%s196 + $0x18] sm:$0xff]
      %v221 = vld [vmem:[%s196 + $0x20] sm:$0xff]
      %v222 = vld [vmem:[%s196 + $0x28] sm:$0xff]
      %v223 = vld [vmem:[%s196 + $0x30] sm:$0xff]
      %v224 = vld [vmem:[%s196 + $0x38] sm:$0xff]
      %v225 = vld [vmem:[%s196 + $0x40] sm:$0xff]
      %v226 = vld [vmem:[%s196 + $0x48] sm:$0xff]
      %v227 = vld [vmem:[%s196 + $0x50] sm:$0xff]
      %v228 = vld [vmem:[%s196 + $0x58] sm:$0xff]
      %v229 = vld [vmem:[%s196 + $0x60] sm:$0xff]
      %v230 = vld [vmem:[%s196 + $0x68] sm:$0xff]
      %v231 = vld [vmem:[%s196 + $0x70] sm:$0xff]
      %v232 = vld [vmem:[%s196 + $0x78] sm:$0xff]
      %v233 = vld [vmem:[%s196 + $0x80] sm:$0xff]
      %v234 = vld [vmem:[%s196 + $0x88] sm:$0xff]
      %v235 = vld [vmem:[%s196 + $0x90] sm:$0xff]
      %v236 = vld [vmem:[%s196 + $0x98] sm:$0xff]
      %v237 = vld [vmem:[%s196 + $0xa0] sm:$0xff]
      %v238 = vld [vmem:[%s196 + $0xa8] sm:$0xff]
      %v239 = vld [vmem:[%s196 + $0xb0] sm:$0xff]
      %v240 = vld [vmem:[%s196 + $0xb8] sm:$0xff]
      %v241 = vld [vmem:[%s196 + $0xc0] sm:$0xff]
      %v242 = vld [vmem:[%s196 + $0xc8] sm:$0xff]
      %v243 = vld [vmem:[%s196 + $0xd0] sm:$0xff]
      %v244 = vld [vmem:[%s196 + $0xd8] sm:$0xff]
      %v245 = vld [vmem:[%s196 + $0xe0] sm:$0xff]
      %v246 = vld [vmem:[%s196 + $0xe8] sm:$0xff]
      %v247 = vld [vmem:[%s196 + $0xf0] sm:$0xff]
      %v248 = vld [vmem:[%s196 + $0xf8] sm:$0xff]
      %v249 = vld [vmem:[%s196 + $0x100] sm:$0xff]
      %v250 = vld [vmem:[%s196 + $0x108] sm:$0xff]
      %v251 = vld [vmem:[%s196 + $0x110] sm:$0xff]
      %v252 = vld [vmem:[%s196 + $0x118] sm:$0xff]
      %v253 = vld [vmem:[%s196 + $0x120] sm:$0xff]
      %v254 = vld [vmem:[%s196 + $0x128] sm:$0xff]
      %v255 = vld [vmem:[%s196 + $0x130] sm:$0xff]
      %v256 = vld [vmem:[%s196 + $0x138] sm:$0xff]
      %v257 = vld [vmem:[%s196 + $0x140] sm:$0xff]
      %v258 = vld [vmem:[%s196 + $0x148] sm:$0xff]
      %v259 = vld [vmem:[%s196 + $0x150] sm:$0xff]
      %v260 = vld [vmem:[%s196 + $0x158] sm:$0xff]
      %v261 = vld [vmem:[%s196 + $0x160] sm:$0xff]
      %v262 = vld [vmem:[%s196 + $0x168] sm:$0xff]
      %v263 = vld [vmem:[%s196 + $0x170] sm:$0xff]
      %v264 = vld [vmem:[%s196 + $0x178] sm:$0xff]
      %v265 = vld [vmem:[%s196 + $0x180] sm:$0xff]
      %v266 = vld [vmem:[%s196 + $0x188] sm:$0xff]
      %v267 = vld [vmem:[%s196 + $0x190] sm:$0xff]
      %v268 = vld [vmem:[%s196 + $0x198] sm:$0xff]
      %v269 = vld [vmem:[%s196 + $0x1a0] sm:$0xff]
      %v270 = vld [vmem:[%s196 + $0x1a8] sm:$0xff]
      %v271 = vld [vmem:[%s196 + $0x1b0] sm:$0xff]
      %v272 = vld [vmem:[%s196 + $0x1b8] sm:$0xff]
      %v273 = vld [vmem:[%s196 + $0x1c0] sm:$0xff]
      %v274 = vld [vmem:[%s196 + $0x1c8] sm:$0xff]
      %v275 = vld [vmem:[%s196 + $0x1d0] sm:$0xff]
      %v276 = vld [vmem:[%s196 + $0x1d8] sm:$0xff]
      %v277 = vld [vmem:[%s196 + $0x1e0] sm:$0xff]
      %v278 = vld [vmem:[%s196 + $0x1e8] sm:$0xff]
      %v279 = vld [vmem:[%s196 + $0x1f0] sm:$0xff]
      %v280 = vld [vmem:[%s196 + $0x1f8] sm:$0xff]
      %v281 = vld [vmem:[%s196 + $0x200] sm:$0xff]
      %v282 = vld [vmem:[%s196 + $0x208] sm:$0xff]
      %v283 = vld [vmem:[%s196 + $0x210] sm:$0xff]
      %v284 = vld [vmem:[%s196 + $0x218] sm:$0xff]
      %v285 = vld [vmem:[%s196 + $0x220] sm:$0xff]
      %v286 = vld [vmem:[%s196 + $0x228] sm:$0xff]
      %v287 = vld [vmem:[%s196 + $0x230] sm:$0xff]
      %v288 = vld [vmem:[%s196 + $0x238] sm:$0xff]
      %v289 = vld [vmem:[%s196 + $0x240] sm:$0xff]
      %v290 = vld [vmem:[%s196 + $0x248] sm:$0xff]
      %v291 = vld [vmem:[%s196 + $0x250] sm:$0xff]
      %v292 = vld [vmem:[%s196 + $0x258] sm:$0xff]
      %v293 = vld [vmem:[%s196 + $0x260] sm:$0xff]
      %v294 = vld [vmem:[%s196 + $0x268] sm:$0xff]
      %v295 = vld [vmem:[%s196 + $0x270] sm:$0xff]
      %v296 = vld [vmem:[%s196 + $0x278] sm:$0xff]
      %v297 = vld [vmem:[%s196 + $0x280] sm:$0xff]
      %v298 = vld [vmem:[%s196 + $0x288] sm:$0xff]
      %v299 = vld [vmem:[%s196 + $0x290] sm:$0xff]
      %v300 = vld [vmem:[%s196 + $0x298] sm:$0xff]
      %v301 = vld [vmem:[%s196 + $0x2a0] sm:$0xff]
      %v302 = vld [vmem:[%s196 + $0x2a8] sm:$0xff]
      %v303 = vld [vmem:[%s196 + $0x2b0] sm:$0xff]
      %v304 = vld [vmem:[%s196 + $0x2b8] sm:$0xff]
      %v305 = vld [vmem:[%s196 + $0x2c0] sm:$0xff]
      %v306 = vld [vmem:[%s196 + $0x2c8] sm:$0xff]
      %v307 = vld [vmem:[%s196 + $0x2d0] sm:$0xff]
      %v308 = vld [vmem:[%s196 + $0x2d8] sm:$0xff]
      %v309 = vld [vmem:[%s196 + $0x2e0] sm:$0xff]
      %v310 = vld [vmem:[%s196 + $0x2e8] sm:$0xff]
      %v311 = vld [vmem:[%s196 + $0x2f0] sm:$0xff]
      %v312 = vld [vmem:[%s196 + $0x2f8] sm:$0xff]
      %v313 = vld [vmem:[%s196 + $0x300] sm:$0xff]
      %v314 = vld [vmem:[%s196 + $0x308] sm:$0xff]
      %v315 = vld [vmem:[%s196 + $0x310] sm:$0xff]
      %v316 = vld [vmem:[%s196 + $0x318] sm:$0xff]
      %vm317 = vcmask 261120
      %v319 = vsel %vm317, %v216, 0
      %321 = vmatprep.subr.mxu0 0.0
      %322 = vmatpush1.msra.mxu0 %v217
      %323 = vmatprep.subr.mxu0 0.0
      %324 = vmatpush1.msra.mxu0 %v218
      %325 = vmatprep.subr.mxu0 0.0
      %326 = vmatpush1.msra.mxu0 %v219
      %327 = vmatprep.subr.mxu0 0.0
      %328 = vmatpush1.msra.mxu0 %v220
      %329 = vmatprep.subr.mxu0 0.0
      %330 = vmatpush1.msra.mxu0 %v221
      %331 = vmatprep.subr.mxu0 0.0
      %332 = vmatpush1.msra.mxu0 %v222
      %333 = vmatprep.subr.mxu0 0.0
      %334 = vmatpush1.msra.mxu0 %v223
      %335 = vmatprep.subr.mxu0 0.0
      %336 = vmatpush1.msra.mxu0 %v224
      %337 = vmatprep.subr.mxu0 0.0
      %338 = vmatpush1.msra.mxu0 %v225
      %339 = vmatprep.subr.mxu0 0.0
      %340 = vmatpush1.msra.mxu0 %v226
      %341 = vmatprep.subr.mxu0 0.0
      %342 = vmatpush1.msra.mxu0 %v227
      %343 = vmatprep.subr.mxu0 0.0
      %344 = vmatpush1.msra.mxu0 %v228
      %345 = vmatprep.subr.mxu0 0.0
      %346 = vmatpush1.msra.mxu0 %v229
      %347 = vmatprep.subr.mxu0 0.0
      %348 = vmatpush1.msra.mxu0 %v230
      %349 = vmatprep.subr.mxu0 0.0
      %350 = vmatpush1.msra.mxu0 %v231
      %351 = vmatprep.subr.mxu0 0.0
      %352 = vmatpush1.msra.mxu0 %v232
      %353 = vmatprep.subr.mxu0 0.0
      %354 = vmatpush1.msra.mxu0 %v233
      %355 = vmatprep.subr.mxu0 0.0
      %356 = vmatpush1.msra.mxu0 %v234
      %357 = vmatprep.subr.mxu0 0.0
      %358 = vmatpush1.msra.mxu0 %v235
      %359 = vmatprep.subr.mxu0 0.0
      %360 = vmatpush1.msra.mxu0 %v236
      %361 = vmatprep.subr.mxu0 0.0
      %362 = vmatpush1.msra.mxu0 %v237
      %363 = vmatprep.subr.mxu0 0.0
      %364 = vmatpush1.msra.mxu0 %v238
      %365 = vmatprep.subr.mxu0 0.0
      %366 = vmatpush1.msra.mxu0 %v239
      %367 = vmatprep.subr.mxu0 0.0
      %368 = vmatpush1.msra.mxu0 %v240
      %369 = vmatprep.subr.mxu0 0.0
      %370 = vmatpush1.msra.mxu0 %v241
      %371 = vmatprep.subr.mxu0 0.0
      %372 = vmatpush1.msra.mxu0 %v242
      %373 = vmatprep.subr.mxu0 0.0
      %374 = vmatpush1.msra.mxu0 %v243
      %375 = vmatprep.subr.mxu0 0.0
      %376 = vmatpush1.msra.mxu0 %v244
      %377 = vmatprep.subr.mxu0 0.0
      %378 = vmatpush1.msra.mxu0 %v245
      %379 = vmatprep.subr.mxu0 0.0
      %380 = vmatpush1.msra.mxu0 %v246
      %381 = vmatprep.subr.mxu0 0.0
      %382 = vmatpush1.msra.mxu0 %v247
      %383 = vmatprep.subr.mxu0 0.0
      %384 = vmatpush1.msra.mxu0 %v248
      %385 = vmatprep.mubr.f32.mxu0 %v211
      %386 = vmatmul.mubr.f32.gmra.mrb[0].mxu0 %v210
      %v387 = vpop.f32.mrb[0].mxu0
      %v388 = vadd.f32 0.0, %v387
      %v389 = vpop.f32.mrb[0].mxu0
      %390 = vdwg.mxu0
      %391 = vmatprep.subr.mxu0 0.0
      %392 = vmatpush1.msra.mxu0 %v249
      %393 = vmatprep.subr.mxu0 0.0
      %394 = vmatpush1.msra.mxu0 %v250
      %395 = vmatprep.subr.mxu0 0.0
      %396 = vmatpush1.msra.mxu0 %v251
      %397 = vmatprep.subr.mxu0 0.0
      %398 = vmatpush1.msra.mxu0 %v252
      %399 = vmatprep.subr.mxu0 0.0
      %400 = vmatpush1.msra.mxu0 %v253
      %401 = vmatprep.subr.mxu0 0.0
      %402 = vmatpush1.msra.mxu0 %v254
      %403 = vmatprep.subr.mxu0 0.0
      %404 = vmatpush1.msra.mxu0 %v255
      %405 = vmatprep.subr.mxu0 0.0
      %406 = vmatpush1.msra.mxu0 %v256
      %407 = vmatprep.subr.mxu0 0.0
      %408 = vmatpush1.msra.mxu0 %v257
      %409 = vmatprep.subr.mxu0 0.0
      %410 = vmatpush1.msra.mxu0 %v258
      %411 = vmatprep.subr.mxu0 0.0
      %412 = vmatpush1.msra.mxu0 %v259
      %413 = vmatprep.subr.mxu0 0.0
      %414 = vmatpush1.msra.mxu0 %v260
      %415 = vmatprep.subr.mxu0 0.0
      %416 = vmatpush1.msra.mxu0 %v261
      %417 = vmatprep.subr.mxu0 0.0
      %418 = vmatpush1.msra.mxu0 %v262
      %419 = vmatprep.subr.mxu0 0.0
      %420 = vmatpush1.msra.mxu0 %v263
      %421 = vmatprep.subr.mxu0 0.0
      %422 = vmatpush1.msra.mxu0 %v264
      %423 = vmatprep.subr.mxu0 0.0
      %424 = vmatpush1.msra.mxu0 %v265
      %425 = vmatprep.subr.mxu0 0.0
      %426 = vmatpush1.msra.mxu0 %v266
      %427 = vmatprep.subr.mxu0 0.0
      %428 = vmatpush1.msra.mxu0 %v267
      %429 = vmatprep.subr.mxu0 0.0
      %430 = vmatpush1.msra.mxu0 %v268
      %431 = vmatprep.subr.mxu0 0.0
      %432 = vmatpush1.msra.mxu0 %v269
      %433 = vmatprep.subr.mxu0 0.0
      %434 = vmatpush1.msra.mxu0 %v270
      %435 = vmatprep.subr.mxu0 0.0
      %436 = vmatpush1.msra.mxu0 %v271
      %437 = vmatprep.subr.mxu0 0.0
      %438 = vmatpush1.msra.mxu0 %v272
      %439 = vmatprep.subr.mxu0 0.0
      %440 = vmatpush1.msra.mxu0 %v273
      %441 = vmatprep.subr.mxu0 0.0
      %442 = vmatpush1.msra.mxu0 %v274
      %443 = vmatprep.subr.mxu0 0.0
      %444 = vmatpush1.msra.mxu0 %v275
      %445 = vmatprep.subr.mxu0 0.0
      %446 = vmatpush1.msra.mxu0 %v276
      %447 = vmatprep.subr.mxu0 0.0
      %448 = vmatpush1.msra.mxu0 %v277
      %449 = vmatprep.subr.mxu0 0.0
      %450 = vmatpush1.msra.mxu0 %v278
      %451 = vmatprep.subr.mxu0 0.0
      %452 = vmatpush1.msra.mxu0 %v279
      %453 = vmatprep.subr.mxu0 0.0
      %454 = vmatpush1.msra.mxu0 %v280
      %455 = vmatprep.mubr.f32.mxu0 %v213
      %456 = vmatmul.mubr.f32.gmra.mrb[0].mxu0 %v212
      %v457 = vpop.f32.mrb[0].mxu0
      %v458 = vadd.f32 %v388, %v457
      %v459 = vpop.f32.mrb[0].mxu0
      %460 = vdwg.mxu0
      %461 = vmatprep.subr.mxu0 0.0
      %462 = vmatpush1.msra.mxu0 %v281
      %463 = vmatprep.subr.mxu0 0.0
      %464 = vmatpush1.msra.mxu0 %v282
      %465 = vmatprep.subr.mxu0 0.0
      %466 = vmatpush1.msra.mxu0 %v283
      %467 = vmatprep.subr.mxu0 0.0
      %468 = vmatpush1.msra.mxu0 %v284
      %469 = vmatprep.subr.mxu0 0.0
      %470 = vmatpush1.msra.mxu0 %v285
      %471 = vmatprep.subr.mxu0 0.0
      %472 = vmatpush1.msra.mxu0 %v286
      %473 = vmatprep.subr.mxu0 0.0
      %474 = vmatpush1.msra.mxu0 %v287
      %475 = vmatprep.subr.mxu0 0.0
      %476 = vmatpush1.msra.mxu0 %v288
      %477 = vmatprep.subr.mxu0 0.0
      %478 = vmatpush1.msra.mxu0 %v289
      %479 = vmatprep.subr.mxu0 0.0
      %480 = vmatpush1.msra.mxu0 %v290
      %481 = vmatprep.subr.mxu0 0.0
      %482 = vmatpush1.msra.mxu0 %v291
      %483 = vmatprep.subr.mxu0 0.0
      %484 = vmatpush1.msra.mxu0 %v292
      %485 = vmatprep.subr.mxu0 0.0
      %486 = vmatpush1.msra.mxu0 %v293
      %487 = vmatprep.subr.mxu0 0.0
      %488 = vmatpush1.msra.mxu0 %v294
      %489 = vmatprep.subr.mxu0 0.0
      %490 = vmatpush1.msra.mxu0 %v295
      %491 = vmatprep.subr.mxu0 0.0
      %492 = vmatpush1.msra.mxu0 %v296
      %493 = vmatprep.subr.mxu0 0.0
      %494 = vmatpush1.msra.mxu0 %v297
      %495 = vmatprep.subr.mxu0 0.0
      %496 = vmatpush1.msra.mxu0 %v298
      %497 = vmatprep.subr.mxu0 0.0
      %498 = vmatpush1.msra.mxu0 %v299
      %499 = vmatprep.subr.mxu0 0.0
      %500 = vmatpush1.msra.mxu0 %v300
      %501 = vmatprep.subr.mxu0 0.0
      %502 = vmatpush1.msra.mxu0 %v301
      %503 = vmatprep.subr.mxu0 0.0
      %504 = vmatpush1.msra.mxu0 %v302
      %505 = vmatprep.subr.mxu0 0.0
      %506 = vmatpush1.msra.mxu0 %v303
      %507 = vmatprep.subr.mxu0 0.0
      %508 = vmatpush1.msra.mxu0 %v304
      %509 = vmatprep.subr.mxu0 0.0
      %510 = vmatpush1.msra.mxu0 %v305
      %511 = vmatprep.subr.mxu0 0.0
      %512 = vmatpush1.msra.mxu0 %v306
      %513 = vmatprep.subr.mxu0 0.0
      %514 = vmatpush1.msra.mxu0 %v307
      %515 = vmatprep.subr.mxu0 0.0
      %516 = vmatpush1.msra.mxu0 %v308
      %517 = vmatprep.subr.mxu0 0.0
      %518 = vmatpush1.msra.mxu0 %v309
      %519 = vmatprep.subr.mxu0 0.0
      %520 = vmatpush1.msra.mxu0 %v310
      %521 = vmatprep.subr.mxu0 0.0
      %522 = vmatpush1.msra.mxu0 %v311
      %523 = vmatprep.subr.mxu0 0.0
      %524 = vmatpush1.msra.mxu0 %v312
      %525 = vmatprep.mubr.f32.mxu0 %v215
      %526 = vmatmul.mubr.f32.gmra.mrb[0].mxu0 %v214
      %v527 = vpop.f32.mrb[0].mxu0
      %v528 = vadd.f32 %v458, %v527
      %v529 = vpop.f32.mrb[0].mxu0
      %530 = vdwg.mxu0
      %531 = vmatprep.subr.mxu0 0.0
      %532 = vmatpush1.msra.mxu0 %v313
      %533 = vmatprep.subr.mxu0 0.0
      %534 = vmatpush1.msra.mxu0 %v314
      %535 = vmatprep.subr.mxu0 0.0
      %536 = vmatpush1.msra.mxu0 %v315
      %537 = vmatprep.subr.mxu0 0.0
      %538 = vmatpush1.msra.mxu0 %v316
      %539 = vmatprep.subr.mxu0 0.0
      %540 = vmatpush1.msra.mxu0 0.0
      %541 = vmatprep.subr.mxu0 0.0
      %542 = vmatpush1.msra.mxu0 0.0
      %543 = vmatprep.subr.mxu0 0.0
      %544 = vmatpush1.msra.mxu0 0.0
      %545 = vmatprep.subr.mxu0 0.0
      %546 = vmatpush1.msra.mxu0 0.0
      %547 = vmatprep.subr.mxu0 0.0
      %548 = vmatpush1.msra.mxu0 0.0
      %549 = vmatprep.subr.mxu0 0.0
      %550 = vmatpush1.msra.mxu0 0.0
      %551 = vmatprep.subr.mxu0 0.0
      %552 = vmatpush1.msra.mxu0 0.0
      %553 = vmatprep.subr.mxu0 0.0
      %554 = vmatpush1.msra.mxu0 0.0
      %555 = vmatprep.subr.mxu0 0.0
      %556 = vmatpush1.msra.mxu0 0.0
      %557 = vmatprep.subr.mxu0 0.0
      %558 = vmatpush1.msra.mxu0 0.0
      %559 = vmatprep.subr.mxu0 0.0
      %560 = vmatpush1.msra.mxu0 0.0
      %561 = vmatprep.subr.mxu0 0.0
      %562 = vmatpush1.msra.mxu0 0.0
      %563 = vmatprep.subr.mxu0 0.0
      %564 = vmatpush1.msra.mxu0 0.0
      %565 = vmatprep.subr.mxu0 0.0
      %566 = vmatpush1.msra.mxu0 0.0
      %567 = vmatprep.subr.mxu0 0.0
      %568 = vmatpush1.msra.mxu0 0.0
      %569 = vmatprep.subr.mxu0 0.0
      %570 = vmatpush1.msra.mxu0 0.0
      %571 = vmatprep.subr.mxu0 0.0
      %572 = vmatpush1.msra.mxu0 0.0
      %573 = vmatprep.subr.mxu0 0.0
      %574 = vmatpush1.msra.mxu0 0.0
      %575 = vmatprep.subr.mxu0 0.0
      %576 = vmatpush1.msra.mxu0 0.0
      %577 = vmatprep.subr.mxu0 0.0
      %578 = vmatpush1.msra.mxu0 0.0
      %579 = vmatprep.subr.mxu0 0.0
      %580 = vmatpush1.msra.mxu0 0.0
      %581 = vmatprep.subr.mxu0 0.0
      %582 = vmatpush1.msra.mxu0 0.0
      %583 = vmatprep.subr.mxu0 0.0
      %584 = vmatpush1.msra.mxu0 0.0
      %585 = vmatprep.subr.mxu0 0.0
      %586 = vmatpush1.msra.mxu0 0.0
      %587 = vmatprep.subr.mxu0 0.0
      %588 = vmatpush1.msra.mxu0 0.0
      %589 = vmatprep.subr.mxu0 0.0
      %590 = vmatpush1.msra.mxu0 0.0
      %591 = vmatprep.subr.mxu0 0.0
      %592 = vmatpush1.msra.mxu0 0.0
      %593 = vmatprep.subr.mxu0 0.0
      %594 = vmatpush1.msra.mxu0 0.0
      %595 = vmatprep.mubr.f32.mxu0 0.0
      %596 = vmatmul.mubr.f32.gmra.mrb[0].mxu0 %v319
      %v597 = vpop.f32.mrb[0].mxu0
      %v598 = vadd.f32 %v528, %v597
      %v599 = vpop.f32.mrb[0].mxu0
      %600 = vdwg.mxu0
      %v601 = vld [vmem:[#allocation2] sm:$0xff]
      %v602 = vadd.f32 %v601, %v598
      %v603 = vld [vmem:[%s2] sm:$0xff]
      %605 = vset.pattern.permute.xlu0 0
      %606 = vperm.xlu0 %605, %v603
      %v607 = vpop.permute.xlu0 %606
      %v609 = vadd.f32 %v602, %v607
      %vm610 = vcmp.gt.f32.partialorder %v609, 1.0
      %v611 = vsel %vm610, 1, 0
      %v612 = vcvt.s32.f32 %v611
      %613 = vst [vmem:[%s204] sm:$0xff] %v612
      %v614 = vsel %vm610, 0.0, %v609
      %615 = vst [vmem:[#allocation2] sm:$0xff] %v614
      %p616 = scmp.lt.s32.totalorder %s18, 1
      %s617 = scalar_select %p616, %s18, 1
      %p618 = scmp.lt.s32.totalorder %s19, 3
      %s619 = scalar_select %p618, %s19, 3
      %s620 = smul.addr %s617, 4
      %s621 = sadd.s32 %s619, %s620
      %s622 = smul.addr %s621, 8
      %s623 = scalar_lea.vmem %s3, %s622
      // Predicated region
      $region37: #{snn_lstm_forward.8} parent=31 // pred_check
        %p624 = pneg %p116
      $region38: #{snn_lstm_forward.8} parent=31 // pred_check_branch
        %626 = sbr.rel (%p624) target = $region40
      $region39: #{snn_lstm_forward.8} parent=31 // pred_region
        _
      $region40: #{snn_lstm_forward.8} parent=31 // pred_fallthru
        _
    $region32: #{snn_lstm_forward.8} parent=5 // pred_fallthru
      _
    %p627 = scmp.le.s32.totalorder 2, %s9
    // Predicated region
    $region41: #{snn_lstm_forward.8} parent=5 // pred_check
      %p628 = pneg %p627
    $region42: #{snn_lstm_forward.8} parent=5 // pred_check_branch
      %630 = sbr.rel (%p628) target = $region44
    $region43: #{snn_lstm_forward.8} parent=5 // pred_region
      %s631 = ssub.s32 %s9, 2
      // Predicated region
      $region45: #{snn_lstm_forward.8} parent=43 // pred_check
        %p632 = pneg %p122
      $region46: #{snn_lstm_forward.8} parent=43 // pred_check_branch
        %634 = sbr.rel (%p632) target = $region48
      $region47: #{snn_lstm_forward.8} parent=43 // pred_region
        %p635 = scmp.lt.s32.totalorder %s20, 1
        %s636 = scalar_select %p635, %s20, 1
        %p637 = scmp.lt.s32.totalorder %s21, 3
        %s638 = scalar_select %p637, %s21, 3
        %s639 = smul.addr %s636, 4
        %s640 = sadd.s32 %s638, %s639
        %s641 = smul.addr %s640, 8
        %s642 = scalar_lea.vmem %s3, %s641
      $region48: #{snn_lstm_forward.8} parent=43 // pred_fallthru
        _
    $region44: #{snn_lstm_forward.8} parent=5 // pred_fallthru
      _
  $region6: #{snn_lstm_forward.8} parent=0 // loop_footer
    %s13 = sadd.s32 1, %s9
  $region7: #{snn_lstm_forward.8} parent=0 // loop_footer_branch
    %8 = sbr.rel target = $region3
  $region8: #{snn_lstm_forward.8} parent=0 // loop_exit
    _

// kernel: snn_lstm_forward.9
$region0: #{snn_lstm_forward.9}
  #allocation0 [shape = 'u32[]', space=smem, size = 0x4, offset = 0x4, fixed_abs, tag = 'smem constant byte address 0x4 - core index']
  #allocation1 [shape = 'u32[144,128]{1,0:T(1,128)}', space=vmem, size = 0x12000, scoped, tag = 'internal scratch']
  #allocation2 [shape = 'f32[3,8,128]{2,1,0:T(8,128)}', space=vmem, size = 0x3000, scoped, tag = 'scratch operand']
  #allocation3 [shape = 'f32[3,8,128]{2,1,0:T(8,128)}', space=vmem, size = 0x3000, scoped, tag = 'scratch operand']
  #allocation4 [shape = 'f32[8,128]{1,0:T(8,128)}', space=vmem, size = 0x1000, scoped, tag = 'scratch operand']
  %s0 = inlined_call_operand.vmem [shape: f32[4,8,768], index: 0, kind: input, shape index: {}]
  %s1 = inlined_call_operand.vmem [shape: f32[768,512], index: 1, kind: input, shape index: {}]
  %s2 = inlined_call_operand.vmem [shape: f32[128,512], index: 2, kind: input, shape index: {}]
  %s3 = inlined_call_operand.vmem [shape: f32[128,512], index: 3, kind: input, shape index: {}]
  %s4 = inlined_call_operand.vmem [shape: f32[128,512], index: 4, kind: input, shape index: {}]
  %s5 = inlined_call_operand.vmem [shape: f32[128,512], index: 5, kind: input, shape index: {}]
  %s6 = inlined_call_operand.vmem [shape: f32[128,512], index: 6, kind: input, shape index: {}]
  %s7 = inlined_call_operand.vmem [shape: f32[1,512], index: 7, kind: input, shape index: {}]
  %s8 = inlined_call_operand.vmem [shape: f32[1,512], index: 8, kind: input, shape index: {}]
  %s9 = inlined_call_operand.vmem [shape: f32[1,512], index: 9, kind: input, shape index: {}]
  %s10 = inlined_call_operand.vmem [shape: f32[8,128], index: 10, kind: output, shape index: {}]
  %s11 = sld [smem:[#allocation0]]
  $region81: #{snn_lstm_forward.9} parent=0
    _
  %s13 = ssub.s32 1, %s11
  %s14 = scalar_select 0, %s13, %s11
  loop: start=0, step=1, limit=6
  $region2: #{snn_lstm_forward.9} parent=0 // loop_pre_header
    _
  $region3: #{snn_lstm_forward.9} parent=0 // loop_header
    %s16 = sphi 0, %s20
    %p17 = scmp.ge.s32.totalorder %s16, 6
    %s26 = sphi 0, %s28
    %s29 = sphi 0, %s26
    %s30 = sphi 0, %s29
    %s46 = sphi 0, %s30
    %s50 = sphi 0, %s50
    %s52 = sphi 0, %s50
    %s53 = sphi 0, %s52
    %s67 = sphi 0, %s53
    %s71 = sphi 0, %s71
    %s73 = sphi 0, %s71
    %s74 = sphi 0, %s73
    %s88 = sphi 0, %s74
    %s92 = sphi 0, %s92
    %s94 = sphi 0, %s92
    %s95 = sphi 0, %s94
    %s109 = sphi 0, %s95
    %s113 = sphi 0, %s113
    %s115 = sphi 0, %s113
    %s116 = sphi 0, %s115
    %s130 = sphi 0, %s116
    %s134 = sphi 0, %s134
    %s136 = sphi 0, %s134
    %s137 = sphi 0, %s136
    %s151 = sphi 0, %s137
    %s155 = sphi 0, %s155
    %s157 = sphi 0, %s155
    %s158 = sphi 0, %s157
    %s172 = sphi 0, %s158
    %s176 = sphi 0, %s176
    %s178 = sphi 0, %s176
    %s179 = sphi 0, %s178
    %s193 = sphi 0, %s179
    %s197 = sphi 0, %s197
    %s199 = sphi 0, %s197
    %s200 = sphi 0, %s199
    %s214 = sphi 0, %s200
    %s218 = sphi 0, %s218
    %s220 = sphi 0, %s218
    %s221 = sphi 0, %s220
    %s235 = sphi 0, %s221
    %s239 = sphi 0, %s239
    %s241 = sphi 0, %s239
    %s242 = sphi 0, %s241
    %s256 = sphi 0, %s242
  $region4: #{snn_lstm_forward.9} parent=0 // loop_header_branch
    %19 = sbr.rel (%p17) target = $region8
  $region5: #{snn_lstm_forward.9} parent=0 // loop_body
    %s21 = ssub.s32 %s16, 1
    %s22 = ssub.s32 %s16, 2
    %s23 = sadd.s32 %s16, 1
    %s24 = ssub.s32 %s16, %s23
    %p25 = scmp.eq.s32.totalorder %s24, 0
    %s27 = sadd.s32 %s26, 1
    %s28 = scalar_select %p25, %s26, %s27
    %p31 = pneg %p25
    %p32 = scmp.eq.s32.totalorder %s16, 3
    %p33 = por %p31, %p32
    %p34 = scmp.ne.s32.totalorder %s26, %s29
    %p35 = scmp.eq.s32.totalorder %s16, 0
    %p36 = por %p34, %p35
    %p37 = scmp.ne.s32.totalorder %s26, %s29
    %p38 = scmp.eq.s32.totalorder %s21, 3
    %p39 = por %p37, %p38
    %p40 = scmp.ne.s32.totalorder %s29, %s30
    %p41 = scmp.eq.s32.totalorder %s21, 0
    %p42 = por %p40, %p41
    %p43 = scmp.ne.s32.totalorder %s29, %s30
    %p44 = scmp.eq.s32.totalorder %s22, 3
    %p45 = por %p43, %p44
    %p47 = scmp.ne.s32.totalorder %s30, %s46
    %p48 = scmp.eq.s32.totalorder %s22, 0
    %p49 = por %p47, %p48
    %s51 = sadd.s32 %s50, 1
    %p54 = scmp.eq.s32.totalorder %s16, 3
    %p55 = scmp.ne.s32.totalorder %s50, %s52
    %p56 = scmp.eq.s32.totalorder %s16, 0
    %p57 = por %p55, %p56
    %p58 = scmp.ne.s32.totalorder %s50, %s52
    %p59 = scmp.eq.s32.totalorder %s21, 3
    %p60 = por %p58, %p59
    %p61 = scmp.ne.s32.totalorder %s52, %s53
    %p62 = scmp.eq.s32.totalorder %s21, 0
    %p63 = por %p61, %p62
    %p64 = scmp.ne.s32.totalorder %s52, %s53
    %p65 = scmp.eq.s32.totalorder %s22, 3
    %p66 = por %p64, %p65
    %p68 = scmp.ne.s32.totalorder %s53, %s67
    %p69 = scmp.eq.s32.totalorder %s22, 0
    %p70 = por %p68, %p69
    %s72 = sadd.s32 %s71, 1
    %p75 = scmp.eq.s32.totalorder %s16, 3
    %p76 = scmp.ne.s32.totalorder %s71, %s73
    %p77 = scmp.eq.s32.totalorder %s16, 0
    %p78 = por %p76, %p77
    %p79 = scmp.ne.s32.totalorder %s71, %s73
    %p80 = scmp.eq.s32.totalorder %s21, 3
    %p81 = por %p79, %p80
    %p82 = scmp.ne.s32.totalorder %s73, %s74
    %p83 = scmp.eq.s32.totalorder %s21, 0
    %p84 = por %p82, %p83
    %p85 = scmp.ne.s32.totalorder %s73, %s74
    %p86 = scmp.eq.s32.totalorder %s22, 3
    %p87 = por %p85, %p86
    %p89 = scmp.ne.s32.totalorder %s74, %s88
    %p90 = scmp.eq.s32.totalorder %s22, 0
    %p91 = por %p89, %p90
    %s93 = sadd.s32 %s92, 1
    %p96 = scmp.eq.s32.totalorder %s16, 3
    %p97 = scmp.ne.s32.totalorder %s92, %s94
    %p98 = scmp.eq.s32.totalorder %s16, 0
    %p99 = por %p97, %p98
    %p100 = scmp.ne.s32.totalorder %s92, %s94
    %p101 = scmp.eq.s32.totalorder %s21, 3
    %p102 = por %p100, %p101
    %p103 = scmp.ne.s32.totalorder %s94, %s95
    %p104 = scmp.eq.s32.totalorder %s21, 0
    %p105 = por %p103, %p104
    %p106 = scmp.ne.s32.totalorder %s94, %s95
    %p107 = scmp.eq.s32.totalorder %s22, 3
    %p108 = por %p106, %p107
    %p110 = scmp.ne.s32.totalorder %s95, %s109
    %p111 = scmp.eq.s32.totalorder %s22, 0
    %p112 = por %p110, %p111
    %s114 = sadd.s32 %s113, 1
    %p117 = scmp.eq.s32.totalorder %s16, 3
    %p118 = scmp.ne.s32.totalorder %s113, %s115
    %p119 = scmp.eq.s32.totalorder %s16, 0
    %p120 = por %p118, %p119
    %p121 = scmp.ne.s32.totalorder %s113, %s115
    %p122 = scmp.eq.s32.totalorder %s21, 3
    %p123 = por %p121, %p122
    %p124 = scmp.ne.s32.totalorder %s115, %s116
    %p125 = scmp.eq.s32.totalorder %s21, 0
    %p126 = por %p124, %p125
    %p127 = scmp.ne.s32.totalorder %s115, %s116
    %p128 = scmp.eq.s32.totalorder %s22, 3
    %p129 = por %p127, %p128
    %p131 = scmp.ne.s32.totalorder %s116, %s130
    %p132 = scmp.eq.s32.totalorder %s22, 0
    %p133 = por %p131, %p132
    %s135 = sadd.s32 %s134, 1
    %p138 = scmp.eq.s32.totalorder %s16, 3
    %p139 = scmp.ne.s32.totalorder %s134, %s136
    %p140 = scmp.eq.s32.totalorder %s16, 0
    %p141 = por %p139, %p140
    %p142 = scmp.ne.s32.totalorder %s134, %s136
    %p143 = scmp.eq.s32.totalorder %s21, 3
    %p144 = por %p142, %p143
    %p145 = scmp.ne.s32.totalorder %s136, %s137
    %p146 = scmp.eq.s32.totalorder %s21, 0
    %p147 = por %p145, %p146
    %p148 = scmp.ne.s32.totalorder %s136, %s137
    %p149 = scmp.eq.s32.totalorder %s22, 3
    %p150 = por %p148, %p149
    %p152 = scmp.ne.s32.totalorder %s137, %s151
    %p153 = scmp.eq.s32.totalorder %s22, 0
    %p154 = por %p152, %p153
    %s156 = sadd.s32 %s155, 1
    %p159 = scmp.eq.s32.totalorder %s16, 3
    %p160 = scmp.ne.s32.totalorder %s155, %s157
    %p161 = scmp.eq.s32.totalorder %s16, 0
    %p162 = por %p160, %p161
    %p163 = scmp.ne.s32.totalorder %s155, %s157
    %p164 = scmp.eq.s32.totalorder %s21, 3
    %p165 = por %p163, %p164
    %p166 = scmp.ne.s32.totalorder %s157, %s158
    %p167 = scmp.eq.s32.totalorder %s21, 0
    %p168 = por %p166, %p167
    %p169 = scmp.ne.s32.totalorder %s157, %s158
    %p170 = scmp.eq.s32.totalorder %s22, 3
    %p171 = por %p169, %p170
    %p173 = scmp.ne.s32.totalorder %s158, %s172
    %p174 = scmp.eq.s32.totalorder %s22, 0
    %p175 = por %p173, %p174
    %s177 = sadd.s32 %s176, 1
    %p180 = scmp.eq.s32.totalorder %s16, 3
    %p181 = scmp.ne.s32.totalorder %s176, %s178
    %p182 = scmp.eq.s32.totalorder %s16, 0
    %p183 = por %p181, %p182
    %p184 = scmp.ne.s32.totalorder %s176, %s178
    %p185 = scmp.eq.s32.totalorder %s21, 3
    %p186 = por %p184, %p185
    %p187 = scmp.ne.s32.totalorder %s178, %s179
    %p188 = scmp.eq.s32.totalorder %s21, 0
    %p189 = por %p187, %p188
    %p190 = scmp.ne.s32.totalorder %s178, %s179
    %p191 = scmp.eq.s32.totalorder %s22, 3
    %p192 = por %p190, %p191
    %p194 = scmp.ne.s32.totalorder %s179, %s193
    %p195 = scmp.eq.s32.totalorder %s22, 0
    %p196 = por %p194, %p195
    %s198 = sadd.s32 %s197, 1
    %p201 = scmp.eq.s32.totalorder %s16, 3
    %p202 = scmp.ne.s32.totalorder %s197, %s199
    %p203 = scmp.eq.s32.totalorder %s16, 0
    %p204 = por %p202, %p203
    %p205 = scmp.ne.s32.totalorder %s197, %s199
    %p206 = scmp.eq.s32.totalorder %s21, 3
    %p207 = por %p205, %p206
    %p208 = scmp.ne.s32.totalorder %s199, %s200
    %p209 = scmp.eq.s32.totalorder %s21, 0
    %p210 = por %p208, %p209
    %p211 = scmp.ne.s32.totalorder %s199, %s200
    %p212 = scmp.eq.s32.totalorder %s22, 3
    %p213 = por %p211, %p212
    %p215 = scmp.ne.s32.totalorder %s200, %s214
    %p216 = scmp.eq.s32.totalorder %s22, 0
    %p217 = por %p215, %p216
    %s219 = sadd.s32 %s218, 1
    %p222 = scmp.eq.s32.totalorder %s16, 3
    %p223 = scmp.ne.s32.totalorder %s218, %s220
    %p224 = scmp.eq.s32.totalorder %s16, 0
    %p225 = por %p223, %p224
    %p226 = scmp.ne.s32.totalorder %s218, %s220
    %p227 = scmp.eq.s32.totalorder %s21, 3
    %p228 = por %p226, %p227
    %p229 = scmp.ne.s32.totalorder %s220, %s221
    %p230 = scmp.eq.s32.totalorder %s21, 0
    %p231 = por %p229, %p230
    %p232 = scmp.ne.s32.totalorder %s220, %s221
    %p233 = scmp.eq.s32.totalorder %s22, 3
    %p234 = por %p232, %p233
    %p236 = scmp.ne.s32.totalorder %s221, %s235
    %p237 = scmp.eq.s32.totalorder %s22, 0
    %p238 = por %p236, %p237
    %s240 = sadd.s32 %s239, 1
    %p243 = scmp.eq.s32.totalorder %s16, 3
    %p244 = scmp.ne.s32.totalorder %s239, %s241
    %p245 = scmp.eq.s32.totalorder %s16, 0
    %p246 = por %p244, %p245
    %p247 = scmp.ne.s32.totalorder %s239, %s241
    %p248 = scmp.eq.s32.totalorder %s21, 3
    %p249 = por %p247, %p248
    %p250 = scmp.ne.s32.totalorder %s241, %s242
    %p251 = scmp.eq.s32.totalorder %s21, 0
    %p252 = por %p250, %p251
    %p253 = scmp.ne.s32.totalorder %s241, %s242
    %p254 = scmp.eq.s32.totalorder %s22, 3
    %p255 = por %p253, %p254
    %p257 = scmp.ne.s32.totalorder %s242, %s256
    %p258 = scmp.eq.s32.totalorder %s22, 0
    %p259 = por %p257, %p258
    %p260 = scmp.le.s32.totalorder 1, %s16
    %p261 = scmp.lt.s32.totalorder %s16, 5
    %p262 = pnand %p260, %p261
    %p263 = pneg %p262
    // Predicated region
    $region9: #{snn_lstm_forward.9} parent=5 // pred_check
      _
    $region10: #{snn_lstm_forward.9} parent=5 // pred_check_branch
      %265 = sbr.rel (%p262) target = $region12
    $region11: #{snn_lstm_forward.9} parent=5 // pred_region
      %s266 = ssub.s32 %s16, 1
      // Predicated region
      $region13: #{snn_lstm_forward.9} parent=11 // pred_check
        %p267 = pneg %p63
      $region14: #{snn_lstm_forward.9} parent=11 // pred_check_branch
        %269 = sbr.rel (%p267) target = $region16
      $region15: #{snn_lstm_forward.9} parent=11 // pred_region
        _
      $region16: #{snn_lstm_forward.9} parent=11 // pred_fallthru
        _
      // Predicated region
      $region17: #{snn_lstm_forward.9} parent=11 // pred_check
        %p270 = pneg %p84
      $region18: #{snn_lstm_forward.9} parent=11 // pred_check_branch
        %272 = sbr.rel (%p270) target = $region20
      $region19: #{snn_lstm_forward.9} parent=11 // pred_region
        _
      $region20: #{snn_lstm_forward.9} parent=11 // pred_fallthru
        _
      // Predicated region
      $region21: #{snn_lstm_forward.9} parent=11 // pred_check
        %p273 = pneg %p105
      $region22: #{snn_lstm_forward.9} parent=11 // pred_check_branch
        %275 = sbr.rel (%p273) target = $region24
      $region23: #{snn_lstm_forward.9} parent=11 // pred_region
        _
      $region24: #{snn_lstm_forward.9} parent=11 // pred_fallthru
        _
      // Predicated region
      $region25: #{snn_lstm_forward.9} parent=11 // pred_check
        %p276 = pneg %p126
      $region26: #{snn_lstm_forward.9} parent=11 // pred_check_branch
        %278 = sbr.rel (%p276) target = $region28
      $region27: #{snn_lstm_forward.9} parent=11 // pred_region
        _
      $region28: #{snn_lstm_forward.9} parent=11 // pred_fallthru
        _
      // Predicated region
      $region29: #{snn_lstm_forward.9} parent=11 // pred_check
        %p279 = pneg %p147
      $region30: #{snn_lstm_forward.9} parent=11 // pred_check_branch
        %281 = sbr.rel (%p279) target = $region32
      $region31: #{snn_lstm_forward.9} parent=11 // pred_region
        _
      $region32: #{snn_lstm_forward.9} parent=11 // pred_fallthru
        _
      // Predicated region
      $region33: #{snn_lstm_forward.9} parent=11 // pred_check
        %p282 = pneg %p168
      $region34: #{snn_lstm_forward.9} parent=11 // pred_check_branch
        %284 = sbr.rel (%p282) target = $region36
      $region35: #{snn_lstm_forward.9} parent=11 // pred_region
        _
      $region36: #{snn_lstm_forward.9} parent=11 // pred_fallthru
        _
      // Predicated region
      $region37: #{snn_lstm_forward.9} parent=11 // pred_check
        %p285 = pneg %p189
      $region38: #{snn_lstm_forward.9} parent=11 // pred_check_branch
        %287 = sbr.rel (%p285) target = $region40
      $region39: #{snn_lstm_forward.9} parent=11 // pred_region
        _
      $region40: #{snn_lstm_forward.9} parent=11 // pred_fallthru
        _
      // Predicated region
      $region41: #{snn_lstm_forward.9} parent=11 // pred_check
        %p288 = pneg %p210
      $region42: #{snn_lstm_forward.9} parent=11 // pred_check_branch
        %290 = sbr.rel (%p288) target = $region44
      $region43: #{snn_lstm_forward.9} parent=11 // pred_region
        _
      $region44: #{snn_lstm_forward.9} parent=11 // pred_fallthru
        _
      // Predicated region
      $region45: #{snn_lstm_forward.9} parent=11 // pred_check
        %p291 = pneg %p231
      $region46: #{snn_lstm_forward.9} parent=11 // pred_check_branch
        %293 = sbr.rel (%p291) target = $region48
      $region47: #{snn_lstm_forward.9} parent=11 // pred_region
        _
      $region48: #{snn_lstm_forward.9} parent=11 // pred_fallthru
        _
    $region12: #{snn_lstm_forward.9} parent=5 // pred_fallthru
      _
    %p294 = scmp.lt.s32.totalorder %s16, 4
    // Predicated region
    $region49: #{snn_lstm_forward.9} parent=5 // pred_check
      %p295 = pneg %p294
    $region50: #{snn_lstm_forward.9} parent=5 // pred_check_branch
      %297 = sbr.rel (%p295) target = $region52
    $region51: #{snn_lstm_forward.9} parent=5 // pred_region
      // Predicated region
      $region53: #{snn_lstm_forward.9} parent=51 // pred_check
        %p298 = pneg %p36
      $region54: #{snn_lstm_forward.9} parent=51 // pred_check_branch
        %300 = sbr.rel (%p298) target = $region56
      $region55: #{snn_lstm_forward.9} parent=51 // pred_region
        %p301 = scmp.lt.s32.totalorder %s16, 3
        %s302 = scalar_select %p301, %s16, 3
        %s303 = smul.addr %s302, 6
        %s304 = smul.addr %s303, 8
        %s305 = scalar_lea.vmem %s0, %s304
      $region56: #{snn_lstm_forward.9} parent=51 // pred_fallthru
        _
    $region52: #{snn_lstm_forward.9} parent=5 // pred_fallthru
      _
    %p306 = scmp.le.s32.totalorder 1, %s16
    %p307 = scmp.lt.s32.totalorder %s16, 5
    %p308 = pnand %p306, %p307
    %p309 = pneg %p308
    // Predicated region
    $region57: #{snn_lstm_forward.9} parent=5 // pred_check
      _
    $region58: #{snn_lstm_forward.9} parent=5 // pred_check_branch
      %311 = sbr.rel (%p308) target = $region60
    $region59: #{snn_lstm_forward.9} parent=5 // pred_region
      %s312 = ssub.s32 %s16, 1
      %p313 = scmp.lt.s32.totalorder %s21, 3
      %s314 = scalar_select %p313, %s21, 3
      %s315 = smul.addr %s314, 6
      %s316 = smul.addr %s315, 8
      %s317 = scalar_lea.vmem %s0, %s316
      %p318 = pneg %p42
      %p319 = pneg %p39
      %p320 = pneg %p63
      %p321 = pneg %p60
      %p322 = pneg %p84
      %p323 = pneg %p81
      %p324 = pneg %p105
      %p325 = pneg %p102
      %p326 = pneg %p126
      %p327 = pneg %p123
      %p328 = pneg %p147
      %p329 = pneg %p144
      %p330 = pneg %p168
      %p331 = pneg %p165
      %p332 = pneg %p189
      %p333 = pneg %p186
      %p334 = pneg %p210
      %p335 = pneg %p207
      %p336 = pneg %p231
      %p337 = pneg %p228
      %p338 = pneg %p252
      %p339 = pneg %p249
      %p340 = scmp.lt.s32.totalorder %s21, 3
      %s341 = scalar_select %p340, %s21, 3
      %s342 = smul.addr %s341, 6
      %s343 = smul.addr %s342, 8
      %s344 = scalar_lea.vmem %s0, %s343
      %p345 = scmp.eq.s32.totalorder %s21, 0
      // Predicated region
      $region61: #{snn_lstm_forward.9} parent=59 // pred_check
        %p346 = pneg %p345
      $region62: #{snn_lstm_forward.9} parent=59 // pred_check_branch
        %348 = sbr.rel (%p346) target = $region64
      $region63: #{snn_lstm_forward.9} parent=59 // pred_region
        %349 = vst [vmem:[#allocation2] sm:$0xff] 0.0
        %350 = vst [vmem:[#allocation2 + $0x8] sm:$0xff] 0.0
        %351 = vst [vmem:[#allocation2 + $0x10] sm:$0xff] 0.0
        %352 = vst [vmem:[#allocation3] sm:$0xff] 0.0
        %353 = vst [vmem:[#allocation3 + $0x8] sm:$0xff] 0.0
        %354 = vst [vmem:[#allocation3 + $0x10] sm:$0xff] 0.0
        %355 = vst [vmem:[#allocation4] sm:$0xff] 0.0
      $region64: #{snn_lstm_forward.9} parent=59 // pred_fallthru
        _
      %v356 = vld [vmem:[%s344] sm:$0xff]
      %v357 = vld [vmem:[%s344 + $0x8] sm:$0xff]
      %v358 = vld [vmem:[%s344 + $0x10] sm:$0xff]
      %v359 = vld [vmem:[%s344 + $0x18] sm:$0xff]
      %v360 = vld [vmem:[%s344 + $0x20] sm:$0xff]
      %v361 = vld [vmem:[%s344 + $0x28] sm:$0xff]
      %v362 = vld [vmem:[%s1] sm:$0xff]
      %v363 = vld [vmem:[%s1 + $0x8] sm:$0xff]
      %v364 = vld [vmem:[%s1 + $0x10] sm:$0xff]
      %v365 = vld [vmem:[%s1 + $0x18] sm:$0xff]
      %v366 = vld [vmem:[%s1 + $0x20] sm:$0xff]
      %v367 = vld [vmem:[%s1 + $0x28] sm:$0xff]
      %v368 = vld [vmem:[%s1 + $0x30] sm:$0xff]
      %v369 = vld [vmem:[%s1 + $0x38] sm:$0xff]
      %v370 = vld [vmem:[%s1 + $0x40] sm:$0xff]
      %v371 = vld [vmem:[%s1 + $0x48] sm:$0xff]
      %v372 = vld [vmem:[%s1 + $0x50] sm:$0xff]
      %v373 = vld [vmem:[%s1 + $0x58] sm:$0xff]
      %v374 = vld [vmem:[%s1 + $0x60] sm:$0xff]
      %v375 = vld [vmem:[%s1 + $0x68] sm:$0xff]
      %v376 = vld [vmem:[%s1 + $0x70] sm:$0xff]
      %v377 = vld [vmem:[%s1 + $0x78] sm:$0xff]
      %v378 = vld [vmem:[%s1 + $0x80] sm:$0xff]
      %v379 = vld [vmem:[%s1 + $0x88] sm:$0xff]
      %v380 = vld [vmem:[%s1 + $0x90] sm:$0xff]
      %v381 = vld [vmem:[%s1 + $0x98] sm:$0xff]
      %v382 = vld [vmem:[%s1 + $0xa0] sm:$0xff]
      %v383 = vld [vmem:[%s1 + $0xa8] sm:$0xff]
      %v384 = vld [vmem:[%s1 + $0xb0] sm:$0xff]
      %v385 = vld [vmem:[%s1 + $0xb8] sm:$0xff]
      %v386 = vld [vmem:[%s1 + $0xc0] sm:$0xff]
      %v387 = vld [vmem:[%s1 + $0xc8] sm:$0xff]
      %v388 = vld [vmem:[%s1 + $0xd0] sm:$0xff]
      %v389 = vld [vmem:[%s1 + $0xd8] sm:$0xff]
      %v390 = vld [vmem:[%s1 + $0xe0] sm:$0xff]
      %v391 = vld [vmem:[%s1 + $0xe8] sm:$0xff]
      %v392 = vld [vmem:[%s1 + $0xf0] sm:$0xff]
      %v393 = vld [vmem:[%s1 + $0xf8] sm:$0xff]
      %v394 = vld [vmem:[%s1 + $0x100] sm:$0xff]
      %v395 = vld [vmem:[%s1 + $0x108] sm:$0xff]
      %v396 = vld [vmem:[%s1 + $0x110] sm:$0xff]
      %v397 = vld [vmem:[%s1 + $0x118] sm:$0xff]
      %v398 = vld [vmem:[%s1 + $0x120] sm:$0xff]
      %v399 = vld [vmem:[%s1 + $0x128] sm:$0xff]
      %v400 = vld [vmem:[%s1 + $0x130] sm:$0xff]
      %v401 = vld [vmem:[%s1 + $0x138] sm:$0xff]
      %v402 = vld [vmem:[%s1 + $0x140] sm:$0xff]
      %v403 = vld [vmem:[%s1 + $0x148] sm:$0xff]
      %v404 = vld [vmem:[%s1 + $0x150] sm:$0xff]
      %v405 = vld [vmem:[%s1 + $0x158] sm:$0xff]
      %v406 = vld [vmem:[%s1 + $0x160] sm:$0xff]
      %v407 = vld [vmem:[%s1 + $0x168] sm:$0xff]
      %v408 = vld [vmem:[%s1 + $0x170] sm:$0xff]
      %v409 = vld [vmem:[%s1 + $0x178] sm:$0xff]
      %v410 = vld [vmem:[%s1 + $0x180] sm:$0xff]
      %v411 = vld [vmem:[%s1 + $0x188] sm:$0xff]
      %v412 = vld [vmem:[%s1 + $0x190] sm:$0xff]
      %v413 = vld [vmem:[%s1 + $0x198] sm:$0xff]
      %v414 = vld [vmem:[%s1 + $0x1a0] sm:$0xff]
      %v415 = vld [vmem:[%s1 + $0x1a8] sm:$0xff]
      %v416 = vld [vmem:[%s1 + $0x1b0] sm:$0xff]
      %v417 = vld [vmem:[%s1 + $0x1b8] sm:$0xff]
      %v418 = vld [vmem:[%s1 + $0x1c0] sm:$0xff]
      %v419 = vld [vmem:[%s1 + $0x1c8] sm:$0xff]
      %v420 = vld [vmem:[%s1 + $0x1d0] sm:$0xff]
      %v421 = vld [vmem:[%s1 + $0x1d8] sm:$0xff]
      %v422 = vld [vmem:[%s1 + $0x1e0] sm:$0xff]
      %v423 = vld [vmem:[%s1 + $0x1e8] sm:$0xff]
      %v424 = vld [vmem:[%s1 + $0x1f0] sm:$0xff]
      %v425 = vld [vmem:[%s1 + $0x1f8] sm:$0xff]
      %v426 = vld [vmem:[%s1 + $0x200] sm:$0xff]
      %v427 = vld [vmem:[%s1 + $0x208] sm:$0xff]
      %v428 = vld [vmem:[%s1 + $0x210] sm:$0xff]
      %v429 = vld [vmem:[%s1 + $0x218] sm:$0xff]
      %v430 = vld [vmem:[%s1 + $0x220] sm:$0xff]
      %v431 = vld [vmem:[%s1 + $0x228] sm:$0xff]
      %v432 = vld [vmem:[%s1 + $0x230] sm:$0xff]
      %v433 = vld [vmem:[%s1 + $0x238] sm:$0xff]
      %v434 = vld [vmem:[%s1 + $0x240] sm:$0xff]
      %v435 = vld [vmem:[%s1 + $0x248] sm:$0xff]
      %v436 = vld [vmem:[%s1 + $0x250] sm:$0xff]
      %v437 = vld [vmem:[%s1 + $0x258] sm:$0xff]
      %v438 = vld [vmem:[%s1 + $0x260] sm:$0xff]
      %v439 = vld [vmem:[%s1 + $0x268] sm:$0xff]
      %v440 = vld [vmem:[%s1 + $0x270] sm:$0xff]
      %v441 = vld [vmem:[%s1 + $0x278] sm:$0xff]
      %v442 = vld [vmem:[%s1 + $0x280] sm:$0xff]
      %v443 = vld [vmem:[%s1 + $0x288] sm:$0xff]
      %v444 = vld [vmem:[%s1 + $0x290] sm:$0xff]
      %v445 = vld [vmem:[%s1 + $0x298] sm:$0xff]
      %v446 = vld [vmem:[%s1 + $0x2a0] sm:$0xff]
      %v447 = vld [vmem:[%s1 + $0x2a8] sm:$0xff]
      %v448 = vld [vmem:[%s1 + $0x2b0] sm:$0xff]
      %v449 = vld [vmem:[%s1 + $0x2b8] sm:$0xff]
      %v450 = vld [vmem:[%s1 + $0x2c0] sm:$0xff]
      %v451 = vld [vmem:[%s1 + $0x2c8] sm:$0xff]
      %v452 = vld [vmem:[%s1 + $0x2d0] sm:$0xff]
      %v453 = vld [vmem:[%s1 + $0x2d8] sm:$0xff]
      %v454 = vld [vmem:[%s1 + $0x2e0] sm:$0xff]
      %v455 = vld [vmem:[%s1 + $0x2e8] sm:$0xff]
      %v456 = vld [vmem:[%s1 + $0x2f0] sm:$0xff]
      %v457 = vld [vmem:[%s1 + $0x2f8] sm:$0xff]
      %v458 = vld [vmem:[%s1 + $0x300] sm:$0xff]
      %v459 = vld [vmem:[%s1 + $0x308] sm:$0xff]
      %v460 = vld [vmem:[%s1 + $0x310] sm:$0xff]
      %v461 = vld [vmem:[%s1 + $0x318] sm:$0xff]
      %v462 = vld [vmem:[%s1 + $0x320] sm:$0xff]
      %v463 = vld [vmem:[%s1 + $0x328] sm:$0xff]
      %v464 = vld [vmem:[%s1 + $0x330] sm:$0xff]
      %v465 = vld [vmem:[%s1 + $0x338] sm:$0xff]
      %v466 = vld [vmem:[%s1 + $0x340] sm:$0xff]
      %v467 = vld [vmem:[%s1 + $0x348] sm:$0xff]
      %v468 = vld [vmem:[%s1 + $0x350] sm:$0xff]
      %v469 = vld [vmem:[%s1 + $0x358] sm:$0xff]
      %v470 = vld [vmem:[%s1 + $0x360] sm:$0xff]
      %v471 = vld [vmem:[%s1 + $0x368] sm:$0xff]
      %v472 = vld [vmem:[%s1 + $0x370] sm:$0xff]
      %v473 = vld [vmem:[%s1 + $0x378] sm:$0xff]
      %v474 = vld [vmem:[%s1 + $0x380] sm:$0xff]
      %v475 = vld [vmem:[%s1 + $0x388] sm:$0xff]
      %v476 = vld [vmem:[%s1 + $0x390] sm:$0xff]
      %v477 = vld [vmem:[%s1 + $0x398] sm:$0xff]
      %v478 = vld [vmem:[%s1 + $0x3a0] sm:$0xff]
      %v479 = vld [vmem:[%s1 + $0x3a8] sm:$0xff]
      %v480 = vld [vmem:[%s1 + $0x3b0] sm:$0xff]
      %v481 = vld [vmem:[%s1 + $0x3b8] sm:$0xff]
      %v482 = vld [vmem:[%s1 + $0x3c0] sm:$0xff]
      %v483 = vld [vmem:[%s1 + $0x3c8] sm:$0xff]
      %v484 = vld [vmem:[%s1 + $0x3d0] sm:$0xff]
      %v485 = vld [vmem:[%s1 + $0x3d8] sm:$0xff]
      %v486 = vld [vmem:[%s1 + $0x3e0] sm:$0xff]
      %v487 = vld [vmem:[%s1 + $0x3e8] sm:$0xff]
      %v488 = vld [vmem:[%s1 + $0x3f0] sm:$0xff]
      %v489 = vld [vmem:[%s1 + $0x3f8] sm:$0xff]
      %v490 = vld [vmem:[%s1 + $0x400] sm:$0xff]
      %v491 = vld [vmem:[%s1 + $0x408] sm:$0xff]
      %v492 = vld [vmem:[%s1 + $0x410] sm:$0xff]
      %v493 = vld [vmem:[%s1 + $0x418] sm:$0xff]
      %v494 = vld [vmem:[%s1 + $0x420] sm:$0xff]
      %v495 = vld [vmem:[%s1 + $0x428] sm:$0xff]
      %v496 = vld [vmem:[%s1 + $0x430] sm:$0xff]
      %v497 = vld [vmem:[%s1 + $0x438] sm:$0xff]
      %v498 = vld [vmem:[%s1 + $0x440] sm:$0xff]
      %v499 = vld [vmem:[%s1 + $0x448] sm:$0xff]
      %v500 = vld [vmem:[%s1 + $0x450] sm:$0xff]
      %v501 = vld [vmem:[%s1 + $0x458] sm:$0xff]
      %v502 = vld [vmem:[%s1 + $0x460] sm:$0xff]
      %v503 = vld [vmem:[%s1 + $0x468] sm:$0xff]
      %v504 = vld [vmem:[%s1 + $0x470] sm:$0xff]
      %v505 = vld [vmem:[%s1 + $0x478] sm:$0xff]
      %v506 = vld [vmem:[%s1 + $0x480] sm:$0xff]
      %v507 = vld [vmem:[%s1 + $0x488] sm:$0xff]
      %v508 = vld [vmem:[%s1 + $0x490] sm:$0xff]
      %v509 = vld [vmem:[%s1 + $0x498] sm:$0xff]
      %v510 = vld [vmem:[%s1 + $0x4a0] sm:$0xff]
      %v511 = vld [vmem:[%s1 + $0x4a8] sm:$0xff]
      %v512 = vld [vmem:[%s1 + $0x4b0] sm:$0xff]
      %v513 = vld [vmem:[%s1 + $0x4b8] sm:$0xff]
      %v514 = vld [vmem:[%s1 + $0x4c0] sm:$0xff]
      %v515 = vld [vmem:[%s1 + $0x4c8] sm:$0xff]
      %v516 = vld [vmem:[%s1 + $0x4d0] sm:$0xff]
      %v517 = vld [vmem:[%s1 + $0x4d8] sm:$0xff]
      %v518 = vld [vmem:[%s1 + $0x4e0] sm:$0xff]
      %v519 = vld [vmem:[%s1 + $0x4e8] sm:$0xff]
      %v520 = vld [vmem:[%s1 + $0x4f0] sm:$0xff]
      %v521 = vld [vmem:[%s1 + $0x4f8] sm:$0xff]
      %v522 = vld [vmem:[%s1 + $0x500] sm:$0xff]
      %v523 = vld [vmem:[%s1 + $0x508] sm:$0xff]
      %v524 = vld [vmem:[%s1 + $0x510] sm:$0xff]
      %v525 = vld [vmem:[%s1 + $0x518] sm:$0xff]
      %v526 = vld [vmem:[%s1 + $0x520] sm:$0xff]
      %v527 = vld [vmem:[%s1 + $0x528] sm:$0xff]
      %v528 = vld [vmem:[%s1 + $0x530] sm:$0xff]
      %v529 = vld [vmem:[%s1 + $0x538] sm:$0xff]
      %v530 = vld [vmem:[%s1 + $0x540] sm:$0xff]
      %v531 = vld [vmem:[%s1 + $0x548] sm:$0xff]
      %v532 = vld [vmem:[%s1 + $0x550] sm:$0xff]
      %v533 = vld [vmem:[%s1 + $0x558] sm:$0xff]
      %v534 = vld [vmem:[%s1 + $0x560] sm:$0xff]
      %v535 = vld [vmem:[%s1 + $0x568] sm:$0xff]
      %v536 = vld [vmem:[%s1 + $0x570] sm:$0xff]
      %v537 = vld [vmem:[%s1 + $0x578] sm:$0xff]
      %v538 = vld [vmem:[%s1 + $0x580] sm:$0xff]
      %v539 = vld [vmem:[%s1 + $0x588] sm:$0xff]
      %v540 = vld [vmem:[%s1 + $0x590] sm:$0xff]
      %v541 = vld [vmem:[%s1 + $0x598] sm:$0xff]
      %v542 = vld [vmem:[%s1 + $0x5a0] sm:$0xff]
      %v543 = vld [vmem:[%s1 + $0x5a8] sm:$0xff]
      %v544 = vld [vmem:[%s1 + $0x5b0] sm:$0xff]
      %v545 = vld [vmem:[%s1 + $0x5b8] sm:$0xff]
      %v546 = vld [vmem:[%s1 + $0x5c0] sm:$0xff]
      %v547 = vld [vmem:[%s1 + $0x5c8] sm:$0xff]
      %v548 = vld [vmem:[%s1 + $0x5d0] sm:$0xff]
      %v549 = vld [vmem:[%s1 + $0x5d8] sm:$0xff]
      %v550 = vld [vmem:[%s1 + $0x5e0] sm:$0xff]
      %v551 = vld [vmem:[%s1 + $0x5e8] sm:$0xff]
      %v552 = vld [vmem:[%s1 + $0x5f0] sm:$0xff]
      %v553 = vld [vmem:[%s1 + $0x5f8] sm:$0xff]
      %v554 = vld [vmem:[%s1 + $0x600] sm:$0xff]
      %v555 = vld [vmem:[%s1 + $0x608] sm:$0xff]
      %v556 = vld [vmem:[%s1 + $0x610] sm:$0xff]
      %v557 = vld [vmem:[%s1 + $0x618] sm:$0xff]
      %v558 = vld [vmem:[%s1 + $0x620] sm:$0xff]
      %v559 = vld [vmem:[%s1 + $0x628] sm:$0xff]
      %v560 = vld [vmem:[%s1 + $0x630] sm:$0xff]
      %v561 = vld [vmem:[%s1 + $0x638] sm:$0xff]
      %v562 = vld [vmem:[%s1 + $0x640] sm:$0xff]
      %v563 = vld [vmem:[%s1 + $0x648] sm:$0xff]
      %v564 = vld [vmem:[%s1 + $0x650] sm:$0xff]
      %v565 = vld [vmem:[%s1 + $0x658] sm:$0xff]
      %v566 = vld [vmem:[%s1 + $0x660] sm:$0xff]
      %v567 = vld [vmem:[%s1 + $0x668] sm:$0xff]
      %v568 = vld [vmem:[%s1 + $0x670] sm:$0xff]
      %v569 = vld [vmem:[%s1 + $0x678] sm:$0xff]
      %v570 = vld [vmem:[%s1 + $0x680] sm:$0xff]
      %v571 = vld [vmem:[%s1 + $0x688] sm:$0xff]
      %v572 = vld [vmem:[%s1 + $0x690] sm:$0xff]
      %v573 = vld [vmem:[%s1 + $0x698] sm:$0xff]
      %v574 = vld [vmem:[%s1 + $0x6a0] sm:$0xff]
      %v575 = vld [vmem:[%s1 + $0x6a8] sm:$0xff]
      %v576 = vld [vmem:[%s1 + $0x6b0] sm:$0xff]
      %v577 = vld [vmem:[%s1 + $0x6b8] sm:$0xff]
      %v578 = vld [vmem:[%s1 + $0x6c0] sm:$0xff]
      %v579 = vld [vmem:[%s1 + $0x6c8] sm:$0xff]
      %v580 = vld [vmem:[%s1 + $0x6d0] sm:$0xff]
      %v581 = vld [vmem:[%s1 + $0x6d8] sm:$0xff]
      %v582 = vld [vmem:[%s1 + $0x6e0] sm:$0xff]
      %v583 = vld [vmem:[%s1 + $0x6e8] sm:$0xff]
      %v584 = vld [vmem:[%s1 + $0x6f0] sm:$0xff]
      %v585 = vld [vmem:[%s1 + $0x6f8] sm:$0xff]
      %v586 = vld [vmem:[%s1 + $0x700] sm:$0xff]
      %v587 = vld [vmem:[%s1 + $0x708] sm:$0xff]
      %v588 = vld [vmem:[%s1 + $0x710] sm:$0xff]
      %v589 = vld [vmem:[%s1 + $0x718] sm:$0xff]
      %v590 = vld [vmem:[%s1 + $0x720] sm:$0xff]
      %v591 = vld [vmem:[%s1 + $0x728] sm:$0xff]
      %v592 = vld [vmem:[%s1 + $0x730] sm:$0xff]
      %v593 = vld [vmem:[%s1 + $0x738] sm:$0xff]
      %v594 = vld [vmem:[%s1 + $0x740] sm:$0xff]
      %v595 = vld [vmem:[%s1 + $0x748] sm:$0xff]
      %v596 = vld [vmem:[%s1 + $0x750] sm:$0xff]
      %v597 = vld [vmem:[%s1 + $0x758] sm:$0xff]
      %v598 = vld [vmem:[%s1 + $0x760] sm:$0xff]
      %v599 = vld [vmem:[%s1 + $0x768] sm:$0xff]
      %v600 = vld [vmem:[%s1 + $0x770] sm:$0xff]
      %v601 = vld [vmem:[%s1 + $0x778] sm:$0xff]
      %v602 = vld [vmem:[%s1 + $0x780] sm:$0xff]
      %v603 = vld [vmem:[%s1 + $0x788] sm:$0xff]
      %v604 = vld [vmem:[%s1 + $0x790] sm:$0xff]
      %v605 = vld [vmem:[%s1 + $0x798] sm:$0xff]
      %v606 = vld [vmem:[%s1 + $0x7a0] sm:$0xff]
      %v607 = vld [vmem:[%s1 + $0x7a8] sm:$0xff]
      %v608 = vld [vmem:[%s1 + $0x7b0] sm:$0xff]
      %v609 = vld [vmem:[%s1 + $0x7b8] sm:$0xff]
      %v610 = vld [vmem:[%s1 + $0x7c0] sm:$0xff]
      %v611 = vld [vmem:[%s1 + $0x7c8] sm:$0xff]
      %v612 = vld [vmem:[%s1 + $0x7d0] sm:$0xff]
      %v613 = vld [vmem:[%s1 + $0x7d8] sm:$0xff]
      %v614 = vld [vmem:[%s1 + $0x7e0] sm:$0xff]
      %v615 = vld [vmem:[%s1 + $0x7e8] sm:$0xff]
      %v616 = vld [vmem:[%s1 + $0x7f0] sm:$0xff]
      %v617 = vld [vmem:[%s1 + $0x7f8] sm:$0xff]
      %v618 = vld [vmem:[%s1 + $0x800] sm:$0xff]
      %v619 = vld [vmem:[%s1 + $0x808] sm:$0xff]
      %v620 = vld [vmem:[%s1 + $0x810] sm:$0xff]
      %v621 = vld [vmem:[%s1 + $0x818] sm:$0xff]
      %v622 = vld [vmem:[%s1 + $0x820] sm:$0xff]
      %v623 = vld [vmem:[%s1 + $0x828] sm:$0xff]
      %v624 = vld [vmem:[%s1 + $0x830] sm:$0xff]
      %v625 = vld [vmem:[%s1 + $0x838] sm:$0xff]
      %v626 = vld [vmem:[%s1 + $0x840] sm:$0xff]
      %v627 = vld [vmem:[%s1 + $0x848] sm:$0xff]
      %v628 = vld [vmem:[%s1 + $0x850] sm:$0xff]
      %v629 = vld [vmem:[%s1 + $0x858] sm:$0xff]
      %v630 = vld [vmem:[%s1 + $0x860] sm:$0xff]
      %v631 = vld [vmem:[%s1 + $0x868] sm:$0xff]
      %v632 = vld [vmem:[%s1 + $0x870] sm:$0xff]
      %v633 = vld [vmem:[%s1 + $0x878] sm:$0xff]
      %v634 = vld [vmem:[%s1 + $0x880] sm:$0xff]
      %v635 = vld [vmem:[%s1 + $0x888] sm:$0xff]
      %v636 = vld [vmem:[%s1 + $0x890] sm:$0xff]
      %v637 = vld [vmem:[%s1 + $0x898] sm:$0xff]
      %v638 = vld [vmem:[%s1 + $0x8a0] sm:$0xff]
      %v639 = vld [vmem:[%s1 + $0x8a8] sm:$0xff]
      %v640 = vld [vmem:[%s1 + $0x8b0] sm:$0xff]
      %v641 = vld [vmem:[%s1 + $0x8b8] sm:$0xff]
      %v642 = vld [vmem:[%s1 + $0x8c0] sm:$0xff]
      %v643 = vld [vmem:[%s1 + $0x8c8] sm:$0xff]
      %v644 = vld [vmem:[%s1 + $0x8d0] sm:$0xff]
      %v645 = vld [vmem:[%s1 + $0x8d8] sm:$0xff]
      %v646 = vld [vmem:[%s1 + $0x8e0] sm:$0xff]
      %v647 = vld [vmem:[%s1 + $0x8e8] sm:$0xff]
      %v648 = vld [vmem:[%s1 + $0x8f0] sm:$0xff]
      %v649 = vld [vmem:[%s1 + $0x8f8] sm:$0xff]
      %v650 = vld [vmem:[%s1 + $0x900] sm:$0xff]
      %v651 = vld [vmem:[%s1 + $0x908] sm:$0xff]
      %v652 = vld [vmem:[%s1 + $0x910] sm:$0xff]
      %v653 = vld [vmem:[%s1 + $0x918] sm:$0xff]
      %v654 = vld [vmem:[%s1 + $0x920] sm:$0xff]
      %v655 = vld [vmem:[%s1 + $0x928] sm:$0xff]
      %v656 = vld [vmem:[%s1 + $0x930] sm:$0xff]
      %v657 = vld [vmem:[%s1 + $0x938] sm:$0xff]
      %v658 = vld [vmem:[%s1 + $0x940] sm:$0xff]
      %v659 = vld [vmem:[%s1 + $0x948] sm:$0xff]
      %v660 = vld [vmem:[%s1 + $0x950] sm:$0xff]
      %v661 = vld [vmem:[%s1 + $0x958] sm:$0xff]
      %v662 = vld [vmem:[%s1 + $0x960] sm:$0xff]
      %v663 = vld [vmem:[%s1 + $0x968] sm:$0xff]
      %v664 = vld [vmem:[%s1 + $0x970] sm:$0xff]
      %v665 = vld [vmem:[%s1 + $0x978] sm:$0xff]
      %v666 = vld [vmem:[%s1 + $0x980] sm:$0xff]
      %v667 = vld [vmem:[%s1 + $0x988] sm:$0xff]
      %v668 = vld [vmem:[%s1 + $0x990] sm:$0xff]
      %v669 = vld [vmem:[%s1 + $0x998] sm:$0xff]
      %v670 = vld [vmem:[%s1 + $0x9a0] sm:$0xff]
      %v671 = vld [vmem:[%s1 + $0x9a8] sm:$0xff]
      %v672 = vld [vmem:[%s1 + $0x9b0] sm:$0xff]
      %v673 = vld [vmem:[%s1 + $0x9b8] sm:$0xff]
      %v674 = vld [vmem:[%s1 + $0x9c0] sm:$0xff]
      %v675 = vld [vmem:[%s1 + $0x9c8] sm:$0xff]
      %v676 = vld [vmem:[%s1 + $0x9d0] sm:$0xff]
      %v677 = vld [vmem:[%s1 + $0x9d8] sm:$0xff]
      %v678 = vld [vmem:[%s1 + $0x9e0] sm:$0xff]
      %v679 = vld [vmem:[%s1 + $0x9e8] sm:$0xff]
      %v680 = vld [vmem:[%s1 + $0x9f0] sm:$0xff]
      %v681 = vld [vmem:[%s1 + $0x9f8] sm:$0xff]
      %v682 = vld [vmem:[%s1 + $0xa00] sm:$0xff]
      %v683 = vld [vmem:[%s1 + $0xa08] sm:$0xff]
      %v684 = vld [vmem:[%s1 + $0xa10] sm:$0xff]
      %v685 = vld [vmem:[%s1 + $0xa18] sm:$0xff]
      %v686 = vld [vmem:[%s1 + $0xa20] sm:$0xff]
      %v687 = vld [vmem:[%s1 + $0xa28] sm:$0xff]
      %v688 = vld [vmem:[%s1 + $0xa30] sm:$0xff]
      %v689 = vld [vmem:[%s1 + $0xa38] sm:$0xff]
      %v690 = vld [vmem:[%s1 + $0xa40] sm:$0xff]
      %v691 = vld [vmem:[%s1 + $0xa48] sm:$0xff]
      %v692 = vld [vmem:[%s1 + $0xa50] sm:$0xff]
      %v693 = vld [vmem:[%s1 + $0xa58] sm:$0xff]
      %v694 = vld [vmem:[%s1 + $0xa60] sm:$0xff]
      %v695 = vld [vmem:[%s1 + $0xa68] sm:$0xff]
      %v696 = vld [vmem:[%s1 + $0xa70] sm:$0xff]
      %v697 = vld [vmem:[%s1 + $0xa78] sm:$0xff]
      %v698 = vld [vmem:[%s1 + $0xa80] sm:$0xff]
      %v699 = vld [vmem:[%s1 + $0xa88] sm:$0xff]
      %v700 = vld [vmem:[%s1 + $0xa90] sm:$0xff]
      %v701 = vld [vmem:[%s1 + $0xa98] sm:$0xff]
      %v702 = vld [vmem:[%s1 + $0xaa0] sm:$0xff]
      %v703 = vld [vmem:[%s1 + $0xaa8] sm:$0xff]
      %v704 = vld [vmem:[%s1 + $0xab0] sm:$0xff]
      %v705 = vld [vmem:[%s1 + $0xab8] sm:$0xff]
      %v706 = vld [vmem:[%s1 + $0xac0] sm:$0xff]
      %v707 = vld [vmem:[%s1 + $0xac8] sm:$0xff]
      %v708 = vld [vmem:[%s1 + $0xad0] sm:$0xff]
      %v709 = vld [vmem:[%s1 + $0xad8] sm:$0xff]
      %v710 = vld [vmem:[%s1 + $0xae0] sm:$0xff]
      %v711 = vld [vmem:[%s1 + $0xae8] sm:$0xff]
      %v712 = vld [vmem:[%s1 + $0xaf0] sm:$0xff]
      %v713 = vld [vmem:[%s1 + $0xaf8] sm:$0xff]
      %v714 = vld [vmem:[%s1 + $0xb00] sm:$0xff]
      %v715 = vld [vmem:[%s1 + $0xb08] sm:$0xff]
      %v716 = vld [vmem:[%s1 + $0xb10] sm:$0xff]
      %v717 = vld [vmem:[%s1 + $0xb18] sm:$0xff]
      %v718 = vld [vmem:[%s1 + $0xb20] sm:$0xff]
      %v719 = vld [vmem:[%s1 + $0xb28] sm:$0xff]
      %v720 = vld [vmem:[%s1 + $0xb30] sm:$0xff]
      %v721 = vld [vmem:[%s1 + $0xb38] sm:$0xff]
      %v722 = vld [vmem:[%s1 + $0xb40] sm:$0xff]
      %v723 = vld [vmem:[%s1 + $0xb48] sm:$0xff]
      %v724 = vld [vmem:[%s1 + $0xb50] sm:$0xff]
      %v725 = vld [vmem:[%s1 + $0xb58] sm:$0xff]
      %v726 = vld [vmem:[%s1 + $0xb60] sm:$0xff]
      %v727 = vld [vmem:[%s1 + $0xb68] sm:$0xff]
      %v728 = vld [vmem:[%s1 + $0xb70] sm:$0xff]
      %v729 = vld [vmem:[%s1 + $0xb78] sm:$0xff]
      %v730 = vld [vmem:[%s1 + $0xb80] sm:$0xff]
      %v731 = vld [vmem:[%s1 + $0xb88] sm:$0xff]
      %v732 = vld [vmem:[%s1 + $0xb90] sm:$0xff]
      %v733 = vld [vmem:[%s1 + $0xb98] sm:$0xff]
      %v734 = vld [vmem:[%s1 + $0xba0] sm:$0xff]
      %v735 = vld [vmem:[%s1 + $0xba8] sm:$0xff]
      %v736 = vld [vmem:[%s1 + $0xbb0] sm:$0xff]
      %v737 = vld [vmem:[%s1 + $0xbb8] sm:$0xff]
      %v738 = vld [vmem:[%s1 + $0xbc0] sm:$0xff]
      %v739 = vld [vmem:[%s1 + $0xbc8] sm:$0xff]
      %v740 = vld [vmem:[%s1 + $0xbd0] sm:$0xff]
      %v741 = vld [vmem:[%s1 + $0xbd8] sm:$0xff]
      %v742 = vld [vmem:[%s1 + $0xbe0] sm:$0xff]
      %v743 = vld [vmem:[%s1 + $0xbe8] sm:$0xff]
      %v744 = vld [vmem:[%s1 + $0xbf0] sm:$0xff]
      %v745 = vld [vmem:[%s1 + $0xbf8] sm:$0xff]
      %v746 = vld [vmem:[#allocation2] sm:$0xff]
      %v747 = vld [vmem:[%s2] sm:$0xff]
      %v748 = vld [vmem:[%s2 + $0x8] sm:$0xff]
      %v749 = vld [vmem:[%s2 + $0x10] sm:$0xff]
      %v750 = vld [vmem:[%s2 + $0x18] sm:$0xff]
      %v751 = vld [vmem:[%s2 + $0x20] sm:$0xff]
      %v752 = vld [vmem:[%s2 + $0x28] sm:$0xff]
      %v753 = vld [vmem:[%s2 + $0x30] sm:$0xff]
      %v754 = vld [vmem:[%s2 + $0x38] sm:$0xff]
      %v755 = vld [vmem:[%s2 + $0x40] sm:$0xff]
      %v756 = vld [vmem:[%s2 + $0x48] sm:$0xff]
      %v757 = vld [vmem:[%s2 + $0x50] sm:$0xff]
      %v758 = vld [vmem:[%s2 + $0x58] sm:$0xff]
      %v759 = vld [vmem:[%s2 + $0x60] sm:$0xff]
      %v760 = vld [vmem:[%s2 + $0x68] sm:$0xff]
      %v761 = vld [vmem:[%s2 + $0x70] sm:$0xff]
      %v762 = vld [vmem:[%s2 + $0x78] sm:$0xff]
      %v763 = vld [vmem:[%s2 + $0x80] sm:$0xff]
      %v764 = vld [vmem:[%s2 + $0x88] sm:$0xff]
      %v765 = vld [vmem:[%s2 + $0x90] sm:$0xff]
      %v766 = vld [vmem:[%s2 + $0x98] sm:$0xff]
      %v767 = vld [vmem:[%s2 + $0xa0] sm:$0xff]
      %v768 = vld [vmem:[%s2 + $0xa8] sm:$0xff]
      %v769 = vld [vmem:[%s2 + $0xb0] sm:$0xff]
      %v770 = vld [vmem:[%s2 + $0xb8] sm:$0xff]
      %v771 = vld [vmem:[%s2 + $0xc0] sm:$0xff]
      %v772 = vld [vmem:[%s2 + $0xc8] sm:$0xff]
      %v773 = vld [vmem:[%s2 + $0xd0] sm:$0xff]
      %v774 = vld [vmem:[%s2 + $0xd8] sm:$0xff]
      %v775 = vld [vmem:[%s2 + $0xe0] sm:$0xff]
      %v776 = vld [vmem:[%s2 + $0xe8] sm:$0xff]
      %v777 = vld [vmem:[%s2 + $0xf0] sm:$0xff]
      %v778 = vld [vmem:[%s2 + $0xf8] sm:$0xff]
      %v779 = vld [vmem:[%s2 + $0x100] sm:$0xff]
      %v780 = vld [vmem:[%s2 + $0x108] sm:$0xff]
      %v781 = vld [vmem:[%s2 + $0x110] sm:$0xff]
      %v782 = vld [vmem:[%s2 + $0x118] sm:$0xff]
      %v783 = vld [vmem:[%s2 + $0x120] sm:$0xff]
      %v784 = vld [vmem:[%s2 + $0x128] sm:$0xff]
      %v785 = vld [vmem:[%s2 + $0x130] sm:$0xff]
      %v786 = vld [vmem:[%s2 + $0x138] sm:$0xff]
      %v787 = vld [vmem:[%s2 + $0x140] sm:$0xff]
      %v788 = vld [vmem:[%s2 + $0x148] sm:$0xff]
      %v789 = vld [vmem:[%s2 + $0x150] sm:$0xff]
      %v790 = vld [vmem:[%s2 + $0x158] sm:$0xff]
      %v791 = vld [vmem:[%s2 + $0x160] sm:$0xff]
      %v792 = vld [vmem:[%s2 + $0x168] sm:$0xff]
      %v793 = vld [vmem:[%s2 + $0x170] sm:$0xff]
      %v794 = vld [vmem:[%s2 + $0x178] sm:$0xff]
      %v795 = vld [vmem:[%s2 + $0x180] sm:$0xff]
      %v796 = vld [vmem:[%s2 + $0x188] sm:$0xff]
      %v797 = vld [vmem:[%s2 + $0x190] sm:$0xff]
      %v798 = vld [vmem:[%s2 + $0x198] sm:$0xff]
      %v799 = vld [vmem:[%s2 + $0x1a0] sm:$0xff]
      %v800 = vld [vmem:[%s2 + $0x1a8] sm:$0xff]
      %v801 = vld [vmem:[%s2 + $0x1b0] sm:$0xff]
      %v802 = vld [vmem:[%s2 + $0x1b8] sm:$0xff]
      %v803 = vld [vmem:[%s2 + $0x1c0] sm:$0xff]
      %v804 = vld [vmem:[%s2 + $0x1c8] sm:$0xff]
      %v805 = vld [vmem:[%s2 + $0x1d0] sm:$0xff]
      %v806 = vld [vmem:[%s2 + $0x1d8] sm:$0xff]
      %v807 = vld [vmem:[%s2 + $0x1e0] sm:$0xff]
      %v808 = vld [vmem:[%s2 + $0x1e8] sm:$0xff]
      %v809 = vld [vmem:[%s2 + $0x1f0] sm:$0xff]
      %v810 = vld [vmem:[%s2 + $0x1f8] sm:$0xff]
      %811 = vmatprep.subr.mxu0 %v748
      %812 = vmatpush1.msra.mxu0 %v747
      %813 = vmatprep.subr.mxu0 %v752
      %814 = vmatpush1.msra.mxu0 %v751
      %815 = vmatprep.subr.mxu0 %v756
      %816 = vmatpush1.msra.mxu0 %v755
      %817 = vmatprep.subr.mxu0 %v760
      %818 = vmatpush1.msra.mxu0 %v759
      %819 = vmatprep.subr.mxu0 %v764
      %820 = vmatpush1.msra.mxu0 %v763
      %821 = vmatprep.subr.mxu0 %v768
      %822 = vmatpush1.msra.mxu0 %v767
      %823 = vmatprep.subr.mxu0 %v772
      %824 = vmatpush1.msra.mxu0 %v771
      %825 = vmatprep.subr.mxu0 %v776
      %826 = vmatpush1.msra.mxu0 %v775
      %827 = vmatprep.subr.mxu0 %v780
      %828 = vmatpush1.msra.mxu0 %v779
      %829 = vmatprep.subr.mxu0 %v784
      %830 = vmatpush1.msra.mxu0 %v783
      %831 = vmatprep.subr.mxu0 %v788
      %832 = vmatpush1.msra.mxu0 %v787
      %833 = vmatprep.subr.mxu0 %v792
      %834 = vmatpush1.msra.mxu0 %v791
      %835 = vmatprep.subr.mxu0 %v796
      %836 = vmatpush1.msra.mxu0 %v795
      %837 = vmatprep.subr.mxu0 %v800
      %838 = vmatpush1.msra.mxu0 %v799
      %839 = vmatprep.subr.mxu0 %v804
      %840 = vmatpush1.msra.mxu0 %v803
      %841 = vmatprep.subr.mxu0 %v808
      %842 = vmatpush1.msra.mxu0 %v807
      %843 = vmatprep.subr.mxu0 0.0
      %844 = vmatpush1.msra.mxu0 0.0
      %845 = vmatprep.subr.mxu0 0.0
      %846 = vmatpush1.msra.mxu0 0.0
      %847 = vmatprep.subr.mxu0 0.0
      %848 = vmatpush1.msra.mxu0 0.0
      %849 = vmatprep.subr.mxu0 0.0
      %850 = vmatpush1.msra.mxu0 0.0
      %851 = vmatprep.subr.mxu0 0.0
      %852 = vmatpush1.msra.mxu0 0.0
      %853 = vmatprep.subr.mxu0 0.0
      %854 = vmatpush1.msra.mxu0 0.0
      %855 = vmatprep.subr.mxu0 0.0
      %856 = vmatpush1.msra.mxu0 0.0
      %857 = vmatprep.subr.mxu0 0.0
      %858 = vmatpush1.msra.mxu0 0.0
      %859 = vmatprep.subr.mxu0 0.0
      %860 = vmatpush1.msra.mxu0 0.0
      %861 = vmatprep.subr.mxu0 0.0
      %862 = vmatpush1.msra.mxu0 0.0
      %863 = vmatprep.subr.mxu0 0.0
      %864 = vmatpush1.msra.mxu0 0.0
      %865 = vmatprep.subr.mxu0 0.0
      %866 = vmatpush1.msra.mxu0 0.0
      %867 = vmatprep.subr.mxu0 0.0
      %868 = vmatpush1.msra.mxu0 0.0
      %869 = vmatprep.subr.mxu0 0.0
      %870 = vmatpush1.msra.mxu0 0.0
      %871 = vmatprep.subr.mxu0 0.0
      %872 = vmatpush1.msra.mxu0 0.0
      %873 = vmatprep.subr.mxu0 0.0
      %874 = vmatpush1.msra.mxu0 0.0
      %875 = vmatprep.mubr.f32.mxu0 0.0
      %876 = vmatmul.mubr.f32.gmra.mrb[0].mxu0 %v746
      %v877 = vpop.f32.mrb[0].mxu0
      %v878 = vadd.f32 0.0, %v877
      %v879 = vpop.f32.mrb[0].mxu0
      %v880 = vadd.f32 0.0, %v879
      %881 = vdwg.mxu0
      %882 = vmatprep.subr.mxu0 %v750
      %883 = vmatpush1.msra.mxu0 %v749
      %884 = vmatprep.subr.mxu0 %v754
      %885 = vmatpush1.msra.mxu0 %v753
      %886 = vmatprep.subr.mxu0 %v758
      %887 = vmatpush1.msra.mxu0 %v757
      %888 = vmatprep.subr.mxu0 %v762
      %889 = vmatpush1.msra.mxu0 %v761
      %890 = vmatprep.subr.mxu0 %v766
      %891 = vmatpush1.msra.mxu0 %v765
      %892 = vmatprep.subr.mxu0 %v770
      %893 = vmatpush1.msra.mxu0 %v769
      %894 = vmatprep.subr.mxu0 %v774
      %895 = vmatpush1.msra.mxu0 %v773
      %896 = vmatprep.subr.mxu0 %v778
      %897 = vmatpush1.msra.mxu0 %v777
      %898 = vmatprep.subr.mxu0 %v782
      %899 = vmatpush1.msra.mxu0 %v781
      %900 = vmatprep.subr.mxu0 %v786
      %901 = vmatpush1.msra.mxu0 %v785
      %902 = vmatprep.subr.mxu0 %v790
      %903 = vmatpush1.msra.mxu0 %v789
      %904 = vmatprep.subr.mxu0 %v794
      %905 = vmatpush1.msra.mxu0 %v793
      %906 = vmatprep.subr.mxu0 %v798
      %907 = vmatpush1.msra.mxu0 %v797
      %908 = vmatprep.subr.mxu0 %v802
      %909 = vmatpush1.msra.mxu0 %v801
      %910 = vmatprep.subr.mxu0 %v806
      %911 = vmatpush1.msra.mxu0 %v805
      %912 = vmatprep.subr.mxu0 %v810
      %913 = vmatpush1.msra.mxu0 %v809
      %914 = vmatprep.subr.mxu0 0.0
      %915 = vmatpush1.msra.mxu0 0.0
      %916 = vmatprep.subr.mxu0 0.0
      %917 = vmatpush1.msra.mxu0 0.0
      %918 = vmatprep.subr.mxu0 0.0
      %919 = vmatpush1.msra.mxu0 0.0
      %920 = vmatprep.subr.mxu0 0.0
      %921 = vmatpush1.msra.mxu0 0.0
      %922 = vmatprep.subr.mxu0 0.0
      %923 = vmatpush1.msra.mxu0 0.0
      %924 = vmatprep.subr.mxu0 0.0
      %925 = vmatpush1.msra.mxu0 0.0
      %926 = vmatprep.subr.mxu0 0.0
      %927 = vmatpush1.msra.mxu0 0.0
      %928 = vmatprep.subr.mxu0 0.0
      %929 = vmatpush1.msra.mxu0 0.0
      %930 = vmatprep.subr.mxu0 0.0
      %931 = vmatpush1.msra.mxu0 0.0
      %932 = vmatprep.subr.mxu0 0.0
      %933 = vmatpush1.msra.mxu0 0.0
      %934 = vmatprep.subr.mxu0 0.0
      %935 = vmatpush1.msra.mxu0 0.0
      %936 = vmatprep.subr.mxu0 0.0
      %937 = vmatpush1.msra.mxu0 0.0
      %938 = vmatprep.subr.mxu0 0.0
      %939 = vmatpush1.msra.mxu0 0.0
      %940 = vmatprep.subr.mxu0 0.0
      %941 = vmatpush1.msra.mxu0 0.0
      %942 = vmatprep.subr.mxu0 0.0
      %943 = vmatpush1.msra.mxu0 0.0
      %944 = vmatprep.subr.mxu0 0.0
      %945 = vmatpush1.msra.mxu0 0.0
      %946 = vmatprep.mubr.f32.mxu0 0.0
      %947 = vmatmul.mubr.f32.gmra.mrb[0].mxu0 %v746
      %v948 = vpop.f32.mrb[0].mxu0
      %v949 = vadd.f32 0.0, %v948
      %v950 = vpop.f32.mrb[0].mxu0
      %v951 = vadd.f32 0.0, %v950
      %952 = vdwg.mxu0
      %953 = vmatprep.subr.mxu0 %v363
      %954 = vmatpush1.msra.mxu0 %v362
      %955 = vmatprep.subr.mxu0 %v367
      %956 = vmatpush1.msra.mxu0 %v366
      %957 = vmatprep.subr.mxu0 %v371
      %958 = vmatpush1.msra.mxu0 %v370
      %959 = vmatprep.subr.mxu0 %v375
      %960 = vmatpush1.msra.mxu0 %v374
      %961 = vmatprep.subr.mxu0 %v379
      %962 = vmatpush1.msra.mxu0 %v378
      %963 = vmatprep.subr.mxu0 %v383
      %964 = vmatpush1.msra.mxu0 %v382
      %965 = vmatprep.subr.mxu0 %v387
      %966 = vmatpush1.msra.mxu0 %v386
      %967 = vmatprep.subr.mxu0 %v391
      %968 = vmatpush1.msra.mxu0 %v390
      %969 = vmatprep.subr.mxu0 %v395
      %970 = vmatpush1.msra.mxu0 %v394
      %971 = vmatprep.subr.mxu0 %v399
      %972 = vmatpush1.msra.mxu0 %v398
      %973 = vmatprep.subr.mxu0 %v403
      %974 = vmatpush1.msra.mxu0 %v402
      %975 = vmatprep.subr.mxu0 %v407
      %976 = vmatpush1.msra.mxu0 %v406
      %977 = vmatprep.subr.mxu0 %v411
      %978 = vmatpush1.msra.mxu0 %v410
      %979 = vmatprep.subr.mxu0 %v415
      %980 = vmatpush1.msra.mxu0 %v414
      %981 = vmatprep.subr.mxu0 %v419
      %982 = vmatpush1.msra.mxu0 %v418
      %983 = vmatprep.subr.mxu0 %v423
      %984 = vmatpush1.msra.mxu0 %v422
      %985 = vmatprep.subr.mxu0 %v427
      %986 = vmatpush1.msra.mxu0 %v426
      %987 = vmatprep.subr.mxu0 %v431
      %988 = vmatpush1.msra.mxu0 %v430
      %989 = vmatprep.subr.mxu0 %v435
      %990 = vmatpush1.msra.mxu0 %v434
      %991 = vmatprep.subr.mxu0 %v439
      %992 = vmatpush1.msra.mxu0 %v438
      %993 = vmatprep.subr.mxu0 %v443
      %994 = vmatpush1.msra.mxu0 %v442
      %995 = vmatprep.subr.mxu0 %v447
      %996 = vmatpush1.msra.mxu0 %v446
      %997 = vmatprep.subr.mxu0 %v451
      %998 = vmatpush1.msra.mxu0 %v450
      %999 = vmatprep.subr.mxu0 %v455
      %1000 = vmatpush1.msra.mxu0 %v454
      %1001 = vmatprep.subr.mxu0 %v459
      %1002 = vmatpush1.msra.mxu0 %v458
      %1003 = vmatprep.subr.mxu0 %v463
      %1004 = vmatpush1.msra.mxu0 %v462
      %1005 = vmatprep.subr.mxu0 %v467
      %1006 = vmatpush1.msra.mxu0 %v466
      %1007 = vmatprep.subr.mxu0 %v471
      %1008 = vmatpush1.msra.mxu0 %v470
      %1009 = vmatprep.subr.mxu0 %v475
      %1010 = vmatpush1.msra.mxu0 %v474
      %1011 = vmatprep.subr.mxu0 %v479
      %1012 = vmatpush1.msra.mxu0 %v478
      %1013 = vmatprep.subr.mxu0 %v483
      %1014 = vmatpush1.msra.mxu0 %v482
      %1015 = vmatprep.subr.mxu0 %v487
      %1016 = vmatpush1.msra.mxu0 %v486
      %1017 = vmatprep.mubr.f32.mxu0 %v357
      %1018 = vmatmul.mubr.f32.gmra.mrb[0].mxu0 %v356
      %v1019 = vpop.f32.mrb[0].mxu0
      %v1020 = vadd.f32 %v878, %v1019
      %v1021 = vpop.f32.mrb[0].mxu0
      %v1022 = vadd.f32 %v880, %v1021
      %1023 = vdwg.mxu0
      %1024 = vmatprep.subr.mxu0 %v491
      %1025 = vmatpush1.msra.mxu0 %v490
      %1026 = vmatprep.subr.mxu0 %v495
      %1027 = vmatpush1.msra.mxu0 %v494
      %1028 = vmatprep.subr.mxu0 %v499
      %1029 = vmatpush1.msra.mxu0 %v498
      %1030 = vmatprep.subr.mxu0 %v503
      %1031 = vmatpush1.msra.mxu0 %v502
      %1032 = vmatprep.subr.mxu0 %v507
      %1033 = vmatpush1.msra.mxu0 %v506
      %1034 = vmatprep.subr.mxu0 %v511
      %1035 = vmatpush1.msra.mxu0 %v510
      %1036 = vmatprep.subr.mxu0 %v515
      %1037 = vmatpush1.msra.mxu0 %v514
      %1038 = vmatprep.subr.mxu0 %v519
      %1039 = vmatpush1.msra.mxu0 %v518
      %1040 = vmatprep.subr.mxu0 %v523
      %1041 = vmatpush1.msra.mxu0 %v522
      %1042 = vmatprep.subr.mxu0 %v527
      %1043 = vmatpush1.msra.mxu0 %v526
      %1044 = vmatprep.subr.mxu0 %v531
      %1045 = vmatpush1.msra.mxu0 %v530
      %1046 = vmatprep.subr.mxu0 %v535
      %1047 = vmatpush1.msra.mxu0 %v534
      %1048 = vmatprep.subr.mxu0 %v539
      %1049 = vmatpush1.msra.mxu0 %v538
      %1050 = vmatprep.subr.mxu0 %v543
      %1051 = vmatpush1.msra.mxu0 %v542
      %1052 = vmatprep.subr.mxu0 %v547
      %1053 = vmatpush1.msra.mxu0 %v546
      %1054 = vmatprep.subr.mxu0 %v551
      %1055 = vmatpush1.msra.mxu0 %v550
      %1056 = vmatprep.subr.mxu0 %v555
      %1057 = vmatpush1.msra.mxu0 %v554
      %1058 = vmatprep.subr.mxu0 %v559
      %1059 = vmatpush1.msra.mxu0 %v558
      %1060 = vmatprep.subr.mxu0 %v563
      %1061 = vmatpush1.msra.mxu0 %v562
      %1062 = vmatprep.subr.mxu0 %v567
      %1063 = vmatpush1.msra.mxu0 %v566
      %1064 = vmatprep.subr.mxu0 %v571
      %1065 = vmatpush1.msra.mxu0 %v570
      %1066 = vmatprep.subr.mxu0 %v575
      %1067 = vmatpush1.msra.mxu0 %v574
      %1068 = vmatprep.subr.mxu0 %v579
      %1069 = vmatpush1.msra.mxu0 %v578
      %1070 = vmatprep.subr.mxu0 %v583
      %1071 = vmatpush1.msra.mxu0 %v582
      %1072 = vmatprep.subr.mxu0 %v587
      %1073 = vmatpush1.msra.mxu0 %v586
      %1074 = vmatprep.subr.mxu0 %v591
      %1075 = vmatpush1.msra.mxu0 %v590
      %1076 = vmatprep.subr.mxu0 %v595
      %1077 = vmatpush1.msra.mxu0 %v594
      %1078 = vmatprep.subr.mxu0 %v599
      %1079 = vmatpush1.msra.mxu0 %v598
      %1080 = vmatprep.subr.mxu0 %v603
      %1081 = vmatpush1.msra.mxu0 %v602
      %1082 = vmatprep.subr.mxu0 %v607
      %1083 = vmatpush1.msra.mxu0 %v606
      %1084 = vmatprep.subr.mxu0 %v611
      %1085 = vmatpush1.msra.mxu0 %v610
      %1086 = vmatprep.subr.mxu0 %v615
      %1087 = vmatpush1.msra.mxu0 %v614
      %1088 = vmatprep.mubr.f32.mxu0 %v359
      %1089 = vmatmul.mubr.f32.gmra.mrb[0].mxu0 %v358
      %v1090 = vpop.f32.mrb[0].mxu0
      %v1091 = vadd.f32 %v1020, %v1090
      %v1092 = vpop.f32.mrb[0].mxu0
      %v1093 = vadd.f32 %v1022, %v1092
      %1094 = vdwg.mxu0
      %1095 = vmatprep.subr.mxu0 %v619
      %1096 = vmatpush1.msra.mxu0 %v618
      %1097 = vmatprep.subr.mxu0 %v623
      %1098 = vmatpush1.msra.mxu0 %v622
      %1099 = vmatprep.subr.mxu0 %v627
      %1100 = vmatpush1.msra.mxu0 %v626
      %1101 = vmatprep.subr.mxu0 %v631
      %1102 = vmatpush1.msra.mxu0 %v630
      %1103 = vmatprep.subr.mxu0 %v635
      %1104 = vmatpush1.msra.mxu0 %v634
      %1105 = vmatprep.subr.mxu0 %v639
      %1106 = vmatpush1.msra.mxu0 %v638
      %1107 = vmatprep.subr.mxu0 %v643
      %1108 = vmatpush1.msra.mxu0 %v642
      %1109 = vmatprep.subr.mxu0 %v647
      %1110 = vmatpush1.msra.mxu0 %v646
      %1111 = vmatprep.subr.mxu0 %v651
      %1112 = vmatpush1.msra.mxu0 %v650
      %1113 = vmatprep.subr.mxu0 %v655
      %1114 = vmatpush1.msra.mxu0 %v654
      %1115 = vmatprep.subr.mxu0 %v659
      %1116 = vmatpush1.msra.mxu0 %v658
      %1117 = vmatprep.subr.mxu0 %v663
      %1118 = vmatpush1.msra.mxu0 %v662
      %1119 = vmatprep.subr.mxu0 %v667
      %1120 = vmatpush1.msra.mxu0 %v666
      %1121 = vmatprep.subr.mxu0 %v671
      %1122 = vmatpush1.msra.mxu0 %v670
      %1123 = vmatprep.subr.mxu0 %v675
      %1124 = vmatpush1.msra.mxu0 %v674
      %1125 = vmatprep.subr.mxu0 %v679
      %1126 = vmatpush1.msra.mxu0 %v678
      %1127 = vmatprep.subr.mxu0 %v683
      %1128 = vmatpush1.msra.mxu0 %v682
      %1129 = vmatprep.subr.mxu0 %v687
      %1130 = vmatpush1.msra.mxu0 %v686
      %1131 = vmatprep.subr.mxu0 %v691
      %1132 = vmatpush1.msra.mxu0 %v690
      %1133 = vmatprep.subr.mxu0 %v695
      %1134 = vmatpush1.msra.mxu0 %v694
      %1135 = vmatprep.subr.mxu0 %v699
      %1136 = vmatpush1.msra.mxu0 %v698
      %1137 = vmatprep.subr.mxu0 %v703
      %1138 = vmatpush1.msra.mxu0 %v702
      %1139 = vmatprep.subr.mxu0 %v707
      %1140 = vmatpush1.msra.mxu0 %v706
      %1141 = vmatprep.subr.mxu0 %v711
      %1142 = vmatpush1.msra.mxu0 %v710
      %1143 = vmatprep.subr.mxu0 %v715
      %1144 = vmatpush1.msra.mxu0 %v714
      %1145 = vmatprep.subr.mxu0 %v719
      %1146 = vmatpush1.msra.mxu0 %v718
      %1147 = vmatprep.subr.mxu0 %v723
      %1148 = vmatpush1.msra.mxu0 %v722
      %1149 = vmatprep.subr.mxu0 %v727
      %1150 = vmatpush1.msra.mxu0 %v726
      %1151 = vmatprep.subr.mxu0 %v731
      %1152 = vmatpush1.msra.mxu0 %v730
      %1153 = vmatprep.subr.mxu0 %v735
      %1154 = vmatpush1.msra.mxu0 %v734
      %1155 = vmatprep.subr.mxu0 %v739
      %1156 = vmatpush1.msra.mxu0 %v738
      %1157 = vmatprep.subr.mxu0 %v743
      %1158 = vmatpush1.msra.mxu0 %v742
      %1159 = vmatprep.mubr.f32.mxu0 %v361
      %1160 = vmatmul.mubr.f32.gmra.mrb[0].mxu0 %v360
      %v1161 = vpop.f32.mrb[0].mxu0
      %v1162 = vadd.f32 %v1091, %v1161
      %v1163 = vpop.f32.mrb[0].mxu0
      %v1164 = vadd.f32 %v1093, %v1163
      %1165 = vdwg.mxu0
      %1166 = vmatprep.subr.mxu0 %v365
      %1167 = vmatpush1.msra.mxu0 %v364
      %1168 = vmatprep.subr.mxu0 %v369
      %1169 = vmatpush1.msra.mxu0 %v368
      %1170 = vmatprep.subr.mxu0 %v373
      %1171 = vmatpush1.msra.mxu0 %v372
      %1172 = vmatprep.subr.mxu0 %v377
      %1173 = vmatpush1.msra.mxu0 %v376
      %1174 = vmatprep.subr.mxu0 %v381
      %1175 = vmatpush1.msra.mxu0 %v380
      %1176 = vmatprep.subr.mxu0 %v385
      %1177 = vmatpush1.msra.mxu0 %v384
      %1178 = vmatprep.subr.mxu0 %v389
      %1179 = vmatpush1.msra.mxu0 %v388
      %1180 = vmatprep.subr.mxu0 %v393
      %1181 = vmatpush1.msra.mxu0 %v392
      %1182 = vmatprep.subr.mxu0 %v397
      %1183 = vmatpush1.msra.mxu0 %v396
      %1184 = vmatprep.subr.mxu0 %v401
      %1185 = vmatpush1.msra.mxu0 %v400
      %1186 = vmatprep.subr.mxu0 %v405
      %1187 = vmatpush1.msra.mxu0 %v404
      %1188 = vmatprep.subr.mxu0 %v409
      %1189 = vmatpush1.msra.mxu0 %v408
      %1190 = vmatprep.subr.mxu0 %v413
      %1191 = vmatpush1.msra.mxu0 %v412
      %1192 = vmatprep.subr.mxu0 %v417
      %1193 = vmatpush1.msra.mxu0 %v416
      %1194 = vmatprep.subr.mxu0 %v421
      %1195 = vmatpush1.msra.mxu0 %v420
      %1196 = vmatprep.subr.mxu0 %v425
      %1197 = vmatpush1.msra.mxu0 %v424
      %1198 = vmatprep.subr.mxu0 %v429
      %1199 = vmatpush1.msra.mxu0 %v428
      %1200 = vmatprep.subr.mxu0 %v433
      %1201 = vmatpush1.msra.mxu0 %v432
      %1202 = vmatprep.subr.mxu0 %v437
      %1203 = vmatpush1.msra.mxu0 %v436
      %1204 = vmatprep.subr.mxu0 %v441
      %1205 = vmatpush1.msra.mxu0 %v440
      %1206 = vmatprep.subr.mxu0 %v445
      %1207 = vmatpush1.msra.mxu0 %v444
      %1208 = vmatprep.subr.mxu0 %v449
      %1209 = vmatpush1.msra.mxu0 %v448
      %1210 = vmatprep.subr.mxu0 %v453
      %1211 = vmatpush1.msra.mxu0 %v452
      %1212 = vmatprep.subr.mxu0 %v457
      %1213 = vmatpush1.msra.mxu0 %v456
      %1214 = vmatprep.subr.mxu0 %v461
      %1215 = vmatpush1.msra.mxu0 %v460
      %1216 = vmatprep.subr.mxu0 %v465
      %1217 = vmatpush1.msra.mxu0 %v464
      %1218 = vmatprep.subr.mxu0 %v469
      %1219 = vmatpush1.msra.mxu0 %v468
      %1220 = vmatprep.subr.mxu0 %v473
      %1221 = vmatpush1.msra.mxu0 %v472
      %1222 = vmatprep.subr.mxu0 %v477
      %1223 = vmatpush1.msra.mxu0 %v476
      %1224 = vmatprep.subr.mxu0 %v481
      %1225 = vmatpush1.msra.mxu0 %v480
      %1226 = vmatprep.subr.mxu0 %v485
      %1227 = vmatpush1.msra.mxu0 %v484
      %1228 = vmatprep.subr.mxu0 %v489
      %1229 = vmatpush1.msra.mxu0 %v488
      %1230 = vmatprep.mubr.f32.mxu0 %v357
      %1231 = vmatmul.mubr.f32.gmra.mrb[0].mxu0 %v356
      %v1232 = vpop.f32.mrb[0].mxu0
      %v1233 = vadd.f32 %v949, %v1232
      %v1234 = vpop.f32.mrb[0].mxu0
      %v1235 = vadd.f32 %v951, %v1234
      %1236 = vdwg.mxu0
      %1237 = vmatprep.subr.mxu0 %v493
      %1238 = vmatpush1.msra.mxu0 %v492
      %1239 = vmatprep.subr.mxu0 %v497
      %1240 = vmatpush1.msra.mxu0 %v496
      %1241 = vmatprep.subr.mxu0 %v501
      %1242 = vmatpush1.msra.mxu0 %v500
      %1243 = vmatprep.subr.mxu0 %v505
      %1244 = vmatpush1.msra.mxu0 %v504
      %1245 = vmatprep.subr.mxu0 %v509
      %1246 = vmatpush1.msra.mxu0 %v508
      %1247 = vmatprep.subr.mxu0 %v513
      %1248 = vmatpush1.msra.mxu0 %v512
      %1249 = vmatprep.subr.mxu0 %v517
      %1250 = vmatpush1.msra.mxu0 %v516
      %1251 = vmatprep.subr.mxu0 %v521
      %1252 = vmatpush1.msra.mxu0 %v520
      %1253 = vmatprep.subr.mxu0 %v525
      %1254 = vmatpush1.msra.mxu0 %v524
      %1255 = vmatprep.subr.mxu0 %v529
      %1256 = vmatpush1.msra.mxu0 %v528
      %1257 = vmatprep.subr.mxu0 %v533
      %1258 = vmatpush1.msra.mxu0 %v532
      %1259 = vmatprep.subr.mxu0 %v537
      %1260 = vmatpush1.msra.mxu0 %v536
      %1261 = vmatprep.subr.mxu0 %v541
      %1262 = vmatpush1.msra.mxu0 %v540
      %1263 = vmatprep.subr.mxu0 %v545
      %1264 = vmatpush1.msra.mxu0 %v544
      %1265 = vmatprep.subr.mxu0 %v549
      %1266 = vmatpush1.msra.mxu0 %v548
      %1267 = vmatprep.subr.mxu0 %v553
      %1268 = vmatpush1.msra.mxu0 %v552
      %1269 = vmatprep.subr.mxu0 %v557
      %1270 = vmatpush1.msra.mxu0 %v556
      %1271 = vmatprep.subr.mxu0 %v561
      %1272 = vmatpush1.msra.mxu0 %v560
      %1273 = vmatprep.subr.mxu0 %v565
      %1274 = vmatpush1.msra.mxu0 %v564
      %1275 = vmatprep.subr.mxu0 %v569
      %1276 = vmatpush1.msra.mxu0 %v568
      %1277 = vmatprep.subr.mxu0 %v573
      %1278 = vmatpush1.msra.mxu0 %v572
      %1279 = vmatprep.subr.mxu0 %v577
      %1280 = vmatpush1.msra.mxu0 %v576
      %1281 = vmatprep.subr.mxu0 %v581
      %1282 = vmatpush1.msra.mxu0 %v580
      %1283 = vmatprep.subr.mxu0 %v585
      %1284 = vmatpush1.msra.mxu0 %v584
      %1285 = vmatprep.subr.mxu0 %v589
      %1286 = vmatpush1.msra.mxu0 %v588
      %1287 = vmatprep.subr.mxu0 %v593
      %1288 = vmatpush1.msra.mxu0 %v592
      %1289 = vmatprep.subr.mxu0 %v597
      %1290 = vmatpush1.msra.mxu0 %v596
      %1291 = vmatprep.subr.mxu0 %v601
      %1292 = vmatpush1.msra.mxu0 %v600
      %1293 = vmatprep.subr.mxu0 %v605
      %1294 = vmatpush1.msra.mxu0 %v604
      %1295 = vmatprep.subr.mxu0 %v609
      %1296 = vmatpush1.msra.mxu0 %v608
      %1297 = vmatprep.subr.mxu0 %v613
      %1298 = vmatpush1.msra.mxu0 %v612
      %1299 = vmatprep.subr.mxu0 %v617
      %1300 = vmatpush1.msra.mxu0 %v616
      %1301 = vmatprep.mubr.f32.mxu0 %v359
      %1302 = vmatmul.mubr.f32.gmra.mrb[0].mxu0 %v358
      %v1303 = vpop.f32.mrb[0].mxu0
      %v1304 = vadd.f32 %v1233, %v1303
      %v1305 = vpop.f32.mrb[0].mxu0
      %v1306 = vadd.f32 %v1235, %v1305
      %1307 = vdwg.mxu0
      %1308 = vmatprep.subr.mxu0 %v621
      %1309 = vmatpush1.msra.mxu0 %v620
      %1310 = vmatprep.subr.mxu0 %v625
      %1311 = vmatpush1.msra.mxu0 %v624
      %1312 = vmatprep.subr.mxu0 %v629
      %1313 = vmatpush1.msra.mxu0 %v628
      %1314 = vmatprep.subr.mxu0 %v633
      %1315 = vmatpush1.msra.mxu0 %v632
      %1316 = vmatprep.subr.mxu0 %v637
      %1317 = vmatpush1.msra.mxu0 %v636
      %1318 = vmatprep.subr.mxu0 %v641
      %1319 = vmatpush1.msra.mxu0 %v640
      %1320 = vmatprep.subr.mxu0 %v645
      %1321 = vmatpush1.msra.mxu0 %v644
      %1322 = vmatprep.subr.mxu0 %v649
      %1323 = vmatpush1.msra.mxu0 %v648
      %1324 = vmatprep.subr.mxu0 %v653
      %1325 = vmatpush1.msra.mxu0 %v652
      %1326 = vmatprep.subr.mxu0 %v657
      %1327 = vmatpush1.msra.mxu0 %v656
      %1328 = vmatprep.subr.mxu0 %v661
      %1329 = vmatpush1.msra.mxu0 %v660
      %1330 = vmatprep.subr.mxu0 %v665
      %1331 = vmatpush1.msra.mxu0 %v664
      %1332 = vmatprep.subr.mxu0 %v669
      %1333 = vmatpush1.msra.mxu0 %v668
      %1334 = vmatprep.subr.mxu0 %v673
      %1335 = vmatpush1.msra.mxu0 %v672
      %1336 = vmatprep.subr.mxu0 %v677
      %1337 = vmatpush1.msra.mxu0 %v676
      %1338 = vmatprep.subr.mxu0 %v681
      %1339 = vmatpush1.msra.mxu0 %v680
      %1340 = vmatprep.subr.mxu0 %v685
      %1341 = vmatpush1.msra.mxu0 %v684
      %1342 = vmatprep.subr.mxu0 %v689
      %1343 = vmatpush1.msra.mxu0 %v688
      %1344 = vmatprep.subr.mxu0 %v693
      %1345 = vmatpush1.msra.mxu0 %v692
      %1346 = vmatprep.subr.mxu0 %v697
      %1347 = vmatpush1.msra.mxu0 %v696
      %1348 = vmatprep.subr.mxu0 %v701
      %1349 = vmatpush1.msra.mxu0 %v700
      %1350 = vmatprep.subr.mxu0 %v705
      %1351 = vmatpush1.msra.mxu0 %v704
      %1352 = vmatprep.subr.mxu0 %v709
      %1353 = vmatpush1.msra.mxu0 %v708
      %1354 = vmatprep.subr.mxu0 %v713
      %1355 = vmatpush1.msra.mxu0 %v712
      %1356 = vmatprep.subr.mxu0 %v717
      %1357 = vmatpush1.msra.mxu0 %v716
      %1358 = vmatprep.subr.mxu0 %v721
      %1359 = vmatpush1.msra.mxu0 %v720
      %1360 = vmatprep.subr.mxu0 %v725
      %1361 = vmatpush1.msra.mxu0 %v724
      %1362 = vmatprep.subr.mxu0 %v729
      %1363 = vmatpush1.msra.mxu0 %v728
      %1364 = vmatprep.subr.mxu0 %v733
      %1365 = vmatpush1.msra.mxu0 %v732
      %1366 = vmatprep.subr.mxu0 %v737
      %1367 = vmatpush1.msra.mxu0 %v736
      %1368 = vmatprep.subr.mxu0 %v741
      %1369 = vmatpush1.msra.mxu0 %v740
      %1370 = vmatprep.subr.mxu0 %v745
      %1371 = vmatpush1.msra.mxu0 %v744
      %1372 = vmatprep.mubr.f32.mxu0 %v361
      %1373 = vmatmul.mubr.f32.gmra.mrb[0].mxu0 %v360
      %v1374 = vpop.f32.mrb[0].mxu0
      %v1375 = vadd.f32 %v1304, %v1374
      %v1376 = vpop.f32.mrb[0].mxu0
      %v1377 = vadd.f32 %v1306, %v1376
      %1378 = vdwg.mxu0
      %v1379 = vld [vmem:[%s7] sm:$0xf]
      %v1381 = vlaneseq
      %v1382 = vshrl.u32 %v1381, 7
      %v1383 = vsub.s32 0, %v1382
      %v1384 = vrot.slane %v1379, %v1383
      %v1385 = vlaneseq
      %v1386 = vshrl.u32 %v1385, 7
      %v1387 = vsub.s32 1, %v1386
      %v1388 = vrot.slane %v1379, %v1387
      %v1389 = vlaneseq
      %v1390 = vshrl.u32 %v1389, 7
      %v1391 = vsub.s32 2, %v1390
      %v1392 = vrot.slane %v1379, %v1391
      %v1393 = vlaneseq
      %v1394 = vshrl.u32 %v1393, 7
      %v1395 = vsub.s32 3, %v1394
      %v1396 = vrot.slane %v1379, %v1395
      %v1401 = vadd.f32 %v1162, %v1384
      %v1402 = vadd.f32 %v1164, %v1388
      %v1403 = vadd.f32 %v1375, %v1392
      %v1404 = vadd.f32 %v1377, %v1396
      %v1405 = vsub.f32 0.0, %v1401
      %v1406 = vmul.f32 %v1405, 1.442695
      %v1407 = vpow.pop %v1406
      %v1408 = vadd.f32 %v1407, 1.0
      %v1409 = vrcp.pop %v1408
      %v1410 = vmul.f32 1.0, %v1409
      %v1411 = vsub.f32 0.0, %v1402
      %v1412 = vmul.f32 %v1411, 1.442695
      %v1413 = vpow.pop %v1412
      %v1414 = vadd.f32 %v1413, 1.0
      %v1415 = vrcp.pop %v1414
      %v1416 = vmul.f32 1.0, %v1415
      %v1417 = vtanh.pop %v1403
      %v1418 = vsub.f32 0.0, %v1404
      %v1419 = vmul.f32 %v1418, 1.442695
      %v1420 = vpow.pop %v1419
      %v1421 = vadd.f32 %v1420, 1.0
      %v1422 = vrcp.pop %v1421
      %v1423 = vmul.f32 1.0, %v1422
      %v1424 = vld [vmem:[#allocation3] sm:$0xff]
      %v1425 = vmul.f32 %v1416, %v1424
      %v1426 = vmul.f32 %v1410, %v1417
      %v1427 = vadd.f32 %v1425, %v1426
      %v1428 = vtanh.pop %v1427
      %v1429 = vmul.f32 %v1423, %v1428
      %1430 = vst [vmem:[#allocation3] sm:$0xff] %v1427
      %1431 = vst [vmem:[#allocation2] sm:$0xff] %v1429
      %v1432 = vld [vmem:[%s3] sm:$0xff]
      %v1433 = vld [vmem:[%s3 + $0x8] sm:$0xff]
      %v1434 = vld [vmem:[%s3 + $0x10] sm:$0xff]
      %v1435 = vld [vmem:[%s3 + $0x18] sm:$0xff]
      %v1436 = vld [vmem:[%s3 + $0x20] sm:$0xff]
      %v1437 = vld [vmem:[%s3 + $0x28] sm:$0xff]
      %v1438 = vld [vmem:[%s3 + $0x30] sm:$0xff]
      %v1439 = vld [vmem:[%s3 + $0x38] sm:$0xff]
      %v1440 = vld [vmem:[%s3 + $0x40] sm:$0xff]
      %v1441 = vld [vmem:[%s3 + $0x48] sm:$0xff]
      %v1442 = vld [vmem:[%s3 + $0x50] sm:$0xff]
      %v1443 = vld [vmem:[%s3 + $0x58] sm:$0xff]
      %v1444 = vld [vmem:[%s3 + $0x60] sm:$0xff]
      %v1445 = vld [vmem:[%s3 + $0x68] sm:$0xff]
      %v1446 = vld [vmem:[%s3 + $0x70] sm:$0xff]
      %v1447 = vld [vmem:[%s3 + $0x78] sm:$0xff]
      %v1448 = vld [vmem:[%s3 + $0x80] sm:$0xff]
      %v1449 = vld [vmem:[%s3 + $0x88] sm:$0xff]
      %v1450 = vld [vmem:[%s3 + $0x90] sm:$0xff]
      %v1451 = vld [vmem:[%s3 + $0x98] sm:$0xff]
      %v1452 = vld [vmem:[%s3 + $0xa0] sm:$0xff]
      %v1453 = vld [vmem:[%s3 + $0xa8] sm:$0xff]
      %v1454 = vld [vmem:[%s3 + $0xb0] sm:$0xff]
      %v1455 = vld [vmem:[%s3 + $0xb8] sm:$0xff]
      %v1456 = vld [vmem:[%s3 + $0xc0] sm:$0xff]
      %v1457 = vld [vmem:[%s3 + $0xc8] sm:$0xff]
      %v1458 = vld [vmem:[%s3 + $0xd0] sm:$0xff]
      %v1459 = vld [vmem:[%s3 + $0xd8] sm:$0xff]
      %v1460 = vld [vmem:[%s3 + $0xe0] sm:$0xff]
      %v1461 = vld [vmem:[%s3 + $0xe8] sm:$0xff]
      %v1462 = vld [vmem:[%s3 + $0xf0] sm:$0xff]
      %v1463 = vld [vmem:[%s3 + $0xf8] sm:$0xff]
      %v1464 = vld [vmem:[%s3 + $0x100] sm:$0xff]
      %v1465 = vld [vmem:[%s3 + $0x108] sm:$0xff]
      %v1466 = vld [vmem:[%s3 + $0x110] sm:$0xff]
      %v1467 = vld [vmem:[%s3 + $0x118] sm:$0xff]
      %v1468 = vld [vmem:[%s3 + $0x120] sm:$0xff]
      %v1469 = vld [vmem:[%s3 + $0x128] sm:$0xff]
      %v1470 = vld [vmem:[%s3 + $0x130] sm:$0xff]
      %v1471 = vld [vmem:[%s3 + $0x138] sm:$0xff]
      %v1472 = vld [vmem:[%s3 + $0x140] sm:$0xff]
      %v1473 = vld [vmem:[%s3 + $0x148] sm:$0xff]
      %v1474 = vld [vmem:[%s3 + $0x150] sm:$0xff]
      %v1475 = vld [vmem:[%s3 + $0x158] sm:$0xff]
      %v1476 = vld [vmem:[%s3 + $0x160] sm:$0xff]
      %v1477 = vld [vmem:[%s3 + $0x168] sm:$0xff]
      %v1478 = vld [vmem:[%s3 + $0x170] sm:$0xff]
      %v1479 = vld [vmem:[%s3 + $0x178] sm:$0xff]
      %v1480 = vld [vmem:[%s3 + $0x180] sm:$0xff]
      %v1481 = vld [vmem:[%s3 + $0x188] sm:$0xff]
      %v1482 = vld [vmem:[%s3 + $0x190] sm:$0xff]
      %v1483 = vld [vmem:[%s3 + $0x198] sm:$0xff]
      %v1484 = vld [vmem:[%s3 + $0x1a0] sm:$0xff]
      %v1485 = vld [vmem:[%s3 + $0x1a8] sm:$0xff]
      %v1486 = vld [vmem:[%s3 + $0x1b0] sm:$0xff]
      %v1487 = vld [vmem:[%s3 + $0x1b8] sm:$0xff]
      %v1488 = vld [vmem:[%s3 + $0x1c0] sm:$0xff]
      %v1489 = vld [vmem:[%s3 + $0x1c8] sm:$0xff]
      %v1490 = vld [vmem:[%s3 + $0x1d0] sm:$0xff]
      %v1491 = vld [vmem:[%s3 + $0x1d8] sm:$0xff]
      %v1492 = vld [vmem:[%s3 + $0x1e0] sm:$0xff]
      %v1493 = vld [vmem:[%s3 + $0x1e8] sm:$0xff]
      %v1494 = vld [vmem:[%s3 + $0x1f0] sm:$0xff]
      %v1495 = vld [vmem:[%s3 + $0x1f8] sm:$0xff]
      %s1496 = scalar_lea.vmem [#allocation2], 8
      %v1497 = vld [vmem:[%s1496] sm:$0xff]
      %v1498 = vld [vmem:[%s4] sm:$0xff]
      %v1499 = vld [vmem:[%s4 + $0x8] sm:$0xff]
      %v1500 = vld [vmem:[%s4 + $0x10] sm:$0xff]
      %v1501 = vld [vmem:[%s4 + $0x18] sm:$0xff]
      %v1502 = vld [vmem:[%s4 + $0x20] sm:$0xff]
      %v1503 = vld [vmem:[%s4 + $0x28] sm:$0xff]
      %v1504 = vld [vmem:[%s4 + $0x30] sm:$0xff]
      %v1505 = vld [vmem:[%s4 + $0x38] sm:$0xff]
      %v1506 = vld [vmem:[%s4 + $0x40] sm:$0xff]
      %v1507 = vld [vmem:[%s4 + $0x48] sm:$0xff]
      %v1508 = vld [vmem:[%s4 + $0x50] sm:$0xff]
      %v1509 = vld [vmem:[%s4 + $0x58] sm:$0xff]
      %v1510 = vld [vmem:[%s4 + $0x60] sm:$0xff]
      %v1511 = vld [vmem:[%s4 + $0x68] sm:$0xff]
      %v1512 = vld [vmem:[%s4 + $0x70] sm:$0xff]
      %v1513 = vld [vmem:[%s4 + $0x78] sm:$0xff]
      %v1514 = vld [vmem:[%s4 + $0x80] sm:$0xff]
      %v1515 = vld [vmem:[%s4 + $0x88] sm:$0xff]
      %v1516 = vld [vmem:[%s4 + $0x90] sm:$0xff]
      %v1517 = vld [vmem:[%s4 + $0x98] sm:$0xff]
      %v1518 = vld [vmem:[%s4 + $0xa0] sm:$0xff]
      %v1519 = vld [vmem:[%s4 + $0xa8] sm:$0xff]
      %v1520 = vld [vmem:[%s4 + $0xb0] sm:$0xff]
      %v1521 = vld [vmem:[%s4 + $0xb8] sm:$0xff]
      %v1522 = vld [vmem:[%s4 + $0xc0] sm:$0xff]
      %v1523 = vld [vmem:[%s4 + $0xc8] sm:$0xff]
      %v1524 = vld [vmem:[%s4 + $0xd0] sm:$0xff]
      %v1525 = vld [vmem:[%s4 + $0xd8] sm:$0xff]
      %v1526 = vld [vmem:[%s4 + $0xe0] sm:$0xff]
      %v1527 = vld [vmem:[%s4 + $0xe8] sm:$0xff]
      %v1528 = vld [vmem:[%s4 + $0xf0] sm:$0xff]
      %v1529 = vld [vmem:[%s4 + $0xf8] sm:$0xff]
      %v1530 = vld [vmem:[%s4 + $0x100] sm:$0xff]
      %v1531 = vld [vmem:[%s4 + $0x108] sm:$0xff]
      %v1532 = vld [vmem:[%s4 + $0x110] sm:$0xff]
      %v1533 = vld [vmem:[%s4 + $0x118] sm:$0xff]
      %v1534 = vld [vmem:[%s4 + $0x120] sm:$0xff]
      %v1535 = vld [vmem:[%s4 + $0x128] sm:$0xff]
      %v1536 = vld [vmem:[%s4 + $0x130] sm:$0xff]
      %v1537 = vld [vmem:[%s4 + $0x138] sm:$0xff]
      %v1538 = vld [vmem:[%s4 + $0x140] sm:$0xff]
      %v1539 = vld [vmem:[%s4 + $0x148] sm:$0xff]
      %v1540 = vld [vmem:[%s4 + $0x150] sm:$0xff]
      %v1541 = vld [vmem:[%s4 + $0x158] sm:$0xff]
      %v1542 = vld [vmem:[%s4 + $0x160] sm:$0xff]
      %v1543 = vld [vmem:[%s4 + $0x168] sm:$0xff]
      %v1544 = vld [vmem:[%s4 + $0x170] sm:$0xff]
      %v1545 = vld [vmem:[%s4 + $0x178] sm:$0xff]
      %v1546 = vld [vmem:[%s4 + $0x180] sm:$0xff]
      %v1547 = vld [vmem:[%s4 + $0x188] sm:$0xff]
      %v1548 = vld [vmem:[%s4 + $0x190] sm:$0xff]
      %v1549 = vld [vmem:[%s4 + $0x198] sm:$0xff]
      %v1550 = vld [vmem:[%s4 + $0x1a0] sm:$0xff]
      %v1551 = vld [vmem:[%s4 + $0x1a8] sm:$0xff]
      %v1552 = vld [vmem:[%s4 + $0x1b0] sm:$0xff]
      %v1553 = vld [vmem:[%s4 + $0x1b8] sm:$0xff]
      %v1554 = vld [vmem:[%s4 + $0x1c0] sm:$0xff]
      %v1555 = vld [vmem:[%s4 + $0x1c8] sm:$0xff]
      %v1556 = vld [vmem:[%s4 + $0x1d0] sm:$0xff]
      %v1557 = vld [vmem:[%s4 + $0x1d8] sm:$0xff]
      %v1558 = vld [vmem:[%s4 + $0x1e0] sm:$0xff]
      %v1559 = vld [vmem:[%s4 + $0x1e8] sm:$0xff]
      %v1560 = vld [vmem:[%s4 + $0x1f0] sm:$0xff]
      %v1561 = vld [vmem:[%s4 + $0x1f8] sm:$0xff]
      %1562 = vmatprep.subr.mxu0 %v1499
      %1563 = vmatpush1.msra.mxu0 %v1498
      %1564 = vmatprep.subr.mxu0 %v1503
      %1565 = vmatpush1.msra.mxu0 %v1502
      %1566 = vmatprep.subr.mxu0 %v1507
      %1567 = vmatpush1.msra.mxu0 %v1506
      %1568 = vmatprep.subr.mxu0 %v1511
      %1569 = vmatpush1.msra.mxu0 %v1510
      %1570 = vmatprep.subr.mxu0 %v1515
      %1571 = vmatpush1.msra.mxu0 %v1514
      %1572 = vmatprep.subr.mxu0 %v1519
      %1573 = vmatpush1.msra.mxu0 %v1518
      %1574 = vmatprep.subr.mxu0 %v1523
      %1575 = vmatpush1.msra.mxu0 %v1522
      %1576 = vmatprep.subr.mxu0 %v1527
      %1577 = vmatpush1.msra.mxu0 %v1526
      %1578 = vmatprep.subr.mxu0 %v1531
      %1579 = vmatpush1.msra.mxu0 %v1530
      %1580 = vmatprep.subr.mxu0 %v1535
      %1581 = vmatpush1.msra.mxu0 %v1534
      %1582 = vmatprep.subr.mxu0 %v1539
      %1583 = vmatpush1.msra.mxu0 %v1538
      %1584 = vmatprep.subr.mxu0 %v1543
      %1585 = vmatpush1.msra.mxu0 %v1542
      %1586 = vmatprep.subr.mxu0 %v1547
      %1587 = vmatpush1.msra.mxu0 %v1546
      %1588 = vmatprep.subr.mxu0 %v1551
      %1589 = vmatpush1.msra.mxu0 %v1550
      %1590 = vmatprep.subr.mxu0 %v1555
      %1591 = vmatpush1.msra.mxu0 %v1554
      %1592 = vmatprep.subr.mxu0 %v1559
      %1593 = vmatpush1.msra.mxu0 %v1558
      %1594 = vmatprep.subr.mxu0 0.0
      %1595 = vmatpush1.msra.mxu0 0.0
      %1596 = vmatprep.subr.mxu0 0.0
      %1597 = vmatpush1.msra.mxu0 0.0
      %1598 = vmatprep.subr.mxu0 0.0
      %1599 = vmatpush1.msra.mxu0 0.0
      %1600 = vmatprep.subr.mxu0 0.0
      %1601 = vmatpush1.msra.mxu0 0.0
      %1602 = vmatprep.subr.mxu0 0.0
      %1603 = vmatpush1.msra.mxu0 0.0
      %1604 = vmatprep.subr.mxu0 0.0
      %1605 = vmatpush1.msra.mxu0 0.0
      %1606 = vmatprep.subr.mxu0 0.0
      %1607 = vmatpush1.msra.mxu0 0.0
      %1608 = vmatprep.subr.mxu0 0.0
      %1609 = vmatpush1.msra.mxu0 0.0
      %1610 = vmatprep.subr.mxu0 0.0
      %1611 = vmatpush1.msra.mxu0 0.0
      %1612 = vmatprep.subr.mxu0 0.0
      %1613 = vmatpush1.msra.mxu0 0.0
      %1614 = vmatprep.subr.mxu0 0.0
      %1615 = vmatpush1.msra.mxu0 0.0
      %1616 = vmatprep.subr.mxu0 0.0
      %1617 = vmatpush1.msra.mxu0 0.0
      %1618 = vmatprep.subr.mxu0 0.0
      %1619 = vmatpush1.msra.mxu0 0.0
      %1620 = vmatprep.subr.mxu0 0.0
      %1621 = vmatpush1.msra.mxu0 0.0
      %1622 = vmatprep.subr.mxu0 0.0
      %1623 = vmatpush1.msra.mxu0 0.0
      %1624 = vmatprep.subr.mxu0 0.0
      %1625 = vmatpush1.msra.mxu0 0.0
      %1626 = vmatprep.mubr.f32.mxu0 0.0
      %1627 = vmatmul.mubr.f32.gmra.mrb[0].mxu0 %v1497
      %v1628 = vpop.f32.mrb[0].mxu0
      %v1629 = vadd.f32 0.0, %v1628
      %v1630 = vpop.f32.mrb[0].mxu0
      %v1631 = vadd.f32 0.0, %v1630
      %1632 = vdwg.mxu0
      %1633 = vmatprep.subr.mxu0 %v1501
      %1634 = vmatpush1.msra.mxu0 %v1500
      %1635 = vmatprep.subr.mxu0 %v1505
      %1636 = vmatpush1.msra.mxu0 %v1504
      %1637 = vmatprep.subr.mxu0 %v1509
      %1638 = vmatpush1.msra.mxu0 %v1508
      %1639 = vmatprep.subr.mxu0 %v1513
      %1640 = vmatpush1.msra.mxu0 %v1512
      %1641 = vmatprep.subr.mxu0 %v1517
      %1642 = vmatpush1.msra.mxu0 %v1516
      %1643 = vmatprep.subr.mxu0 %v1521
      %1644 = vmatpush1.msra.mxu0 %v1520
      %1645 = vmatprep.subr.mxu0 %v1525
      %1646 = vmatpush1.msra.mxu0 %v1524
      %1647 = vmatprep.subr.mxu0 %v1529
      %1648 = vmatpush1.msra.mxu0 %v1528
      %1649 = vmatprep.subr.mxu0 %v1533
      %1650 = vmatpush1.msra.mxu0 %v1532
      %1651 = vmatprep.subr.mxu0 %v1537
      %1652 = vmatpush1.msra.mxu0 %v1536
      %1653 = vmatprep.subr.mxu0 %v1541
      %1654 = vmatpush1.msra.mxu0 %v1540
      %1655 = vmatprep.subr.mxu0 %v1545
      %1656 = vmatpush1.msra.mxu0 %v1544
      %1657 = vmatprep.subr.mxu0 %v1549
      %1658 = vmatpush1.msra.mxu0 %v1548
      %1659 = vmatprep.subr.mxu0 %v1553
      %1660 = vmatpush1.msra.mxu0 %v1552
      %1661 = vmatprep.subr.mxu0 %v1557
      %1662 = vmatpush1.msra.mxu0 %v1556
      %1663 = vmatprep.subr.mxu0 %v1561
      %1664 = vmatpush1.msra.mxu0 %v1560
      %1665 = vmatprep.subr.mxu0 0.0
      %1666 = vmatpush1.msra.mxu0 0.0
      %1667 = vmatprep.subr.mxu0 0.0
      %1668 = vmatpush1.msra.mxu0 0.0
      %1669 = vmatprep.subr.mxu0 0.0
      %1670 = vmatpush1.msra.mxu0 0.0
      %1671 = vmatprep.subr.mxu0 0.0
      %1672 = vmatpush1.msra.mxu0 0.0
      %1673 = vmatprep.subr.mxu0 0.0
      %1674 = vmatpush1.msra.mxu0 0.0
      %1675 = vmatprep.subr.mxu0 0.0
      %1676 = vmatpush1.msra.mxu0 0.0
      %1677 = vmatprep.subr.mxu0 0.0
      %1678 = vmatpush1.msra.mxu0 0.0
      %1679 = vmatprep.subr.mxu0 0.0
      %1680 = vmatpush1.msra.mxu0 0.0
      %1681 = vmatprep.subr.mxu0 0.0
      %1682 = vmatpush1.msra.mxu0 0.0
      %1683 = vmatprep.subr.mxu0 0.0
      %1684 = vmatpush1.msra.mxu0 0.0
      %1685 = vmatprep.subr.mxu0 0.0
      %1686 = vmatpush1.msra.mxu0 0.0
      %1687 = vmatprep.subr.mxu0 0.0
      %1688 = vmatpush1.msra.mxu0 0.0
      %1689 = vmatprep.subr.mxu0 0.0
      %1690 = vmatpush1.msra.mxu0 0.0
      %1691 = vmatprep.subr.mxu0 0.0
      %1692 = vmatpush1.msra.mxu0 0.0
      %1693 = vmatprep.subr.mxu0 0.0
      %1694 = vmatpush1.msra.mxu0 0.0
      %1695 = vmatprep.subr.mxu0 0.0
      %1696 = vmatpush1.msra.mxu0 0.0
      %1697 = vmatprep.mubr.f32.mxu0 0.0
      %1698 = vmatmul.mubr.f32.gmra.mrb[0].mxu0 %v1497
      %v1699 = vpop.f32.mrb[0].mxu0
      %v1700 = vadd.f32 0.0, %v1699
      %v1701 = vpop.f32.mrb[0].mxu0
      %v1702 = vadd.f32 0.0, %v1701
      %1703 = vdwg.mxu0
      %1704 = vmatprep.subr.mxu0 %v1433
      %1705 = vmatpush1.msra.mxu0 %v1432
      %1706 = vmatprep.subr.mxu0 %v1437
      %1707 = vmatpush1.msra.mxu0 %v1436
      %1708 = vmatprep.subr.mxu0 %v1441
      %1709 = vmatpush1.msra.mxu0 %v1440
      %1710 = vmatprep.subr.mxu0 %v1445
      %1711 = vmatpush1.msra.mxu0 %v1444
      %1712 = vmatprep.subr.mxu0 %v1449
      %1713 = vmatpush1.msra.mxu0 %v1448
      %1714 = vmatprep.subr.mxu0 %v1453
      %1715 = vmatpush1.msra.mxu0 %v1452
      %1716 = vmatprep.subr.mxu0 %v1457
      %1717 = vmatpush1.msra.mxu0 %v1456
      %1718 = vmatprep.subr.mxu0 %v1461
      %1719 = vmatpush1.msra.mxu0 %v1460
      %1720 = vmatprep.subr.mxu0 %v1465
      %1721 = vmatpush1.msra.mxu0 %v1464
      %1722 = vmatprep.subr.mxu0 %v1469
      %1723 = vmatpush1.msra.mxu0 %v1468
      %1724 = vmatprep.subr.mxu0 %v1473
      %1725 = vmatpush1.msra.mxu0 %v1472
      %1726 = vmatprep.subr.mxu0 %v1477
      %1727 = vmatpush1.msra.mxu0 %v1476
      %1728 = vmatprep.subr.mxu0 %v1481
      %1729 = vmatpush1.msra.mxu0 %v1480
      %1730 = vmatprep.subr.mxu0 %v1485
      %1731 = vmatpush1.msra.mxu0 %v1484
      %1732 = vmatprep.subr.mxu0 %v1489
      %1733 = vmatpush1.msra.mxu0 %v1488
      %1734 = vmatprep.subr.mxu0 %v1493
      %1735 = vmatpush1.msra.mxu0 %v1492
      %1736 = vmatprep.subr.mxu0 0.0
      %1737 = vmatpush1.msra.mxu0 0.0
      %1738 = vmatprep.subr.mxu0 0.0
      %1739 = vmatpush1.msra.mxu0 0.0
      %1740 = vmatprep.subr.mxu0 0.0
      %1741 = vmatpush1.msra.mxu0 0.0
      %1742 = vmatprep.subr.mxu0 0.0
      %1743 = vmatpush1.msra.mxu0 0.0
      %1744 = vmatprep.subr.mxu0 0.0
      %1745 = vmatpush1.msra.mxu0 0.0
      %1746 = vmatprep.subr.mxu0 0.0
      %1747 = vmatpush1.msra.mxu0 0.0
      %1748 = vmatprep.subr.mxu0 0.0
      %1749 = vmatpush1.msra.mxu0 0.0
      %1750 = vmatprep.subr.mxu0 0.0
      %1751 = vmatpush1.msra.mxu0 0.0
      %1752 = vmatprep.subr.mxu0 0.0
      %1753 = vmatpush1.msra.mxu0 0.0
      %1754 = vmatprep.subr.mxu0 0.0
      %1755 = vmatpush1.msra.mxu0 0.0
      %1756 = vmatprep.subr.mxu0 0.0
      %1757 = vmatpush1.msra.mxu0 0.0
      %1758 = vmatprep.subr.mxu0 0.0
      %1759 = vmatpush1.msra.mxu0 0.0
      %1760 = vmatprep.subr.mxu0 0.0
      %1761 = vmatpush1.msra.mxu0 0.0
      %1762 = vmatprep.subr.mxu0 0.0
      %1763 = vmatpush1.msra.mxu0 0.0
      %1764 = vmatprep.subr.mxu0 0.0
      %1765 = vmatpush1.msra.mxu0 0.0
      %1766 = vmatprep.subr.mxu0 0.0
      %1767 = vmatpush1.msra.mxu0 0.0
      %1768 = vmatprep.mubr.f32.mxu0 0.0
      %1769 = vmatmul.mubr.f32.gmra.mrb[0].mxu0 %v1429
      %v1770 = vpop.f32.mrb[0].mxu0
      %v1771 = vadd.f32 %v1629, %v1770
      %v1772 = vpop.f32.mrb[0].mxu0
      %v1773 = vadd.f32 %v1631, %v1772
      %1774 = vdwg.mxu0
      %1775 = vmatprep.subr.mxu0 %v1435
      %1776 = vmatpush1.msra.mxu0 %v1434
      %1777 = vmatprep.subr.mxu0 %v1439
      %1778 = vmatpush1.msra.mxu0 %v1438
      %1779 = vmatprep.subr.mxu0 %v1443
      %1780 = vmatpush1.msra.mxu0 %v1442
      %1781 = vmatprep.subr.mxu0 %v1447
      %1782 = vmatpush1.msra.mxu0 %v1446
      %1783 = vmatprep.subr.mxu0 %v1451
      %1784 = vmatpush1.msra.mxu0 %v1450
      %1785 = vmatprep.subr.mxu0 %v1455
      %1786 = vmatpush1.msra.mxu0 %v1454
      %1787 = vmatprep.subr.mxu0 %v1459
      %1788 = vmatpush1.msra.mxu0 %v1458
      %1789 = vmatprep.subr.mxu0 %v1463
      %1790 = vmatpush1.msra.mxu0 %v1462
      %1791 = vmatprep.subr.mxu0 %v1467
      %1792 = vmatpush1.msra.mxu0 %v1466
      %1793 = vmatprep.subr.mxu0 %v1471
      %1794 = vmatpush1.msra.mxu0 %v1470
      %1795 = vmatprep.subr.mxu0 %v1475
      %1796 = vmatpush1.msra.mxu0 %v1474
      %1797 = vmatprep.subr.mxu0 %v1479
      %1798 = vmatpush1.msra.mxu0 %v1478
      %1799 = vmatprep.subr.mxu0 %v1483
      %1800 = vmatpush1.msra.mxu0 %v1482
      %1801 = vmatprep.subr.mxu0 %v1487
      %1802 = vmatpush1.msra.mxu0 %v1486
      %1803 = vmatprep.subr.mxu0 %v1491
      %1804 = vmatpush1.msra.mxu0 %v1490
      %1805 = vmatprep.subr.mxu0 %v1495
      %1806 = vmatpush1.msra.mxu0 %v1494
      %1807 = vmatprep.subr.mxu0 0.0
      %1808 = vmatpush1.msra.mxu0 0.0
      %1809 = vmatprep.subr.mxu0 0.0
      %1810 = vmatpush1.msra.mxu0 0.0
      %1811 = vmatprep.subr.mxu0 0.0
      %1812 = vmatpush1.msra.mxu0 0.0
      %1813 = vmatprep.subr.mxu0 0.0
      %1814 = vmatpush1.msra.mxu0 0.0
      %1815 = vmatprep.subr.mxu0 0.0
      %1816 = vmatpush1.msra.mxu0 0.0
      %1817 = vmatprep.subr.mxu0 0.0
      %1818 = vmatpush1.msra.mxu0 0.0
      %1819 = vmatprep.subr.mxu0 0.0
      %1820 = vmatpush1.msra.mxu0 0.0
      %1821 = vmatprep.subr.mxu0 0.0
      %1822 = vmatpush1.msra.mxu0 0.0
      %1823 = vmatprep.subr.mxu0 0.0
      %1824 = vmatpush1.msra.mxu0 0.0
      %1825 = vmatprep.subr.mxu0 0.0
      %1826 = vmatpush1.msra.mxu0 0.0
      %1827 = vmatprep.subr.mxu0 0.0
      %1828 = vmatpush1.msra.mxu0 0.0
      %1829 = vmatprep.subr.mxu0 0.0
      %1830 = vmatpush1.msra.mxu0 0.0
      %1831 = vmatprep.subr.mxu0 0.0
      %1832 = vmatpush1.msra.mxu0 0.0
      %1833 = vmatprep.subr.mxu0 0.0
      %1834 = vmatpush1.msra.mxu0 0.0
      %1835 = vmatprep.subr.mxu0 0.0
      %1836 = vmatpush1.msra.mxu0 0.0
      %1837 = vmatprep.subr.mxu0 0.0
      %1838 = vmatpush1.msra.mxu0 0.0
      %1839 = vmatprep.mubr.f32.mxu0 0.0
      %1840 = vmatmul.mubr.f32.gmra.mrb[0].mxu0 %v1429
      %v1841 = vpop.f32.mrb[0].mxu0
      %v1842 = vadd.f32 %v1700, %v1841
      %v1843 = vpop.f32.mrb[0].mxu0
      %v1844 = vadd.f32 %v1702, %v1843
      %1845 = vdwg.mxu0
      %v1846 = vld [vmem:[%s8] sm:$0xf]
      %v1848 = vlaneseq
      %v1849 = vshrl.u32 %v1848, 7
      %v1850 = vsub.s32 0, %v1849
      %v1851 = vrot.slane %v1846, %v1850
      %v1852 = vlaneseq
      %v1853 = vshrl.u32 %v1852, 7
      %v1854 = vsub.s32 1, %v1853
      %v1855 = vrot.slane %v1846, %v1854
      %v1856 = vlaneseq
      %v1857 = vshrl.u32 %v1856, 7
      %v1858 = vsub.s32 2, %v1857
      %v1859 = vrot.slane %v1846, %v1858
      %v1860 = vlaneseq
      %v1861 = vshrl.u32 %v1860, 7
      %v1862 = vsub.s32 3, %v1861
      %v1863 = vrot.slane %v1846, %v1862
      %v1868 = vadd.f32 %v1771, %v1851
      %v1869 = vadd.f32 %v1773, %v1855
      %v1870 = vadd.f32 %v1842, %v1859
      %v1871 = vadd.f32 %v1844, %v1863
      %v1872 = vsub.f32 0.0, %v1868
      %v1873 = vmul.f32 %v1872, 1.442695
      %v1874 = vpow.pop %v1873
      %v1875 = vadd.f32 %v1874, 1.0
      %v1876 = vrcp.pop %v1875
      %v1877 = vmul.f32 1.0, %v1876
      %v1878 = vsub.f32 0.0, %v1869
      %v1879 = vmul.f32 %v1878, 1.442695
      %v1880 = vpow.pop %v1879
      %v1881 = vadd.f32 %v1880, 1.0
      %v1882 = vrcp.pop %v1881
      %v1883 = vmul.f32 1.0, %v1882
      %v1884 = vtanh.pop %v1870
      %v1885 = vsub.f32 0.0, %v1871
      %v1886 = vmul.f32 %v1885, 1.442695
      %v1887 = vpow.pop %v1886
      %v1888 = vadd.f32 %v1887, 1.0
      %v1889 = vrcp.pop %v1888
      %v1890 = vmul.f32 1.0, %v1889
      %s1891 = scalar_lea.vmem [#allocation3], 8
      %v1892 = vld [vmem:[%s1891] sm:$0xff]
      %v1893 = vmul.f32 %v1883, %v1892
      %v1894 = vmul.f32 %v1877, %v1884
      %v1895 = vadd.f32 %v1893, %v1894
      %v1896 = vtanh.pop %v1895
      %v1897 = vmul.f32 %v1890, %v1896
      %1898 = vst [vmem:[%s1891] sm:$0xff] %v1895
      %1899 = vst [vmem:[%s1496] sm:$0xff] %v1897
      %v1900 = vld [vmem:[%s5] sm:$0xff]
      %v1901 = vld [vmem:[%s5 + $0x8] sm:$0xff]
      %v1902 = vld [vmem:[%s5 + $0x10] sm:$0xff]
      %v1903 = vld [vmem:[%s5 + $0x18] sm:$0xff]
      %v1904 = vld [vmem:[%s5 + $0x20] sm:$0xff]
      %v1905 = vld [vmem:[%s5 + $0x28] sm:$0xff]
      %v1906 = vld [vmem:[%s5 + $0x30] sm:$0xff]
      %v1907 = vld [vmem:[%s5 + $0x38] sm:$0xff]
      %v1908 = vld [vmem:[%s5 + $0x40] sm:$0xff]
      %v1909 = vld [vmem:[%s5 + $0x48] sm:$0xff]
      %v1910 = vld [vmem:[%s5 + $0x50] sm:$0xff]
      %v1911 = vld [vmem:[%s5 + $0x58] sm:$0xff]
      %v1912 = vld [vmem:[%s5 + $0x60] sm:$0xff]
      %v1913 = vld [vmem:[%s5 + $0x68] sm:$0xff]
      %v1914 = vld [vmem:[%s5 + $0x70] sm:$0xff]
      %v1915 = vld [vmem:[%s5 + $0x78] sm:$0xff]
      %v1916 = vld [vmem:[%s5 + $0x80] sm:$0xff]
      %v1917 = vld [vmem:[%s5 + $0x88] sm:$0xff]
      %v1918 = vld [vmem:[%s5 + $0x90] sm:$0xff]
      %v1919 = vld [vmem:[%s5 + $0x98] sm:$0xff]
      %v1920 = vld [vmem:[%s5 + $0xa0] sm:$0xff]
      %v1921 = vld [vmem:[%s5 + $0xa8] sm:$0xff]
      %v1922 = vld [vmem:[%s5 + $0xb0] sm:$0xff]
      %v1923 = vld [vmem:[%s5 + $0xb8] sm:$0xff]
      %v1924 = vld [vmem:[%s5 + $0xc0] sm:$0xff]
      %v1925 = vld [vmem:[%s5 + $0xc8] sm:$0xff]
      %v1926 = vld [vmem:[%s5 + $0xd0] sm:$0xff]
      %v1927 = vld [vmem:[%s5 + $0xd8] sm:$0xff]
      %v1928 = vld [vmem:[%s5 + $0xe0] sm:$0xff]
      %v1929 = vld [vmem:[%s5 + $0xe8] sm:$0xff]
      %v1930 = vld [vmem:[%s5 + $0xf0] sm:$0xff]
      %v1931 = vld [vmem:[%s5 + $0xf8] sm:$0xff]
      %v1932 = vld [vmem:[%s5 + $0x100] sm:$0xff]
      %v1933 = vld [vmem:[%s5 + $0x108] sm:$0xff]
      %v1934 = vld [vmem:[%s5 + $0x110] sm:$0xff]
      %v1935 = vld [vmem:[%s5 + $0x118] sm:$0xff]
      %v1936 = vld [vmem:[%s5 + $0x120] sm:$0xff]
      %v1937 = vld [vmem:[%s5 + $0x128] sm:$0xff]
      %v1938 = vld [vmem:[%s5 + $0x130] sm:$0xff]
      %v1939 = vld [vmem:[%s5 + $0x138] sm:$0xff]
      %v1940 = vld [vmem:[%s5 + $0x140] sm:$0xff]
      %v1941 = vld [vmem:[%s5 + $0x148] sm:$0xff]
      %v1942 = vld [vmem:[%s5 + $0x150] sm:$0xff]
      %v1943 = vld [vmem:[%s5 + $0x158] sm:$0xff]
      %v1944 = vld [vmem:[%s5 + $0x160] sm:$0xff]
      %v1945 = vld [vmem:[%s5 + $0x168] sm:$0xff]
      %v1946 = vld [vmem:[%s5 + $0x170] sm:$0xff]
      %v1947 = vld [vmem:[%s5 + $0x178] sm:$0xff]
      %v1948 = vld [vmem:[%s5 + $0x180] sm:$0xff]
      %v1949 = vld [vmem:[%s5 + $0x188] sm:$0xff]
      %v1950 = vld [vmem:[%s5 + $0x190] sm:$0xff]
      %v1951 = vld [vmem:[%s5 + $0x198] sm:$0xff]
      %v1952 = vld [vmem:[%s5 + $0x1a0] sm:$0xff]
      %v1953 = vld [vmem:[%s5 + $0x1a8] sm:$0xff]
      %v1954 = vld [vmem:[%s5 + $0x1b0] sm:$0xff]
      %v1955 = vld [vmem:[%s5 + $0x1b8] sm:$0xff]
      %v1956 = vld [vmem:[%s5 + $0x1c0] sm:$0xff]
      %v1957 = vld [vmem:[%s5 + $0x1c8] sm:$0xff]
      %v1958 = vld [vmem:[%s5 + $0x1d0] sm:$0xff]
      %v1959 = vld [vmem:[%s5 + $0x1d8] sm:$0xff]
      %v1960 = vld [vmem:[%s5 + $0x1e0] sm:$0xff]
      %v1961 = vld [vmem:[%s5 + $0x1e8] sm:$0xff]
      %v1962 = vld [vmem:[%s5 + $0x1f0] sm:$0xff]
      %v1963 = vld [vmem:[%s5 + $0x1f8] sm:$0xff]
      %s1964 = scalar_lea.vmem [#allocation2], 16
      %v1965 = vld [vmem:[%s1964] sm:$0xff]
      %v1966 = vld [vmem:[%s6] sm:$0xff]
      %v1967 = vld [vmem:[%s6 + $0x8] sm:$0xff]
      %v1968 = vld [vmem:[%s6 + $0x10] sm:$0xff]
      %v1969 = vld [vmem:[%s6 + $0x18] sm:$0xff]
      %v1970 = vld [vmem:[%s6 + $0x20] sm:$0xff]
      %v1971 = vld [vmem:[%s6 + $0x28] sm:$0xff]
      %v1972 = vld [vmem:[%s6 + $0x30] sm:$0xff]
      %v1973 = vld [vmem:[%s6 + $0x38] sm:$0xff]
      %v1974 = vld [vmem:[%s6 + $0x40] sm:$0xff]
      %v1975 = vld [vmem:[%s6 + $0x48] sm:$0xff]
      %v1976 = vld [vmem:[%s6 + $0x50] sm:$0xff]
      %v1977 = vld [vmem:[%s6 + $0x58] sm:$0xff]
      %v1978 = vld [vmem:[%s6 + $0x60] sm:$0xff]
      %v1979 = vld [vmem:[%s6 + $0x68] sm:$0xff]
      %v1980 = vld [vmem:[%s6 + $0x70] sm:$0xff]
      %v1981 = vld [vmem:[%s6 + $0x78] sm:$0xff]
      %v1982 = vld [vmem:[%s6 + $0x80] sm:$0xff]
      %v1983 = vld [vmem:[%s6 + $0x88] sm:$0xff]
      %v1984 = vld [vmem:[%s6 + $0x90] sm:$0xff]
      %v1985 = vld [vmem:[%s6 + $0x98] sm:$0xff]
      %v1986 = vld [vmem:[%s6 + $0xa0] sm:$0xff]
      %v1987 = vld [vmem:[%s6 + $0xa8] sm:$0xff]
      %v1988 = vld [vmem:[%s6 + $0xb0] sm:$0xff]
      %v1989 = vld [vmem:[%s6 + $0xb8] sm:$0xff]
      %v1990 = vld [vmem:[%s6 + $0xc0] sm:$0xff]
      %v1991 = vld [vmem:[%s6 + $0xc8] sm:$0xff]
      %v1992 = vld [vmem:[%s6 + $0xd0] sm:$0xff]
      %v1993 = vld [vmem:[%s6 + $0xd8] sm:$0xff]
      %v1994 = vld [vmem:[%s6 + $0xe0] sm:$0xff]
      %v1995 = vld [vmem:[%s6 + $0xe8] sm:$0xff]
      %v1996 = vld [vmem:[%s6 + $0xf0] sm:$0xff]
      %v1997 = vld [vmem:[%s6 + $0xf8] sm:$0xff]
      %v1998 = vld [vmem:[%s6 + $0x100] sm:$0xff]
      %v1999 = vld [vmem:[%s6 + $0x108] sm:$0xff]
      %v2000 = vld [vmem:[%s6 + $0x110] sm:$0xff]
      %v2001 = vld [vmem:[%s6 + $0x118] sm:$0xff]
      %v2002 = vld [vmem:[%s6 + $0x120] sm:$0xff]
      %v2003 = vld [vmem:[%s6 + $0x128] sm:$0xff]
      %v2004 = vld [vmem:[%s6 + $0x130] sm:$0xff]
      %v2005 = vld [vmem:[%s6 + $0x138] sm:$0xff]
      %v2006 = vld [vmem:[%s6 + $0x140] sm:$0xff]
      %v2007 = vld [vmem:[%s6 + $0x148] sm:$0xff]
      %v2008 = vld [vmem:[%s6 + $0x150] sm:$0xff]
      %v2009 = vld [vmem:[%s6 + $0x158] sm:$0xff]
      %v2010 = vld [vmem:[%s6 + $0x160] sm:$0xff]
      %v2011 = vld [vmem:[%s6 + $0x168] sm:$0xff]
      %v2012 = vld [vmem:[%s6 + $0x170] sm:$0xff]
      %v2013 = vld [vmem:[%s6 + $0x178] sm:$0xff]
      %v2014 = vld [vmem:[%s6 + $0x180] sm:$0xff]
      %v2015 = vld [vmem:[%s6 + $0x188] sm:$0xff]
      %v2016 = vld [vmem:[%s6 + $0x190] sm:$0xff]
      %v2017 = vld [vmem:[%s6 + $0x198] sm:$0xff]
      %v2018 = vld [vmem:[%s6 + $0x1a0] sm:$0xff]
      %v2019 = vld [vmem:[%s6 + $0x1a8] sm:$0xff]
      %v2020 = vld [vmem:[%s6 + $0x1b0] sm:$0xff]
      %v2021 = vld [vmem:[%s6 + $0x1b8] sm:$0xff]
      %v2022 = vld [vmem:[%s6 + $0x1c0] sm:$0xff]
      %v2023 = vld [vmem:[%s6 + $0x1c8] sm:$0xff]
      %v2024 = vld [vmem:[%s6 + $0x1d0] sm:$0xff]
      %v2025 = vld [vmem:[%s6 + $0x1d8] sm:$0xff]
      %v2026 = vld [vmem:[%s6 + $0x1e0] sm:$0xff]
      %v2027 = vld [vmem:[%s6 + $0x1e8] sm:$0xff]
      %v2028 = vld [vmem:[%s6 + $0x1f0] sm:$0xff]
      %v2029 = vld [vmem:[%s6 + $0x1f8] sm:$0xff]
      %2030 = vmatprep.subr.mxu0 %v1967
      %2031 = vmatpush1.msra.mxu0 %v1966
      %2032 = vmatprep.subr.mxu0 %v1971
      %2033 = vmatpush1.msra.mxu0 %v1970
      %2034 = vmatprep.subr.mxu0 %v1975
      %2035 = vmatpush1.msra.mxu0 %v1974
      %2036 = vmatprep.subr.mxu0 %v1979
      %2037 = vmatpush1.msra.mxu0 %v1978
      %2038 = vmatprep.subr.mxu0 %v1983
      %2039 = vmatpush1.msra.mxu0 %v1982
      %2040 = vmatprep.subr.mxu0 %v1987
      %2041 = vmatpush1.msra.mxu0 %v1986
      %2042 = vmatprep.subr.mxu0 %v1991
      %2043 = vmatpush1.msra.mxu0 %v1990
      %2044 = vmatprep.subr.mxu0 %v1995
      %2045 = vmatpush1.msra.mxu0 %v1994
      %2046 = vmatprep.subr.mxu0 %v1999
      %2047 = vmatpush1.msra.mxu0 %v1998
      %2048 = vmatprep.subr.mxu0 %v2003
      %2049 = vmatpush1.msra.mxu0 %v2002
      %2050 = vmatprep.subr.mxu0 %v2007
      %2051 = vmatpush1.msra.mxu0 %v2006
      %2052 = vmatprep.subr.mxu0 %v2011
      %2053 = vmatpush1.msra.mxu0 %v2010
      %2054 = vmatprep.subr.mxu0 %v2015
      %2055 = vmatpush1.msra.mxu0 %v2014
      %2056 = vmatprep.subr.mxu0 %v2019
      %2057 = vmatpush1.msra.mxu0 %v2018
      %2058 = vmatprep.subr.mxu0 %v2023
      %2059 = vmatpush1.msra.mxu0 %v2022
      %2060 = vmatprep.subr.mxu0 %v2027
      %2061 = vmatpush1.msra.mxu0 %v2026
      %2062 = vmatprep.subr.mxu0 0.0
      %2063 = vmatpush1.msra.mxu0 0.0
      %2064 = vmatprep.subr.mxu0 0.0
      %2065 = vmatpush1.msra.mxu0 0.0
      %2066 = vmatprep.subr.mxu0 0.0
      %2067 = vmatpush1.msra.mxu0 0.0
      %2068 = vmatprep.subr.mxu0 0.0
      %2069 = vmatpush1.msra.mxu0 0.0
      %2070 = vmatprep.subr.mxu0 0.0
      %2071 = vmatpush1.msra.mxu0 0.0
      %2072 = vmatprep.subr.mxu0 0.0
      %2073 = vmatpush1.msra.mxu0 0.0
      %2074 = vmatprep.subr.mxu0 0.0
      %2075 = vmatpush1.msra.mxu0 0.0
      %2076 = vmatprep.subr.mxu0 0.0
      %2077 = vmatpush1.msra.mxu0 0.0
      %2078 = vmatprep.subr.mxu0 0.0
      %2079 = vmatpush1.msra.mxu0 0.0
      %2080 = vmatprep.subr.mxu0 0.0
      %2081 = vmatpush1.msra.mxu0 0.0
      %2082 = vmatprep.subr.mxu0 0.0
      %2083 = vmatpush1.msra.mxu0 0.0
      %2084 = vmatprep.subr.mxu0 0.0
      %2085 = vmatpush1.msra.mxu0 0.0
      %2086 = vmatprep.subr.mxu0 0.0
      %2087 = vmatpush1.msra.mxu0 0.0
      %2088 = vmatprep.subr.mxu0 0.0
      %2089 = vmatpush1.msra.mxu0 0.0
      %2090 = vmatprep.subr.mxu0 0.0
      %2091 = vmatpush1.msra.mxu0 0.0
      %2092 = vmatprep.subr.mxu0 0.0
      %2093 = vmatpush1.msra.mxu0 0.0
      %2094 = vmatprep.mubr.f32.mxu0 0.0
      %2095 = vmatmul.mubr.f32.gmra.mrb[0].mxu0 %v1965
      %v2096 = vpop.f32.mrb[0].mxu0
      %v2097 = vadd.f32 0.0, %v2096
      %v2098 = vpop.f32.mrb[0].mxu0
      %v2099 = vadd.f32 0.0, %v2098
      %2100 = vdwg.mxu0
      %2101 = vmatprep.subr.mxu0 %v1969
      %2102 = vmatpush1.msra.mxu0 %v1968
      %2103 = vmatprep.subr.mxu0 %v1973
      %2104 = vmatpush1.msra.mxu0 %v1972
      %2105 = vmatprep.subr.mxu0 %v1977
      %2106 = vmatpush1.msra.mxu0 %v1976
      %2107 = vmatprep.subr.mxu0 %v1981
      %2108 = vmatpush1.msra.mxu0 %v1980
      %2109 = vmatprep.subr.mxu0 %v1985
      %2110 = vmatpush1.msra.mxu0 %v1984
      %2111 = vmatprep.subr.mxu0 %v1989
      %2112 = vmatpush1.msra.mxu0 %v1988
      %2113 = vmatprep.subr.mxu0 %v1993
      %2114 = vmatpush1.msra.mxu0 %v1992
      %2115 = vmatprep.subr.mxu0 %v1997
      %2116 = vmatpush1.msra.mxu0 %v1996
      %2117 = vmatprep.subr.mxu0 %v2001
      %2118 = vmatpush1.msra.mxu0 %v2000
      %2119 = vmatprep.subr.mxu0 %v2005
      %2120 = vmatpush1.msra.mxu0 %v2004
      %2121 = vmatprep.subr.mxu0 %v2009
      %2122 = vmatpush1.msra.mxu0 %v2008
      %2123 = vmatprep.subr.mxu0 %v2013
      %2124 = vmatpush1.msra.mxu0 %v2012
      %2125 = vmatprep.subr.mxu0 %v2017
      %2126 = vmatpush1.msra.mxu0 %v2016
      %2127 = vmatprep.subr.mxu0 %v2021
      %2128 = vmatpush1.msra.mxu0 %v2020
      %2129 = vmatprep.subr.mxu0 %v2025
      %2130 = vmatpush1.msra.mxu0 %v2024
      %2131 = vmatprep.subr.mxu0 %v2029
      %2132 = vmatpush1.msra.mxu0 %v2028
      %2133 = vmatprep.subr.mxu0 0.0
      %2134 = vmatpush1.msra.mxu0 0.0
      %2135 = vmatprep.subr.mxu0 0.0
      %2136 = vmatpush1.msra.mxu0 0.0
      %2137 = vmatprep.subr.mxu0 0.0
      %2138 = vmatpush1.msra.mxu0 0.0
      %2139 = vmatprep.subr.mxu0 0.0
      %2140 = vmatpush1.msra.mxu0 0.0
      %2141 = vmatprep.subr.mxu0 0.0
      %2142 = vmatpush1.msra.mxu0 0.0
      %2143 = vmatprep.subr.mxu0 0.0
      %2144 = vmatpush1.msra.mxu0 0.0
      %2145 = vmatprep.subr.mxu0 0.0
      %2146 = vmatpush1.msra.mxu0 0.0
      %2147 = vmatprep.subr.mxu0 0.0
      %2148 = vmatpush1.msra.mxu0 0.0
      %2149 = vmatprep.subr.mxu0 0.0
      %2150 = vmatpush1.msra.mxu0 0.0
      %2151 = vmatprep.subr.mxu0 0.0
      %2152 = vmatpush1.msra.mxu0 0.0
      %2153 = vmatprep.subr.mxu0 0.0
      %2154 = vmatpush1.msra.mxu0 0.0
      %2155 = vmatprep.subr.mxu0 0.0
      %2156 = vmatpush1.msra.mxu0 0.0
      %2157 = vmatprep.subr.mxu0 0.0
      %2158 = vmatpush1.msra.mxu0 0.0
      %2159 = vmatprep.subr.mxu0 0.0
      %2160 = vmatpush1.msra.mxu0 0.0
      %2161 = vmatprep.subr.mxu0 0.0
      %2162 = vmatpush1.msra.mxu0 0.0
      %2163 = vmatprep.subr.mxu0 0.0
      %2164 = vmatpush1.msra.mxu0 0.0
      %2165 = vmatprep.mubr.f32.mxu0 0.0
      %2166 = vmatmul.mubr.f32.gmra.mrb[0].mxu0 %v1965
      %v2167 = vpop.f32.mrb[0].mxu0
      %v2168 = vadd.f32 0.0, %v2167
      %v2169 = vpop.f32.mrb[0].mxu0
      %v2170 = vadd.f32 0.0, %v2169
      %2171 = vdwg.mxu0
      %2172 = vmatprep.subr.mxu0 %v1901
      %2173 = vmatpush1.msra.mxu0 %v1900
      %2174 = vmatprep.subr.mxu0 %v1905
      %2175 = vmatpush1.msra.mxu0 %v1904
      %2176 = vmatprep.subr.mxu0 %v1909
      %2177 = vmatpush1.msra.mxu0 %v1908
      %2178 = vmatprep.subr.mxu0 %v1913
      %2179 = vmatpush1.msra.mxu0 %v1912
      %2180 = vmatprep.subr.mxu0 %v1917
      %2181 = vmatpush1.msra.mxu0 %v1916
      %2182 = vmatprep.subr.mxu0 %v1921
      %2183 = vmatpush1.msra.mxu0 %v1920
      %2184 = vmatprep.subr.mxu0 %v1925
      %2185 = vmatpush1.msra.mxu0 %v1924
      %2186 = vmatprep.subr.mxu0 %v1929
      %2187 = vmatpush1.msra.mxu0 %v1928
      %2188 = vmatprep.subr.mxu0 %v1933
      %2189 = vmatpush1.msra.mxu0 %v1932
      %2190 = vmatprep.subr.mxu0 %v1937
      %2191 = vmatpush1.msra.mxu0 %v1936
      %2192 = vmatprep.subr.mxu0 %v1941
      %2193 = vmatpush1.msra.mxu0 %v1940
      %2194 = vmatprep.subr.mxu0 %v1945
      %2195 = vmatpush1.msra.mxu0 %v1944
      %2196 = vmatprep.subr.mxu0 %v1949
      %2197 = vmatpush1.msra.mxu0 %v1948
      %2198 = vmatprep.subr.mxu0 %v1953
      %2199 = vmatpush1.msra.mxu0 %v1952
      %2200 = vmatprep.subr.mxu0 %v1957
      %2201 = vmatpush1.msra.mxu0 %v1956
      %2202 = vmatprep.subr.mxu0 %v1961
      %2203 = vmatpush1.msra.mxu0 %v1960
      %2204 = vmatprep.subr.mxu0 0.0
      %2205 = vmatpush1.msra.mxu0 0.0
      %2206 = vmatprep.subr.mxu0 0.0
      %2207 = vmatpush1.msra.mxu0 0.0
      %2208 = vmatprep.subr.mxu0 0.0
      %2209 = vmatpush1.msra.mxu0 0.0
      %2210 = vmatprep.subr.mxu0 0.0
      %2211 = vmatpush1.msra.mxu0 0.0
      %2212 = vmatprep.subr.mxu0 0.0
      %2213 = vmatpush1.msra.mxu0 0.0
      %2214 = vmatprep.subr.mxu0 0.0
      %2215 = vmatpush1.msra.mxu0 0.0
      %2216 = vmatprep.subr.mxu0 0.0
      %2217 = vmatpush1.msra.mxu0 0.0
      %2218 = vmatprep.subr.mxu0 0.0
      %2219 = vmatpush1.msra.mxu0 0.0
      %2220 = vmatprep.subr.mxu0 0.0
      %2221 = vmatpush1.msra.mxu0 0.0
      %2222 = vmatprep.subr.mxu0 0.0
      %2223 = vmatpush1.msra.mxu0 0.0
      %2224 = vmatprep.subr.mxu0 0.0
      %2225 = vmatpush1.msra.mxu0 0.0
      %2226 = vmatprep.subr.mxu0 0.0
      %2227 = vmatpush1.msra.mxu0 0.0
      %2228 = vmatprep.subr.mxu0 0.0
      %2229 = vmatpush1.msra.mxu0 0.0
      %2230 = vmatprep.subr.mxu0 0.0
      %2231 = vmatpush1.msra.mxu0 0.0
      %2232 = vmatprep.subr.mxu0 0.0
      %2233 = vmatpush1.msra.mxu0 0.0
      %2234 = vmatprep.subr.mxu0 0.0
      %2235 = vmatpush1.msra.mxu0 0.0
      %2236 = vmatprep.mubr.f32.mxu0 0.0
      %2237 = vmatmul.mubr.f32.gmra.mrb[0].mxu0 %v1897
      %v2238 = vpop.f32.mrb[0].mxu0
      %v2239 = vadd.f32 %v2097, %v2238
      %v2240 = vpop.f32.mrb[0].mxu0
      %v2241 = vadd.f32 %v2099, %v2240
      %2242 = vdwg.mxu0
      %2243 = vmatprep.subr.mxu0 %v1903
      %2244 = vmatpush1.msra.mxu0 %v1902
      %2245 = vmatprep.subr.mxu0 %v1907
      %2246 = vmatpush1.msra.mxu0 %v1906
      %2247 = vmatprep.subr.mxu0 %v1911
      %2248 = vmatpush1.msra.mxu0 %v1910
      %2249 = vmatprep.subr.mxu0 %v1915
      %2250 = vmatpush1.msra.mxu0 %v1914
      %2251 = vmatprep.subr.mxu0 %v1919
      %2252 = vmatpush1.msra.mxu0 %v1918
      %2253 = vmatprep.subr.mxu0 %v1923
      %2254 = vmatpush1.msra.mxu0 %v1922
      %2255 = vmatprep.subr.mxu0 %v1927
      %2256 = vmatpush1.msra.mxu0 %v1926
      %2257 = vmatprep.subr.mxu0 %v1931
      %2258 = vmatpush1.msra.mxu0 %v1930
      %2259 = vmatprep.subr.mxu0 %v1935
      %2260 = vmatpush1.msra.mxu0 %v1934
      %2261 = vmatprep.subr.mxu0 %v1939
      %2262 = vmatpush1.msra.mxu0 %v1938
      %2263 = vmatprep.subr.mxu0 %v1943
      %2264 = vmatpush1.msra.mxu0 %v1942
      %2265 = vmatprep.subr.mxu0 %v1947
      %2266 = vmatpush1.msra.mxu0 %v1946
      %2267 = vmatprep.subr.mxu0 %v1951
      %2268 = vmatpush1.msra.mxu0 %v1950
      %2269 = vmatprep.subr.mxu0 %v1955
      %2270 = vmatpush1.msra.mxu0 %v1954
      %2271 = vmatprep.subr.mxu0 %v1959
      %2272 = vmatpush1.msra.mxu0 %v1958
      %2273 = vmatprep.subr.mxu0 %v1963
      %2274 = vmatpush1.msra.mxu0 %v1962
      %2275 = vmatprep.subr.mxu0 0.0
      %2276 = vmatpush1.msra.mxu0 0.0
      %2277 = vmatprep.subr.mxu0 0.0
      %2278 = vmatpush1.msra.mxu0 0.0
      %2279 = vmatprep.subr.mxu0 0.0
      %2280 = vmatpush1.msra.mxu0 0.0
      %2281 = vmatprep.subr.mxu0 0.0
      %2282 = vmatpush1.msra.mxu0 0.0
      %2283 = vmatprep.subr.mxu0 0.0
      %2284 = vmatpush1.msra.mxu0 0.0
      %2285 = vmatprep.subr.mxu0 0.0
      %2286 = vmatpush1.msra.mxu0 0.0
      %2287 = vmatprep.subr.mxu0 0.0
      %2288 = vmatpush1.msra.mxu0 0.0
      %2289 = vmatprep.subr.mxu0 0.0
      %2290 = vmatpush1.msra.mxu0 0.0
      %2291 = vmatprep.subr.mxu0 0.0
      %2292 = vmatpush1.msra.mxu0 0.0
      %2293 = vmatprep.subr.mxu0 0.0
      %2294 = vmatpush1.msra.mxu0 0.0
      %2295 = vmatprep.subr.mxu0 0.0
      %2296 = vmatpush1.msra.mxu0 0.0
      %2297 = vmatprep.subr.mxu0 0.0
      %2298 = vmatpush1.msra.mxu0 0.0
      %2299 = vmatprep.subr.mxu0 0.0
      %2300 = vmatpush1.msra.mxu0 0.0
      %2301 = vmatprep.subr.mxu0 0.0
      %2302 = vmatpush1.msra.mxu0 0.0
      %2303 = vmatprep.subr.mxu0 0.0
      %2304 = vmatpush1.msra.mxu0 0.0
      %2305 = vmatprep.subr.mxu0 0.0
      %2306 = vmatpush1.msra.mxu0 0.0
      %2307 = vmatprep.mubr.f32.mxu0 0.0
      %2308 = vmatmul.mubr.f32.gmra.mrb[0].mxu0 %v1897
      %v2309 = vpop.f32.mrb[0].mxu0
      %v2310 = vadd.f32 %v2168, %v2309
      %v2311 = vpop.f32.mrb[0].mxu0
      %v2312 = vadd.f32 %v2170, %v2311
      %2313 = vdwg.mxu0
      %v2314 = vld [vmem:[%s9] sm:$0xf]
      %v2316 = vlaneseq
      %v2317 = vshrl.u32 %v2316, 7
      %v2318 = vsub.s32 0, %v2317
      %v2319 = vrot.slane %v2314, %v2318
      %v2320 = vlaneseq
      %v2321 = vshrl.u32 %v2320, 7
      %v2322 = vsub.s32 1, %v2321
      %v2323 = vrot.slane %v2314, %v2322
      %v2324 = vlaneseq
      %v2325 = vshrl.u32 %v2324, 7
      %v2326 = vsub.s32 2, %v2325
      %v2327 = vrot.slane %v2314, %v2326
      %v2328 = vlaneseq
      %v2329 = vshrl.u32 %v2328, 7
      %v2330 = vsub.s32 3, %v2329
      %v2331 = vrot.slane %v2314, %v2330
      %v2336 = vadd.f32 %v2239, %v2319
      %v2337 = vadd.f32 %v2241, %v2323
      %v2338 = vadd.f32 %v2310, %v2327
      %v2339 = vadd.f32 %v2312, %v2331
      %v2340 = vsub.f32 0.0, %v2336
      %v2341 = vmul.f32 %v2340, 1.442695
      %v2342 = vpow.pop %v2341
      %v2343 = vadd.f32 %v2342, 1.0
      %v2344 = vrcp.pop %v2343
      %v2345 = vmul.f32 1.0, %v2344
      %v2346 = vsub.f32 0.0, %v2337
      %v2347 = vmul.f32 %v2346, 1.442695
      %v2348 = vpow.pop %v2347
      %v2349 = vadd.f32 %v2348, 1.0
      %v2350 = vrcp.pop %v2349
      %v2351 = vmul.f32 1.0, %v2350
      %v2352 = vtanh.pop %v2338
      %v2353 = vsub.f32 0.0, %v2339
      %v2354 = vmul.f32 %v2353, 1.442695
      %v2355 = vpow.pop %v2354
      %v2356 = vadd.f32 %v2355, 1.0
      %v2357 = vrcp.pop %v2356
      %v2358 = vmul.f32 1.0, %v2357
      %s2359 = scalar_lea.vmem [#allocation3], 16
      %v2360 = vld [vmem:[%s2359] sm:$0xff]
      %v2361 = vmul.f32 %v2351, %v2360
      %v2362 = vmul.f32 %v2345, %v2352
      %v2363 = vadd.f32 %v2361, %v2362
      %v2364 = vtanh.pop %v2363
      %v2365 = vmul.f32 %v2358, %v2364
      %2366 = vst [vmem:[%s2359] sm:$0xff] %v2363
      %2367 = vst [vmem:[%s1964] sm:$0xff] %v2365
      %v2368 = vld [vmem:[#allocation4] sm:$0xff]
      %v2369 = vadd.f32 %v2368, %v2365
      %2370 = vst [vmem:[#allocation4] sm:$0xff] %v2369
      %p2371 = scmp.eq.s32.totalorder %s21, 3
      // Predicated region
      $region65: #{snn_lstm_forward.9} parent=59 // pred_check
        %p2372 = pneg %p2371
      $region66: #{snn_lstm_forward.9} parent=59 // pred_check_branch
        %2374 = sbr.rel (%p2372) target = $region68
      $region67: #{snn_lstm_forward.9} parent=59 // pred_region
        %v2375 = vld [vmem:[#allocation4] sm:$0xff]
        %2376 = vst [vmem:[%s10] sm:$0xff] %v2375
      $region68: #{snn_lstm_forward.9} parent=59 // pred_fallthru
        _
      // Predicated region
      $region69: #{snn_lstm_forward.9} parent=59 // pred_check
        %p2377 = pneg %p249
      $region70: #{snn_lstm_forward.9} parent=59 // pred_check_branch
        %2379 = sbr.rel (%p2377) target = $region72
      $region71: #{snn_lstm_forward.9} parent=59 // pred_region
        _
      $region72: #{snn_lstm_forward.9} parent=59 // pred_fallthru
        _
      // Predicated region
      $region73: #{snn_lstm_forward.9} parent=59 // pred_check
        %p2380 = pneg %p249
      $region74: #{snn_lstm_forward.9} parent=59 // pred_check_branch
        %2382 = sbr.rel (%p2380) target = $region76
      $region75: #{snn_lstm_forward.9} parent=59 // pred_region
        _
      $region76: #{snn_lstm_forward.9} parent=59 // pred_fallthru
        _
    $region60: #{snn_lstm_forward.9} parent=5 // pred_fallthru
      _
    %p2383 = scmp.le.s32.totalorder 2, %s16
    // Predicated region
    $region77: #{snn_lstm_forward.9} parent=5 // pred_check
      %p2384 = pneg %p2383
    $region78: #{snn_lstm_forward.9} parent=5 // pred_check_branch
      %2386 = sbr.rel (%p2384) target = $region80
    $region79: #{snn_lstm_forward.9} parent=5 // pred_region
      %s2387 = ssub.s32 %s16, 2
    $region80: #{snn_lstm_forward.9} parent=5 // pred_fallthru
      _
  $region6: #{snn_lstm_forward.9} parent=0 // loop_footer
    %s20 = sadd.s32 1, %s16
  $region7: #{snn_lstm_forward.9} parent=0 // loop_footer_branch
    %15 = sbr.rel target = $region3
  $region8: #{snn_lstm_forward.9} parent=0 // loop_exit
    _

</llo_original>
